<compile_context>
chip_gen: v7x
topology: tpu7x:2x2x1
jax: 0.10.0
libtpu: 0.0.40
codegen_flags: <defaults>
</compile_context>

<pallas_src>
import functools

import jax
import jax.numpy as jnp
from jax.experimental import pallas as pl
from jax.experimental.pallas import tpu as pltpu

D_MODEL = 32
NHEAD = 2
DFF = 2048
LN_EPS = 1e-5
N_ENC = 2
N_DEC = 2


def _round_up(n, m):
    return -(-n // m) * m


# ----------------------------------------------------------------------------
# Static parameter-slab layout (pure Python; depends only on the architecture)
# ----------------------------------------------------------------------------
def _build_layout(n_enc=N_ENC, n_dec=N_DEC, d=D_MODEL, dff=DFF):
    """Returns (w_layout, v_layout, w_total, v_total).

    w_layout: name -> (lane_offset, width) into the bf16 (d, w_total) slab.
    v_layout: name -> (lane_offset, width) into the f32 (1, v_total) slab.
    All offsets are 128-lane aligned.
    """
    w_entries, v_entries = {}, {}
    w_off, v_off = 0, 0

    def w_add(name, width):
        nonlocal w_off
        w_entries[name] = (w_off, width)
        w_off += _round_up(width, 128)

    def v_add(name, width):
        nonlocal v_off
        v_entries[name] = (v_off, width)
        v_off += _round_up(width, 128)

    for i in range(n_enc):
        p = "enc%d." % i
        w_add(p + "wqkv", 3 * d)
        w_add(p + "wo", d)
        w_add(p + "w1", dff)
        w_add(p + "w2t", dff)
        v_add(p + "bqkv", 3 * d)
        v_add(p + "bo", d)
        v_add(p + "b1", dff)
        v_add(p + "b2", d)
        for n in ("ln1_g", "ln1_b", "ln2_g", "ln2_b"):
            v_add(p + n, d)
    for i in range(n_dec):
        p = "dec%d." % i
        w_add(p + "sa_wqkv", 3 * d)
        w_add(p + "sa_wo", d)
        w_add(p + "ca_wqkv", 3 * d)
        w_add(p + "ca_wo", d)
        w_add(p + "w1", dff)
        w_add(p + "w2t", dff)
        v_add(p + "sa_bqkv", 3 * d)
        v_add(p + "sa_bo", d)
        v_add(p + "ca_bqkv", 3 * d)
        v_add(p + "ca_bo", d)
        v_add(p + "b1", dff)
        v_add(p + "b2", d)
        for n in ("ln1_g", "ln1_b", "ln2_g", "ln2_b", "ln3_g", "ln3_b"):
            v_add(p + n, d)
    return w_entries, v_entries, w_off, v_off


def pack_params(params, n_enc=N_ENC, n_dec=N_DEC, d=D_MODEL, dff=DFF):
    """Pack the parameter pytree into (w_slab bf16 (d,Wtot), v_slab f32 (1,Vtot)).

    Call once at init (outside the jitted forward)."""
    wL, vL, wtot, vtot = _build_layout(n_enc, n_dec, d, dff)
    w = jnp.zeros((d, wtot), jnp.bfloat16)
    v = jnp.zeros((1, vtot), jnp.float32)

    def put_w(name, arr):
        nonlocal w
        off, width = wL[name]
        w = w.at[:, off:off + width].set(arr.astype(jnp.bfloat16))

    def put_v(name, arr):
        nonlocal v
        off, width = vL[name]
        v = v.at[0, off:off + width].set(arr.astype(jnp.float32))

    for i, lp in enumerate(params["encoder"]):
        p = "enc%d." % i
        put_w(p + "wqkv", lp["self_attn"]["wqkv"])
        put_w(p + "wo", lp["self_attn"]["wo"])
        put_w(p + "w1", lp["w1"])
        put_w(p + "w2t", lp["w2"].T)          # store transposed: (d, dff)
        put_v(p + "bqkv", lp["self_attn"]["bqkv"])
        put_v(p + "bo", lp["self_attn"]["bo"])
        put_v(p + "b1", lp["b1"])
        put_v(p + "b2", lp["b2"])
        for n in ("ln1_g", "ln1_b", "ln2_g", "ln2_b"):
            put_v(p + n, lp[n])
    for i, lp in enumerate(params["decoder"]):
        p = "dec%d." % i
        put_w(p + "sa_wqkv", lp["self_attn"]["wqkv"])
        put_w(p + "sa_wo", lp["self_attn"]["wo"])
        put_w(p + "ca_wqkv", lp["cross_attn"]["wqkv"])
        put_w(p + "ca_wo", lp["cross_attn"]["wo"])
        put_w(p + "w1", lp["w1"])
        put_w(p + "w2t", lp["w2"].T)
        put_v(p + "sa_bqkv", lp["self_attn"]["bqkv"])
        put_v(p + "sa_bo", lp["self_attn"]["bo"])
        put_v(p + "ca_bqkv", lp["cross_attn"]["bqkv"])
        put_v(p + "ca_bo", lp["cross_attn"]["bo"])
        put_v(p + "b1", lp["b1"])
        put_v(p + "b2", lp["b2"])
        for n in ("ln1_g", "ln1_b", "ln2_g", "ln2_b", "ln3_g", "ln3_b"):
            put_v(p + n, lp[n])
    return w, v


# ----------------------------------------------------------------------------
# Fused whole-model kernel (single grid step, whole batch folded in)
# ----------------------------------------------------------------------------
def _fused_kernel(layout, dims, tgt_ref, det_ref, w_ref, v_ref,
                  out_det_ref, out_tgt_ref):
    wL, vL = layout
    lt, ls, b, d, nhead, n_enc, n_dec = dims
    nt, ns = lt * b, ls * b
    dk = d // nhead
    scale = 1.0 / float(dk) ** 0.5

    def gw(name):                              # bf16 weight slice (d, width)
        off, width = wL[name]
        return w_ref[:, off:off + width]

    def gv(name):                              # f32 vector slice (1, width)
        off, width = vL[name]
        return v_ref[:, off:off + width]

    def mm(x, w_bf16):                         # f32 act -> bf16 MXU -> f32 acc
        return jnp.dot(x.astype(jnp.bfloat16), w_bf16,
                       preferred_element_type=jnp.float32)

    def layernorm(y, g, bb):
        mu = jnp.mean(y, axis=-1, keepdims=True)
        var = jnp.mean((y - mu) * (y - mu), axis=-1, keepdims=True)
        return (y - mu) * jax.lax.rsqrt(var + LN_EPS) * g + bb

    def same_batch_mask(nq, nk):
        rq = jax.lax.broadcasted_iota(jnp.int32, (nq, nk), 0) % b
        ck = jax.lax.broadcasted_iota(jnp.int32, (nq, nk), 1) % b
        return rq == ck

    def attention(q, k, v_, wo, bo, mask):
        """q:(Nq,d), k/v_:(Nk,d) flattened rows; mask keeps same-batch pairs."""
        acc = None
        for h in range(nhead):                 # static unroll (nhead = 2)
            sl = slice(h * dk, (h + 1) * dk)
            s = jax.lax.dot_general(           # q @ k^T, f32 on MXU
                q[:, sl], k[:, sl], (((1,), (1,)), ((), ())),
                preferred_element_type=jnp.float32) * scale
            s = jnp.where(mask, s, -jnp.inf)   # forbid cross-batch attention
            s = s - jnp.max(s, axis=-1, keepdims=True)
            e = jnp.exp(s)
            p = e / jnp.sum(e, axis=-1, keepdims=True)   # exact divide
            head = jnp.dot(p, v_[:, sl], preferred_element_type=jnp.float32)
            contrib = mm(head, wo[sl, :])      # per-head output projection
            acc = contrib if acc is None else acc + contrib
        return acc + bo

    def ffn(x, w1, b1, w2t, b2):
        h = jnp.maximum(mm(x, w1) + b1, 0.0)   # (rows, dff), relu in f32
        return jax.lax.dot_general(            # contract the dff (lane) dims
            h.astype(jnp.bfloat16), w2t, (((1,), (1,)), ((), ())),
            preferred_element_type=jnp.float32) + b2

    # Same-batch masks (compile-time shapes, computed once).
    m_tt = same_batch_mask(nt, nt)
    m_ss = same_batch_mask(ns, ns)
    m_st = same_batch_mask(ns, nt)

    # ---------------- Encoder over targets ----------------
    x = tgt_ref[...]                           # (Lt*B, d) f32
    for i in range(n_enc):
        p = "enc%d." % i
        qkv = mm(x, gw(p + "wqkv")) + gv(p + "bqkv")
        q, k, v_ = qkv[:, :d], qkv[:, d:2 * d], qkv[:, 2 * d:3 * d]
        sa = attention(q, k, v_, gw(p + "wo"), gv(p + "bo"), m_tt)
        x = layernorm(x + sa, gv(p + "ln1_g"), gv(p + "ln1_b"))
        ff = ffn(x, gw(p + "w1"), gv(p + "b1"), gw(p + "w2t"), gv(p + "b2"))
        x = layernorm(x + ff, gv(p + "ln2_g"), gv(p + "ln2_b"))
    mem = x

    # ---------------- Decoder over detections ----------------
    y = det_ref[...]                           # (Ls*B, d) f32
    for i in range(n_dec):
        p = "dec%d." % i
        qkv = mm(y, gw(p + "sa_wqkv")) + gv(p + "sa_bqkv")
        q, k, v_ = qkv[:, :d], qkv[:, d:2 * d], qkv[:, 2 * d:3 * d]
        sa = attention(q, k, v_, gw(p + "sa_wo"), gv(p + "sa_bo"), m_ss)
        y = layernorm(y + sa, gv(p + "ln1_g"), gv(p + "ln1_b"))

        ca_wqkv, ca_bqkv = gw(p + "ca_wqkv"), gv(p + "ca_bqkv")
        q = mm(y, ca_wqkv[:, :d]) + ca_bqkv[:, :d]
        kv = mm(mem, ca_wqkv[:, d:3 * d]) + ca_bqkv[:, d:3 * d]
        k, v_ = kv[:, :d], kv[:, d:2 * d]
        ca = attention(q, k, v_, gw(p + "ca_wo"), gv(p + "ca_bo"), m_st)
        y = layernorm(y + ca, gv(p + "ln2_g"), gv(p + "ln2_b"))

        ff = ffn(y, gw(p + "w1"), gv(p + "b1"), gw(p + "w2t"), gv(p + "b2"))
        y = layernorm(y + ff, gv(p + "ln3_g"), gv(p + "ln3_b"))

    out_tgt_ref[...] = mem.astype(out_tgt_ref.dtype)
    out_det_ref[...] = y.astype(out_det_ref.dtype)


def single_branch_transformer(w_slab, v_slab, targets, detections,
                              *, n_enc=N_ENC, n_dec=N_DEC, nhead=NHEAD):
    """targets: (T+1, B, D), detections: (S, B, D).

    Returns (transformed_detections, transformed_targets) — PyTorch order."""
    lt, b, d = targets.shape
    ls = detections.shape[0]
    wL, vL, wtot, vtot = _build_layout(n_enc, n_dec, d, DFF)
    assert w_slab.shape == (d, wtot) and v_slab.shape == (1, vtot)

    # Seq-first (L, B, D) -> flattened rows (L*B, D): a free, contiguous reshape
    # (no wrapper transposes).
    tgt2d = targets.reshape(lt * b, d)
    det2d = detections.reshape(ls * b, d)

    kernel = functools.partial(_fused_kernel, (wL, vL),
                               (lt, ls, b, d, nhead, n_enc, n_dec))

    out_det2d, out_tgt2d = pl.pallas_call(
        kernel,
        out_shape=(jax.ShapeDtypeStruct((ls * b, d), detections.dtype),
                   jax.ShapeDtypeStruct((lt * b, d), targets.dtype)),
        grid=(1,),                                   # whole batch in one step
        in_specs=[pl.BlockSpec((lt * b, d), lambda i: (0, 0)),
                  pl.BlockSpec((ls * b, d), lambda i: (0, 0)),
                  pl.BlockSpec((d, wtot), lambda i: (0, 0)),   # bf16 weights
                  pl.BlockSpec((1, vtot), lambda i: (0, 0))],  # f32 bias/LN
        out_specs=(pl.BlockSpec((ls * b, d), lambda i: (0, 0)),
                   pl.BlockSpec((lt * b, d), lambda i: (0, 0))),
        compiler_params=pltpu.CompilerParams(
            dimension_semantics=("arbitrary",)),
    )(tgt2d, det2d, w_slab, v_slab)

    return (out_det2d.reshape(ls, b, d), out_tgt2d.reshape(lt, b, d))


# ----------------------------------------------------------------------------
# Pure-JAX reference (mirrors the kernel's bf16 MXU casts for tight validation)
# ----------------------------------------------------------------------------
def _mm_ref(x, w):
    return jnp.dot(x.astype(jnp.bfloat16), w.astype(jnp.bfloat16),
                   preferred_element_type=jnp.float32)


def _reference_forward(params, targets, detections, nhead=NHEAD):
    def mha(mp, q_in, kv_in):
        lq, bb, d = q_in.shape
        lk = kv_in.shape[0]
        dk = d // nhead
        wqkv, bqkv = mp["wqkv"], mp["bqkv"]
        q = _mm_ref(q_in, wqkv[:, :d]) + bqkv[:d]
        k = _mm_ref(kv_in, wqkv[:, d:2 * d]) + bqkv[d:2 * d]
        v = _mm_ref(kv_in, wqkv[:, 2 * d:]) + bqkv[2 * d:]
        qh = q.reshape(lq, bb, nhead, dk).transpose(1, 2, 0, 3)
        kh = k.reshape(lk, bb, nhead, dk).transpose(1, 2, 0, 3)
        vh = v.reshape(lk, bb, nhead, dk).transpose(1, 2, 0, 3)
        s = jnp.einsum("bhqd,bhkd->bhqk", qh, kh) / jnp.sqrt(float(dk))
        p = jax.nn.softmax(s, axis=-1)
        o = jnp.einsum("bhqk,bhkd->bhqd", p, vh)
        o = o.transpose(2, 0, 1, 3).reshape(lq, bb, d)
        return _mm_ref(o, mp["wo"]) + mp["bo"]

    def ln(x, g, bb):
        mu = x.mean(-1, keepdims=True)
        var = ((x - mu) ** 2).mean(-1, keepdims=True)
        return (x - mu) * jax.lax.rsqrt(var + LN_EPS) * g + bb

    def enc(lp, x):
        x = ln(x + mha(lp["self_attn"], x, x), lp["ln1_g"], lp["ln1_b"])
        h = jnp.maximum(_mm_ref(x, lp["w1"]) + lp["b1"], 0.0)
        return ln(x + _mm_ref(h, lp["w2"]) + lp["b2"], lp["ln2_g"], lp["ln2_b"])

    def dec(lp, x, mem):
        x = ln(x + mha(lp["self_attn"], x, x), lp["ln1_g"], lp["ln1_b"])
        x = ln(x + mha(lp["cross_attn"], x, mem), lp["ln2_g"], lp["ln2_b"])
        h = jnp.maximum(_mm_ref(x, lp["w1"]) + lp["b1"], 0.0)
        return ln(x + _mm_ref(h, lp["w2"]) + lp["b2"], lp["ln3_g"], lp["ln3_b"])

    mem = targets
    for lp in params["encoder"]:
        mem = enc(lp, mem)
    out = detections
    for lp in params["decoder"]:
        out = dec(lp, out, mem)
    return out, mem


# ----------------------------------------------------------------------------
# Deterministic parameter construction
# ----------------------------------------------------------------------------
def _init_mha(key, d):
    ks = jax.random.split(key, 4)
    s = 0.05
    return dict(
        wqkv=jax.random.normal(ks[0], (d, 3 * d), jnp.float32) * s,
        bqkv=jax.random.normal(ks[1], (3 * d,), jnp.float32) * s,
        wo=jax.random.normal(ks[2], (d, d), jnp.float32) * s,
        bo=jax.random.normal(ks[3], (d,), jnp.float32) * s,
    )


def _init_encoder_layer(key, d, dff):
    k0, k1, k2 = jax.random.split(key, 3)
    s = 0.05
    return dict(
        self_attn=_init_mha(k0, d),
        w1=jax.random.normal(k1, (d, dff), jnp.float32) * s,
        b1=jnp.zeros((dff,), jnp.float32),
        w2=jax.random.normal(k2, (dff, d), jnp.float32) * s,
        b2=jnp.zeros((d,), jnp.float32),
        ln1_g=jnp.ones((d,), jnp.float32), ln1_b=jnp.zeros((d,), jnp.float32),
        ln2_g=jnp.ones((d,), jnp.float32), ln2_b=jnp.zeros((d,), jnp.float32),
    )


def _init_decoder_layer(key, d, dff):
    k0, k1, k2, k3 = jax.random.split(key, 4)
    s = 0.05
    return dict(
        self_attn=_init_mha(k0, d),
        cross_attn=_init_mha(k1, d),
        w1=jax.random.normal(k2, (d, dff), jnp.float32) * s,
        b1=jnp.zeros((dff,), jnp.float32),
        w2=jax.random.normal(k3, (dff, d), jnp.float32) * s,
        b2=jnp.zeros((d,), jnp.float32),
        ln1_g=jnp.ones((d,), jnp.float32), ln1_b=jnp.zeros((d,), jnp.float32),
        ln2_g=jnp.ones((d,), jnp.float32), ln2_b=jnp.zeros((d,), jnp.float32),
        ln3_g=jnp.ones((d,), jnp.float32), ln3_b=jnp.zeros((d,), jnp.float32),
    )


def init_params(key, d=D_MODEL, dff=DFF, enc_layers=N_ENC, dec_layers=N_DEC):
    keys = jax.random.split(key, enc_layers + dec_layers)
    return dict(
        encoder=[_init_encoder_layer(keys[i], d, dff) for i in range(enc_layers)],
        decoder=[_init_decoder_layer(keys[enc_layers + i], d, dff)
                 for i in range(dec_layers)],
    )


# ----------------------------------------------------------------------------
# Driver
# ----------------------------------------------------------------------------
if __name__ == "__main__":
    key = jax.random.PRNGKey(0)
    kp, kt, kd = jax.random.split(key, 3)

    num_targets_plus_null = 9   # (num_targets + 1)
    num_detections = 8
    batch = 2

    params = init_params(kp)
    targets = jax.random.normal(
        kt, (num_targets_plus_null, batch, D_MODEL), jnp.float32)
    detections = jax.random.normal(
        kd, (num_detections, batch, D_MODEL), jnp.float32)

    # One-time parameter packing (init-time, not on the per-call path).
    w_slab, v_slab = pack_params(params)
    w_slab, v_slab = jax.block_until_ready((w_slab, v_slab))

    fwd = jax.jit(single_branch_transformer)
    transformed_detections, transformed_targets = fwd(
        w_slab, v_slab, targets, detections)
    jax.block_until_ready((transformed_detections, transformed_targets))

    assert transformed_detections.shape == (num_detections, batch, D_MODEL)
    assert transformed_targets.shape == (num_targets_plus_null, batch, D_MODEL)
    assert jnp.all(jnp.isfinite(transformed_detections))
    assert jnp.all(jnp.isfinite(transformed_targets))

    # Validate against a pure-JAX reference that applies the same bf16 casts
    # at the MXU inputs (the only intentional precision loss in the kernel;
    # the softmax denominator is now an exact divide).
    ref_det, ref_tgt = jax.jit(_reference_forward)(params, targets, detections)
    assert jnp.allclose(transformed_detections, ref_det, rtol=2e-3, atol=2e-3)
    assert jnp.allclose(transformed_targets, ref_tgt, rtol=2e-3, atol=2e-3)

    print("KERNEL_OK")
</pallas_src>

<mosaic_0001>
module attributes {stable_mosaic.version = 11 : i64} {
  func.func @_fused_kernel(%arg0: i32, %arg1: memref<18x32xf32, #tpu.memory_space<vmem>>, %arg2: memref<16x32xf32, #tpu.memory_space<vmem>>, %arg3: memref<32x17920xbf16, #tpu.memory_space<vmem>>, %arg4: memref<1x12800xf32, #tpu.memory_space<vmem>>, %arg5: memref<16x32xf32, #tpu.memory_space<vmem>>, %arg6: memref<18x32xf32, #tpu.memory_space<vmem>>) attributes {dimension_semantics = [#tpu.dimension_semantics<arbitrary>], iteration_bounds = array<i64: 1>, scalar_prefetch = 0 : i64, scratch_operands = 0 : i64, tpu.core_type = #tpu.core_type<tc>, window_params = [{pipeline_mode = #tpu.pipeline_mode<synchronous>, transform_indices = @transform_0, window_bounds = array<i64: 18, 32>}, {pipeline_mode = #tpu.pipeline_mode<synchronous>, transform_indices = @transform_1, window_bounds = array<i64: 16, 32>}, {pipeline_mode = #tpu.pipeline_mode<synchronous>, transform_indices = @transform_2, window_bounds = array<i64: 32, 17920>}, {pipeline_mode = #tpu.pipeline_mode<synchronous>, transform_indices = @transform_3, window_bounds = array<i64: 1, 12800>}, {pipeline_mode = #tpu.pipeline_mode<synchronous>, transform_indices = @transform_4, window_bounds = array<i64: 16, 32>}, {pipeline_mode = #tpu.pipeline_mode<synchronous>, transform_indices = @transform_5, window_bounds = array<i64: 18, 32>}]} {
    %0 = tpu.iota {dimensions = array<i32: 0>} : vector<18x18xi32>
    %c2_i32 = arith.constant 2 : i32
    %c0_i32 = arith.constant 0 : i32
    %1 = arith.cmpi eq, %c2_i32, %c0_i32 : i32
    %c1_i32 = arith.constant 1 : i32
    %2 = arith.select %1, %c1_i32, %c2_i32 : i32
    %3 = vector.broadcast %2 : i32 to vector<18x18xi32>
    %4 = arith.remsi %0, %3 : vector<18x18xi32>
    %c0_i32_0 = arith.constant 0 : i32
    %5 = vector.broadcast %c0_i32_0 : i32 to vector<18x18xi32>
    %6 = arith.cmpi ne, %4, %5 : vector<18x18xi32>
    %c0_i32_1 = arith.constant 0 : i32
    %7 = vector.broadcast %c0_i32_1 : i32 to vector<18x18xi32>
    %8 = arith.cmpi slt, %4, %7 : vector<18x18xi32>
    %c0_i32_2 = arith.constant 0 : i32
    %9 = arith.cmpi slt, %2, %c0_i32_2 : i32
    %10 = vector.broadcast %9 : i1 to vector<18x18xi1>
    %11 = vector.broadcast %10 : vector<18x18xi1> to vector<18x18xi1>
    %12 = arith.xori %8, %11 : vector<18x18xi1>
    %13 = arith.andi %12, %6 : vector<18x18xi1>
    %14 = vector.broadcast %2 : i32 to vector<18x18xi32>
    %15 = arith.addi %4, %14 : vector<18x18xi32>
    %16 = arith.select %13, %15, %4 : vector<18x18xi1>, vector<18x18xi32>
    %17 = tpu.iota {dimensions = array<i32: 1>} : vector<18x18xi32>
    %c2_i32_3 = arith.constant 2 : i32
    %c0_i32_4 = arith.constant 0 : i32
    %18 = arith.cmpi eq, %c2_i32_3, %c0_i32_4 : i32
    %c1_i32_5 = arith.constant 1 : i32
    %19 = arith.select %18, %c1_i32_5, %c2_i32_3 : i32
    %20 = vector.broadcast %19 : i32 to vector<18x18xi32>
    %21 = arith.remsi %17, %20 : vector<18x18xi32>
    %c0_i32_6 = arith.constant 0 : i32
    %22 = vector.broadcast %c0_i32_6 : i32 to vector<18x18xi32>
    %23 = arith.cmpi ne, %21, %22 : vector<18x18xi32>
    %c0_i32_7 = arith.constant 0 : i32
    %24 = vector.broadcast %c0_i32_7 : i32 to vector<18x18xi32>
    %25 = arith.cmpi slt, %21, %24 : vector<18x18xi32>
    %c0_i32_8 = arith.constant 0 : i32
    %26 = arith.cmpi slt, %19, %c0_i32_8 : i32
    %27 = vector.broadcast %26 : i1 to vector<18x18xi1>
    %28 = vector.broadcast %27 : vector<18x18xi1> to vector<18x18xi1>
    %29 = arith.xori %25, %28 : vector<18x18xi1>
    %30 = arith.andi %29, %23 : vector<18x18xi1>
    %31 = vector.broadcast %19 : i32 to vector<18x18xi32>
    %32 = arith.addi %21, %31 : vector<18x18xi32>
    %33 = arith.select %30, %32, %21 : vector<18x18xi1>, vector<18x18xi32>
    %34 = arith.cmpi eq, %16, %33 : vector<18x18xi32>
    %35 = tpu.iota {dimensions = array<i32: 0>} : vector<16x16xi32>
    %c2_i32_9 = arith.constant 2 : i32
    %c0_i32_10 = arith.constant 0 : i32
    %36 = arith.cmpi eq, %c2_i32_9, %c0_i32_10 : i32
    %c1_i32_11 = arith.constant 1 : i32
    %37 = arith.select %36, %c1_i32_11, %c2_i32_9 : i32
    %38 = vector.broadcast %37 : i32 to vector<16x16xi32>
    %39 = arith.remsi %35, %38 : vector<16x16xi32>
    %c0_i32_12 = arith.constant 0 : i32
    %40 = vector.broadcast %c0_i32_12 : i32 to vector<16x16xi32>
    %41 = arith.cmpi ne, %39, %40 : vector<16x16xi32>
    %c0_i32_13 = arith.constant 0 : i32
    %42 = vector.broadcast %c0_i32_13 : i32 to vector<16x16xi32>
    %43 = arith.cmpi slt, %39, %42 : vector<16x16xi32>
    %c0_i32_14 = arith.constant 0 : i32
    %44 = arith.cmpi slt, %37, %c0_i32_14 : i32
    %45 = vector.broadcast %44 : i1 to vector<16x16xi1>
    %46 = vector.broadcast %45 : vector<16x16xi1> to vector<16x16xi1>
    %47 = arith.xori %43, %46 : vector<16x16xi1>
    %48 = arith.andi %47, %41 : vector<16x16xi1>
    %49 = vector.broadcast %37 : i32 to vector<16x16xi32>
    %50 = arith.addi %39, %49 : vector<16x16xi32>
    %51 = arith.select %48, %50, %39 : vector<16x16xi1>, vector<16x16xi32>
    %52 = tpu.iota {dimensions = array<i32: 1>} : vector<16x16xi32>
    %c2_i32_15 = arith.constant 2 : i32
    %c0_i32_16 = arith.constant 0 : i32
    %53 = arith.cmpi eq, %c2_i32_15, %c0_i32_16 : i32
    %c1_i32_17 = arith.constant 1 : i32
    %54 = arith.select %53, %c1_i32_17, %c2_i32_15 : i32
    %55 = vector.broadcast %54 : i32 to vector<16x16xi32>
    %56 = arith.remsi %52, %55 : vector<16x16xi32>
    %c0_i32_18 = arith.constant 0 : i32
    %57 = vector.broadcast %c0_i32_18 : i32 to vector<16x16xi32>
    %58 = arith.cmpi ne, %56, %57 : vector<16x16xi32>
    %c0_i32_19 = arith.constant 0 : i32
    %59 = vector.broadcast %c0_i32_19 : i32 to vector<16x16xi32>
    %60 = arith.cmpi slt, %56, %59 : vector<16x16xi32>
    %c0_i32_20 = arith.constant 0 : i32
    %61 = arith.cmpi slt, %54, %c0_i32_20 : i32
    %62 = vector.broadcast %61 : i1 to vector<16x16xi1>
    %63 = vector.broadcast %62 : vector<16x16xi1> to vector<16x16xi1>
    %64 = arith.xori %60, %63 : vector<16x16xi1>
    %65 = arith.andi %64, %58 : vector<16x16xi1>
    %66 = vector.broadcast %54 : i32 to vector<16x16xi32>
    %67 = arith.addi %56, %66 : vector<16x16xi32>
    %68 = arith.select %65, %67, %56 : vector<16x16xi1>, vector<16x16xi32>
    %69 = arith.cmpi eq, %51, %68 : vector<16x16xi32>
    %70 = tpu.iota {dimensions = array<i32: 0>} : vector<16x18xi32>
    %c2_i32_21 = arith.constant 2 : i32
    %c0_i32_22 = arith.constant 0 : i32
    %71 = arith.cmpi eq, %c2_i32_21, %c0_i32_22 : i32
    %c1_i32_23 = arith.constant 1 : i32
    %72 = arith.select %71, %c1_i32_23, %c2_i32_21 : i32
    %73 = vector.broadcast %72 : i32 to vector<16x18xi32>
    %74 = arith.remsi %70, %73 : vector<16x18xi32>
    %c0_i32_24 = arith.constant 0 : i32
    %75 = vector.broadcast %c0_i32_24 : i32 to vector<16x18xi32>
    %76 = arith.cmpi ne, %74, %75 : vector<16x18xi32>
    %c0_i32_25 = arith.constant 0 : i32
    %77 = vector.broadcast %c0_i32_25 : i32 to vector<16x18xi32>
    %78 = arith.cmpi slt, %74, %77 : vector<16x18xi32>
    %c0_i32_26 = arith.constant 0 : i32
    %79 = arith.cmpi slt, %72, %c0_i32_26 : i32
    %80 = vector.broadcast %79 : i1 to vector<16x18xi1>
    %81 = vector.broadcast %80 : vector<16x18xi1> to vector<16x18xi1>
    %82 = arith.xori %78, %81 : vector<16x18xi1>
    %83 = arith.andi %82, %76 : vector<16x18xi1>
    %84 = vector.broadcast %72 : i32 to vector<16x18xi32>
    %85 = arith.addi %74, %84 : vector<16x18xi32>
    %86 = arith.select %83, %85, %74 : vector<16x18xi1>, vector<16x18xi32>
    %87 = tpu.iota {dimensions = array<i32: 1>} : vector<16x18xi32>
    %c2_i32_27 = arith.constant 2 : i32
    %c0_i32_28 = arith.constant 0 : i32
    %88 = arith.cmpi eq, %c2_i32_27, %c0_i32_28 : i32
    %c1_i32_29 = arith.constant 1 : i32
    %89 = arith.select %88, %c1_i32_29, %c2_i32_27 : i32
    %90 = vector.broadcast %89 : i32 to vector<16x18xi32>
    %91 = arith.remsi %87, %90 : vector<16x18xi32>
    %c0_i32_30 = arith.constant 0 : i32
    %92 = vector.broadcast %c0_i32_30 : i32 to vector<16x18xi32>
    %93 = arith.cmpi ne, %91, %92 : vector<16x18xi32>
    %c0_i32_31 = arith.constant 0 : i32
    %94 = vector.broadcast %c0_i32_31 : i32 to vector<16x18xi32>
    %95 = arith.cmpi slt, %91, %94 : vector<16x18xi32>
    %c0_i32_32 = arith.constant 0 : i32
    %96 = arith.cmpi slt, %89, %c0_i32_32 : i32
    %97 = vector.broadcast %96 : i1 to vector<16x18xi1>
    %98 = vector.broadcast %97 : vector<16x18xi1> to vector<16x18xi1>
    %99 = arith.xori %95, %98 : vector<16x18xi1>
    %100 = arith.andi %99, %93 : vector<16x18xi1>
    %101 = vector.broadcast %89 : i32 to vector<16x18xi32>
    %102 = arith.addi %91, %101 : vector<16x18xi32>
    %103 = arith.select %100, %102, %91 : vector<16x18xi1>, vector<16x18xi32>
    %104 = arith.cmpi eq, %86, %103 : vector<16x18xi32>
    %c0 = arith.constant 0 : index
    %c0_33 = arith.constant 0 : index
    %105 = vector.load %arg1[%c0, %c0_33] : memref<18x32xf32, #tpu.memory_space<vmem>>, vector<18x32xf32>
    %c0_34 = arith.constant 0 : index
    %c0_35 = arith.constant 0 : index
    %106 = vector.load %arg3[%c0_34, %c0_35] : memref<32x17920xbf16, #tpu.memory_space<vmem>>, vector<32x96xbf16>
    %107 = arith.truncf %105 : vector<18x32xf32> to vector<18x32xbf16>
    %cst = arith.constant dense<0.000000e+00> : vector<18x96xf32>
    %108 = tpu.matmul %107, %106, %cst {dimension_numbers = #tpu.dot_dimension_numbers<[1], [0], [0], [1], [0, 0, 1, 1], [], []>} : vector<18x32xbf16>, vector<32x96xbf16>, vector<18x96xf32> -> vector<18x96xf32>
    %c0_36 = arith.constant 0 : index
    %c0_37 = arith.constant 0 : index
    %109 = vector.load %arg4[%c0_36, %c0_37] : memref<1x12800xf32, #tpu.memory_space<vmem>>, vector<1x96xf32>
    %110 = vector.broadcast %109 : vector<1x96xf32> to vector<18x96xf32>
    %111 = arith.addf %108, %110 : vector<18x96xf32>
    %112 = vector.extract_strided_slice %111 {offsets = [0, 0], sizes = [18, 32], strides = [1, 1]} : vector<18x96xf32> to vector<18x32xf32>
    %113 = vector.extract_strided_slice %111 {offsets = [0, 32], sizes = [18, 32], strides = [1, 1]} : vector<18x96xf32> to vector<18x32xf32>
    %114 = vector.extract_strided_slice %111 {offsets = [0, 64], sizes = [18, 32], strides = [1, 1]} : vector<18x96xf32> to vector<18x32xf32>
    %c0_38 = arith.constant 0 : index
    %c128 = arith.constant 128 : index
    %115 = vector.load %arg3[%c0_38, %c128] : memref<32x17920xbf16, #tpu.memory_space<vmem>>, vector<32x32xbf16>
    %c0_39 = arith.constant 0 : index
    %c128_40 = arith.constant 128 : index
    %116 = vector.load %arg4[%c0_39, %c128_40] : memref<1x12800xf32, #tpu.memory_space<vmem>>, vector<1x32xf32>
    %117 = vector.extract_strided_slice %112 {offsets = [0, 0], sizes = [18, 16], strides = [1, 1]} : vector<18x32xf32> to vector<18x16xf32>
    %118 = vector.extract_strided_slice %113 {offsets = [0, 0], sizes = [18, 16], strides = [1, 1]} : vector<18x32xf32> to vector<18x16xf32>
    %cst_41 = arith.constant dense<0.000000e+00> : vector<18x18xf32>
    %119 = tpu.matmul %117, %118, %cst_41 {dimension_numbers = #tpu.dot_dimension_numbers<[1], [1], [0], [0], [0, 0, 1, 0], [], []>} : vector<18x16xf32>, vector<18x16xf32>, vector<18x18xf32> -> vector<18x18xf32>
    %cst_42 = arith.constant 2.500000e-01 : f32
    %120 = vector.broadcast %cst_42 : f32 to vector<18x18xf32>
    %121 = arith.mulf %119, %120 : vector<18x18xf32>
    %cst_43 = arith.constant 0xFF800000 : f32
    %122 = vector.broadcast %cst_43 : f32 to vector<18x18xf32>
    %123 = arith.select %34, %121, %122 : vector<18x18xi1>, vector<18x18xf32>
    %cst_44 = arith.constant dense<0xFF800000> : vector<18xf32>
    %124 = vector.multi_reduction <maximumf>, %123, %cst_44 [1] : vector<18x18xf32> to vector<18xf32>
    %125 = vector.shape_cast %124 : vector<18xf32> to vector<18x1xf32>
    %126 = vector.broadcast %125 : vector<18x1xf32> to vector<18x18xf32>
    %127 = arith.subf %123, %126 : vector<18x18xf32>
    %128 = math.exp %127 : vector<18x18xf32>
    %cst_45 = arith.constant dense<0.000000e+00> : vector<18xf32>
    %129 = vector.multi_reduction <add>, %128, %cst_45 [1] : vector<18x18xf32> to vector<18xf32>
    %130 = vector.shape_cast %129 : vector<18xf32> to vector<18x1xf32>
    %131 = vector.broadcast %130 : vector<18x1xf32> to vector<18x18xf32>
    %132 = arith.divf %128, %131 : vector<18x18xf32>
    %133 = vector.extract_strided_slice %114 {offsets = [0, 0], sizes = [18, 16], strides = [1, 1]} : vector<18x32xf32> to vector<18x16xf32>
    %cst_46 = arith.constant dense<0.000000e+00> : vector<18x16xf32>
    %134 = tpu.matmul %132, %133, %cst_46 {dimension_numbers = #tpu.dot_dimension_numbers<[1], [0], [0], [1], [0, 0, 1, 1], [], []>} : vector<18x18xf32>, vector<18x16xf32>, vector<18x16xf32> -> vector<18x16xf32>
    %135 = vector.extract_strided_slice %115 {offsets = [0, 0], sizes = [16, 32], strides = [1, 1]} : vector<32x32xbf16> to vector<16x32xbf16>
    %136 = arith.truncf %134 : vector<18x16xf32> to vector<18x16xbf16>
    %cst_47 = arith.constant dense<0.000000e+00> : vector<18x32xf32>
    %137 = tpu.matmul %136, %135, %cst_47 {dimension_numbers = #tpu.dot_dimension_numbers<[1], [0], [0], [1], [0, 0, 1, 1], [], []>} : vector<18x16xbf16>, vector<16x32xbf16>, vector<18x32xf32> -> vector<18x32xf32>
    %138 = vector.extract_strided_slice %112 {offsets = [0, 16], sizes = [18, 16], strides = [1, 1]} : vector<18x32xf32> to vector<18x16xf32>
    %139 = vector.extract_strided_slice %113 {offsets = [0, 16], sizes = [18, 16], strides = [1, 1]} : vector<18x32xf32> to vector<18x16xf32>
    %cst_48 = arith.constant dense<0.000000e+00> : vector<18x18xf32>
    %140 = tpu.matmul %138, %139, %cst_48 {dimension_numbers = #tpu.dot_dimension_numbers<[1], [1], [0], [0], [0, 0, 1, 0], [], []>} : vector<18x16xf32>, vector<18x16xf32>, vector<18x18xf32> -> vector<18x18xf32>
    %cst_49 = arith.constant 2.500000e-01 : f32
    %141 = vector.broadcast %cst_49 : f32 to vector<18x18xf32>
    %142 = arith.mulf %140, %141 : vector<18x18xf32>
    %cst_50 = arith.constant 0xFF800000 : f32
    %143 = vector.broadcast %cst_50 : f32 to vector<18x18xf32>
    %144 = arith.select %34, %142, %143 : vector<18x18xi1>, vector<18x18xf32>
    %cst_51 = arith.constant dense<0xFF800000> : vector<18xf32>
    %145 = vector.multi_reduction <maximumf>, %144, %cst_51 [1] : vector<18x18xf32> to vector<18xf32>
    %146 = vector.shape_cast %145 : vector<18xf32> to vector<18x1xf32>
    %147 = vector.broadcast %146 : vector<18x1xf32> to vector<18x18xf32>
    %148 = arith.subf %144, %147 : vector<18x18xf32>
    %149 = math.exp %148 : vector<18x18xf32>
    %cst_52 = arith.constant dense<0.000000e+00> : vector<18xf32>
    %150 = vector.multi_reduction <add>, %149, %cst_52 [1] : vector<18x18xf32> to vector<18xf32>
    %151 = vector.shape_cast %150 : vector<18xf32> to vector<18x1xf32>
    %152 = vector.broadcast %151 : vector<18x1xf32> to vector<18x18xf32>
    %153 = arith.divf %149, %152 : vector<18x18xf32>
    %154 = vector.extract_strided_slice %114 {offsets = [0, 16], sizes = [18, 16], strides = [1, 1]} : vector<18x32xf32> to vector<18x16xf32>
    %cst_53 = arith.constant dense<0.000000e+00> : vector<18x16xf32>
    %155 = tpu.matmul %153, %154, %cst_53 {dimension_numbers = #tpu.dot_dimension_numbers<[1], [0], [0], [1], [0, 0, 1, 1], [], []>} : vector<18x18xf32>, vector<18x16xf32>, vector<18x16xf32> -> vector<18x16xf32>
    %156 = vector.extract_strided_slice %115 {offsets = [16, 0], sizes = [16, 32], strides = [1, 1]} : vector<32x32xbf16> to vector<16x32xbf16>
    %157 = arith.truncf %155 : vector<18x16xf32> to vector<18x16xbf16>
    %cst_54 = arith.constant dense<0.000000e+00> : vector<18x32xf32>
    %158 = tpu.matmul %157, %156, %cst_54 {dimension_numbers = #tpu.dot_dimension_numbers<[1], [0], [0], [1], [0, 0, 1, 1], [], []>} : vector<18x16xbf16>, vector<16x32xbf16>, vector<18x32xf32> -> vector<18x32xf32>
    %159 = arith.addf %137, %158 : vector<18x32xf32>
    %160 = vector.broadcast %116 : vector<1x32xf32> to vector<18x32xf32>
    %161 = arith.addf %159, %160 : vector<18x32xf32>
    %162 = arith.addf %105, %161 : vector<18x32xf32>
    %c0_55 = arith.constant 0 : index
    %c2432 = arith.constant 2432 : index
    %163 = vector.load %arg4[%c0_55, %c2432] : memref<1x12800xf32, #tpu.memory_space<vmem>>, vector<1x32xf32>
    %c0_56 = arith.constant 0 : index
    %c2560 = arith.constant 2560 : index
    %164 = vector.load %arg4[%c0_56, %c2560] : memref<1x12800xf32, #tpu.memory_space<vmem>>, vector<1x32xf32>
    %cst_57 = arith.constant dense<0.000000e+00> : vector<18xf32>
    %165 = vector.multi_reduction <add>, %162, %cst_57 [1] : vector<18x32xf32> to vector<18xf32>
    %166 = vector.shape_cast %165 : vector<18xf32> to vector<18x1xf32>
    %cst_58 = arith.constant 3.200000e+01 : f32
    %167 = vector.broadcast %cst_58 : f32 to vector<18x1xf32>
    %168 = arith.divf %166, %167 : vector<18x1xf32>
    %169 = vector.broadcast %168 : vector<18x1xf32> to vector<18x32xf32>
    %170 = arith.subf %162, %169 : vector<18x32xf32>
    %171 = vector.broadcast %168 : vector<18x1xf32> to vector<18x32xf32>
    %172 = arith.subf %162, %171 : vector<18x32xf32>
    %173 = arith.mulf %170, %172 : vector<18x32xf32>
    %cst_59 = arith.constant dense<0.000000e+00> : vector<18xf32>
    %174 = vector.multi_reduction <add>, %173, %cst_59 [1] : vector<18x32xf32> to vector<18xf32>
    %175 = vector.shape_cast %174 : vector<18xf32> to vector<18x1xf32>
    %cst_60 = arith.constant 3.200000e+01 : f32
    %176 = vector.broadcast %cst_60 : f32 to vector<18x1xf32>
    %177 = arith.divf %175, %176 : vector<18x1xf32>
    %178 = vector.broadcast %168 : vector<18x1xf32> to vector<18x32xf32>
    %179 = arith.subf %162, %178 : vector<18x32xf32>
    %cst_61 = arith.constant 9.99999974E-6 : f32
    %180 = vector.broadcast %cst_61 : f32 to vector<18x1xf32>
    %181 = arith.addf %177, %180 : vector<18x1xf32>
    %182 = math.rsqrt %181 : vector<18x1xf32>
    %183 = vector.broadcast %182 : vector<18x1xf32> to vector<18x32xf32>
    %184 = arith.mulf %179, %183 : vector<18x32xf32>
    %185 = vector.broadcast %163 : vector<1x32xf32> to vector<18x32xf32>
    %186 = arith.mulf %184, %185 : vector<18x32xf32>
    %187 = vector.broadcast %164 : vector<1x32xf32> to vector<18x32xf32>
    %188 = arith.addf %186, %187 : vector<18x32xf32>
    %c0_62 = arith.constant 0 : index
    %c256 = arith.constant 256 : index
    %189 = vector.load %arg3[%c0_62, %c256] : memref<32x17920xbf16, #tpu.memory_space<vmem>>, vector<32x2048xbf16>
    %c0_63 = arith.constant 0 : index
    %c256_64 = arith.constant 256 : index
    %190 = vector.load %arg4[%c0_63, %c256_64] : memref<1x12800xf32, #tpu.memory_space<vmem>>, vector<1x2048xf32>
    %c0_65 = arith.constant 0 : index
    %c2304 = arith.constant 2304 : index
    %191 = vector.load %arg3[%c0_65, %c2304] : memref<32x17920xbf16, #tpu.memory_space<vmem>>, vector<32x2048xbf16>
    %c0_66 = arith.constant 0 : index
    %c2304_67 = arith.constant 2304 : index
    %192 = vector.load %arg4[%c0_66, %c2304_67] : memref<1x12800xf32, #tpu.memory_space<vmem>>, vector<1x32xf32>
    %193 = arith.truncf %188 : vector<18x32xf32> to vector<18x32xbf16>
    %cst_68 = arith.constant dense<0.000000e+00> : vector<18x2048xf32>
    %194 = tpu.matmul %193, %189, %cst_68 {dimension_numbers = #tpu.dot_dimension_numbers<[1], [0], [0], [1], [0, 0, 1, 1], [], []>} : vector<18x32xbf16>, vector<32x2048xbf16>, vector<18x2048xf32> -> vector<18x2048xf32>
    %195 = vector.broadcast %190 : vector<1x2048xf32> to vector<18x2048xf32>
    %196 = arith.addf %194, %195 : vector<18x2048xf32>
    %cst_69 = arith.constant 0.000000e+00 : f32
    %197 = vector.broadcast %cst_69 : f32 to vector<18x2048xf32>
    %198 = arith.maximumf %196, %197 : vector<18x2048xf32>
    %199 = arith.truncf %198 : vector<18x2048xf32> to vector<18x2048xbf16>
    %cst_70 = arith.constant dense<0.000000e+00> : vector<18x32xf32>
    %200 = tpu.matmul %199, %191, %cst_70 {dimension_numbers = #tpu.dot_dimension_numbers<[1], [1], [0], [0], [0, 0, 1, 0], [], []>} : vector<18x2048xbf16>, vector<32x2048xbf16>, vector<18x32xf32> -> vector<18x32xf32>
    %201 = vector.broadcast %192 : vector<1x32xf32> to vector<18x32xf32>
    %202 = arith.addf %200, %201 : vector<18x32xf32>
    %203 = arith.addf %188, %202 : vector<18x32xf32>
    %c0_71 = arith.constant 0 : index
    %c2688 = arith.constant 2688 : index
    %204 = vector.load %arg4[%c0_71, %c2688] : memref<1x12800xf32, #tpu.memory_space<vmem>>, vector<1x32xf32>
    %c0_72 = arith.constant 0 : index
    %c2816 = arith.constant 2816 : index
    %205 = vector.load %arg4[%c0_72, %c2816] : memref<1x12800xf32, #tpu.memory_space<vmem>>, vector<1x32xf32>
    %cst_73 = arith.constant dense<0.000000e+00> : vector<18xf32>
    %206 = vector.multi_reduction <add>, %203, %cst_73 [1] : vector<18x32xf32> to vector<18xf32>
    %207 = vector.shape_cast %206 : vector<18xf32> to vector<18x1xf32>
    %cst_74 = arith.constant 3.200000e+01 : f32
    %208 = vector.broadcast %cst_74 : f32 to vector<18x1xf32>
    %209 = arith.divf %207, %208 : vector<18x1xf32>
    %210 = vector.broadcast %209 : vector<18x1xf32> to vector<18x32xf32>
    %211 = arith.subf %203, %210 : vector<18x32xf32>
    %212 = vector.broadcast %209 : vector<18x1xf32> to vector<18x32xf32>
    %213 = arith.subf %203, %212 : vector<18x32xf32>
    %214 = arith.mulf %211, %213 : vector<18x32xf32>
    %cst_75 = arith.constant dense<0.000000e+00> : vector<18xf32>
    %215 = vector.multi_reduction <add>, %214, %cst_75 [1] : vector<18x32xf32> to vector<18xf32>
    %216 = vector.shape_cast %215 : vector<18xf32> to vector<18x1xf32>
    %cst_76 = arith.constant 3.200000e+01 : f32
    %217 = vector.broadcast %cst_76 : f32 to vector<18x1xf32>
    %218 = arith.divf %216, %217 : vector<18x1xf32>
    %219 = vector.broadcast %209 : vector<18x1xf32> to vector<18x32xf32>
    %220 = arith.subf %203, %219 : vector<18x32xf32>
    %cst_77 = arith.constant 9.99999974E-6 : f32
    %221 = vector.broadcast %cst_77 : f32 to vector<18x1xf32>
    %222 = arith.addf %218, %221 : vector<18x1xf32>
    %223 = math.rsqrt %222 : vector<18x1xf32>
    %224 = vector.broadcast %223 : vector<18x1xf32> to vector<18x32xf32>
    %225 = arith.mulf %220, %224 : vector<18x32xf32>
    %226 = vector.broadcast %204 : vector<1x32xf32> to vector<18x32xf32>
    %227 = arith.mulf %225, %226 : vector<18x32xf32>
    %228 = vector.broadcast %205 : vector<1x32xf32> to vector<18x32xf32>
    %229 = arith.addf %227, %228 : vector<18x32xf32>
    %c0_78 = arith.constant 0 : index
    %c4352 = arith.constant 4352 : index
    %230 = vector.load %arg3[%c0_78, %c4352] : memref<32x17920xbf16, #tpu.memory_space<vmem>>, vector<32x96xbf16>
    %231 = arith.truncf %229 : vector<18x32xf32> to vector<18x32xbf16>
    %cst_79 = arith.constant dense<0.000000e+00> : vector<18x96xf32>
    %232 = tpu.matmul %231, %230, %cst_79 {dimension_numbers = #tpu.dot_dimension_numbers<[1], [0], [0], [1], [0, 0, 1, 1], [], []>} : vector<18x32xbf16>, vector<32x96xbf16>, vector<18x96xf32> -> vector<18x96xf32>
    %c0_80 = arith.constant 0 : index
    %c2944 = arith.constant 2944 : index
    %233 = vector.load %arg4[%c0_80, %c2944] : memref<1x12800xf32, #tpu.memory_space<vmem>>, vector<1x96xf32>
    %234 = vector.broadcast %233 : vector<1x96xf32> to vector<18x96xf32>
    %235 = arith.addf %232, %234 : vector<18x96xf32>
    %236 = vector.extract_strided_slice %235 {offsets = [0, 0], sizes = [18, 32], strides = [1, 1]} : vector<18x96xf32> to vector<18x32xf32>
    %237 = vector.extract_strided_slice %235 {offsets = [0, 32], sizes = [18, 32], strides = [1, 1]} : vector<18x96xf32> to vector<18x32xf32>
    %238 = vector.extract_strided_slice %235 {offsets = [0, 64], sizes = [18, 32], strides = [1, 1]} : vector<18x96xf32> to vector<18x32xf32>
    %c0_81 = arith.constant 0 : index
    %c4480 = arith.constant 4480 : index
    %239 = vector.load %arg3[%c0_81, %c4480] : memref<32x17920xbf16, #tpu.memory_space<vmem>>, vector<32x32xbf16>
    %c0_82 = arith.constant 0 : index
    %c3072 = arith.constant 3072 : index
    %240 = vector.load %arg4[%c0_82, %c3072] : memref<1x12800xf32, #tpu.memory_space<vmem>>, vector<1x32xf32>
    %241 = vector.extract_strided_slice %236 {offsets = [0, 0], sizes = [18, 16], strides = [1, 1]} : vector<18x32xf32> to vector<18x16xf32>
    %242 = vector.extract_strided_slice %237 {offsets = [0, 0], sizes = [18, 16], strides = [1, 1]} : vector<18x32xf32> to vector<18x16xf32>
    %cst_83 = arith.constant dense<0.000000e+00> : vector<18x18xf32>
    %243 = tpu.matmul %241, %242, %cst_83 {dimension_numbers = #tpu.dot_dimension_numbers<[1], [1], [0], [0], [0, 0, 1, 0], [], []>} : vector<18x16xf32>, vector<18x16xf32>, vector<18x18xf32> -> vector<18x18xf32>
    %cst_84 = arith.constant 2.500000e-01 : f32
    %244 = vector.broadcast %cst_84 : f32 to vector<18x18xf32>
    %245 = arith.mulf %243, %244 : vector<18x18xf32>
    %cst_85 = arith.constant 0xFF800000 : f32
    %246 = vector.broadcast %cst_85 : f32 to vector<18x18xf32>
    %247 = arith.select %34, %245, %246 : vector<18x18xi1>, vector<18x18xf32>
    %cst_86 = arith.constant dense<0xFF800000> : vector<18xf32>
    %248 = vector.multi_reduction <maximumf>, %247, %cst_86 [1] : vector<18x18xf32> to vector<18xf32>
    %249 = vector.shape_cast %248 : vector<18xf32> to vector<18x1xf32>
    %250 = vector.broadcast %249 : vector<18x1xf32> to vector<18x18xf32>
    %251 = arith.subf %247, %250 : vector<18x18xf32>
    %252 = math.exp %251 : vector<18x18xf32>
    %cst_87 = arith.constant dense<0.000000e+00> : vector<18xf32>
    %253 = vector.multi_reduction <add>, %252, %cst_87 [1] : vector<18x18xf32> to vector<18xf32>
    %254 = vector.shape_cast %253 : vector<18xf32> to vector<18x1xf32>
    %255 = vector.broadcast %254 : vector<18x1xf32> to vector<18x18xf32>
    %256 = arith.divf %252, %255 : vector<18x18xf32>
    %257 = vector.extract_strided_slice %238 {offsets = [0, 0], sizes = [18, 16], strides = [1, 1]} : vector<18x32xf32> to vector<18x16xf32>
    %cst_88 = arith.constant dense<0.000000e+00> : vector<18x16xf32>
    %258 = tpu.matmul %256, %257, %cst_88 {dimension_numbers = #tpu.dot_dimension_numbers<[1], [0], [0], [1], [0, 0, 1, 1], [], []>} : vector<18x18xf32>, vector<18x16xf32>, vector<18x16xf32> -> vector<18x16xf32>
    %259 = vector.extract_strided_slice %239 {offsets = [0, 0], sizes = [16, 32], strides = [1, 1]} : vector<32x32xbf16> to vector<16x32xbf16>
    %260 = arith.truncf %258 : vector<18x16xf32> to vector<18x16xbf16>
    %cst_89 = arith.constant dense<0.000000e+00> : vector<18x32xf32>
    %261 = tpu.matmul %260, %259, %cst_89 {dimension_numbers = #tpu.dot_dimension_numbers<[1], [0], [0], [1], [0, 0, 1, 1], [], []>} : vector<18x16xbf16>, vector<16x32xbf16>, vector<18x32xf32> -> vector<18x32xf32>
    %262 = vector.extract_strided_slice %236 {offsets = [0, 16], sizes = [18, 16], strides = [1, 1]} : vector<18x32xf32> to vector<18x16xf32>
    %263 = vector.extract_strided_slice %237 {offsets = [0, 16], sizes = [18, 16], strides = [1, 1]} : vector<18x32xf32> to vector<18x16xf32>
    %cst_90 = arith.constant dense<0.000000e+00> : vector<18x18xf32>
    %264 = tpu.matmul %262, %263, %cst_90 {dimension_numbers = #tpu.dot_dimension_numbers<[1], [1], [0], [0], [0, 0, 1, 0], [], []>} : vector<18x16xf32>, vector<18x16xf32>, vector<18x18xf32> -> vector<18x18xf32>
    %cst_91 = arith.constant 2.500000e-01 : f32
    %265 = vector.broadcast %cst_91 : f32 to vector<18x18xf32>
    %266 = arith.mulf %264, %265 : vector<18x18xf32>
    %cst_92 = arith.constant 0xFF800000 : f32
    %267 = vector.broadcast %cst_92 : f32 to vector<18x18xf32>
    %268 = arith.select %34, %266, %267 : vector<18x18xi1>, vector<18x18xf32>
    %cst_93 = arith.constant dense<0xFF800000> : vector<18xf32>
    %269 = vector.multi_reduction <maximumf>, %268, %cst_93 [1] : vector<18x18xf32> to vector<18xf32>
    %270 = vector.shape_cast %269 : vector<18xf32> to vector<18x1xf32>
    %271 = vector.broadcast %270 : vector<18x1xf32> to vector<18x18xf32>
    %272 = arith.subf %268, %271 : vector<18x18xf32>
    %273 = math.exp %272 : vector<18x18xf32>
    %cst_94 = arith.constant dense<0.000000e+00> : vector<18xf32>
    %274 = vector.multi_reduction <add>, %273, %cst_94 [1] : vector<18x18xf32> to vector<18xf32>
    %275 = vector.shape_cast %274 : vector<18xf32> to vector<18x1xf32>
    %276 = vector.broadcast %275 : vector<18x1xf32> to vector<18x18xf32>
    %277 = arith.divf %273, %276 : vector<18x18xf32>
    %278 = vector.extract_strided_slice %238 {offsets = [0, 16], sizes = [18, 16], strides = [1, 1]} : vector<18x32xf32> to vector<18x16xf32>
    %cst_95 = arith.constant dense<0.000000e+00> : vector<18x16xf32>
    %279 = tpu.matmul %277, %278, %cst_95 {dimension_numbers = #tpu.dot_dimension_numbers<[1], [0], [0], [1], [0, 0, 1, 1], [], []>} : vector<18x18xf32>, vector<18x16xf32>, vector<18x16xf32> -> vector<18x16xf32>
    %280 = vector.extract_strided_slice %239 {offsets = [16, 0], sizes = [16, 32], strides = [1, 1]} : vector<32x32xbf16> to vector<16x32xbf16>
    %281 = arith.truncf %279 : vector<18x16xf32> to vector<18x16xbf16>
    %cst_96 = arith.constant dense<0.000000e+00> : vector<18x32xf32>
    %282 = tpu.matmul %281, %280, %cst_96 {dimension_numbers = #tpu.dot_dimension_numbers<[1], [0], [0], [1], [0, 0, 1, 1], [], []>} : vector<18x16xbf16>, vector<16x32xbf16>, vector<18x32xf32> -> vector<18x32xf32>
    %283 = arith.addf %261, %282 : vector<18x32xf32>
    %284 = vector.broadcast %240 : vector<1x32xf32> to vector<18x32xf32>
    %285 = arith.addf %283, %284 : vector<18x32xf32>
    %286 = arith.addf %229, %285 : vector<18x32xf32>
    %c0_97 = arith.constant 0 : index
    %c5376 = arith.constant 5376 : index
    %287 = vector.load %arg4[%c0_97, %c5376] : memref<1x12800xf32, #tpu.memory_space<vmem>>, vector<1x32xf32>
    %c0_98 = arith.constant 0 : index
    %c5504 = arith.constant 5504 : index
    %288 = vector.load %arg4[%c0_98, %c5504] : memref<1x12800xf32, #tpu.memory_space<vmem>>, vector<1x32xf32>
    %cst_99 = arith.constant dense<0.000000e+00> : vector<18xf32>
    %289 = vector.multi_reduction <add>, %286, %cst_99 [1] : vector<18x32xf32> to vector<18xf32>
    %290 = vector.shape_cast %289 : vector<18xf32> to vector<18x1xf32>
    %cst_100 = arith.constant 3.200000e+01 : f32
    %291 = vector.broadcast %cst_100 : f32 to vector<18x1xf32>
    %292 = arith.divf %290, %291 : vector<18x1xf32>
    %293 = vector.broadcast %292 : vector<18x1xf32> to vector<18x32xf32>
    %294 = arith.subf %286, %293 : vector<18x32xf32>
    %295 = vector.broadcast %292 : vector<18x1xf32> to vector<18x32xf32>
    %296 = arith.subf %286, %295 : vector<18x32xf32>
    %297 = arith.mulf %294, %296 : vector<18x32xf32>
    %cst_101 = arith.constant dense<0.000000e+00> : vector<18xf32>
    %298 = vector.multi_reduction <add>, %297, %cst_101 [1] : vector<18x32xf32> to vector<18xf32>
    %299 = vector.shape_cast %298 : vector<18xf32> to vector<18x1xf32>
    %cst_102 = arith.constant 3.200000e+01 : f32
    %300 = vector.broadcast %cst_102 : f32 to vector<18x1xf32>
    %301 = arith.divf %299, %300 : vector<18x1xf32>
    %302 = vector.broadcast %292 : vector<18x1xf32> to vector<18x32xf32>
    %303 = arith.subf %286, %302 : vector<18x32xf32>
    %cst_103 = arith.constant 9.99999974E-6 : f32
    %304 = vector.broadcast %cst_103 : f32 to vector<18x1xf32>
    %305 = arith.addf %301, %304 : vector<18x1xf32>
    %306 = math.rsqrt %305 : vector<18x1xf32>
    %307 = vector.broadcast %306 : vector<18x1xf32> to vector<18x32xf32>
    %308 = arith.mulf %303, %307 : vector<18x32xf32>
    %309 = vector.broadcast %287 : vector<1x32xf32> to vector<18x32xf32>
    %310 = arith.mulf %308, %309 : vector<18x32xf32>
    %311 = vector.broadcast %288 : vector<1x32xf32> to vector<18x32xf32>
    %312 = arith.addf %310, %311 : vector<18x32xf32>
    %c0_104 = arith.constant 0 : index
    %c4608 = arith.constant 4608 : index
    %313 = vector.load %arg3[%c0_104, %c4608] : memref<32x17920xbf16, #tpu.memory_space<vmem>>, vector<32x2048xbf16>
    %c0_105 = arith.constant 0 : index
    %c3200 = arith.constant 3200 : index
    %314 = vector.load %arg4[%c0_105, %c3200] : memref<1x12800xf32, #tpu.memory_space<vmem>>, vector<1x2048xf32>
    %c0_106 = arith.constant 0 : index
    %c6656 = arith.constant 6656 : index
    %315 = vector.load %arg3[%c0_106, %c6656] : memref<32x17920xbf16, #tpu.memory_space<vmem>>, vector<32x2048xbf16>
    %c0_107 = arith.constant 0 : index
    %c5248 = arith.constant 5248 : index
    %316 = vector.load %arg4[%c0_107, %c5248] : memref<1x12800xf32, #tpu.memory_space<vmem>>, vector<1x32xf32>
    %317 = arith.truncf %312 : vector<18x32xf32> to vector<18x32xbf16>
    %cst_108 = arith.constant dense<0.000000e+00> : vector<18x2048xf32>
    %318 = tpu.matmul %317, %313, %cst_108 {dimension_numbers = #tpu.dot_dimension_numbers<[1], [0], [0], [1], [0, 0, 1, 1], [], []>} : vector<18x32xbf16>, vector<32x2048xbf16>, vector<18x2048xf32> -> vector<18x2048xf32>
    %319 = vector.broadcast %314 : vector<1x2048xf32> to vector<18x2048xf32>
    %320 = arith.addf %318, %319 : vector<18x2048xf32>
    %cst_109 = arith.constant 0.000000e+00 : f32
    %321 = vector.broadcast %cst_109 : f32 to vector<18x2048xf32>
    %322 = arith.maximumf %320, %321 : vector<18x2048xf32>
    %323 = arith.truncf %322 : vector<18x2048xf32> to vector<18x2048xbf16>
    %cst_110 = arith.constant dense<0.000000e+00> : vector<18x32xf32>
    %324 = tpu.matmul %323, %315, %cst_110 {dimension_numbers = #tpu.dot_dimension_numbers<[1], [1], [0], [0], [0, 0, 1, 0], [], []>} : vector<18x2048xbf16>, vector<32x2048xbf16>, vector<18x32xf32> -> vector<18x32xf32>
    %325 = vector.broadcast %316 : vector<1x32xf32> to vector<18x32xf32>
    %326 = arith.addf %324, %325 : vector<18x32xf32>
    %327 = arith.addf %312, %326 : vector<18x32xf32>
    %c0_111 = arith.constant 0 : index
    %c5632 = arith.constant 5632 : index
    %328 = vector.load %arg4[%c0_111, %c5632] : memref<1x12800xf32, #tpu.memory_space<vmem>>, vector<1x32xf32>
    %c0_112 = arith.constant 0 : index
    %c5760 = arith.constant 5760 : index
    %329 = vector.load %arg4[%c0_112, %c5760] : memref<1x12800xf32, #tpu.memory_space<vmem>>, vector<1x32xf32>
    %cst_113 = arith.constant dense<0.000000e+00> : vector<18xf32>
    %330 = vector.multi_reduction <add>, %327, %cst_113 [1] : vector<18x32xf32> to vector<18xf32>
    %331 = vector.shape_cast %330 : vector<18xf32> to vector<18x1xf32>
    %cst_114 = arith.constant 3.200000e+01 : f32
    %332 = vector.broadcast %cst_114 : f32 to vector<18x1xf32>
    %333 = arith.divf %331, %332 : vector<18x1xf32>
    %334 = vector.broadcast %333 : vector<18x1xf32> to vector<18x32xf32>
    %335 = arith.subf %327, %334 : vector<18x32xf32>
    %336 = vector.broadcast %333 : vector<18x1xf32> to vector<18x32xf32>
    %337 = arith.subf %327, %336 : vector<18x32xf32>
    %338 = arith.mulf %335, %337 : vector<18x32xf32>
    %cst_115 = arith.constant dense<0.000000e+00> : vector<18xf32>
    %339 = vector.multi_reduction <add>, %338, %cst_115 [1] : vector<18x32xf32> to vector<18xf32>
    %340 = vector.shape_cast %339 : vector<18xf32> to vector<18x1xf32>
    %cst_116 = arith.constant 3.200000e+01 : f32
    %341 = vector.broadcast %cst_116 : f32 to vector<18x1xf32>
    %342 = arith.divf %340, %341 : vector<18x1xf32>
    %343 = vector.broadcast %333 : vector<18x1xf32> to vector<18x32xf32>
    %344 = arith.subf %327, %343 : vector<18x32xf32>
    %cst_117 = arith.constant 9.99999974E-6 : f32
    %345 = vector.broadcast %cst_117 : f32 to vector<18x1xf32>
    %346 = arith.addf %342, %345 : vector<18x1xf32>
    %347 = math.rsqrt %346 : vector<18x1xf32>
    %348 = vector.broadcast %347 : vector<18x1xf32> to vector<18x32xf32>
    %349 = arith.mulf %344, %348 : vector<18x32xf32>
    %350 = vector.broadcast %328 : vector<1x32xf32> to vector<18x32xf32>
    %351 = arith.mulf %349, %350 : vector<18x32xf32>
    %352 = vector.broadcast %329 : vector<1x32xf32> to vector<18x32xf32>
    %353 = arith.addf %351, %352 : vector<18x32xf32>
    %c0_118 = arith.constant 0 : index
    %c0_119 = arith.constant 0 : index
    %354 = vector.load %arg2[%c0_118, %c0_119] : memref<16x32xf32, #tpu.memory_space<vmem>>, vector<16x32xf32>
    %c0_120 = arith.constant 0 : index
    %c8704 = arith.constant 8704 : index
    %355 = vector.load %arg3[%c0_120, %c8704] : memref<32x17920xbf16, #tpu.memory_space<vmem>>, vector<32x96xbf16>
    %356 = arith.truncf %354 : vector<16x32xf32> to vector<16x32xbf16>
    %cst_121 = arith.constant dense<0.000000e+00> : vector<16x96xf32>
    %357 = tpu.matmul %356, %355, %cst_121 {dimension_numbers = #tpu.dot_dimension_numbers<[1], [0], [0], [1], [0, 0, 1, 1], [], []>} : vector<16x32xbf16>, vector<32x96xbf16>, vector<16x96xf32> -> vector<16x96xf32>
    %c0_122 = arith.constant 0 : index
    %c5888 = arith.constant 5888 : index
    %358 = vector.load %arg4[%c0_122, %c5888] : memref<1x12800xf32, #tpu.memory_space<vmem>>, vector<1x96xf32>
    %359 = vector.broadcast %358 : vector<1x96xf32> to vector<16x96xf32>
    %360 = arith.addf %357, %359 : vector<16x96xf32>
    %361 = vector.extract_strided_slice %360 {offsets = [0, 0], sizes = [16, 32], strides = [1, 1]} : vector<16x96xf32> to vector<16x32xf32>
    %362 = vector.extract_strided_slice %360 {offsets = [0, 32], sizes = [16, 32], strides = [1, 1]} : vector<16x96xf32> to vector<16x32xf32>
    %363 = vector.extract_strided_slice %360 {offsets = [0, 64], sizes = [16, 32], strides = [1, 1]} : vector<16x96xf32> to vector<16x32xf32>
    %c0_123 = arith.constant 0 : index
    %c8832 = arith.constant 8832 : index
    %364 = vector.load %arg3[%c0_123, %c8832] : memref<32x17920xbf16, #tpu.memory_space<vmem>>, vector<32x32xbf16>
    %c0_124 = arith.constant 0 : index
    %c6016 = arith.constant 6016 : index
    %365 = vector.load %arg4[%c0_124, %c6016] : memref<1x12800xf32, #tpu.memory_space<vmem>>, vector<1x32xf32>
    %366 = vector.extract_strided_slice %361 {offsets = [0, 0], sizes = [16, 16], strides = [1, 1]} : vector<16x32xf32> to vector<16x16xf32>
    %367 = vector.extract_strided_slice %362 {offsets = [0, 0], sizes = [16, 16], strides = [1, 1]} : vector<16x32xf32> to vector<16x16xf32>
    %cst_125 = arith.constant dense<0.000000e+00> : vector<16x16xf32>
    %368 = tpu.matmul %366, %367, %cst_125 {dimension_numbers = #tpu.dot_dimension_numbers<[1], [1], [0], [0], [0, 0, 1, 0], [], []>} : vector<16x16xf32>, vector<16x16xf32>, vector<16x16xf32> -> vector<16x16xf32>
    %cst_126 = arith.constant 2.500000e-01 : f32
    %369 = vector.broadcast %cst_126 : f32 to vector<16x16xf32>
    %370 = arith.mulf %368, %369 : vector<16x16xf32>
    %cst_127 = arith.constant 0xFF800000 : f32
    %371 = vector.broadcast %cst_127 : f32 to vector<16x16xf32>
    %372 = arith.select %69, %370, %371 : vector<16x16xi1>, vector<16x16xf32>
    %cst_128 = arith.constant dense<0xFF800000> : vector<16xf32>
    %373 = vector.multi_reduction <maximumf>, %372, %cst_128 [1] : vector<16x16xf32> to vector<16xf32>
    %374 = vector.shape_cast %373 : vector<16xf32> to vector<16x1xf32>
    %375 = vector.broadcast %374 : vector<16x1xf32> to vector<16x16xf32>
    %376 = arith.subf %372, %375 : vector<16x16xf32>
    %377 = math.exp %376 : vector<16x16xf32>
    %cst_129 = arith.constant dense<0.000000e+00> : vector<16xf32>
    %378 = vector.multi_reduction <add>, %377, %cst_129 [1] : vector<16x16xf32> to vector<16xf32>
    %379 = vector.shape_cast %378 : vector<16xf32> to vector<16x1xf32>
    %380 = vector.broadcast %379 : vector<16x1xf32> to vector<16x16xf32>
    %381 = arith.divf %377, %380 : vector<16x16xf32>
    %382 = vector.extract_strided_slice %363 {offsets = [0, 0], sizes = [16, 16], strides = [1, 1]} : vector<16x32xf32> to vector<16x16xf32>
    %cst_130 = arith.constant dense<0.000000e+00> : vector<16x16xf32>
    %383 = tpu.matmul %381, %382, %cst_130 {dimension_numbers = #tpu.dot_dimension_numbers<[1], [0], [0], [1], [0, 0, 1, 1], [], []>} : vector<16x16xf32>, vector<16x16xf32>, vector<16x16xf32> -> vector<16x16xf32>
    %384 = vector.extract_strided_slice %364 {offsets = [0, 0], sizes = [16, 32], strides = [1, 1]} : vector<32x32xbf16> to vector<16x32xbf16>
    %385 = arith.truncf %383 : vector<16x16xf32> to vector<16x16xbf16>
    %cst_131 = arith.constant dense<0.000000e+00> : vector<16x32xf32>
    %386 = tpu.matmul %385, %384, %cst_131 {dimension_numbers = #tpu.dot_dimension_numbers<[1], [0], [0], [1], [0, 0, 1, 1], [], []>} : vector<16x16xbf16>, vector<16x32xbf16>, vector<16x32xf32> -> vector<16x32xf32>
    %387 = vector.extract_strided_slice %361 {offsets = [0, 16], sizes = [16, 16], strides = [1, 1]} : vector<16x32xf32> to vector<16x16xf32>
    %388 = vector.extract_strided_slice %362 {offsets = [0, 16], sizes = [16, 16], strides = [1, 1]} : vector<16x32xf32> to vector<16x16xf32>
    %cst_132 = arith.constant dense<0.000000e+00> : vector<16x16xf32>
    %389 = tpu.matmul %387, %388, %cst_132 {dimension_numbers = #tpu.dot_dimension_numbers<[1], [1], [0], [0], [0, 0, 1, 0], [], []>} : vector<16x16xf32>, vector<16x16xf32>, vector<16x16xf32> -> vector<16x16xf32>
    %cst_133 = arith.constant 2.500000e-01 : f32
    %390 = vector.broadcast %cst_133 : f32 to vector<16x16xf32>
    %391 = arith.mulf %389, %390 : vector<16x16xf32>
    %cst_134 = arith.constant 0xFF800000 : f32
    %392 = vector.broadcast %cst_134 : f32 to vector<16x16xf32>
    %393 = arith.select %69, %391, %392 : vector<16x16xi1>, vector<16x16xf32>
    %cst_135 = arith.constant dense<0xFF800000> : vector<16xf32>
    %394 = vector.multi_reduction <maximumf>, %393, %cst_135 [1] : vector<16x16xf32> to vector<16xf32>
    %395 = vector.shape_cast %394 : vector<16xf32> to vector<16x1xf32>
    %396 = vector.broadcast %395 : vector<16x1xf32> to vector<16x16xf32>
    %397 = arith.subf %393, %396 : vector<16x16xf32>
    %398 = math.exp %397 : vector<16x16xf32>
    %cst_136 = arith.constant dense<0.000000e+00> : vector<16xf32>
    %399 = vector.multi_reduction <add>, %398, %cst_136 [1] : vector<16x16xf32> to vector<16xf32>
    %400 = vector.shape_cast %399 : vector<16xf32> to vector<16x1xf32>
    %401 = vector.broadcast %400 : vector<16x1xf32> to vector<16x16xf32>
    %402 = arith.divf %398, %401 : vector<16x16xf32>
    %403 = vector.extract_strided_slice %363 {offsets = [0, 16], sizes = [16, 16], strides = [1, 1]} : vector<16x32xf32> to vector<16x16xf32>
    %cst_137 = arith.constant dense<0.000000e+00> : vector<16x16xf32>
    %404 = tpu.matmul %402, %403, %cst_137 {dimension_numbers = #tpu.dot_dimension_numbers<[1], [0], [0], [1], [0, 0, 1, 1], [], []>} : vector<16x16xf32>, vector<16x16xf32>, vector<16x16xf32> -> vector<16x16xf32>
    %405 = vector.extract_strided_slice %364 {offsets = [16, 0], sizes = [16, 32], strides = [1, 1]} : vector<32x32xbf16> to vector<16x32xbf16>
    %406 = arith.truncf %404 : vector<16x16xf32> to vector<16x16xbf16>
    %cst_138 = arith.constant dense<0.000000e+00> : vector<16x32xf32>
    %407 = tpu.matmul %406, %405, %cst_138 {dimension_numbers = #tpu.dot_dimension_numbers<[1], [0], [0], [1], [0, 0, 1, 1], [], []>} : vector<16x16xbf16>, vector<16x32xbf16>, vector<16x32xf32> -> vector<16x32xf32>
    %408 = arith.addf %386, %407 : vector<16x32xf32>
    %409 = vector.broadcast %365 : vector<1x32xf32> to vector<16x32xf32>
    %410 = arith.addf %408, %409 : vector<16x32xf32>
    %411 = arith.addf %354, %410 : vector<16x32xf32>
    %c0_139 = arith.constant 0 : index
    %c8576 = arith.constant 8576 : index
    %412 = vector.load %arg4[%c0_139, %c8576] : memref<1x12800xf32, #tpu.memory_space<vmem>>, vector<1x32xf32>
    %c0_140 = arith.constant 0 : index
    %c8704_141 = arith.constant 8704 : index
    %413 = vector.load %arg4[%c0_140, %c8704_141] : memref<1x12800xf32, #tpu.memory_space<vmem>>, vector<1x32xf32>
    %cst_142 = arith.constant dense<0.000000e+00> : vector<16xf32>
    %414 = vector.multi_reduction <add>, %411, %cst_142 [1] : vector<16x32xf32> to vector<16xf32>
    %415 = vector.shape_cast %414 : vector<16xf32> to vector<16x1xf32>
    %cst_143 = arith.constant 3.200000e+01 : f32
    %416 = vector.broadcast %cst_143 : f32 to vector<16x1xf32>
    %417 = arith.divf %415, %416 : vector<16x1xf32>
    %418 = vector.broadcast %417 : vector<16x1xf32> to vector<16x32xf32>
    %419 = arith.subf %411, %418 : vector<16x32xf32>
    %420 = vector.broadcast %417 : vector<16x1xf32> to vector<16x32xf32>
    %421 = arith.subf %411, %420 : vector<16x32xf32>
    %422 = arith.mulf %419, %421 : vector<16x32xf32>
    %cst_144 = arith.constant dense<0.000000e+00> : vector<16xf32>
    %423 = vector.multi_reduction <add>, %422, %cst_144 [1] : vector<16x32xf32> to vector<16xf32>
    %424 = vector.shape_cast %423 : vector<16xf32> to vector<16x1xf32>
    %cst_145 = arith.constant 3.200000e+01 : f32
    %425 = vector.broadcast %cst_145 : f32 to vector<16x1xf32>
    %426 = arith.divf %424, %425 : vector<16x1xf32>
    %427 = vector.broadcast %417 : vector<16x1xf32> to vector<16x32xf32>
    %428 = arith.subf %411, %427 : vector<16x32xf32>
    %cst_146 = arith.constant 9.99999974E-6 : f32
    %429 = vector.broadcast %cst_146 : f32 to vector<16x1xf32>
    %430 = arith.addf %426, %429 : vector<16x1xf32>
    %431 = math.rsqrt %430 : vector<16x1xf32>
    %432 = vector.broadcast %431 : vector<16x1xf32> to vector<16x32xf32>
    %433 = arith.mulf %428, %432 : vector<16x32xf32>
    %434 = vector.broadcast %412 : vector<1x32xf32> to vector<16x32xf32>
    %435 = arith.mulf %433, %434 : vector<16x32xf32>
    %436 = vector.broadcast %413 : vector<1x32xf32> to vector<16x32xf32>
    %437 = arith.addf %435, %436 : vector<16x32xf32>
    %c0_147 = arith.constant 0 : index
    %c8960 = arith.constant 8960 : index
    %438 = vector.load %arg3[%c0_147, %c8960] : memref<32x17920xbf16, #tpu.memory_space<vmem>>, vector<32x96xbf16>
    %c0_148 = arith.constant 0 : index
    %c6144 = arith.constant 6144 : index
    %439 = vector.load %arg4[%c0_148, %c6144] : memref<1x12800xf32, #tpu.memory_space<vmem>>, vector<1x96xf32>
    %440 = vector.extract_strided_slice %438 {offsets = [0, 0], sizes = [32, 32], strides = [1, 1]} : vector<32x96xbf16> to vector<32x32xbf16>
    %441 = arith.truncf %437 : vector<16x32xf32> to vector<16x32xbf16>
    %cst_149 = arith.constant dense<0.000000e+00> : vector<16x32xf32>
    %442 = tpu.matmul %441, %440, %cst_149 {dimension_numbers = #tpu.dot_dimension_numbers<[1], [0], [0], [1], [0, 0, 1, 1], [], []>} : vector<16x32xbf16>, vector<32x32xbf16>, vector<16x32xf32> -> vector<16x32xf32>
    %443 = vector.extract_strided_slice %439 {offsets = [0, 0], sizes = [1, 32], strides = [1, 1]} : vector<1x96xf32> to vector<1x32xf32>
    %444 = vector.broadcast %443 : vector<1x32xf32> to vector<16x32xf32>
    %445 = arith.addf %442, %444 : vector<16x32xf32>
    %446 = vector.extract_strided_slice %438 {offsets = [0, 32], sizes = [32, 64], strides = [1, 1]} : vector<32x96xbf16> to vector<32x64xbf16>
    %447 = arith.truncf %353 : vector<18x32xf32> to vector<18x32xbf16>
    %cst_150 = arith.constant dense<0.000000e+00> : vector<18x64xf32>
    %448 = tpu.matmul %447, %446, %cst_150 {dimension_numbers = #tpu.dot_dimension_numbers<[1], [0], [0], [1], [0, 0, 1, 1], [], []>} : vector<18x32xbf16>, vector<32x64xbf16>, vector<18x64xf32> -> vector<18x64xf32>
    %449 = vector.extract_strided_slice %439 {offsets = [0, 32], sizes = [1, 64], strides = [1, 1]} : vector<1x96xf32> to vector<1x64xf32>
    %450 = vector.broadcast %449 : vector<1x64xf32> to vector<18x64xf32>
    %451 = arith.addf %448, %450 : vector<18x64xf32>
    %452 = vector.extract_strided_slice %451 {offsets = [0, 0], sizes = [18, 32], strides = [1, 1]} : vector<18x64xf32> to vector<18x32xf32>
    %453 = vector.extract_strided_slice %451 {offsets = [0, 32], sizes = [18, 32], strides = [1, 1]} : vector<18x64xf32> to vector<18x32xf32>
    %c0_151 = arith.constant 0 : index
    %c9088 = arith.constant 9088 : index
    %454 = vector.load %arg3[%c0_151, %c9088] : memref<32x17920xbf16, #tpu.memory_space<vmem>>, vector<32x32xbf16>
    %c0_152 = arith.constant 0 : index
    %c6272 = arith.constant 6272 : index
    %455 = vector.load %arg4[%c0_152, %c6272] : memref<1x12800xf32, #tpu.memory_space<vmem>>, vector<1x32xf32>
    %456 = vector.extract_strided_slice %445 {offsets = [0, 0], sizes = [16, 16], strides = [1, 1]} : vector<16x32xf32> to vector<16x16xf32>
    %457 = vector.extract_strided_slice %452 {offsets = [0, 0], sizes = [18, 16], strides = [1, 1]} : vector<18x32xf32> to vector<18x16xf32>
    %cst_153 = arith.constant dense<0.000000e+00> : vector<16x18xf32>
    %458 = tpu.matmul %456, %457, %cst_153 {dimension_numbers = #tpu.dot_dimension_numbers<[1], [1], [0], [0], [0, 0, 1, 0], [], []>} : vector<16x16xf32>, vector<18x16xf32>, vector<16x18xf32> -> vector<16x18xf32>
    %cst_154 = arith.constant 2.500000e-01 : f32
    %459 = vector.broadcast %cst_154 : f32 to vector<16x18xf32>
    %460 = arith.mulf %458, %459 : vector<16x18xf32>
    %cst_155 = arith.constant 0xFF800000 : f32
    %461 = vector.broadcast %cst_155 : f32 to vector<16x18xf32>
    %462 = arith.select %104, %460, %461 : vector<16x18xi1>, vector<16x18xf32>
    %cst_156 = arith.constant dense<0xFF800000> : vector<16xf32>
    %463 = vector.multi_reduction <maximumf>, %462, %cst_156 [1] : vector<16x18xf32> to vector<16xf32>
    %464 = vector.shape_cast %463 : vector<16xf32> to vector<16x1xf32>
    %465 = vector.broadcast %464 : vector<16x1xf32> to vector<16x18xf32>
    %466 = arith.subf %462, %465 : vector<16x18xf32>
    %467 = math.exp %466 : vector<16x18xf32>
    %cst_157 = arith.constant dense<0.000000e+00> : vector<16xf32>
    %468 = vector.multi_reduction <add>, %467, %cst_157 [1] : vector<16x18xf32> to vector<16xf32>
    %469 = vector.shape_cast %468 : vector<16xf32> to vector<16x1xf32>
    %470 = vector.broadcast %469 : vector<16x1xf32> to vector<16x18xf32>
    %471 = arith.divf %467, %470 : vector<16x18xf32>
    %472 = vector.extract_strided_slice %453 {offsets = [0, 0], sizes = [18, 16], strides = [1, 1]} : vector<18x32xf32> to vector<18x16xf32>
    %cst_158 = arith.constant dense<0.000000e+00> : vector<16x16xf32>
    %473 = tpu.matmul %471, %472, %cst_158 {dimension_numbers = #tpu.dot_dimension_numbers<[1], [0], [0], [1], [0, 0, 1, 1], [], []>} : vector<16x18xf32>, vector<18x16xf32>, vector<16x16xf32> -> vector<16x16xf32>
    %474 = vector.extract_strided_slice %454 {offsets = [0, 0], sizes = [16, 32], strides = [1, 1]} : vector<32x32xbf16> to vector<16x32xbf16>
    %475 = arith.truncf %473 : vector<16x16xf32> to vector<16x16xbf16>
    %cst_159 = arith.constant dense<0.000000e+00> : vector<16x32xf32>
    %476 = tpu.matmul %475, %474, %cst_159 {dimension_numbers = #tpu.dot_dimension_numbers<[1], [0], [0], [1], [0, 0, 1, 1], [], []>} : vector<16x16xbf16>, vector<16x32xbf16>, vector<16x32xf32> -> vector<16x32xf32>
    %477 = vector.extract_strided_slice %445 {offsets = [0, 16], sizes = [16, 16], strides = [1, 1]} : vector<16x32xf32> to vector<16x16xf32>
    %478 = vector.extract_strided_slice %452 {offsets = [0, 16], sizes = [18, 16], strides = [1, 1]} : vector<18x32xf32> to vector<18x16xf32>
    %cst_160 = arith.constant dense<0.000000e+00> : vector<16x18xf32>
    %479 = tpu.matmul %477, %478, %cst_160 {dimension_numbers = #tpu.dot_dimension_numbers<[1], [1], [0], [0], [0, 0, 1, 0], [], []>} : vector<16x16xf32>, vector<18x16xf32>, vector<16x18xf32> -> vector<16x18xf32>
    %cst_161 = arith.constant 2.500000e-01 : f32
    %480 = vector.broadcast %cst_161 : f32 to vector<16x18xf32>
    %481 = arith.mulf %479, %480 : vector<16x18xf32>
    %cst_162 = arith.constant 0xFF800000 : f32
    %482 = vector.broadcast %cst_162 : f32 to vector<16x18xf32>
    %483 = arith.select %104, %481, %482 : vector<16x18xi1>, vector<16x18xf32>
    %cst_163 = arith.constant dense<0xFF800000> : vector<16xf32>
    %484 = vector.multi_reduction <maximumf>, %483, %cst_163 [1] : vector<16x18xf32> to vector<16xf32>
    %485 = vector.shape_cast %484 : vector<16xf32> to vector<16x1xf32>
    %486 = vector.broadcast %485 : vector<16x1xf32> to vector<16x18xf32>
    %487 = arith.subf %483, %486 : vector<16x18xf32>
    %488 = math.exp %487 : vector<16x18xf32>
    %cst_164 = arith.constant dense<0.000000e+00> : vector<16xf32>
    %489 = vector.multi_reduction <add>, %488, %cst_164 [1] : vector<16x18xf32> to vector<16xf32>
    %490 = vector.shape_cast %489 : vector<16xf32> to vector<16x1xf32>
    %491 = vector.broadcast %490 : vector<16x1xf32> to vector<16x18xf32>
    %492 = arith.divf %488, %491 : vector<16x18xf32>
    %493 = vector.extract_strided_slice %453 {offsets = [0, 16], sizes = [18, 16], strides = [1, 1]} : vector<18x32xf32> to vector<18x16xf32>
    %cst_165 = arith.constant dense<0.000000e+00> : vector<16x16xf32>
    %494 = tpu.matmul %492, %493, %cst_165 {dimension_numbers = #tpu.dot_dimension_numbers<[1], [0], [0], [1], [0, 0, 1, 1], [], []>} : vector<16x18xf32>, vector<18x16xf32>, vector<16x16xf32> -> vector<16x16xf32>
    %495 = vector.extract_strided_slice %454 {offsets = [16, 0], sizes = [16, 32], strides = [1, 1]} : vector<32x32xbf16> to vector<16x32xbf16>
    %496 = arith.truncf %494 : vector<16x16xf32> to vector<16x16xbf16>
    %cst_166 = arith.constant dense<0.000000e+00> : vector<16x32xf32>
    %497 = tpu.matmul %496, %495, %cst_166 {dimension_numbers = #tpu.dot_dimension_numbers<[1], [0], [0], [1], [0, 0, 1, 1], [], []>} : vector<16x16xbf16>, vector<16x32xbf16>, vector<16x32xf32> -> vector<16x32xf32>
    %498 = arith.addf %476, %497 : vector<16x32xf32>
    %499 = vector.broadcast %455 : vector<1x32xf32> to vector<16x32xf32>
    %500 = arith.addf %498, %499 : vector<16x32xf32>
    %501 = arith.addf %437, %500 : vector<16x32xf32>
    %c0_167 = arith.constant 0 : index
    %c8832_168 = arith.constant 8832 : index
    %502 = vector.load %arg4[%c0_167, %c8832_168] : memref<1x12800xf32, #tpu.memory_space<vmem>>, vector<1x32xf32>
    %c0_169 = arith.constant 0 : index
    %c8960_170 = arith.constant 8960 : index
    %503 = vector.load %arg4[%c0_169, %c8960_170] : memref<1x12800xf32, #tpu.memory_space<vmem>>, vector<1x32xf32>
    %cst_171 = arith.constant dense<0.000000e+00> : vector<16xf32>
    %504 = vector.multi_reduction <add>, %501, %cst_171 [1] : vector<16x32xf32> to vector<16xf32>
    %505 = vector.shape_cast %504 : vector<16xf32> to vector<16x1xf32>
    %cst_172 = arith.constant 3.200000e+01 : f32
    %506 = vector.broadcast %cst_172 : f32 to vector<16x1xf32>
    %507 = arith.divf %505, %506 : vector<16x1xf32>
    %508 = vector.broadcast %507 : vector<16x1xf32> to vector<16x32xf32>
    %509 = arith.subf %501, %508 : vector<16x32xf32>
    %510 = vector.broadcast %507 : vector<16x1xf32> to vector<16x32xf32>
    %511 = arith.subf %501, %510 : vector<16x32xf32>
    %512 = arith.mulf %509, %511 : vector<16x32xf32>
    %cst_173 = arith.constant dense<0.000000e+00> : vector<16xf32>
    %513 = vector.multi_reduction <add>, %512, %cst_173 [1] : vector<16x32xf32> to vector<16xf32>
    %514 = vector.shape_cast %513 : vector<16xf32> to vector<16x1xf32>
    %cst_174 = arith.constant 3.200000e+01 : f32
    %515 = vector.broadcast %cst_174 : f32 to vector<16x1xf32>
    %516 = arith.divf %514, %515 : vector<16x1xf32>
    %517 = vector.broadcast %507 : vector<16x1xf32> to vector<16x32xf32>
    %518 = arith.subf %501, %517 : vector<16x32xf32>
    %cst_175 = arith.constant 9.99999974E-6 : f32
    %519 = vector.broadcast %cst_175 : f32 to vector<16x1xf32>
    %520 = arith.addf %516, %519 : vector<16x1xf32>
    %521 = math.rsqrt %520 : vector<16x1xf32>
    %522 = vector.broadcast %521 : vector<16x1xf32> to vector<16x32xf32>
    %523 = arith.mulf %518, %522 : vector<16x32xf32>
    %524 = vector.broadcast %502 : vector<1x32xf32> to vector<16x32xf32>
    %525 = arith.mulf %523, %524 : vector<16x32xf32>
    %526 = vector.broadcast %503 : vector<1x32xf32> to vector<16x32xf32>
    %527 = arith.addf %525, %526 : vector<16x32xf32>
    %c0_176 = arith.constant 0 : index
    %c9216 = arith.constant 9216 : index
    %528 = vector.load %arg3[%c0_176, %c9216] : memref<32x17920xbf16, #tpu.memory_space<vmem>>, vector<32x2048xbf16>
    %c0_177 = arith.constant 0 : index
    %c6400 = arith.constant 6400 : index
    %529 = vector.load %arg4[%c0_177, %c6400] : memref<1x12800xf32, #tpu.memory_space<vmem>>, vector<1x2048xf32>
    %c0_178 = arith.constant 0 : index
    %c11264 = arith.constant 11264 : index
    %530 = vector.load %arg3[%c0_178, %c11264] : memref<32x17920xbf16, #tpu.memory_space<vmem>>, vector<32x2048xbf16>
    %c0_179 = arith.constant 0 : index
    %c8448 = arith.constant 8448 : index
    %531 = vector.load %arg4[%c0_179, %c8448] : memref<1x12800xf32, #tpu.memory_space<vmem>>, vector<1x32xf32>
    %532 = arith.truncf %527 : vector<16x32xf32> to vector<16x32xbf16>
    %cst_180 = arith.constant dense<0.000000e+00> : vector<16x2048xf32>
    %533 = tpu.matmul %532, %528, %cst_180 {dimension_numbers = #tpu.dot_dimension_numbers<[1], [0], [0], [1], [0, 0, 1, 1], [], []>} : vector<16x32xbf16>, vector<32x2048xbf16>, vector<16x2048xf32> -> vector<16x2048xf32>
    %534 = vector.broadcast %529 : vector<1x2048xf32> to vector<16x2048xf32>
    %535 = arith.addf %533, %534 : vector<16x2048xf32>
    %cst_181 = arith.constant 0.000000e+00 : f32
    %536 = vector.broadcast %cst_181 : f32 to vector<16x2048xf32>
    %537 = arith.maximumf %535, %536 : vector<16x2048xf32>
    %538 = arith.truncf %537 : vector<16x2048xf32> to vector<16x2048xbf16>
    %cst_182 = arith.constant dense<0.000000e+00> : vector<16x32xf32>
    %539 = tpu.matmul %538, %530, %cst_182 {dimension_numbers = #tpu.dot_dimension_numbers<[1], [1], [0], [0], [0, 0, 1, 0], [], []>} : vector<16x2048xbf16>, vector<32x2048xbf16>, vector<16x32xf32> -> vector<16x32xf32>
    %540 = vector.broadcast %531 : vector<1x32xf32> to vector<16x32xf32>
    %541 = arith.addf %539, %540 : vector<16x32xf32>
    %542 = arith.addf %527, %541 : vector<16x32xf32>
    %c0_183 = arith.constant 0 : index
    %c9088_184 = arith.constant 9088 : index
    %543 = vector.load %arg4[%c0_183, %c9088_184] : memref<1x12800xf32, #tpu.memory_space<vmem>>, vector<1x32xf32>
    %c0_185 = arith.constant 0 : index
    %c9216_186 = arith.constant 9216 : index
    %544 = vector.load %arg4[%c0_185, %c9216_186] : memref<1x12800xf32, #tpu.memory_space<vmem>>, vector<1x32xf32>
    %cst_187 = arith.constant dense<0.000000e+00> : vector<16xf32>
    %545 = vector.multi_reduction <add>, %542, %cst_187 [1] : vector<16x32xf32> to vector<16xf32>
    %546 = vector.shape_cast %545 : vector<16xf32> to vector<16x1xf32>
    %cst_188 = arith.constant 3.200000e+01 : f32
    %547 = vector.broadcast %cst_188 : f32 to vector<16x1xf32>
    %548 = arith.divf %546, %547 : vector<16x1xf32>
    %549 = vector.broadcast %548 : vector<16x1xf32> to vector<16x32xf32>
    %550 = arith.subf %542, %549 : vector<16x32xf32>
    %551 = vector.broadcast %548 : vector<16x1xf32> to vector<16x32xf32>
    %552 = arith.subf %542, %551 : vector<16x32xf32>
    %553 = arith.mulf %550, %552 : vector<16x32xf32>
    %cst_189 = arith.constant dense<0.000000e+00> : vector<16xf32>
    %554 = vector.multi_reduction <add>, %553, %cst_189 [1] : vector<16x32xf32> to vector<16xf32>
    %555 = vector.shape_cast %554 : vector<16xf32> to vector<16x1xf32>
    %cst_190 = arith.constant 3.200000e+01 : f32
    %556 = vector.broadcast %cst_190 : f32 to vector<16x1xf32>
    %557 = arith.divf %555, %556 : vector<16x1xf32>
    %558 = vector.broadcast %548 : vector<16x1xf32> to vector<16x32xf32>
    %559 = arith.subf %542, %558 : vector<16x32xf32>
    %cst_191 = arith.constant 9.99999974E-6 : f32
    %560 = vector.broadcast %cst_191 : f32 to vector<16x1xf32>
    %561 = arith.addf %557, %560 : vector<16x1xf32>
    %562 = math.rsqrt %561 : vector<16x1xf32>
    %563 = vector.broadcast %562 : vector<16x1xf32> to vector<16x32xf32>
    %564 = arith.mulf %559, %563 : vector<16x32xf32>
    %565 = vector.broadcast %543 : vector<1x32xf32> to vector<16x32xf32>
    %566 = arith.mulf %564, %565 : vector<16x32xf32>
    %567 = vector.broadcast %544 : vector<1x32xf32> to vector<16x32xf32>
    %568 = arith.addf %566, %567 : vector<16x32xf32>
    %c0_192 = arith.constant 0 : index
    %c13312 = arith.constant 13312 : index
    %569 = vector.load %arg3[%c0_192, %c13312] : memref<32x17920xbf16, #tpu.memory_space<vmem>>, vector<32x96xbf16>
    %570 = arith.truncf %568 : vector<16x32xf32> to vector<16x32xbf16>
    %cst_193 = arith.constant dense<0.000000e+00> : vector<16x96xf32>
    %571 = tpu.matmul %570, %569, %cst_193 {dimension_numbers = #tpu.dot_dimension_numbers<[1], [0], [0], [1], [0, 0, 1, 1], [], []>} : vector<16x32xbf16>, vector<32x96xbf16>, vector<16x96xf32> -> vector<16x96xf32>
    %c0_194 = arith.constant 0 : index
    %c9344 = arith.constant 9344 : index
    %572 = vector.load %arg4[%c0_194, %c9344] : memref<1x12800xf32, #tpu.memory_space<vmem>>, vector<1x96xf32>
    %573 = vector.broadcast %572 : vector<1x96xf32> to vector<16x96xf32>
    %574 = arith.addf %571, %573 : vector<16x96xf32>
    %575 = vector.extract_strided_slice %574 {offsets = [0, 0], sizes = [16, 32], strides = [1, 1]} : vector<16x96xf32> to vector<16x32xf32>
    %576 = vector.extract_strided_slice %574 {offsets = [0, 32], sizes = [16, 32], strides = [1, 1]} : vector<16x96xf32> to vector<16x32xf32>
    %577 = vector.extract_strided_slice %574 {offsets = [0, 64], sizes = [16, 32], strides = [1, 1]} : vector<16x96xf32> to vector<16x32xf32>
    %c0_195 = arith.constant 0 : index
    %c13440 = arith.constant 13440 : index
    %578 = vector.load %arg3[%c0_195, %c13440] : memref<32x17920xbf16, #tpu.memory_space<vmem>>, vector<32x32xbf16>
    %c0_196 = arith.constant 0 : index
    %c9472 = arith.constant 9472 : index
    %579 = vector.load %arg4[%c0_196, %c9472] : memref<1x12800xf32, #tpu.memory_space<vmem>>, vector<1x32xf32>
    %580 = vector.extract_strided_slice %575 {offsets = [0, 0], sizes = [16, 16], strides = [1, 1]} : vector<16x32xf32> to vector<16x16xf32>
    %581 = vector.extract_strided_slice %576 {offsets = [0, 0], sizes = [16, 16], strides = [1, 1]} : vector<16x32xf32> to vector<16x16xf32>
    %cst_197 = arith.constant dense<0.000000e+00> : vector<16x16xf32>
    %582 = tpu.matmul %580, %581, %cst_197 {dimension_numbers = #tpu.dot_dimension_numbers<[1], [1], [0], [0], [0, 0, 1, 0], [], []>} : vector<16x16xf32>, vector<16x16xf32>, vector<16x16xf32> -> vector<16x16xf32>
    %cst_198 = arith.constant 2.500000e-01 : f32
    %583 = vector.broadcast %cst_198 : f32 to vector<16x16xf32>
    %584 = arith.mulf %582, %583 : vector<16x16xf32>
    %cst_199 = arith.constant 0xFF800000 : f32
    %585 = vector.broadcast %cst_199 : f32 to vector<16x16xf32>
    %586 = arith.select %69, %584, %585 : vector<16x16xi1>, vector<16x16xf32>
    %cst_200 = arith.constant dense<0xFF800000> : vector<16xf32>
    %587 = vector.multi_reduction <maximumf>, %586, %cst_200 [1] : vector<16x16xf32> to vector<16xf32>
    %588 = vector.shape_cast %587 : vector<16xf32> to vector<16x1xf32>
    %589 = vector.broadcast %588 : vector<16x1xf32> to vector<16x16xf32>
    %590 = arith.subf %586, %589 : vector<16x16xf32>
    %591 = math.exp %590 : vector<16x16xf32>
    %cst_201 = arith.constant dense<0.000000e+00> : vector<16xf32>
    %592 = vector.multi_reduction <add>, %591, %cst_201 [1] : vector<16x16xf32> to vector<16xf32>
    %593 = vector.shape_cast %592 : vector<16xf32> to vector<16x1xf32>
    %594 = vector.broadcast %593 : vector<16x1xf32> to vector<16x16xf32>
    %595 = arith.divf %591, %594 : vector<16x16xf32>
    %596 = vector.extract_strided_slice %577 {offsets = [0, 0], sizes = [16, 16], strides = [1, 1]} : vector<16x32xf32> to vector<16x16xf32>
    %cst_202 = arith.constant dense<0.000000e+00> : vector<16x16xf32>
    %597 = tpu.matmul %595, %596, %cst_202 {dimension_numbers = #tpu.dot_dimension_numbers<[1], [0], [0], [1], [0, 0, 1, 1], [], []>} : vector<16x16xf32>, vector<16x16xf32>, vector<16x16xf32> -> vector<16x16xf32>
    %598 = vector.extract_strided_slice %578 {offsets = [0, 0], sizes = [16, 32], strides = [1, 1]} : vector<32x32xbf16> to vector<16x32xbf16>
    %599 = arith.truncf %597 : vector<16x16xf32> to vector<16x16xbf16>
    %cst_203 = arith.constant dense<0.000000e+00> : vector<16x32xf32>
    %600 = tpu.matmul %599, %598, %cst_203 {dimension_numbers = #tpu.dot_dimension_numbers<[1], [0], [0], [1], [0, 0, 1, 1], [], []>} : vector<16x16xbf16>, vector<16x32xbf16>, vector<16x32xf32> -> vector<16x32xf32>
    %601 = vector.extract_strided_slice %575 {offsets = [0, 16], sizes = [16, 16], strides = [1, 1]} : vector<16x32xf32> to vector<16x16xf32>
    %602 = vector.extract_strided_slice %576 {offsets = [0, 16], sizes = [16, 16], strides = [1, 1]} : vector<16x32xf32> to vector<16x16xf32>
    %cst_204 = arith.constant dense<0.000000e+00> : vector<16x16xf32>
    %603 = tpu.matmul %601, %602, %cst_204 {dimension_numbers = #tpu.dot_dimension_numbers<[1], [1], [0], [0], [0, 0, 1, 0], [], []>} : vector<16x16xf32>, vector<16x16xf32>, vector<16x16xf32> -> vector<16x16xf32>
    %cst_205 = arith.constant 2.500000e-01 : f32
    %604 = vector.broadcast %cst_205 : f32 to vector<16x16xf32>
    %605 = arith.mulf %603, %604 : vector<16x16xf32>
    %cst_206 = arith.constant 0xFF800000 : f32
    %606 = vector.broadcast %cst_206 : f32 to vector<16x16xf32>
    %607 = arith.select %69, %605, %606 : vector<16x16xi1>, vector<16x16xf32>
    %cst_207 = arith.constant dense<0xFF800000> : vector<16xf32>
    %608 = vector.multi_reduction <maximumf>, %607, %cst_207 [1] : vector<16x16xf32> to vector<16xf32>
    %609 = vector.shape_cast %608 : vector<16xf32> to vector<16x1xf32>
    %610 = vector.broadcast %609 : vector<16x1xf32> to vector<16x16xf32>
    %611 = arith.subf %607, %610 : vector<16x16xf32>
    %612 = math.exp %611 : vector<16x16xf32>
    %cst_208 = arith.constant dense<0.000000e+00> : vector<16xf32>
    %613 = vector.multi_reduction <add>, %612, %cst_208 [1] : vector<16x16xf32> to vector<16xf32>
    %614 = vector.shape_cast %613 : vector<16xf32> to vector<16x1xf32>
    %615 = vector.broadcast %614 : vector<16x1xf32> to vector<16x16xf32>
    %616 = arith.divf %612, %615 : vector<16x16xf32>
    %617 = vector.extract_strided_slice %577 {offsets = [0, 16], sizes = [16, 16], strides = [1, 1]} : vector<16x32xf32> to vector<16x16xf32>
    %cst_209 = arith.constant dense<0.000000e+00> : vector<16x16xf32>
    %618 = tpu.matmul %616, %617, %cst_209 {dimension_numbers = #tpu.dot_dimension_numbers<[1], [0], [0], [1], [0, 0, 1, 1], [], []>} : vector<16x16xf32>, vector<16x16xf32>, vector<16x16xf32> -> vector<16x16xf32>
    %619 = vector.extract_strided_slice %578 {offsets = [16, 0], sizes = [16, 32], strides = [1, 1]} : vector<32x32xbf16> to vector<16x32xbf16>
    %620 = arith.truncf %618 : vector<16x16xf32> to vector<16x16xbf16>
    %cst_210 = arith.constant dense<0.000000e+00> : vector<16x32xf32>
    %621 = tpu.matmul %620, %619, %cst_210 {dimension_numbers = #tpu.dot_dimension_numbers<[1], [0], [0], [1], [0, 0, 1, 1], [], []>} : vector<16x16xbf16>, vector<16x32xbf16>, vector<16x32xf32> -> vector<16x32xf32>
    %622 = arith.addf %600, %621 : vector<16x32xf32>
    %623 = vector.broadcast %579 : vector<1x32xf32> to vector<16x32xf32>
    %624 = arith.addf %622, %623 : vector<16x32xf32>
    %625 = arith.addf %568, %624 : vector<16x32xf32>
    %c0_211 = arith.constant 0 : index
    %c12032 = arith.constant 12032 : index
    %626 = vector.load %arg4[%c0_211, %c12032] : memref<1x12800xf32, #tpu.memory_space<vmem>>, vector<1x32xf32>
    %c0_212 = arith.constant 0 : index
    %c12160 = arith.constant 12160 : index
    %627 = vector.load %arg4[%c0_212, %c12160] : memref<1x12800xf32, #tpu.memory_space<vmem>>, vector<1x32xf32>
    %cst_213 = arith.constant dense<0.000000e+00> : vector<16xf32>
    %628 = vector.multi_reduction <add>, %625, %cst_213 [1] : vector<16x32xf32> to vector<16xf32>
    %629 = vector.shape_cast %628 : vector<16xf32> to vector<16x1xf32>
    %cst_214 = arith.constant 3.200000e+01 : f32
    %630 = vector.broadcast %cst_214 : f32 to vector<16x1xf32>
    %631 = arith.divf %629, %630 : vector<16x1xf32>
    %632 = vector.broadcast %631 : vector<16x1xf32> to vector<16x32xf32>
    %633 = arith.subf %625, %632 : vector<16x32xf32>
    %634 = vector.broadcast %631 : vector<16x1xf32> to vector<16x32xf32>
    %635 = arith.subf %625, %634 : vector<16x32xf32>
    %636 = arith.mulf %633, %635 : vector<16x32xf32>
    %cst_215 = arith.constant dense<0.000000e+00> : vector<16xf32>
    %637 = vector.multi_reduction <add>, %636, %cst_215 [1] : vector<16x32xf32> to vector<16xf32>
    %638 = vector.shape_cast %637 : vector<16xf32> to vector<16x1xf32>
    %cst_216 = arith.constant 3.200000e+01 : f32
    %639 = vector.broadcast %cst_216 : f32 to vector<16x1xf32>
    %640 = arith.divf %638, %639 : vector<16x1xf32>
    %641 = vector.broadcast %631 : vector<16x1xf32> to vector<16x32xf32>
    %642 = arith.subf %625, %641 : vector<16x32xf32>
    %cst_217 = arith.constant 9.99999974E-6 : f32
    %643 = vector.broadcast %cst_217 : f32 to vector<16x1xf32>
    %644 = arith.addf %640, %643 : vector<16x1xf32>
    %645 = math.rsqrt %644 : vector<16x1xf32>
    %646 = vector.broadcast %645 : vector<16x1xf32> to vector<16x32xf32>
    %647 = arith.mulf %642, %646 : vector<16x32xf32>
    %648 = vector.broadcast %626 : vector<1x32xf32> to vector<16x32xf32>
    %649 = arith.mulf %647, %648 : vector<16x32xf32>
    %650 = vector.broadcast %627 : vector<1x32xf32> to vector<16x32xf32>
    %651 = arith.addf %649, %650 : vector<16x32xf32>
    %c0_218 = arith.constant 0 : index
    %c13568 = arith.constant 13568 : index
    %652 = vector.load %arg3[%c0_218, %c13568] : memref<32x17920xbf16, #tpu.memory_space<vmem>>, vector<32x96xbf16>
    %c0_219 = arith.constant 0 : index
    %c9600 = arith.constant 9600 : index
    %653 = vector.load %arg4[%c0_219, %c9600] : memref<1x12800xf32, #tpu.memory_space<vmem>>, vector<1x96xf32>
    %654 = vector.extract_strided_slice %652 {offsets = [0, 0], sizes = [32, 32], strides = [1, 1]} : vector<32x96xbf16> to vector<32x32xbf16>
    %655 = arith.truncf %651 : vector<16x32xf32> to vector<16x32xbf16>
    %cst_220 = arith.constant dense<0.000000e+00> : vector<16x32xf32>
    %656 = tpu.matmul %655, %654, %cst_220 {dimension_numbers = #tpu.dot_dimension_numbers<[1], [0], [0], [1], [0, 0, 1, 1], [], []>} : vector<16x32xbf16>, vector<32x32xbf16>, vector<16x32xf32> -> vector<16x32xf32>
    %657 = vector.extract_strided_slice %653 {offsets = [0, 0], sizes = [1, 32], strides = [1, 1]} : vector<1x96xf32> to vector<1x32xf32>
    %658 = vector.broadcast %657 : vector<1x32xf32> to vector<16x32xf32>
    %659 = arith.addf %656, %658 : vector<16x32xf32>
    %660 = vector.extract_strided_slice %652 {offsets = [0, 32], sizes = [32, 64], strides = [1, 1]} : vector<32x96xbf16> to vector<32x64xbf16>
    %661 = arith.truncf %353 : vector<18x32xf32> to vector<18x32xbf16>
    %cst_221 = arith.constant dense<0.000000e+00> : vector<18x64xf32>
    %662 = tpu.matmul %661, %660, %cst_221 {dimension_numbers = #tpu.dot_dimension_numbers<[1], [0], [0], [1], [0, 0, 1, 1], [], []>} : vector<18x32xbf16>, vector<32x64xbf16>, vector<18x64xf32> -> vector<18x64xf32>
    %663 = vector.extract_strided_slice %653 {offsets = [0, 32], sizes = [1, 64], strides = [1, 1]} : vector<1x96xf32> to vector<1x64xf32>
    %664 = vector.broadcast %663 : vector<1x64xf32> to vector<18x64xf32>
    %665 = arith.addf %662, %664 : vector<18x64xf32>
    %666 = vector.extract_strided_slice %665 {offsets = [0, 0], sizes = [18, 32], strides = [1, 1]} : vector<18x64xf32> to vector<18x32xf32>
    %667 = vector.extract_strided_slice %665 {offsets = [0, 32], sizes = [18, 32], strides = [1, 1]} : vector<18x64xf32> to vector<18x32xf32>
    %c0_222 = arith.constant 0 : index
    %c13696 = arith.constant 13696 : index
    %668 = vector.load %arg3[%c0_222, %c13696] : memref<32x17920xbf16, #tpu.memory_space<vmem>>, vector<32x32xbf16>
    %c0_223 = arith.constant 0 : index
    %c9728 = arith.constant 9728 : index
    %669 = vector.load %arg4[%c0_223, %c9728] : memref<1x12800xf32, #tpu.memory_space<vmem>>, vector<1x32xf32>
    %670 = vector.extract_strided_slice %659 {offsets = [0, 0], sizes = [16, 16], strides = [1, 1]} : vector<16x32xf32> to vector<16x16xf32>
    %671 = vector.extract_strided_slice %666 {offsets = [0, 0], sizes = [18, 16], strides = [1, 1]} : vector<18x32xf32> to vector<18x16xf32>
    %cst_224 = arith.constant dense<0.000000e+00> : vector<16x18xf32>
    %672 = tpu.matmul %670, %671, %cst_224 {dimension_numbers = #tpu.dot_dimension_numbers<[1], [1], [0], [0], [0, 0, 1, 0], [], []>} : vector<16x16xf32>, vector<18x16xf32>, vector<16x18xf32> -> vector<16x18xf32>
    %cst_225 = arith.constant 2.500000e-01 : f32
    %673 = vector.broadcast %cst_225 : f32 to vector<16x18xf32>
    %674 = arith.mulf %672, %673 : vector<16x18xf32>
    %cst_226 = arith.constant 0xFF800000 : f32
    %675 = vector.broadcast %cst_226 : f32 to vector<16x18xf32>
    %676 = arith.select %104, %674, %675 : vector<16x18xi1>, vector<16x18xf32>
    %cst_227 = arith.constant dense<0xFF800000> : vector<16xf32>
    %677 = vector.multi_reduction <maximumf>, %676, %cst_227 [1] : vector<16x18xf32> to vector<16xf32>
    %678 = vector.shape_cast %677 : vector<16xf32> to vector<16x1xf32>
    %679 = vector.broadcast %678 : vector<16x1xf32> to vector<16x18xf32>
    %680 = arith.subf %676, %679 : vector<16x18xf32>
    %681 = math.exp %680 : vector<16x18xf32>
    %cst_228 = arith.constant dense<0.000000e+00> : vector<16xf32>
    %682 = vector.multi_reduction <add>, %681, %cst_228 [1] : vector<16x18xf32> to vector<16xf32>
    %683 = vector.shape_cast %682 : vector<16xf32> to vector<16x1xf32>
    %684 = vector.broadcast %683 : vector<16x1xf32> to vector<16x18xf32>
    %685 = arith.divf %681, %684 : vector<16x18xf32>
    %686 = vector.extract_strided_slice %667 {offsets = [0, 0], sizes = [18, 16], strides = [1, 1]} : vector<18x32xf32> to vector<18x16xf32>
    %cst_229 = arith.constant dense<0.000000e+00> : vector<16x16xf32>
    %687 = tpu.matmul %685, %686, %cst_229 {dimension_numbers = #tpu.dot_dimension_numbers<[1], [0], [0], [1], [0, 0, 1, 1], [], []>} : vector<16x18xf32>, vector<18x16xf32>, vector<16x16xf32> -> vector<16x16xf32>
    %688 = vector.extract_strided_slice %668 {offsets = [0, 0], sizes = [16, 32], strides = [1, 1]} : vector<32x32xbf16> to vector<16x32xbf16>
    %689 = arith.truncf %687 : vector<16x16xf32> to vector<16x16xbf16>
    %cst_230 = arith.constant dense<0.000000e+00> : vector<16x32xf32>
    %690 = tpu.matmul %689, %688, %cst_230 {dimension_numbers = #tpu.dot_dimension_numbers<[1], [0], [0], [1], [0, 0, 1, 1], [], []>} : vector<16x16xbf16>, vector<16x32xbf16>, vector<16x32xf32> -> vector<16x32xf32>
    %691 = vector.extract_strided_slice %659 {offsets = [0, 16], sizes = [16, 16], strides = [1, 1]} : vector<16x32xf32> to vector<16x16xf32>
    %692 = vector.extract_strided_slice %666 {offsets = [0, 16], sizes = [18, 16], strides = [1, 1]} : vector<18x32xf32> to vector<18x16xf32>
    %cst_231 = arith.constant dense<0.000000e+00> : vector<16x18xf32>
    %693 = tpu.matmul %691, %692, %cst_231 {dimension_numbers = #tpu.dot_dimension_numbers<[1], [1], [0], [0], [0, 0, 1, 0], [], []>} : vector<16x16xf32>, vector<18x16xf32>, vector<16x18xf32> -> vector<16x18xf32>
    %cst_232 = arith.constant 2.500000e-01 : f32
    %694 = vector.broadcast %cst_232 : f32 to vector<16x18xf32>
    %695 = arith.mulf %693, %694 : vector<16x18xf32>
    %cst_233 = arith.constant 0xFF800000 : f32
    %696 = vector.broadcast %cst_233 : f32 to vector<16x18xf32>
    %697 = arith.select %104, %695, %696 : vector<16x18xi1>, vector<16x18xf32>
    %cst_234 = arith.constant dense<0xFF800000> : vector<16xf32>
    %698 = vector.multi_reduction <maximumf>, %697, %cst_234 [1] : vector<16x18xf32> to vector<16xf32>
    %699 = vector.shape_cast %698 : vector<16xf32> to vector<16x1xf32>
    %700 = vector.broadcast %699 : vector<16x1xf32> to vector<16x18xf32>
    %701 = arith.subf %697, %700 : vector<16x18xf32>
    %702 = math.exp %701 : vector<16x18xf32>
    %cst_235 = arith.constant dense<0.000000e+00> : vector<16xf32>
    %703 = vector.multi_reduction <add>, %702, %cst_235 [1] : vector<16x18xf32> to vector<16xf32>
    %704 = vector.shape_cast %703 : vector<16xf32> to vector<16x1xf32>
    %705 = vector.broadcast %704 : vector<16x1xf32> to vector<16x18xf32>
    %706 = arith.divf %702, %705 : vector<16x18xf32>
    %707 = vector.extract_strided_slice %667 {offsets = [0, 16], sizes = [18, 16], strides = [1, 1]} : vector<18x32xf32> to vector<18x16xf32>
    %cst_236 = arith.constant dense<0.000000e+00> : vector<16x16xf32>
    %708 = tpu.matmul %706, %707, %cst_236 {dimension_numbers = #tpu.dot_dimension_numbers<[1], [0], [0], [1], [0, 0, 1, 1], [], []>} : vector<16x18xf32>, vector<18x16xf32>, vector<16x16xf32> -> vector<16x16xf32>
    %709 = vector.extract_strided_slice %668 {offsets = [16, 0], sizes = [16, 32], strides = [1, 1]} : vector<32x32xbf16> to vector<16x32xbf16>
    %710 = arith.truncf %708 : vector<16x16xf32> to vector<16x16xbf16>
    %cst_237 = arith.constant dense<0.000000e+00> : vector<16x32xf32>
    %711 = tpu.matmul %710, %709, %cst_237 {dimension_numbers = #tpu.dot_dimension_numbers<[1], [0], [0], [1], [0, 0, 1, 1], [], []>} : vector<16x16xbf16>, vector<16x32xbf16>, vector<16x32xf32> -> vector<16x32xf32>
    %712 = arith.addf %690, %711 : vector<16x32xf32>
    %713 = vector.broadcast %669 : vector<1x32xf32> to vector<16x32xf32>
    %714 = arith.addf %712, %713 : vector<16x32xf32>
    %715 = arith.addf %651, %714 : vector<16x32xf32>
    %c0_238 = arith.constant 0 : index
    %c12288 = arith.constant 12288 : index
    %716 = vector.load %arg4[%c0_238, %c12288] : memref<1x12800xf32, #tpu.memory_space<vmem>>, vector<1x32xf32>
    %c0_239 = arith.constant 0 : index
    %c12416 = arith.constant 12416 : index
    %717 = vector.load %arg4[%c0_239, %c12416] : memref<1x12800xf32, #tpu.memory_space<vmem>>, vector<1x32xf32>
    %cst_240 = arith.constant dense<0.000000e+00> : vector<16xf32>
    %718 = vector.multi_reduction <add>, %715, %cst_240 [1] : vector<16x32xf32> to vector<16xf32>
    %719 = vector.shape_cast %718 : vector<16xf32> to vector<16x1xf32>
    %cst_241 = arith.constant 3.200000e+01 : f32
    %720 = vector.broadcast %cst_241 : f32 to vector<16x1xf32>
    %721 = arith.divf %719, %720 : vector<16x1xf32>
    %722 = vector.broadcast %721 : vector<16x1xf32> to vector<16x32xf32>
    %723 = arith.subf %715, %722 : vector<16x32xf32>
    %724 = vector.broadcast %721 : vector<16x1xf32> to vector<16x32xf32>
    %725 = arith.subf %715, %724 : vector<16x32xf32>
    %726 = arith.mulf %723, %725 : vector<16x32xf32>
    %cst_242 = arith.constant dense<0.000000e+00> : vector<16xf32>
    %727 = vector.multi_reduction <add>, %726, %cst_242 [1] : vector<16x32xf32> to vector<16xf32>
    %728 = vector.shape_cast %727 : vector<16xf32> to vector<16x1xf32>
    %cst_243 = arith.constant 3.200000e+01 : f32
    %729 = vector.broadcast %cst_243 : f32 to vector<16x1xf32>
    %730 = arith.divf %728, %729 : vector<16x1xf32>
    %731 = vector.broadcast %721 : vector<16x1xf32> to vector<16x32xf32>
    %732 = arith.subf %715, %731 : vector<16x32xf32>
    %cst_244 = arith.constant 9.99999974E-6 : f32
    %733 = vector.broadcast %cst_244 : f32 to vector<16x1xf32>
    %734 = arith.addf %730, %733 : vector<16x1xf32>
    %735 = math.rsqrt %734 : vector<16x1xf32>
    %736 = vector.broadcast %735 : vector<16x1xf32> to vector<16x32xf32>
    %737 = arith.mulf %732, %736 : vector<16x32xf32>
    %738 = vector.broadcast %716 : vector<1x32xf32> to vector<16x32xf32>
    %739 = arith.mulf %737, %738 : vector<16x32xf32>
    %740 = vector.broadcast %717 : vector<1x32xf32> to vector<16x32xf32>
    %741 = arith.addf %739, %740 : vector<16x32xf32>
    %c0_245 = arith.constant 0 : index
    %c13824 = arith.constant 13824 : index
    %742 = vector.load %arg3[%c0_245, %c13824] : memref<32x17920xbf16, #tpu.memory_space<vmem>>, vector<32x2048xbf16>
    %c0_246 = arith.constant 0 : index
    %c9856 = arith.constant 9856 : index
    %743 = vector.load %arg4[%c0_246, %c9856] : memref<1x12800xf32, #tpu.memory_space<vmem>>, vector<1x2048xf32>
    %c0_247 = arith.constant 0 : index
    %c15872 = arith.constant 15872 : index
    %744 = vector.load %arg3[%c0_247, %c15872] : memref<32x17920xbf16, #tpu.memory_space<vmem>>, vector<32x2048xbf16>
    %c0_248 = arith.constant 0 : index
    %c11904 = arith.constant 11904 : index
    %745 = vector.load %arg4[%c0_248, %c11904] : memref<1x12800xf32, #tpu.memory_space<vmem>>, vector<1x32xf32>
    %746 = arith.truncf %741 : vector<16x32xf32> to vector<16x32xbf16>
    %cst_249 = arith.constant dense<0.000000e+00> : vector<16x2048xf32>
    %747 = tpu.matmul %746, %742, %cst_249 {dimension_numbers = #tpu.dot_dimension_numbers<[1], [0], [0], [1], [0, 0, 1, 1], [], []>} : vector<16x32xbf16>, vector<32x2048xbf16>, vector<16x2048xf32> -> vector<16x2048xf32>
    %748 = vector.broadcast %743 : vector<1x2048xf32> to vector<16x2048xf32>
    %749 = arith.addf %747, %748 : vector<16x2048xf32>
    %cst_250 = arith.constant 0.000000e+00 : f32
    %750 = vector.broadcast %cst_250 : f32 to vector<16x2048xf32>
    %751 = arith.maximumf %749, %750 : vector<16x2048xf32>
    %752 = arith.truncf %751 : vector<16x2048xf32> to vector<16x2048xbf16>
    %cst_251 = arith.constant dense<0.000000e+00> : vector<16x32xf32>
    %753 = tpu.matmul %752, %744, %cst_251 {dimension_numbers = #tpu.dot_dimension_numbers<[1], [1], [0], [0], [0, 0, 1, 0], [], []>} : vector<16x2048xbf16>, vector<32x2048xbf16>, vector<16x32xf32> -> vector<16x32xf32>
    %754 = vector.broadcast %745 : vector<1x32xf32> to vector<16x32xf32>
    %755 = arith.addf %753, %754 : vector<16x32xf32>
    %756 = arith.addf %741, %755 : vector<16x32xf32>
    %c0_252 = arith.constant 0 : index
    %c12544 = arith.constant 12544 : index
    %757 = vector.load %arg4[%c0_252, %c12544] : memref<1x12800xf32, #tpu.memory_space<vmem>>, vector<1x32xf32>
    %c0_253 = arith.constant 0 : index
    %c12672 = arith.constant 12672 : index
    %758 = vector.load %arg4[%c0_253, %c12672] : memref<1x12800xf32, #tpu.memory_space<vmem>>, vector<1x32xf32>
    %cst_254 = arith.constant dense<0.000000e+00> : vector<16xf32>
    %759 = vector.multi_reduction <add>, %756, %cst_254 [1] : vector<16x32xf32> to vector<16xf32>
    %760 = vector.shape_cast %759 : vector<16xf32> to vector<16x1xf32>
    %cst_255 = arith.constant 3.200000e+01 : f32
    %761 = vector.broadcast %cst_255 : f32 to vector<16x1xf32>
    %762 = arith.divf %760, %761 : vector<16x1xf32>
    %763 = vector.broadcast %762 : vector<16x1xf32> to vector<16x32xf32>
    %764 = arith.subf %756, %763 : vector<16x32xf32>
    %765 = vector.broadcast %762 : vector<16x1xf32> to vector<16x32xf32>
    %766 = arith.subf %756, %765 : vector<16x32xf32>
    %767 = arith.mulf %764, %766 : vector<16x32xf32>
    %cst_256 = arith.constant dense<0.000000e+00> : vector<16xf32>
    %768 = vector.multi_reduction <add>, %767, %cst_256 [1] : vector<16x32xf32> to vector<16xf32>
    %769 = vector.shape_cast %768 : vector<16xf32> to vector<16x1xf32>
    %cst_257 = arith.constant 3.200000e+01 : f32
    %770 = vector.broadcast %cst_257 : f32 to vector<16x1xf32>
    %771 = arith.divf %769, %770 : vector<16x1xf32>
    %772 = vector.broadcast %762 : vector<16x1xf32> to vector<16x32xf32>
    %773 = arith.subf %756, %772 : vector<16x32xf32>
    %cst_258 = arith.constant 9.99999974E-6 : f32
    %774 = vector.broadcast %cst_258 : f32 to vector<16x1xf32>
    %775 = arith.addf %771, %774 : vector<16x1xf32>
    %776 = math.rsqrt %775 : vector<16x1xf32>
    %777 = vector.broadcast %776 : vector<16x1xf32> to vector<16x32xf32>
    %778 = arith.mulf %773, %777 : vector<16x32xf32>
    %779 = vector.broadcast %757 : vector<1x32xf32> to vector<16x32xf32>
    %780 = arith.mulf %778, %779 : vector<16x32xf32>
    %781 = vector.broadcast %758 : vector<1x32xf32> to vector<16x32xf32>
    %782 = arith.addf %780, %781 : vector<16x32xf32>
    %c0_259 = arith.constant 0 : index
    %c0_260 = arith.constant 0 : index
    %783 = vector.load %arg6[%c0_259, %c0_260] : memref<18x32xf32, #tpu.memory_space<vmem>>, vector<18x32xf32>
    tpu.vector_store %arg6[%c0_259, %c0_260], %353 {strides = array<i32>} : memref<18x32xf32, #tpu.memory_space<vmem>>, vector<18x32xf32>,
    %c0_261 = arith.constant 0 : index
    %c0_262 = arith.constant 0 : index
    %784 = vector.load %arg5[%c0_261, %c0_262] : memref<16x32xf32, #tpu.memory_space<vmem>>, vector<16x32xf32>
    tpu.vector_store %arg5[%c0_261, %c0_262], %782 {strides = array<i32>} : memref<16x32xf32, #tpu.memory_space<vmem>>, vector<16x32xf32>,
    return
  }
  func.func @transform_0(%arg0: i32) -> (i32, i32) {
    %c0_i32 = arith.constant 0 : i32
    %c0_i32_0 = arith.constant 0 : i32
    %c0_i32_1 = arith.constant 0 : i32
    return %c0_i32, %c0_i32_0 : i32, i32
  }
  func.func @transform_1(%arg0: i32) -> (i32, i32) {
    %c0_i32 = arith.constant 0 : i32
    %c0_i32_0 = arith.constant 0 : i32
    %c0_i32_1 = arith.constant 0 : i32
    return %c0_i32, %c0_i32_0 : i32, i32
  }
  func.func @transform_2(%arg0: i32) -> (i32, i32) {
    %c0_i32 = arith.constant 0 : i32
    %c0_i32_0 = arith.constant 0 : i32
    %c0_i32_1 = arith.constant 0 : i32
    return %c0_i32, %c0_i32_0 : i32, i32
  }
  func.func @transform_3(%arg0: i32) -> (i32, i32) {
    %c0_i32 = arith.constant 0 : i32
    %c0_i32_0 = arith.constant 0 : i32
    %c0_i32_1 = arith.constant 0 : i32
    return %c0_i32, %c0_i32_0 : i32, i32
  }
  func.func @transform_4(%arg0: i32) -> (i32, i32) {
    %c0_i32 = arith.constant 0 : i32
    %c0_i32_0 = arith.constant 0 : i32
    %c0_i32_1 = arith.constant 0 : i32
    return %c0_i32, %c0_i32_0 : i32, i32
  }
  func.func @transform_5(%arg0: i32) -> (i32, i32) {
    %c0_i32 = arith.constant 0 : i32
    %c0_i32_0 = arith.constant 0 : i32
    %c0_i32_1 = arith.constant 0 : i32
    return %c0_i32, %c0_i32_0 : i32, i32
  }
}

</mosaic_0001>

<llo_original>
// kernel: single_branch_transformer.1
$region0: #{single_branch_transformer.1}
  #allocation0 [shape = 'u32[]', space=smem, size = 0x4, offset = 0x4, fixed_abs, tag = 'smem constant byte address 0x4 - core index']
  #allocation1 [shape = 'u32[144,128]{1,0:T(1,128)}', space=vmem, size = 0x12000, scoped, tag = 'internal scratch']
  %s0 = inlined_call_operand.vmem [shape: f32[18,32], index: 0, kind: input, shape index: {}]
  %s1 = inlined_call_operand.hbm [shape: f32[16,32], index: 1, kind: input, shape index: {}]
  %s2 = inlined_call_operand.hbm [shape: bf16[32,17920], index: 2, kind: input, shape index: {}]
  %s3 = inlined_call_operand.hbm [shape: f32[1,12800], index: 3, kind: input, shape index: {}]
  %s4 = inlined_call_operand.hbm [shape: f32[16,32], index: 4, kind: output, shape index: {0}]
  %s5 = inlined_call_operand.vmem [shape: f32[18,32], index: 5, kind: output, shape index: {1}]
  %6 = xla_tuple %s4, %s5
  %s7 = sld [smem:[#allocation0]]
  $region46: #{single_branch_transformer.1} parent=0
    _
  %s9 = ssub.s32 1, %s7
  %s10 = scalar_select 0, %s9, %s7
  $region1: #{single_branch_transformer.1} parent=0
    #allocation2 [shape = 'u8[8192]{0}', space=vmem, size = 0x2000, scoped, tag = 'input window, operand 1, single buffered']
    #allocation3 [shape = 's32[1]{0}', space=sflag, size = 0x4, scoped, tag = 'scoped memory for single_branch_transformer.1']
    #allocation4 [shape = 's32[1]{0}', space=sflag, size = 0x4, scoped, tag = 'scoped memory for single_branch_transformer.1']
    #allocation5 [shape = 'u8[1146880]{0}', space=vmem, size = 0x118000, scoped, tag = 'input window, operand 2, single buffered']
    #allocation6 [shape = 's32[1]{0}', space=sflag, size = 0x4, scoped, tag = 'scoped memory for single_branch_transformer.1']
    #allocation7 [shape = 'u8[51200]{0}', space=vmem, size = 0xc800, scoped, tag = 'input window, operand 3, single buffered']
    #allocation8 [shape = 'u8[8192]{0}', space=vmem, size = 0x2000, scoped, tag = 'output window, operand 0, single buffered']
    %11 = vsyncpa [#allocation3], 0
    %12 = vsyncpa [#allocation6], 0
    %13 = vsyncpa [#allocation4], 0
    // Predicated region
    $region2: #{single_branch_transformer.1} parent=1 // pred_check
      _
    $region3: #{single_branch_transformer.1} parent=1 // pred_check_branch
      %15 = sbr.rel (0) target = $region5
    $region4: #{single_branch_transformer.1} parent=1 // pred_region
      _
    $region5: #{single_branch_transformer.1} parent=1 // pred_fallthru
      _
    // Predicated region
    $region6: #{single_branch_transformer.1} parent=1 // pred_check
      _
    $region7: #{single_branch_transformer.1} parent=1 // pred_check_branch
      %17 = sbr.rel (0) target = $region9
    $region8: #{single_branch_transformer.1} parent=1 // pred_region
      %s19 = ssub.s32 256, 256
      %20 = vsyncadd [#allocation3], %s19
      %s21 = sshll.u32 [#allocation2], 4
      %s22 = int_to_ptr.vmem [resolvable:$true] %s21
      %27 = dma.hbm_to_vmem [thread:$0]  %s1, 256, %s22, [#allocation3], 128, 128, 8
    $region9: #{single_branch_transformer.1} parent=1 // pred_fallthru
      _
    // Predicated region
    $region10: #{single_branch_transformer.1} parent=1 // pred_check
      _
    $region11: #{single_branch_transformer.1} parent=1 // pred_check_branch
      %29 = sbr.rel (0) target = $region13
    $region12: #{single_branch_transformer.1} parent=1 // pred_region
      %s31 = ssub.s32 35840, 35840
      %32 = vsyncadd [#allocation6], %s31
      %s33 = sshll.u32 [#allocation5], 4
      %s34 = int_to_ptr.vmem [resolvable:$true] %s33
      %39 = dma.hbm_to_vmem [thread:$0]  %s2, 35840, %s34, [#allocation6], 8960, 8960, 560
    $region13: #{single_branch_transformer.1} parent=1 // pred_fallthru
      _
    // Predicated region
    $region14: #{single_branch_transformer.1} parent=1 // pred_check
      _
    $region15: #{single_branch_transformer.1} parent=1 // pred_check_branch
      %41 = sbr.rel (0) target = $region17
    $region16: #{single_branch_transformer.1} parent=1 // pred_region
      %s43 = ssub.s32 1600, 1600
      %44 = vsyncadd [#allocation6], %s43
      %s46 = sshll.u32 [#allocation7], 4
      %s47 = int_to_ptr.vmem [resolvable:$true] %s46
      %49 = dma.hbm_to_vmem [thread:$0]  %s3, 1600, %s47, [#allocation6]
    $region17: #{single_branch_transformer.1} parent=1 // pred_fallthru
      _
    // Predicated region
    $region18: #{single_branch_transformer.1} parent=1 // pred_check
      _
    $region19: #{single_branch_transformer.1} parent=1 // pred_check_branch
      %51 = sbr.rel (0) target = $region21
    $region20: #{single_branch_transformer.1} parent=1 // pred_region
      %52 = dma.done [#allocation3], 256
    $region21: #{single_branch_transformer.1} parent=1 // pred_fallthru
      _
    // Predicated region
    $region22: #{single_branch_transformer.1} parent=1 // pred_check
      _
    $region23: #{single_branch_transformer.1} parent=1 // pred_check_branch
      %54 = sbr.rel (0) target = $region25
    $region24: #{single_branch_transformer.1} parent=1 // pred_region
      %55 = dma.done [#allocation6], 35840
    $region25: #{single_branch_transformer.1} parent=1 // pred_fallthru
      _
    // Predicated region
    $region26: #{single_branch_transformer.1} parent=1 // pred_check
      _
    $region27: #{single_branch_transformer.1} parent=1 // pred_check_branch
      %57 = sbr.rel (0) target = $region29
    $region28: #{single_branch_transformer.1} parent=1 // pred_region
      %58 = dma.done [#allocation6], 1600
    $region29: #{single_branch_transformer.1} parent=1 // pred_fallthru
      _
    %v60 = vlaneseq
    %v61 = vshrl.u32 %v60, 7
    %v62 = vadd.s32 %v61, 8
    %v63 = vadd.s32 %v61, 16
    %vm64 = vcmp.lt.s32.totalorder %v61, 0
    %v65 = vsub.s32 0, %v61
    %v66 = vsel %vm64, %v65, %v61
    %v67 = vshrl.u32 %v66, 1
    %v68 = vand.u32 %v66, 1
    %v69 = vsub.s32 0, %v68
    %v70 = vsel %vm64, %v69, %v68
    %vm71 = vcmp.lt.s32.totalorder %v62, 0
    %v72 = vsub.s32 0, %v62
    %v73 = vsel %vm71, %v72, %v62
    %v74 = vshrl.u32 %v73, 1
    %v75 = vand.u32 %v73, 1
    %v76 = vsub.s32 0, %v75
    %v77 = vsel %vm71, %v76, %v75
    %vm78 = vcmp.lt.s32.totalorder %v63, 0
    %v79 = vsub.s32 0, %v63
    %v80 = vsel %vm78, %v79, %v63
    %v81 = vshrl.u32 %v80, 1
    %v82 = vand.u32 %v80, 1
    %v83 = vsub.s32 0, %v82
    %v84 = vsel %vm78, %v83, %v82
    %vm85 = vcmp.ne.s32.totalorder %v70, 0
    %vm86 = vcmp.ne.s32.totalorder %v77, 0
    %vm87 = vcmp.ne.s32.totalorder %v84, 0
    %vm88 = vcmp.lt.s32.totalorder %v70, 0
    %vm89 = vcmp.lt.s32.totalorder %v77, 0
    %vm90 = vcmp.lt.s32.totalorder %v84, 0
    %vm91 = vmand %vm88, %vm85
    %vm92 = vmand %vm89, %vm86
    %vm93 = vmand %vm90, %vm87
    %v94 = vadd.s32 %v70, 2
    %v95 = vadd.s32 %v77, 2
    %v96 = vadd.s32 %v84, 2
    %v97 = vsel %vm91, %v94, %v70
    %v98 = vsel %vm92, %v95, %v77
    %v99 = vsel %vm93, %v96, %v84
    %v100 = vlaneseq
    %v101 = vand.u32 %v100, 127
    %vm102 = vcmp.lt.s32.totalorder %v101, 0
    %v103 = vsub.s32 0, %v101
    %v104 = vsel %vm102, %v103, %v101
    %v105 = vshrl.u32 %v104, 1
    %v106 = vand.u32 %v104, 1
    %v107 = vsub.s32 0, %v106
    %v108 = vsel %vm102, %v107, %v106
    %vm109 = vcmp.ne.s32.totalorder %v108, 0
    %vm110 = vcmp.lt.s32.totalorder %v108, 0
    %vm111 = vmand %vm110, %vm109
    %v112 = vadd.s32 %v108, 2
    %v113 = vsel %vm111, %v112, %v108
    %vm114 = vcmp.eq.s32.totalorder %v97, %v113
    %vm115 = vcmp.eq.s32.totalorder %v98, %v113
    %vm116 = vcmp.eq.s32.totalorder %v99, %v113
    %v117 = vld [vmem:[%s0] sm:$0xff]
    %v118 = vld [vmem:[%s0 + $0x8] sm:$0xff]
    %v119 = vld [vmem:[%s0 + $0x10] sm:$0x3]
    %v120 = vld [vmem:[#allocation5] sm:$0xf]
    %v121 = vld [vmem:[#allocation5 + $0x230] sm:$0xf]
    %v122 = vld [vmem:[#allocation5 + $0x460] sm:$0xf]
    %v123 = vld [vmem:[#allocation5 + $0x690] sm:$0xf]
    %v124 = vpack.c.bf16 %v118, %v117
    %v125 = vpack.c.bf16 %v119, %v119
    %v126 = vld [vmem:[#allocation7] sm:$0x1]
    %v128 = vlaneseq
    %v129 = vshrl.u32 %v128, 7
    %v130 = vsub.s32 0, %v129
    %v131 = vrot.slane %v126, %v130
    %v137 = vunpack.c.l.b16 %v120
    %v138 = vunpack.c.l.b16 %v121
    %v139 = vunpack.c.l.b16 %v122
    %v140 = vunpack.c.l.b16 %v123
    %v141 = vpack.c.b16 %v138, %v137
    %v142 = vpack.c.b16 %v140, %v139
    %vm145 = vcmask 261120
    %v147 = vsel %vm145, %v124, 0
    %v150 = vsel %vm145, %v125, 0
    %152 = vmatprep.subr.bf16.mxu0 0
    %153 = vmatpush1.bf16.msra.mxu0 %v141
    %154 = vmatprep.subr.bf16.mxu0 0
    %155 = vmatpush1.bf16.msra.mxu0 %v142
    %156 = vmatprep.subr.bf16.mxu0 0
    %157 = vmatpush1.bf16.msra.mxu0 0
    %158 = vmatprep.subr.bf16.mxu0 0
    %159 = vmatpush1.bf16.msra.mxu0 0
    %160 = vmatprep.subr.bf16.mxu0 0
    %161 = vmatpush1.bf16.msra.mxu0 0
    %162 = vmatprep.subr.bf16.mxu0 0
    %163 = vmatpush1.bf16.msra.mxu0 0
    %164 = vmatprep.subr.bf16.mxu0 0
    %165 = vmatpush1.bf16.msra.mxu0 0
    %166 = vmatprep.subr.bf16.mxu0 0
    %167 = vmatpush1.bf16.msra.mxu0 0
    %168 = vmatprep.subr.bf16.mxu0 0
    %169 = vmatpush1.bf16.msra.mxu0 0
    %170 = vmatprep.subr.bf16.mxu0 0
    %171 = vmatpush1.bf16.msra.mxu0 0
    %172 = vmatprep.subr.bf16.mxu0 0
    %173 = vmatpush1.bf16.msra.mxu0 0
    %174 = vmatprep.subr.bf16.mxu0 0
    %175 = vmatpush1.bf16.msra.mxu0 0
    %176 = vmatprep.subr.bf16.mxu0 0
    %177 = vmatpush1.bf16.msra.mxu0 0
    %178 = vmatprep.subr.bf16.mxu0 0
    %179 = vmatpush1.bf16.msra.mxu0 0
    %180 = vmatprep.subr.bf16.mxu0 0
    %181 = vmatpush1.bf16.msra.mxu0 0
    %182 = vmatprep.subr.bf16.mxu0 0
    %183 = vmatpush1.bf16.msra.mxu0 0
    %184 = vmatprep.mubr.bf16.mxu0 0
    %185 = vmatmul.mubr.bf16.gmra.mrb[0].mxu0 %v147
    %v186 = vpop.f32.mrb[0].mxu0
    %v187 = vadd.f32 %v131, %v186
    %v188 = vpop.f32.mrb[0].mxu0
    %v189 = vpop.f32.mrb[0].mxu0
    %v190 = vadd.f32 %v131, %v189
    %v191 = vpop.f32.mrb[0].mxu0
    %192 = vmatprep.mubr.bf16.mxu0 0
    %193 = vmatmul.mubr.bf16.gmra.mrb[0].mxu0 %v150
    %v194 = vpop.f32.mrb[0].mxu0
    %v195 = vadd.f32 %v131, %v194
    %v196 = vpop.f32.mrb[0].mxu0
    %v197 = vpop.f32.mrb[0].mxu0
    %v198 = vpop.f32.mrb[0].mxu0
    %199 = vdwg.mxu0
    %v200 = vld [vmem:[#allocation5 + $0x4] sm:$0xf]
    %v201 = vld [vmem:[#allocation5 + $0x234] sm:$0xf]
    %v202 = vld [vmem:[#allocation5 + $0x464] sm:$0xf]
    %v203 = vld [vmem:[#allocation5 + $0x694] sm:$0xf]
    %v204 = vld [vmem:[#allocation7 + $0x1] sm:$0x1]
    %208 = vrot.lane.b32.xlu0 %v187, 96
    %v209 = vpop.permute.xlu0 %208
    %210 = vrot.lane.b32.xlu0 %v190, 96
    %v211 = vpop.permute.xlu0 %210
    %212 = vrot.lane.b32.xlu0 %v195, 96
    %v213 = vpop.permute.xlu0 %212
    %vm214 = vcmask 130048
    %v215 = vsel %vm214, %v187, 0
    %v217 = vsel %vm214, %v190, 0
    %v219 = vsel %vm214, %v195, 0
    %v221 = vsel %vm214, %v209, 0
    %v223 = vsel %vm214, %v211, 0
    %v225 = vsel %vm214, %v213, 0
    %227 = vmatprep.subr.mxu0 0.0
    %228 = vmatpush1.xpose.msra.mxu0 %v221
    %229 = vmatprep.subr.mxu0 0.0
    %230 = vmatpush1.xpose.msra.mxu0 %v223
    %231 = vmatprep.subr.mxu0 0.0
    %232 = vmatpush1.xpose.msra.mxu0 %v225
    %233 = vmatprep.subr.mxu0 0.0
    %234 = vmatpush1.xpose.msra.mxu0 0.0
    %235 = vmatprep.subr.mxu0 0.0
    %236 = vmatpush1.xpose.msra.mxu0 0.0
    %237 = vmatprep.subr.mxu0 0.0
    %238 = vmatpush1.xpose.msra.mxu0 0.0
    %239 = vmatprep.subr.mxu0 0.0
    %240 = vmatpush1.xpose.msra.mxu0 0.0
    %241 = vmatprep.subr.mxu0 0.0
    %242 = vmatpush1.xpose.msra.mxu0 0.0
    %243 = vmatprep.subr.mxu0 0.0
    %244 = vmatpush1.xpose.msra.mxu0 0.0
    %245 = vmatprep.subr.mxu0 0.0
    %246 = vmatpush1.xpose.msra.mxu0 0.0
    %247 = vmatprep.subr.mxu0 0.0
    %248 = vmatpush1.xpose.msra.mxu0 0.0
    %249 = vmatprep.subr.mxu0 0.0
    %250 = vmatpush1.xpose.msra.mxu0 0.0
    %251 = vmatprep.subr.mxu0 0.0
    %252 = vmatpush1.xpose.msra.mxu0 0.0
    %253 = vmatprep.subr.mxu0 0.0
    %254 = vmatpush1.xpose.msra.mxu0 0.0
    %255 = vmatprep.subr.mxu0 0.0
    %256 = vmatpush1.xpose.msra.mxu0 0.0
    %257 = vmatprep.subr.mxu0 0.0
    %258 = vmatpush1.xpose.msra.mxu0 0.0
    %259 = vmatprep.subr.mxu0 0.0
    %260 = vmatpush1.xpose.msra.mxu0 0.0
    %261 = vmatprep.subr.mxu0 0.0
    %262 = vmatpush1.xpose.msra.mxu0 0.0
    %263 = vmatprep.subr.mxu0 0.0
    %264 = vmatpush1.xpose.msra.mxu0 0.0
    %265 = vmatprep.subr.mxu0 0.0
    %266 = vmatpush1.xpose.msra.mxu0 0.0
    %267 = vmatprep.subr.mxu0 0.0
    %268 = vmatpush1.xpose.msra.mxu0 0.0
    %269 = vmatprep.subr.mxu0 0.0
    %270 = vmatpush1.xpose.msra.mxu0 0.0
    %271 = vmatprep.subr.mxu0 0.0
    %272 = vmatpush1.xpose.msra.mxu0 0.0
    %273 = vmatprep.subr.mxu0 0.0
    %274 = vmatpush1.xpose.msra.mxu0 0.0
    %275 = vmatprep.subr.mxu0 0.0
    %276 = vmatpush1.xpose.msra.mxu0 0.0
    %277 = vmatprep.subr.mxu0 0.0
    %278 = vmatpush1.xpose.msra.mxu0 0.0
    %279 = vmatprep.subr.mxu0 0.0
    %280 = vmatpush1.xpose.msra.mxu0 0.0
    %281 = vmatprep.subr.mxu0 0.0
    %282 = vmatpush1.xpose.msra.mxu0 0.0
    %283 = vmatprep.subr.mxu0 0.0
    %284 = vmatpush1.xpose.msra.mxu0 0.0
    %285 = vmatprep.subr.mxu0 0.0
    %286 = vmatpush1.xpose.msra.mxu0 0.0
    %287 = vmatprep.subr.mxu0 0.0
    %288 = vmatpush1.xpose.msra.mxu0 0.0
    %289 = vmatprep.subr.mxu0 0.0
    %290 = vmatpush1.xpose.msra.mxu0 0.0
    %291 = vmatprep.mubr.f32.mxu0 0.0
    %292 = vmatmul.mubr.f32.gmra.mrb[0].mxu0 %v215
    %v293 = vpop.f32.mrb[0].mxu0
    %v294 = vadd.f32 0.0, %v293
    %v295 = vpop.f32.mrb[0].mxu0
    %296 = vmatprep.mubr.f32.mxu0 0.0
    %297 = vmatmul.mubr.f32.gmra.mrb[0].mxu0 %v217
    %v298 = vpop.f32.mrb[0].mxu0
    %v299 = vadd.f32 0.0, %v298
    %v300 = vpop.f32.mrb[0].mxu0
    %301 = vmatprep.mubr.f32.mxu0 0.0
    %302 = vmatmul.mubr.f32.gmra.mrb[0].mxu0 %v219
    %v303 = vpop.f32.mrb[0].mxu0
    %v304 = vadd.f32 0.0, %v303
    %v305 = vpop.f32.mrb[0].mxu0
    %306 = vdwg.mxu0
    %v307 = vmul.f32 %v294, 0.25
    %v308 = vmul.f32 %v299, 0.25
    %v309 = vmul.f32 %v304, 0.25
    %v310 = vsel %vm114, %v307, -inf
    %v311 = vsel %vm115, %v308, -inf
    %v312 = vsel %vm116, %v309, -inf
    %vm313 = vcmask 146432
    %v314 = vsel %vm313, %v310, -inf
    %315 = vmax.xlane.f32.xlu0 %v314
    %v316 = vpop.xlane.xlu0 %315
    %v317 = vsel %vm313, %v311, -inf
    %318 = vmax.xlane.f32.xlu0 %v317
    %v319 = vpop.xlane.xlu0 %318
    %vm320 = vcmask 140288
    %v321 = vsel %vm320, %v312, -inf
    %322 = vmax.xlane.f32.xlu0 %v321
    %v323 = vpop.xlane.xlu0 %322
    %v324 = vsub.f32 %v310, %v316
    %v325 = vsub.f32 %v311, %v319
    %v326 = vsub.f32 %v312, %v323
    %v327 = vmul.f32 %v324, 1.442695
    %v328 = vpow.pop %v327
    %v329 = vmul.f32 %v325, 1.442695
    %v330 = vpow.pop %v329
    %v331 = vmul.f32 %v326, 1.442695
    %v332 = vpow.pop %v331
    %v333 = vsel %vm313, %v328, 0.0
    %334 = vadd.xlane.f32.xlu0 %v333
    %v335 = vpop.xlane.xlu0 %334
    %v336 = vsel %vm313, %v330, 0.0
    %337 = vadd.xlane.f32.xlu0 %v336
    %v338 = vpop.xlane.xlu0 %337
    %v339 = vsel %vm320, %v332, 0.0
    %340 = vadd.xlane.f32.xlu0 %v339
    %v341 = vpop.xlane.xlu0 %340
    %v342 = vrcp.pop %v335
    %v343 = vmul.f32 %v328, %v342
    %v344 = vrcp.pop %v338
    %v345 = vmul.f32 %v330, %v344
    %v346 = vrcp.pop %v341
    %v347 = vmul.f32 %v332, %v346
    %348 = vrot.lane.b32.xlu0 %v187, 64
    %v349 = vpop.permute.xlu0 %348
    %350 = vrot.lane.b32.xlu0 %v190, 64
    %v351 = vpop.permute.xlu0 %350
    %352 = vrot.lane.b32.xlu0 %v195, 64
    %v353 = vpop.permute.xlu0 %352
    %v357 = vsel %vm313, %v343, 0
    %v360 = vsel %vm313, %v345, 0
    %v363 = vsel %vm313, %v347, 0
    %vm365 = vcmask 1041408
    %v366 = vsel %vm365, %v353, 0
    %368 = vmatprep.subr.mxu0 0.0
    %369 = vmatpush1.msra.mxu0 %v349
    %370 = vmatprep.subr.mxu0 0.0
    %371 = vmatpush1.msra.mxu0 %v351
    %372 = vmatprep.subr.mxu0 0.0
    %373 = vmatpush1.msra.mxu0 %v366
    %374 = vmatprep.subr.mxu0 0.0
    %375 = vmatpush1.msra.mxu0 0.0
    %376 = vmatprep.subr.mxu0 0.0
    %377 = vmatpush1.msra.mxu0 0.0
    %378 = vmatprep.subr.mxu0 0.0
    %379 = vmatpush1.msra.mxu0 0.0
    %380 = vmatprep.subr.mxu0 0.0
    %381 = vmatpush1.msra.mxu0 0.0
    %382 = vmatprep.subr.mxu0 0.0
    %383 = vmatpush1.msra.mxu0 0.0
    %384 = vmatprep.subr.mxu0 0.0
    %385 = vmatpush1.msra.mxu0 0.0
    %386 = vmatprep.subr.mxu0 0.0
    %387 = vmatpush1.msra.mxu0 0.0
    %388 = vmatprep.subr.mxu0 0.0
    %389 = vmatpush1.msra.mxu0 0.0
    %390 = vmatprep.subr.mxu0 0.0
    %391 = vmatpush1.msra.mxu0 0.0
    %392 = vmatprep.subr.mxu0 0.0
    %393 = vmatpush1.msra.mxu0 0.0
    %394 = vmatprep.subr.mxu0 0.0
    %395 = vmatpush1.msra.mxu0 0.0
    %396 = vmatprep.subr.mxu0 0.0
    %397 = vmatpush1.msra.mxu0 0.0
    %398 = vmatprep.subr.mxu0 0.0
    %399 = vmatpush1.msra.mxu0 0.0
    %400 = vmatprep.subr.mxu0 0.0
    %401 = vmatpush1.msra.mxu0 0.0
    %402 = vmatprep.subr.mxu0 0.0
    %403 = vmatpush1.msra.mxu0 0.0
    %404 = vmatprep.subr.mxu0 0.0
    %405 = vmatpush1.msra.mxu0 0.0
    %406 = vmatprep.subr.mxu0 0.0
    %407 = vmatpush1.msra.mxu0 0.0
    %408 = vmatprep.subr.mxu0 0.0
    %409 = vmatpush1.msra.mxu0 0.0
    %410 = vmatprep.subr.mxu0 0.0
    %411 = vmatpush1.msra.mxu0 0.0
    %412 = vmatprep.subr.mxu0 0.0
    %413 = vmatpush1.msra.mxu0 0.0
    %414 = vmatprep.subr.mxu0 0.0
    %415 = vmatpush1.msra.mxu0 0.0
    %416 = vmatprep.subr.mxu0 0.0
    %417 = vmatpush1.msra.mxu0 0.0
    %418 = vmatprep.subr.mxu0 0.0
    %419 = vmatpush1.msra.mxu0 0.0
    %420 = vmatprep.subr.mxu0 0.0
    %421 = vmatpush1.msra.mxu0 0.0
    %422 = vmatprep.subr.mxu0 0.0
    %423 = vmatpush1.msra.mxu0 0.0
    %424 = vmatprep.subr.mxu0 0.0
    %425 = vmatpush1.msra.mxu0 0.0
    %426 = vmatprep.subr.mxu0 0.0
    %427 = vmatpush1.msra.mxu0 0.0
    %428 = vmatprep.subr.mxu0 0.0
    %429 = vmatpush1.msra.mxu0 0.0
    %430 = vmatprep.subr.mxu0 0.0
    %431 = vmatpush1.msra.mxu0 0.0
    %432 = vmatprep.mubr.f32.mxu0 0.0
    %433 = vmatmul.mubr.f32.gmra.mrb[0].mxu0 %v357
    %v434 = vpop.f32.mrb[0].mxu0
    %v435 = vadd.f32 0.0, %v434
    %v436 = vpop.f32.mrb[0].mxu0
    %437 = vmatprep.mubr.f32.mxu0 0.0
    %438 = vmatmul.mubr.f32.gmra.mrb[0].mxu0 %v360
    %v439 = vpop.f32.mrb[0].mxu0
    %v440 = vadd.f32 0.0, %v439
    %v441 = vpop.f32.mrb[0].mxu0
    %442 = vmatprep.mubr.f32.mxu0 0.0
    %443 = vmatmul.mubr.f32.gmra.mrb[0].mxu0 %v363
    %v444 = vpop.f32.mrb[0].mxu0
    %v445 = vadd.f32 0.0, %v444
    %v446 = vpop.f32.mrb[0].mxu0
    %447 = vdwg.mxu0
    %v448 = vpack.c.bf16 %v440, %v435
    %v449 = vpack.c.bf16 %v445, %v445
    %450 = vrot.lane.b32.xlu0 %v187, 112
    %v451 = vpop.permute.xlu0 %450
    %452 = vrot.lane.b32.xlu0 %v190, 112
    %v453 = vpop.permute.xlu0 %452
    %454 = vrot.lane.b32.xlu0 %v195, 112
    %v455 = vpop.permute.xlu0 %454
    %456 = vrot.lane.b32.xlu0 %v187, 80
    %v457 = vpop.permute.xlu0 %456
    %458 = vrot.lane.b32.xlu0 %v190, 80
    %v459 = vpop.permute.xlu0 %458
    %460 = vrot.lane.b32.xlu0 %v195, 80
    %v461 = vpop.permute.xlu0 %460
    %v462 = vsel %vm214, %v451, 0
    %v464 = vsel %vm214, %v453, 0
    %v466 = vsel %vm214, %v455, 0
    %v468 = vsel %vm214, %v457, 0
    %v470 = vsel %vm214, %v459, 0
    %v472 = vsel %vm214, %v461, 0
    %474 = vmatprep.subr.mxu0 0.0
    %475 = vmatpush1.xpose.msra.mxu0 %v468
    %476 = vmatprep.subr.mxu0 0.0
    %477 = vmatpush1.xpose.msra.mxu0 %v470
    %478 = vmatprep.subr.mxu0 0.0
    %479 = vmatpush1.xpose.msra.mxu0 %v472
    %480 = vmatprep.subr.mxu0 0.0
    %481 = vmatpush1.xpose.msra.mxu0 0.0
    %482 = vmatprep.subr.mxu0 0.0
    %483 = vmatpush1.xpose.msra.mxu0 0.0
    %484 = vmatprep.subr.mxu0 0.0
    %485 = vmatpush1.xpose.msra.mxu0 0.0
    %486 = vmatprep.subr.mxu0 0.0
    %487 = vmatpush1.xpose.msra.mxu0 0.0
    %488 = vmatprep.subr.mxu0 0.0
    %489 = vmatpush1.xpose.msra.mxu0 0.0
    %490 = vmatprep.subr.mxu0 0.0
    %491 = vmatpush1.xpose.msra.mxu0 0.0
    %492 = vmatprep.subr.mxu0 0.0
    %493 = vmatpush1.xpose.msra.mxu0 0.0
    %494 = vmatprep.subr.mxu0 0.0
    %495 = vmatpush1.xpose.msra.mxu0 0.0
    %496 = vmatprep.subr.mxu0 0.0
    %497 = vmatpush1.xpose.msra.mxu0 0.0
    %498 = vmatprep.subr.mxu0 0.0
    %499 = vmatpush1.xpose.msra.mxu0 0.0
    %500 = vmatprep.subr.mxu0 0.0
    %501 = vmatpush1.xpose.msra.mxu0 0.0
    %502 = vmatprep.subr.mxu0 0.0
    %503 = vmatpush1.xpose.msra.mxu0 0.0
    %504 = vmatprep.subr.mxu0 0.0
    %505 = vmatpush1.xpose.msra.mxu0 0.0
    %506 = vmatprep.subr.mxu0 0.0
    %507 = vmatpush1.xpose.msra.mxu0 0.0
    %508 = vmatprep.subr.mxu0 0.0
    %509 = vmatpush1.xpose.msra.mxu0 0.0
    %510 = vmatprep.subr.mxu0 0.0
    %511 = vmatpush1.xpose.msra.mxu0 0.0
    %512 = vmatprep.subr.mxu0 0.0
    %513 = vmatpush1.xpose.msra.mxu0 0.0
    %514 = vmatprep.subr.mxu0 0.0
    %515 = vmatpush1.xpose.msra.mxu0 0.0
    %516 = vmatprep.subr.mxu0 0.0
    %517 = vmatpush1.xpose.msra.mxu0 0.0
    %518 = vmatprep.subr.mxu0 0.0
    %519 = vmatpush1.xpose.msra.mxu0 0.0
    %520 = vmatprep.subr.mxu0 0.0
    %521 = vmatpush1.xpose.msra.mxu0 0.0
    %522 = vmatprep.subr.mxu0 0.0
    %523 = vmatpush1.xpose.msra.mxu0 0.0
    %524 = vmatprep.subr.mxu0 0.0
    %525 = vmatpush1.xpose.msra.mxu0 0.0
    %526 = vmatprep.subr.mxu0 0.0
    %527 = vmatpush1.xpose.msra.mxu0 0.0
    %528 = vmatprep.subr.mxu0 0.0
    %529 = vmatpush1.xpose.msra.mxu0 0.0
    %530 = vmatprep.subr.mxu0 0.0
    %531 = vmatpush1.xpose.msra.mxu0 0.0
    %532 = vmatprep.subr.mxu0 0.0
    %533 = vmatpush1.xpose.msra.mxu0 0.0
    %534 = vmatprep.subr.mxu0 0.0
    %535 = vmatpush1.xpose.msra.mxu0 0.0
    %536 = vmatprep.subr.mxu0 0.0
    %537 = vmatpush1.xpose.msra.mxu0 0.0
    %538 = vmatprep.mubr.f32.mxu0 0.0
    %539 = vmatmul.mubr.f32.gmra.mrb[0].mxu0 %v462
    %v540 = vpop.f32.mrb[0].mxu0
    %v541 = vadd.f32 0.0, %v540
    %v542 = vpop.f32.mrb[0].mxu0
    %543 = vmatprep.mubr.f32.mxu0 0.0
    %544 = vmatmul.mubr.f32.gmra.mrb[0].mxu0 %v464
    %v545 = vpop.f32.mrb[0].mxu0
    %v546 = vadd.f32 0.0, %v545
    %v547 = vpop.f32.mrb[0].mxu0
    %548 = vmatprep.mubr.f32.mxu0 0.0
    %549 = vmatmul.mubr.f32.gmra.mrb[0].mxu0 %v466
    %v550 = vpop.f32.mrb[0].mxu0
    %v551 = vadd.f32 0.0, %v550
    %v552 = vpop.f32.mrb[0].mxu0
    %553 = vdwg.mxu0
    %v554 = vmul.f32 %v541, 0.25
    %v555 = vmul.f32 %v546, 0.25
    %v556 = vmul.f32 %v551, 0.25
    %v557 = vsel %vm114, %v554, -inf
    %v558 = vsel %vm115, %v555, -inf
    %v559 = vsel %vm116, %v556, -inf
    %v560 = vsel %vm313, %v557, -inf
    %561 = vmax.xlane.f32.xlu0 %v560
    %v562 = vpop.xlane.xlu0 %561
    %v563 = vsel %vm313, %v558, -inf
    %564 = vmax.xlane.f32.xlu0 %v563
    %v565 = vpop.xlane.xlu0 %564
    %v566 = vsel %vm320, %v559, -inf
    %567 = vmax.xlane.f32.xlu0 %v566
    %v568 = vpop.xlane.xlu0 %567
    %v569 = vsub.f32 %v557, %v562
    %v570 = vsub.f32 %v558, %v565
    %v571 = vsub.f32 %v559, %v568
    %v572 = vmul.f32 %v569, 1.442695
    %v573 = vpow.pop %v572
    %v574 = vmul.f32 %v570, 1.442695
    %v575 = vpow.pop %v574
    %v576 = vmul.f32 %v571, 1.442695
    %v577 = vpow.pop %v576
    %v578 = vsel %vm313, %v573, 0.0
    %579 = vadd.xlane.f32.xlu0 %v578
    %v580 = vpop.xlane.xlu0 %579
    %v581 = vsel %vm313, %v575, 0.0
    %582 = vadd.xlane.f32.xlu0 %v581
    %v583 = vpop.xlane.xlu0 %582
    %v584 = vsel %vm320, %v577, 0.0
    %585 = vadd.xlane.f32.xlu0 %v584
    %v586 = vpop.xlane.xlu0 %585
    %v587 = vrcp.pop %v580
    %v588 = vmul.f32 %v573, %v587
    %v589 = vrcp.pop %v583
    %v590 = vmul.f32 %v575, %v589
    %v591 = vrcp.pop %v586
    %v592 = vmul.f32 %v577, %v591
    %593 = vrot.lane.b32.xlu0 %v187, 48
    %v594 = vpop.permute.xlu0 %593
    %595 = vrot.lane.b32.xlu0 %v190, 48
    %v596 = vpop.permute.xlu0 %595
    %597 = vrot.lane.b32.xlu0 %v195, 48
    %v598 = vpop.permute.xlu0 %597
    %v602 = vsel %vm313, %v588, 0
    %v605 = vsel %vm313, %v590, 0
    %v608 = vsel %vm313, %v592, 0
    %v610 = vsel %vm365, %v598, 0
    %612 = vmatprep.subr.mxu0 0.0
    %613 = vmatpush1.msra.mxu0 %v594
    %614 = vmatprep.subr.mxu0 0.0
    %615 = vmatpush1.msra.mxu0 %v596
    %616 = vmatprep.subr.mxu0 0.0
    %617 = vmatpush1.msra.mxu0 %v610
    %618 = vmatprep.subr.mxu0 0.0
    %619 = vmatpush1.msra.mxu0 0.0
    %620 = vmatprep.subr.mxu0 0.0
    %621 = vmatpush1.msra.mxu0 0.0
    %622 = vmatprep.subr.mxu0 0.0
    %623 = vmatpush1.msra.mxu0 0.0
    %624 = vmatprep.subr.mxu0 0.0
    %625 = vmatpush1.msra.mxu0 0.0
    %626 = vmatprep.subr.mxu0 0.0
    %627 = vmatpush1.msra.mxu0 0.0
    %628 = vmatprep.subr.mxu0 0.0
    %629 = vmatpush1.msra.mxu0 0.0
    %630 = vmatprep.subr.mxu0 0.0
    %631 = vmatpush1.msra.mxu0 0.0
    %632 = vmatprep.subr.mxu0 0.0
    %633 = vmatpush1.msra.mxu0 0.0
    %634 = vmatprep.subr.mxu0 0.0
    %635 = vmatpush1.msra.mxu0 0.0
    %636 = vmatprep.subr.mxu0 0.0
    %637 = vmatpush1.msra.mxu0 0.0
    %638 = vmatprep.subr.mxu0 0.0
    %639 = vmatpush1.msra.mxu0 0.0
    %640 = vmatprep.subr.mxu0 0.0
    %641 = vmatpush1.msra.mxu0 0.0
    %642 = vmatprep.subr.mxu0 0.0
    %643 = vmatpush1.msra.mxu0 0.0
    %644 = vmatprep.subr.mxu0 0.0
    %645 = vmatpush1.msra.mxu0 0.0
    %646 = vmatprep.subr.mxu0 0.0
    %647 = vmatpush1.msra.mxu0 0.0
    %648 = vmatprep.subr.mxu0 0.0
    %649 = vmatpush1.msra.mxu0 0.0
    %650 = vmatprep.subr.mxu0 0.0
    %651 = vmatpush1.msra.mxu0 0.0
    %652 = vmatprep.subr.mxu0 0.0
    %653 = vmatpush1.msra.mxu0 0.0
    %654 = vmatprep.subr.mxu0 0.0
    %655 = vmatpush1.msra.mxu0 0.0
    %656 = vmatprep.subr.mxu0 0.0
    %657 = vmatpush1.msra.mxu0 0.0
    %658 = vmatprep.subr.mxu0 0.0
    %659 = vmatpush1.msra.mxu0 0.0
    %660 = vmatprep.subr.mxu0 0.0
    %661 = vmatpush1.msra.mxu0 0.0
    %662 = vmatprep.subr.mxu0 0.0
    %663 = vmatpush1.msra.mxu0 0.0
    %664 = vmatprep.subr.mxu0 0.0
    %665 = vmatpush1.msra.mxu0 0.0
    %666 = vmatprep.subr.mxu0 0.0
    %667 = vmatpush1.msra.mxu0 0.0
    %668 = vmatprep.subr.mxu0 0.0
    %669 = vmatpush1.msra.mxu0 0.0
    %670 = vmatprep.subr.mxu0 0.0
    %671 = vmatpush1.msra.mxu0 0.0
    %672 = vmatprep.subr.mxu0 0.0
    %673 = vmatpush1.msra.mxu0 0.0
    %674 = vmatprep.subr.mxu0 0.0
    %675 = vmatpush1.msra.mxu0 0.0
    %676 = vmatprep.mubr.f32.mxu0 0.0
    %677 = vmatmul.mubr.f32.gmra.mrb[0].mxu0 %v602
    %v678 = vpop.f32.mrb[0].mxu0
    %v679 = vadd.f32 0.0, %v678
    %v680 = vpop.f32.mrb[0].mxu0
    %681 = vmatprep.mubr.f32.mxu0 0.0
    %682 = vmatmul.mubr.f32.gmra.mrb[0].mxu0 %v605
    %v683 = vpop.f32.mrb[0].mxu0
    %v684 = vadd.f32 0.0, %v683
    %v685 = vpop.f32.mrb[0].mxu0
    %686 = vmatprep.mubr.f32.mxu0 0.0
    %687 = vmatmul.mubr.f32.gmra.mrb[0].mxu0 %v608
    %v688 = vpop.f32.mrb[0].mxu0
    %v689 = vadd.f32 0.0, %v688
    %v690 = vpop.f32.mrb[0].mxu0
    %691 = vdwg.mxu0
    %v692 = vpack.c.bf16 %v684, %v679
    %v693 = vpack.c.bf16 %v689, %v689
    %v696 = vunpack.c.l.b16 %v202
    %v697 = vunpack.c.l.b16 %v203
    %v698 = vpack.c.b16 %v697, %v696
    %v701 = vsel %vm214, %v692, 0
    %v704 = vsel %vm214, %v693, 0
    %706 = vmatprep.subr.bf16.mxu0 0
    %707 = vmatpush1.bf16.msra.mxu0 %v698
    %708 = vmatprep.subr.bf16.mxu0 0
    %709 = vmatpush1.bf16.msra.mxu0 0
    %710 = vmatprep.subr.bf16.mxu0 0
    %711 = vmatpush1.bf16.msra.mxu0 0
    %712 = vmatprep.subr.bf16.mxu0 0
    %713 = vmatpush1.bf16.msra.mxu0 0
    %714 = vmatprep.subr.bf16.mxu0 0
    %715 = vmatpush1.bf16.msra.mxu0 0
    %716 = vmatprep.subr.bf16.mxu0 0
    %717 = vmatpush1.bf16.msra.mxu0 0
    %718 = vmatprep.subr.bf16.mxu0 0
    %719 = vmatpush1.bf16.msra.mxu0 0
    %720 = vmatprep.subr.bf16.mxu0 0
    %721 = vmatpush1.bf16.msra.mxu0 0
    %722 = vmatprep.subr.bf16.mxu0 0
    %723 = vmatpush1.bf16.msra.mxu0 0
    %724 = vmatprep.subr.bf16.mxu0 0
    %725 = vmatpush1.bf16.msra.mxu0 0
    %726 = vmatprep.subr.bf16.mxu0 0
    %727 = vmatpush1.bf16.msra.mxu0 0
    %728 = vmatprep.subr.bf16.mxu0 0
    %729 = vmatpush1.bf16.msra.mxu0 0
    %730 = vmatprep.subr.bf16.mxu0 0
    %731 = vmatpush1.bf16.msra.mxu0 0
    %732 = vmatprep.subr.bf16.mxu0 0
    %733 = vmatpush1.bf16.msra.mxu0 0
    %734 = vmatprep.subr.bf16.mxu0 0
    %735 = vmatpush1.bf16.msra.mxu0 0
    %736 = vmatprep.subr.bf16.mxu0 0
    %737 = vmatpush1.bf16.msra.mxu0 0
    %738 = vmatprep.mubr.bf16.mxu0 0
    %739 = vmatmul.mubr.bf16.gmra.mrb[0].mxu0 %v701
    %v740 = vpop.f32.mrb[0].mxu0
    %v741 = vadd.f32 0.0, %v740
    %v742 = vpop.f32.mrb[0].mxu0
    %v743 = vpop.f32.mrb[0].mxu0
    %v744 = vadd.f32 0.0, %v743
    %v745 = vpop.f32.mrb[0].mxu0
    %746 = vmatprep.mubr.bf16.mxu0 0
    %747 = vmatmul.mubr.bf16.gmra.mrb[0].mxu0 %v704
    %v748 = vpop.f32.mrb[0].mxu0
    %v749 = vadd.f32 0.0, %v748
    %v750 = vpop.f32.mrb[0].mxu0
    %v751 = vpop.f32.mrb[0].mxu0
    %v752 = vpop.f32.mrb[0].mxu0
    %753 = vdwg.mxu0
    %v756 = vunpack.c.l.b16 %v200
    %v757 = vunpack.c.l.b16 %v201
    %v758 = vpack.c.b16 %v757, %v756
    %v761 = vsel %vm214, %v448, 0
    %v764 = vsel %vm214, %v449, 0
    %766 = vmatprep.subr.bf16.mxu0 0
    %767 = vmatpush1.bf16.msra.mxu0 %v758
    %768 = vmatprep.subr.bf16.mxu0 0
    %769 = vmatpush1.bf16.msra.mxu0 0
    %770 = vmatprep.subr.bf16.mxu0 0
    %771 = vmatpush1.bf16.msra.mxu0 0
    %772 = vmatprep.subr.bf16.mxu0 0
    %773 = vmatpush1.bf16.msra.mxu0 0
    %774 = vmatprep.subr.bf16.mxu0 0
    %775 = vmatpush1.bf16.msra.mxu0 0
    %776 = vmatprep.subr.bf16.mxu0 0
    %777 = vmatpush1.bf16.msra.mxu0 0
    %778 = vmatprep.subr.bf16.mxu0 0
    %779 = vmatpush1.bf16.msra.mxu0 0
    %780 = vmatprep.subr.bf16.mxu0 0
    %781 = vmatpush1.bf16.msra.mxu0 0
    %782 = vmatprep.subr.bf16.mxu0 0
    %783 = vmatpush1.bf16.msra.mxu0 0
    %784 = vmatprep.subr.bf16.mxu0 0
    %785 = vmatpush1.bf16.msra.mxu0 0
    %786 = vmatprep.subr.bf16.mxu0 0
    %787 = vmatpush1.bf16.msra.mxu0 0
    %788 = vmatprep.subr.bf16.mxu0 0
    %789 = vmatpush1.bf16.msra.mxu0 0
    %790 = vmatprep.subr.bf16.mxu0 0
    %791 = vmatpush1.bf16.msra.mxu0 0
    %792 = vmatprep.subr.bf16.mxu0 0
    %793 = vmatpush1.bf16.msra.mxu0 0
    %794 = vmatprep.subr.bf16.mxu0 0
    %795 = vmatpush1.bf16.msra.mxu0 0
    %796 = vmatprep.subr.bf16.mxu0 0
    %797 = vmatpush1.bf16.msra.mxu0 0
    %798 = vmatprep.mubr.bf16.mxu0 0
    %799 = vmatmul.mubr.bf16.gmra.mrb[0].mxu0 %v761
    %v800 = vpop.f32.mrb[0].mxu0
    %v801 = vadd.f32 %v741, %v800
    %v802 = vpop.f32.mrb[0].mxu0
    %v803 = vpop.f32.mrb[0].mxu0
    %v804 = vadd.f32 %v744, %v803
    %v805 = vpop.f32.mrb[0].mxu0
    %806 = vmatprep.mubr.bf16.mxu0 0
    %807 = vmatmul.mubr.bf16.gmra.mrb[0].mxu0 %v764
    %v808 = vpop.f32.mrb[0].mxu0
    %v809 = vadd.f32 %v749, %v808
    %v810 = vpop.f32.mrb[0].mxu0
    %v811 = vpop.f32.mrb[0].mxu0
    %v812 = vpop.f32.mrb[0].mxu0
    %813 = vdwg.mxu0
    %v815 = vlaneseq
    %v816 = vshrl.u32 %v815, 7
    %v817 = vsub.s32 0, %v816
    %v818 = vrot.slane %v204, %v817
    %v820 = vadd.f32 %v801, %v818
    %v821 = vadd.f32 %v804, %v818
    %v822 = vadd.f32 %v809, %v818
    %v823 = vadd.f32 %v117, %v820
    %v824 = vadd.f32 %v118, %v821
    %v825 = vadd.f32 %v119, %v822
    %v826 = vld [vmem:[#allocation7 + $0x13] sm:$0x1]
    %v827 = vld [vmem:[#allocation7 + $0x14] sm:$0x1]
    %v828 = vsel %vm145, %v823, 0.0
    %829 = vadd.xlane.f32.xlu0 %v828
    %v830 = vpop.xlane.xlu0 %829
    %v831 = vsel %vm145, %v824, 0.0
    %832 = vadd.xlane.f32.xlu0 %v831
    %v833 = vpop.xlane.xlu0 %832
    %vm834 = vcmask 254976
    %v835 = vsel %vm834, %v825, 0.0
    %836 = vadd.xlane.f32.xlu0 %v835
    %v837 = vpop.xlane.xlu0 %836
    %v838 = vrcp.pop 32.0
    %v839 = vmul.f32 %v830, %v838
    %v840 = vmul.f32 %v833, %v838
    %v841 = vmul.f32 %v837, %v838
    %v842 = vsub.f32 %v823, %v839
    %v843 = vsub.f32 %v824, %v840
    %v844 = vsub.f32 %v825, %v841
    %v845 = vmul.f32 %v842, %v842
    %v846 = vmul.f32 %v843, %v843
    %v847 = vmul.f32 %v844, %v844
    %v848 = vsel %vm145, %v845, 0.0
    %849 = vadd.xlane.f32.xlu0 %v848
    %v850 = vpop.xlane.xlu0 %849
    %v851 = vsel %vm145, %v846, 0.0
    %852 = vadd.xlane.f32.xlu0 %v851
    %v853 = vpop.xlane.xlu0 %852
    %v854 = vsel %vm834, %v847, 0.0
    %855 = vadd.xlane.f32.xlu0 %v854
    %v856 = vpop.xlane.xlu0 %855
    %v857 = vmul.f32 %v850, %v838
    %v858 = vmul.f32 %v853, %v838
    %v859 = vmul.f32 %v856, %v838
    %v860 = vadd.f32 %v857, 1e-05
    %v861 = vadd.f32 %v858, 1e-05
    %v862 = vadd.f32 %v859, 1e-05
    %v863 = vrsqrt.pop %v860
    %v864 = vrsqrt.pop %v861
    %v865 = vrsqrt.pop %v862
    %v866 = vmul.f32 %v842, %v863
    %v867 = vmul.f32 %v843, %v864
    %v868 = vmul.f32 %v844, %v865
    %v870 = vlaneseq
    %v871 = vshrl.u32 %v870, 7
    %v872 = vsub.s32 0, %v871
    %v873 = vrot.slane %v826, %v872
    %v875 = vmul.f32 %v866, %v873
    %v876 = vmul.f32 %v867, %v873
    %v877 = vmul.f32 %v868, %v873
    %v879 = vlaneseq
    %v880 = vshrl.u32 %v879, 7
    %v881 = vsub.s32 0, %v880
    %v882 = vrot.slane %v827, %v881
    %v884 = vadd.f32 %v875, %v882
    %v885 = vadd.f32 %v876, %v882
    %v886 = vadd.f32 %v877, %v882
    %v887 = vld [vmem:[#allocation5 + $0x8] sm:$0xff]
    %v888 = vld [vmem:[#allocation5 + $0x10] sm:$0xff]
    %v889 = vld [vmem:[#allocation5 + $0x18] sm:$0xff]
    %v890 = vld [vmem:[#allocation5 + $0x20] sm:$0xff]
    %v891 = vld [vmem:[#allocation5 + $0x28] sm:$0xff]
    %v892 = vld [vmem:[#allocation5 + $0x30] sm:$0xff]
    %v893 = vld [vmem:[#allocation5 + $0x38] sm:$0xff]
    %v894 = vld [vmem:[#allocation5 + $0x40] sm:$0xff]
    %v895 = vld [vmem:[#allocation5 + $0x238] sm:$0xff]
    %v896 = vld [vmem:[#allocation5 + $0x240] sm:$0xff]
    %v897 = vld [vmem:[#allocation5 + $0x248] sm:$0xff]
    %v898 = vld [vmem:[#allocation5 + $0x250] sm:$0xff]
    %v899 = vld [vmem:[#allocation5 + $0x258] sm:$0xff]
    %v900 = vld [vmem:[#allocation5 + $0x260] sm:$0xff]
    %v901 = vld [vmem:[#allocation5 + $0x268] sm:$0xff]
    %v902 = vld [vmem:[#allocation5 + $0x270] sm:$0xff]
    %v903 = vld [vmem:[#allocation5 + $0x468] sm:$0xff]
    %v904 = vld [vmem:[#allocation5 + $0x470] sm:$0xff]
    %v905 = vld [vmem:[#allocation5 + $0x478] sm:$0xff]
    %v906 = vld [vmem:[#allocation5 + $0x480] sm:$0xff]
    %v907 = vld [vmem:[#allocation5 + $0x488] sm:$0xff]
    %v908 = vld [vmem:[#allocation5 + $0x490] sm:$0xff]
    %v909 = vld [vmem:[#allocation5 + $0x498] sm:$0xff]
    %v910 = vld [vmem:[#allocation5 + $0x4a0] sm:$0xff]
    %v911 = vld [vmem:[#allocation5 + $0x698] sm:$0xff]
    %v912 = vld [vmem:[#allocation5 + $0x6a0] sm:$0xff]
    %v913 = vld [vmem:[#allocation5 + $0x6a8] sm:$0xff]
    %v914 = vld [vmem:[#allocation5 + $0x6b0] sm:$0xff]
    %v915 = vld [vmem:[#allocation5 + $0x6b8] sm:$0xff]
    %v916 = vld [vmem:[#allocation5 + $0x6c0] sm:$0xff]
    %v917 = vld [vmem:[#allocation5 + $0x6c8] sm:$0xff]
    %v918 = vld [vmem:[#allocation5 + $0x6d0] sm:$0xff]
    %v919 = vld [vmem:[#allocation7 + $0x2] sm:$0xff]
    %v920 = vld [vmem:[#allocation7 + $0xa] sm:$0xff]
    %v921 = vld [vmem:[#allocation5 + $0x48] sm:$0xff]
    %v922 = vld [vmem:[#allocation5 + $0x50] sm:$0xff]
    %v923 = vld [vmem:[#allocation5 + $0x58] sm:$0xff]
    %v924 = vld [vmem:[#allocation5 + $0x60] sm:$0xff]
    %v925 = vld [vmem:[#allocation5 + $0x68] sm:$0xff]
    %v926 = vld [vmem:[#allocation5 + $0x70] sm:$0xff]
    %v927 = vld [vmem:[#allocation5 + $0x78] sm:$0xff]
    %v928 = vld [vmem:[#allocation5 + $0x80] sm:$0xff]
    %v929 = vld [vmem:[#allocation5 + $0x278] sm:$0xff]
    %v930 = vld [vmem:[#allocation5 + $0x280] sm:$0xff]
    %v931 = vld [vmem:[#allocation5 + $0x288] sm:$0xff]
    %v932 = vld [vmem:[#allocation5 + $0x290] sm:$0xff]
    %v933 = vld [vmem:[#allocation5 + $0x298] sm:$0xff]
    %v934 = vld [vmem:[#allocation5 + $0x2a0] sm:$0xff]
    %v935 = vld [vmem:[#allocation5 + $0x2a8] sm:$0xff]
    %v936 = vld [vmem:[#allocation5 + $0x2b0] sm:$0xff]
    %v937 = vld [vmem:[#allocation5 + $0x4a8] sm:$0xff]
    %v938 = vld [vmem:[#allocation5 + $0x4b0] sm:$0xff]
    %v939 = vld [vmem:[#allocation5 + $0x4b8] sm:$0xff]
    %v940 = vld [vmem:[#allocation5 + $0x4c0] sm:$0xff]
    %v941 = vld [vmem:[#allocation5 + $0x4c8] sm:$0xff]
    %v942 = vld [vmem:[#allocation5 + $0x4d0] sm:$0xff]
    %v943 = vld [vmem:[#allocation5 + $0x4d8] sm:$0xff]
    %v944 = vld [vmem:[#allocation5 + $0x4e0] sm:$0xff]
    %v945 = vld [vmem:[#allocation5 + $0x6d8] sm:$0xff]
    %v946 = vld [vmem:[#allocation5 + $0x6e0] sm:$0xff]
    %v947 = vld [vmem:[#allocation5 + $0x6e8] sm:$0xff]
    %v948 = vld [vmem:[#allocation5 + $0x6f0] sm:$0xff]
    %v949 = vld [vmem:[#allocation5 + $0x6f8] sm:$0xff]
    %v950 = vld [vmem:[#allocation5 + $0x700] sm:$0xff]
    %v951 = vld [vmem:[#allocation5 + $0x708] sm:$0xff]
    %v952 = vld [vmem:[#allocation5 + $0x710] sm:$0xff]
    %v953 = vld [vmem:[#allocation7 + $0x12] sm:$0x1]
    %v954 = vpack.c.bf16 %v885, %v884
    %v955 = vpack.c.bf16 %v886, %v886
    %v958 = vlaneseq
    %v959 = vshrl.u32 %v958, 7
    %v960 = vsub.s32 0, %v959
    %v961 = vrot.slane %v919, %v960
    %v962 = vlaneseq
    %v963 = vshrl.u32 %v962, 7
    %v964 = vsub.s32 1, %v963
    %v965 = vrot.slane %v919, %v964
    %v966 = vlaneseq
    %v967 = vshrl.u32 %v966, 7
    %v968 = vsub.s32 2, %v967
    %v969 = vrot.slane %v919, %v968
    %v970 = vlaneseq
    %v971 = vshrl.u32 %v970, 7
    %v972 = vsub.s32 3, %v971
    %v973 = vrot.slane %v919, %v972
    %v974 = vlaneseq
    %v975 = vshrl.u32 %v974, 7
    %v976 = vsub.s32 4, %v975
    %v977 = vrot.slane %v919, %v976
    %v978 = vlaneseq
    %v979 = vshrl.u32 %v978, 7
    %v980 = vsub.s32 5, %v979
    %v981 = vrot.slane %v919, %v980
    %v982 = vlaneseq
    %v983 = vshrl.u32 %v982, 7
    %v984 = vsub.s32 6, %v983
    %v985 = vrot.slane %v919, %v984
    %v986 = vlaneseq
    %v987 = vshrl.u32 %v986, 7
    %v988 = vsub.s32 7, %v987
    %v989 = vrot.slane %v919, %v988
    %v990 = vlaneseq
    %v991 = vshrl.u32 %v990, 7
    %v992 = vsub.s32 0, %v991
    %v993 = vrot.slane %v920, %v992
    %v994 = vlaneseq
    %v995 = vshrl.u32 %v994, 7
    %v996 = vsub.s32 1, %v995
    %v997 = vrot.slane %v920, %v996
    %v998 = vlaneseq
    %v999 = vshrl.u32 %v998, 7
    %v1000 = vsub.s32 2, %v999
    %v1001 = vrot.slane %v920, %v1000
    %v1002 = vlaneseq
    %v1003 = vshrl.u32 %v1002, 7
    %v1004 = vsub.s32 3, %v1003
    %v1005 = vrot.slane %v920, %v1004
    %v1006 = vlaneseq
    %v1007 = vshrl.u32 %v1006, 7
    %v1008 = vsub.s32 4, %v1007
    %v1009 = vrot.slane %v920, %v1008
    %v1010 = vlaneseq
    %v1011 = vshrl.u32 %v1010, 7
    %v1012 = vsub.s32 5, %v1011
    %v1013 = vrot.slane %v920, %v1012
    %v1014 = vlaneseq
    %v1015 = vshrl.u32 %v1014, 7
    %v1016 = vsub.s32 6, %v1015
    %v1017 = vrot.slane %v920, %v1016
    %v1018 = vlaneseq
    %v1019 = vshrl.u32 %v1018, 7
    %v1020 = vsub.s32 7, %v1019
    %v1021 = vrot.slane %v920, %v1020
    %v1070 = vunpack.c.l.b16 %v887
    %v1071 = vunpack.c.h.b16 %v887
    %v1072 = vunpack.c.l.b16 %v888
    %v1073 = vunpack.c.h.b16 %v888
    %v1074 = vunpack.c.l.b16 %v889
    %v1075 = vunpack.c.h.b16 %v889
    %v1076 = vunpack.c.l.b16 %v890
    %v1077 = vunpack.c.h.b16 %v890
    %v1078 = vunpack.c.l.b16 %v891
    %v1079 = vunpack.c.h.b16 %v891
    %v1080 = vunpack.c.l.b16 %v892
    %v1081 = vunpack.c.h.b16 %v892
    %v1082 = vunpack.c.l.b16 %v893
    %v1083 = vunpack.c.h.b16 %v893
    %v1084 = vunpack.c.l.b16 %v894
    %v1085 = vunpack.c.h.b16 %v894
    %v1086 = vunpack.c.l.b16 %v895
    %v1087 = vunpack.c.h.b16 %v895
    %v1088 = vunpack.c.l.b16 %v896
    %v1089 = vunpack.c.h.b16 %v896
    %v1090 = vunpack.c.l.b16 %v897
    %v1091 = vunpack.c.h.b16 %v897
    %v1092 = vunpack.c.l.b16 %v898
    %v1093 = vunpack.c.h.b16 %v898
    %v1094 = vunpack.c.l.b16 %v899
    %v1095 = vunpack.c.h.b16 %v899
    %v1096 = vunpack.c.l.b16 %v900
    %v1097 = vunpack.c.h.b16 %v900
    %v1098 = vunpack.c.l.b16 %v901
    %v1099 = vunpack.c.h.b16 %v901
    %v1100 = vunpack.c.l.b16 %v902
    %v1101 = vunpack.c.h.b16 %v902
    %v1102 = vunpack.c.l.b16 %v903
    %v1103 = vunpack.c.h.b16 %v903
    %v1104 = vunpack.c.l.b16 %v904
    %v1105 = vunpack.c.h.b16 %v904
    %v1106 = vunpack.c.l.b16 %v905
    %v1107 = vunpack.c.h.b16 %v905
    %v1108 = vunpack.c.l.b16 %v906
    %v1109 = vunpack.c.h.b16 %v906
    %v1110 = vunpack.c.l.b16 %v907
    %v1111 = vunpack.c.h.b16 %v907
    %v1112 = vunpack.c.l.b16 %v908
    %v1113 = vunpack.c.h.b16 %v908
    %v1114 = vunpack.c.l.b16 %v909
    %v1115 = vunpack.c.h.b16 %v909
    %v1116 = vunpack.c.l.b16 %v910
    %v1117 = vunpack.c.h.b16 %v910
    %v1118 = vunpack.c.l.b16 %v911
    %v1119 = vunpack.c.h.b16 %v911
    %v1120 = vunpack.c.l.b16 %v912
    %v1121 = vunpack.c.h.b16 %v912
    %v1122 = vunpack.c.l.b16 %v913
    %v1123 = vunpack.c.h.b16 %v913
    %v1124 = vunpack.c.l.b16 %v914
    %v1125 = vunpack.c.h.b16 %v914
    %v1126 = vunpack.c.l.b16 %v915
    %v1127 = vunpack.c.h.b16 %v915
    %v1128 = vunpack.c.l.b16 %v916
    %v1129 = vunpack.c.h.b16 %v916
    %v1130 = vunpack.c.l.b16 %v917
    %v1131 = vunpack.c.h.b16 %v917
    %v1132 = vunpack.c.l.b16 %v918
    %v1133 = vunpack.c.h.b16 %v918
    %v1134 = vpack.c.b16 %v1086, %v1070
    %v1135 = vpack.c.b16 %v1087, %v1071
    %v1136 = vpack.c.b16 %v1088, %v1072
    %v1137 = vpack.c.b16 %v1089, %v1073
    %v1138 = vpack.c.b16 %v1090, %v1074
    %v1139 = vpack.c.b16 %v1091, %v1075
    %v1140 = vpack.c.b16 %v1092, %v1076
    %v1141 = vpack.c.b16 %v1093, %v1077
    %v1142 = vpack.c.b16 %v1094, %v1078
    %v1143 = vpack.c.b16 %v1095, %v1079
    %v1144 = vpack.c.b16 %v1096, %v1080
    %v1145 = vpack.c.b16 %v1097, %v1081
    %v1146 = vpack.c.b16 %v1098, %v1082
    %v1147 = vpack.c.b16 %v1099, %v1083
    %v1148 = vpack.c.b16 %v1100, %v1084
    %v1149 = vpack.c.b16 %v1101, %v1085
    %v1150 = vpack.c.b16 %v1118, %v1102
    %v1151 = vpack.c.b16 %v1119, %v1103
    %v1152 = vpack.c.b16 %v1120, %v1104
    %v1153 = vpack.c.b16 %v1121, %v1105
    %v1154 = vpack.c.b16 %v1122, %v1106
    %v1155 = vpack.c.b16 %v1123, %v1107
    %v1156 = vpack.c.b16 %v1124, %v1108
    %v1157 = vpack.c.b16 %v1125, %v1109
    %v1158 = vpack.c.b16 %v1126, %v1110
    %v1159 = vpack.c.b16 %v1127, %v1111
    %v1160 = vpack.c.b16 %v1128, %v1112
    %v1161 = vpack.c.b16 %v1129, %v1113
    %v1162 = vpack.c.b16 %v1130, %v1114
    %v1163 = vpack.c.b16 %v1131, %v1115
    %v1164 = vpack.c.b16 %v1132, %v1116
    %v1165 = vpack.c.b16 %v1133, %v1117
    %v1199 = vsel %vm145, %v954, 0
    %v1202 = vsel %vm145, %v955, 0
    %1204 = vmatprep.subr.bf16.mxu0 %v1135
    %1205 = vmatpush1.bf16.msra.mxu0 %v1134
    %1206 = vmatprep.subr.bf16.mxu0 %v1151
    %1207 = vmatpush1.bf16.msra.mxu0 %v1150
    %1208 = vmatprep.subr.bf16.mxu0 0
    %1209 = vmatpush1.bf16.msra.mxu0 0
    %1210 = vmatprep.subr.bf16.mxu0 0
    %1211 = vmatpush1.bf16.msra.mxu0 0
    %1212 = vmatprep.subr.bf16.mxu0 0
    %1213 = vmatpush1.bf16.msra.mxu0 0
    %1214 = vmatprep.subr.bf16.mxu0 0
    %1215 = vmatpush1.bf16.msra.mxu0 0
    %1216 = vmatprep.subr.bf16.mxu0 0
    %1217 = vmatpush1.bf16.msra.mxu0 0
    %1218 = vmatprep.subr.bf16.mxu0 0
    %1219 = vmatpush1.bf16.msra.mxu0 0
    %1220 = vmatprep.subr.bf16.mxu0 0
    %1221 = vmatpush1.bf16.msra.mxu0 0
    %1222 = vmatprep.subr.bf16.mxu0 0
    %1223 = vmatpush1.bf16.msra.mxu0 0
    %1224 = vmatprep.subr.bf16.mxu0 0
    %1225 = vmatpush1.bf16.msra.mxu0 0
    %1226 = vmatprep.subr.bf16.mxu0 0
    %1227 = vmatpush1.bf16.msra.mxu0 0
    %1228 = vmatprep.subr.bf16.mxu0 0
    %1229 = vmatpush1.bf16.msra.mxu0 0
    %1230 = vmatprep.subr.bf16.mxu0 0
    %1231 = vmatpush1.bf16.msra.mxu0 0
    %1232 = vmatprep.subr.bf16.mxu0 0
    %1233 = vmatpush1.bf16.msra.mxu0 0
    %1234 = vmatprep.subr.bf16.mxu0 0
    %1235 = vmatpush1.bf16.msra.mxu0 0
    %1236 = vmatprep.mubr.bf16.mxu0 0
    %1237 = vmatmul.mubr.bf16.gmra.mrb[0].mxu0 %v1199
    %v1238 = vpop.f32.mrb[0].mxu0
    %v1239 = vadd.f32 %v961, %v1238
    %v1240 = vpop.f32.mrb[0].mxu0
    %v1241 = vadd.f32 %v965, %v1240
    %v1242 = vpop.f32.mrb[0].mxu0
    %v1243 = vadd.f32 %v961, %v1242
    %v1244 = vpop.f32.mrb[0].mxu0
    %v1245 = vadd.f32 %v965, %v1244
    %1246 = vmatprep.mubr.bf16.mxu0 0
    %1247 = vmatmul.mubr.bf16.gmra.mrb[0].mxu0 %v1202
    %v1248 = vpop.f32.mrb[0].mxu0
    %v1249 = vadd.f32 %v961, %v1248
    %v1250 = vpop.f32.mrb[0].mxu0
    %v1251 = vadd.f32 %v965, %v1250
    %v1252 = vpop.f32.mrb[0].mxu0
    %v1253 = vpop.f32.mrb[0].mxu0
    %1254 = vdwg.mxu0
    %1255 = vmatprep.subr.bf16.mxu0 %v1137
    %1256 = vmatpush1.bf16.msra.mxu0 %v1136
    %1257 = vmatprep.subr.bf16.mxu0 %v1153
    %1258 = vmatpush1.bf16.msra.mxu0 %v1152
    %1259 = vmatprep.subr.bf16.mxu0 0
    %1260 = vmatpush1.bf16.msra.mxu0 0
    %1261 = vmatprep.subr.bf16.mxu0 0
    %1262 = vmatpush1.bf16.msra.mxu0 0
    %1263 = vmatprep.subr.bf16.mxu0 0
    %1264 = vmatpush1.bf16.msra.mxu0 0
    %1265 = vmatprep.subr.bf16.mxu0 0
    %1266 = vmatpush1.bf16.msra.mxu0 0
    %1267 = vmatprep.subr.bf16.mxu0 0
    %1268 = vmatpush1.bf16.msra.mxu0 0
    %1269 = vmatprep.subr.bf16.mxu0 0
    %1270 = vmatpush1.bf16.msra.mxu0 0
    %1271 = vmatprep.subr.bf16.mxu0 0
    %1272 = vmatpush1.bf16.msra.mxu0 0
    %1273 = vmatprep.subr.bf16.mxu0 0
    %1274 = vmatpush1.bf16.msra.mxu0 0
    %1275 = vmatprep.subr.bf16.mxu0 0
    %1276 = vmatpush1.bf16.msra.mxu0 0
    %1277 = vmatprep.subr.bf16.mxu0 0
    %1278 = vmatpush1.bf16.msra.mxu0 0
    %1279 = vmatprep.subr.bf16.mxu0 0
    %1280 = vmatpush1.bf16.msra.mxu0 0
    %1281 = vmatprep.subr.bf16.mxu0 0
    %1282 = vmatpush1.bf16.msra.mxu0 0
    %1283 = vmatprep.subr.bf16.mxu0 0
    %1284 = vmatpush1.bf16.msra.mxu0 0
    %1285 = vmatprep.subr.bf16.mxu0 0
    %1286 = vmatpush1.bf16.msra.mxu0 0
    %1287 = vmatprep.mubr.bf16.mxu0 0
    %1288 = vmatmul.mubr.bf16.gmra.mrb[0].mxu0 %v1199
    %v1289 = vpop.f32.mrb[0].mxu0
    %v1290 = vadd.f32 %v969, %v1289
    %v1291 = vpop.f32.mrb[0].mxu0
    %v1292 = vadd.f32 %v973, %v1291
    %v1293 = vpop.f32.mrb[0].mxu0
    %v1294 = vadd.f32 %v969, %v1293
    %v1295 = vpop.f32.mrb[0].mxu0
    %v1296 = vadd.f32 %v973, %v1295
    %1297 = vmatprep.mubr.bf16.mxu0 0
    %1298 = vmatmul.mubr.bf16.gmra.mrb[0].mxu0 %v1202
    %v1299 = vpop.f32.mrb[0].mxu0
    %v1300 = vadd.f32 %v969, %v1299
    %v1301 = vpop.f32.mrb[0].mxu0
    %v1302 = vadd.f32 %v973, %v1301
    %v1303 = vpop.f32.mrb[0].mxu0
    %v1304 = vpop.f32.mrb[0].mxu0
    %1305 = vdwg.mxu0
    %1306 = vmatprep.subr.bf16.mxu0 %v1139
    %1307 = vmatpush1.bf16.msra.mxu0 %v1138
    %1308 = vmatprep.subr.bf16.mxu0 %v1155
    %1309 = vmatpush1.bf16.msra.mxu0 %v1154
    %1310 = vmatprep.subr.bf16.mxu0 0
    %1311 = vmatpush1.bf16.msra.mxu0 0
    %1312 = vmatprep.subr.bf16.mxu0 0
    %1313 = vmatpush1.bf16.msra.mxu0 0
    %1314 = vmatprep.subr.bf16.mxu0 0
    %1315 = vmatpush1.bf16.msra.mxu0 0
    %1316 = vmatprep.subr.bf16.mxu0 0
    %1317 = vmatpush1.bf16.msra.mxu0 0
    %1318 = vmatprep.subr.bf16.mxu0 0
    %1319 = vmatpush1.bf16.msra.mxu0 0
    %1320 = vmatprep.subr.bf16.mxu0 0
    %1321 = vmatpush1.bf16.msra.mxu0 0
    %1322 = vmatprep.subr.bf16.mxu0 0
    %1323 = vmatpush1.bf16.msra.mxu0 0
    %1324 = vmatprep.subr.bf16.mxu0 0
    %1325 = vmatpush1.bf16.msra.mxu0 0
    %1326 = vmatprep.subr.bf16.mxu0 0
    %1327 = vmatpush1.bf16.msra.mxu0 0
    %1328 = vmatprep.subr.bf16.mxu0 0
    %1329 = vmatpush1.bf16.msra.mxu0 0
    %1330 = vmatprep.subr.bf16.mxu0 0
    %1331 = vmatpush1.bf16.msra.mxu0 0
    %1332 = vmatprep.subr.bf16.mxu0 0
    %1333 = vmatpush1.bf16.msra.mxu0 0
    %1334 = vmatprep.subr.bf16.mxu0 0
    %1335 = vmatpush1.bf16.msra.mxu0 0
    %1336 = vmatprep.subr.bf16.mxu0 0
    %1337 = vmatpush1.bf16.msra.mxu0 0
    %1338 = vmatprep.mubr.bf16.mxu0 0
    %1339 = vmatmul.mubr.bf16.gmra.mrb[0].mxu0 %v1199
    %v1340 = vpop.f32.mrb[0].mxu0
    %v1341 = vadd.f32 %v977, %v1340
    %v1342 = vpop.f32.mrb[0].mxu0
    %v1343 = vadd.f32 %v981, %v1342
    %v1344 = vpop.f32.mrb[0].mxu0
    %v1345 = vadd.f32 %v977, %v1344
    %v1346 = vpop.f32.mrb[0].mxu0
    %v1347 = vadd.f32 %v981, %v1346
    %1348 = vmatprep.mubr.bf16.mxu0 0
    %1349 = vmatmul.mubr.bf16.gmra.mrb[0].mxu0 %v1202
    %v1350 = vpop.f32.mrb[0].mxu0
    %v1351 = vadd.f32 %v977, %v1350
    %v1352 = vpop.f32.mrb[0].mxu0
    %v1353 = vadd.f32 %v981, %v1352
    %v1354 = vpop.f32.mrb[0].mxu0
    %v1355 = vpop.f32.mrb[0].mxu0
    %1356 = vdwg.mxu0
    %1357 = vmatprep.subr.bf16.mxu0 %v1141
    %1358 = vmatpush1.bf16.msra.mxu0 %v1140
    %1359 = vmatprep.subr.bf16.mxu0 %v1157
    %1360 = vmatpush1.bf16.msra.mxu0 %v1156
    %1361 = vmatprep.subr.bf16.mxu0 0
    %1362 = vmatpush1.bf16.msra.mxu0 0
    %1363 = vmatprep.subr.bf16.mxu0 0
    %1364 = vmatpush1.bf16.msra.mxu0 0
    %1365 = vmatprep.subr.bf16.mxu0 0
    %1366 = vmatpush1.bf16.msra.mxu0 0
    %1367 = vmatprep.subr.bf16.mxu0 0
    %1368 = vmatpush1.bf16.msra.mxu0 0
    %1369 = vmatprep.subr.bf16.mxu0 0
    %1370 = vmatpush1.bf16.msra.mxu0 0
    %1371 = vmatprep.subr.bf16.mxu0 0
    %1372 = vmatpush1.bf16.msra.mxu0 0
    %1373 = vmatprep.subr.bf16.mxu0 0
    %1374 = vmatpush1.bf16.msra.mxu0 0
    %1375 = vmatprep.subr.bf16.mxu0 0
    %1376 = vmatpush1.bf16.msra.mxu0 0
    %1377 = vmatprep.subr.bf16.mxu0 0
    %1378 = vmatpush1.bf16.msra.mxu0 0
    %1379 = vmatprep.subr.bf16.mxu0 0
    %1380 = vmatpush1.bf16.msra.mxu0 0
    %1381 = vmatprep.subr.bf16.mxu0 0
    %1382 = vmatpush1.bf16.msra.mxu0 0
    %1383 = vmatprep.subr.bf16.mxu0 0
    %1384 = vmatpush1.bf16.msra.mxu0 0
    %1385 = vmatprep.subr.bf16.mxu0 0
    %1386 = vmatpush1.bf16.msra.mxu0 0
    %1387 = vmatprep.subr.bf16.mxu0 0
    %1388 = vmatpush1.bf16.msra.mxu0 0
    %1389 = vmatprep.mubr.bf16.mxu0 0
    %1390 = vmatmul.mubr.bf16.gmra.mrb[0].mxu0 %v1199
    %v1391 = vpop.f32.mrb[0].mxu0
    %v1392 = vadd.f32 %v985, %v1391
    %v1393 = vpop.f32.mrb[0].mxu0
    %v1394 = vadd.f32 %v989, %v1393
    %v1395 = vpop.f32.mrb[0].mxu0
    %v1396 = vadd.f32 %v985, %v1395
    %v1397 = vpop.f32.mrb[0].mxu0
    %v1398 = vadd.f32 %v989, %v1397
    %1399 = vmatprep.mubr.bf16.mxu0 0
    %1400 = vmatmul.mubr.bf16.gmra.mrb[0].mxu0 %v1202
    %v1401 = vpop.f32.mrb[0].mxu0
    %v1402 = vadd.f32 %v985, %v1401
    %v1403 = vpop.f32.mrb[0].mxu0
    %v1404 = vadd.f32 %v989, %v1403
    %v1405 = vpop.f32.mrb[0].mxu0
    %v1406 = vpop.f32.mrb[0].mxu0
    %1407 = vdwg.mxu0
    %1408 = vmatprep.subr.bf16.mxu0 %v1143
    %1409 = vmatpush1.bf16.msra.mxu0 %v1142
    %1410 = vmatprep.subr.bf16.mxu0 %v1159
    %1411 = vmatpush1.bf16.msra.mxu0 %v1158
    %1412 = vmatprep.subr.bf16.mxu0 0
    %1413 = vmatpush1.bf16.msra.mxu0 0
    %1414 = vmatprep.subr.bf16.mxu0 0
    %1415 = vmatpush1.bf16.msra.mxu0 0
    %1416 = vmatprep.subr.bf16.mxu0 0
    %1417 = vmatpush1.bf16.msra.mxu0 0
    %1418 = vmatprep.subr.bf16.mxu0 0
    %1419 = vmatpush1.bf16.msra.mxu0 0
    %1420 = vmatprep.subr.bf16.mxu0 0
    %1421 = vmatpush1.bf16.msra.mxu0 0
    %1422 = vmatprep.subr.bf16.mxu0 0
    %1423 = vmatpush1.bf16.msra.mxu0 0
    %1424 = vmatprep.subr.bf16.mxu0 0
    %1425 = vmatpush1.bf16.msra.mxu0 0
    %1426 = vmatprep.subr.bf16.mxu0 0
    %1427 = vmatpush1.bf16.msra.mxu0 0
    %1428 = vmatprep.subr.bf16.mxu0 0
    %1429 = vmatpush1.bf16.msra.mxu0 0
    %1430 = vmatprep.subr.bf16.mxu0 0
    %1431 = vmatpush1.bf16.msra.mxu0 0
    %1432 = vmatprep.subr.bf16.mxu0 0
    %1433 = vmatpush1.bf16.msra.mxu0 0
    %1434 = vmatprep.subr.bf16.mxu0 0
    %1435 = vmatpush1.bf16.msra.mxu0 0
    %1436 = vmatprep.subr.bf16.mxu0 0
    %1437 = vmatpush1.bf16.msra.mxu0 0
    %1438 = vmatprep.subr.bf16.mxu0 0
    %1439 = vmatpush1.bf16.msra.mxu0 0
    %1440 = vmatprep.mubr.bf16.mxu0 0
    %1441 = vmatmul.mubr.bf16.gmra.mrb[0].mxu0 %v1199
    %v1442 = vpop.f32.mrb[0].mxu0
    %v1443 = vadd.f32 %v993, %v1442
    %v1444 = vpop.f32.mrb[0].mxu0
    %v1445 = vadd.f32 %v997, %v1444
    %v1446 = vpop.f32.mrb[0].mxu0
    %v1447 = vadd.f32 %v993, %v1446
    %v1448 = vpop.f32.mrb[0].mxu0
    %v1449 = vadd.f32 %v997, %v1448
    %1450 = vmatprep.mubr.bf16.mxu0 0
    %1451 = vmatmul.mubr.bf16.gmra.mrb[0].mxu0 %v1202
    %v1452 = vpop.f32.mrb[0].mxu0
    %v1453 = vadd.f32 %v993, %v1452
    %v1454 = vpop.f32.mrb[0].mxu0
    %v1455 = vadd.f32 %v997, %v1454
    %v1456 = vpop.f32.mrb[0].mxu0
    %v1457 = vpop.f32.mrb[0].mxu0
    %1458 = vdwg.mxu0
    %1459 = vmatprep.subr.bf16.mxu0 %v1145
    %1460 = vmatpush1.bf16.msra.mxu0 %v1144
    %1461 = vmatprep.subr.bf16.mxu0 %v1161
    %1462 = vmatpush1.bf16.msra.mxu0 %v1160
    %1463 = vmatprep.subr.bf16.mxu0 0
    %1464 = vmatpush1.bf16.msra.mxu0 0
    %1465 = vmatprep.subr.bf16.mxu0 0
    %1466 = vmatpush1.bf16.msra.mxu0 0
    %1467 = vmatprep.subr.bf16.mxu0 0
    %1468 = vmatpush1.bf16.msra.mxu0 0
    %1469 = vmatprep.subr.bf16.mxu0 0
    %1470 = vmatpush1.bf16.msra.mxu0 0
    %1471 = vmatprep.subr.bf16.mxu0 0
    %1472 = vmatpush1.bf16.msra.mxu0 0
    %1473 = vmatprep.subr.bf16.mxu0 0
    %1474 = vmatpush1.bf16.msra.mxu0 0
    %1475 = vmatprep.subr.bf16.mxu0 0
    %1476 = vmatpush1.bf16.msra.mxu0 0
    %1477 = vmatprep.subr.bf16.mxu0 0
    %1478 = vmatpush1.bf16.msra.mxu0 0
    %1479 = vmatprep.subr.bf16.mxu0 0
    %1480 = vmatpush1.bf16.msra.mxu0 0
    %1481 = vmatprep.subr.bf16.mxu0 0
    %1482 = vmatpush1.bf16.msra.mxu0 0
    %1483 = vmatprep.subr.bf16.mxu0 0
    %1484 = vmatpush1.bf16.msra.mxu0 0
    %1485 = vmatprep.subr.bf16.mxu0 0
    %1486 = vmatpush1.bf16.msra.mxu0 0
    %1487 = vmatprep.subr.bf16.mxu0 0
    %1488 = vmatpush1.bf16.msra.mxu0 0
    %1489 = vmatprep.subr.bf16.mxu0 0
    %1490 = vmatpush1.bf16.msra.mxu0 0
    %1491 = vmatprep.mubr.bf16.mxu0 0
    %1492 = vmatmul.mubr.bf16.gmra.mrb[0].mxu0 %v1199
    %v1493 = vpop.f32.mrb[0].mxu0
    %v1494 = vadd.f32 %v1001, %v1493
    %v1495 = vpop.f32.mrb[0].mxu0
    %v1496 = vadd.f32 %v1005, %v1495
    %v1497 = vpop.f32.mrb[0].mxu0
    %v1498 = vadd.f32 %v1001, %v1497
    %v1499 = vpop.f32.mrb[0].mxu0
    %v1500 = vadd.f32 %v1005, %v1499
    %1501 = vmatprep.mubr.bf16.mxu0 0
    %1502 = vmatmul.mubr.bf16.gmra.mrb[0].mxu0 %v1202
    %v1503 = vpop.f32.mrb[0].mxu0
    %v1504 = vadd.f32 %v1001, %v1503
    %v1505 = vpop.f32.mrb[0].mxu0
    %v1506 = vadd.f32 %v1005, %v1505
    %v1507 = vpop.f32.mrb[0].mxu0
    %v1508 = vpop.f32.mrb[0].mxu0
    %1509 = vdwg.mxu0
    %1510 = vmatprep.subr.bf16.mxu0 %v1147
    %1511 = vmatpush1.bf16.msra.mxu0 %v1146
    %1512 = vmatprep.subr.bf16.mxu0 %v1163
    %1513 = vmatpush1.bf16.msra.mxu0 %v1162
    %1514 = vmatprep.subr.bf16.mxu0 0
    %1515 = vmatpush1.bf16.msra.mxu0 0
    %1516 = vmatprep.subr.bf16.mxu0 0
    %1517 = vmatpush1.bf16.msra.mxu0 0
    %1518 = vmatprep.subr.bf16.mxu0 0
    %1519 = vmatpush1.bf16.msra.mxu0 0
    %1520 = vmatprep.subr.bf16.mxu0 0
    %1521 = vmatpush1.bf16.msra.mxu0 0
    %1522 = vmatprep.subr.bf16.mxu0 0
    %1523 = vmatpush1.bf16.msra.mxu0 0
    %1524 = vmatprep.subr.bf16.mxu0 0
    %1525 = vmatpush1.bf16.msra.mxu0 0
    %1526 = vmatprep.subr.bf16.mxu0 0
    %1527 = vmatpush1.bf16.msra.mxu0 0
    %1528 = vmatprep.subr.bf16.mxu0 0
    %1529 = vmatpush1.bf16.msra.mxu0 0
    %1530 = vmatprep.subr.bf16.mxu0 0
    %1531 = vmatpush1.bf16.msra.mxu0 0
    %1532 = vmatprep.subr.bf16.mxu0 0
    %1533 = vmatpush1.bf16.msra.mxu0 0
    %1534 = vmatprep.subr.bf16.mxu0 0
    %1535 = vmatpush1.bf16.msra.mxu0 0
    %1536 = vmatprep.subr.bf16.mxu0 0
    %1537 = vmatpush1.bf16.msra.mxu0 0
    %1538 = vmatprep.subr.bf16.mxu0 0
    %1539 = vmatpush1.bf16.msra.mxu0 0
    %1540 = vmatprep.subr.bf16.mxu0 0
    %1541 = vmatpush1.bf16.msra.mxu0 0
    %1542 = vmatprep.mubr.bf16.mxu0 0
    %1543 = vmatmul.mubr.bf16.gmra.mrb[0].mxu0 %v1199
    %v1544 = vpop.f32.mrb[0].mxu0
    %v1545 = vadd.f32 %v1009, %v1544
    %v1546 = vpop.f32.mrb[0].mxu0
    %v1547 = vadd.f32 %v1013, %v1546
    %v1548 = vpop.f32.mrb[0].mxu0
    %v1549 = vadd.f32 %v1009, %v1548
    %v1550 = vpop.f32.mrb[0].mxu0
    %v1551 = vadd.f32 %v1013, %v1550
    %1552 = vmatprep.mubr.bf16.mxu0 0
    %1553 = vmatmul.mubr.bf16.gmra.mrb[0].mxu0 %v1202
    %v1554 = vpop.f32.mrb[0].mxu0
    %v1555 = vadd.f32 %v1009, %v1554
    %v1556 = vpop.f32.mrb[0].mxu0
    %v1557 = vadd.f32 %v1013, %v1556
    %v1558 = vpop.f32.mrb[0].mxu0
    %v1559 = vpop.f32.mrb[0].mxu0
    %1560 = vdwg.mxu0
    %1561 = vmatprep.subr.bf16.mxu0 %v1149
    %1562 = vmatpush1.bf16.msra.mxu0 %v1148
    %1563 = vmatprep.subr.bf16.mxu0 %v1165
    %1564 = vmatpush1.bf16.msra.mxu0 %v1164
    %1565 = vmatprep.subr.bf16.mxu0 0
    %1566 = vmatpush1.bf16.msra.mxu0 0
    %1567 = vmatprep.subr.bf16.mxu0 0
    %1568 = vmatpush1.bf16.msra.mxu0 0
    %1569 = vmatprep.subr.bf16.mxu0 0
    %1570 = vmatpush1.bf16.msra.mxu0 0
    %1571 = vmatprep.subr.bf16.mxu0 0
    %1572 = vmatpush1.bf16.msra.mxu0 0
    %1573 = vmatprep.subr.bf16.mxu0 0
    %1574 = vmatpush1.bf16.msra.mxu0 0
    %1575 = vmatprep.subr.bf16.mxu0 0
    %1576 = vmatpush1.bf16.msra.mxu0 0
    %1577 = vmatprep.subr.bf16.mxu0 0
    %1578 = vmatpush1.bf16.msra.mxu0 0
    %1579 = vmatprep.subr.bf16.mxu0 0
    %1580 = vmatpush1.bf16.msra.mxu0 0
    %1581 = vmatprep.subr.bf16.mxu0 0
    %1582 = vmatpush1.bf16.msra.mxu0 0
    %1583 = vmatprep.subr.bf16.mxu0 0
    %1584 = vmatpush1.bf16.msra.mxu0 0
    %1585 = vmatprep.subr.bf16.mxu0 0
    %1586 = vmatpush1.bf16.msra.mxu0 0
    %1587 = vmatprep.subr.bf16.mxu0 0
    %1588 = vmatpush1.bf16.msra.mxu0 0
    %1589 = vmatprep.subr.bf16.mxu0 0
    %1590 = vmatpush1.bf16.msra.mxu0 0
    %1591 = vmatprep.subr.bf16.mxu0 0
    %1592 = vmatpush1.bf16.msra.mxu0 0
    %1593 = vmatprep.mubr.bf16.mxu0 0
    %1594 = vmatmul.mubr.bf16.gmra.mrb[0].mxu0 %v1199
    %v1595 = vpop.f32.mrb[0].mxu0
    %v1596 = vadd.f32 %v1017, %v1595
    %v1597 = vpop.f32.mrb[0].mxu0
    %v1598 = vadd.f32 %v1021, %v1597
    %v1599 = vpop.f32.mrb[0].mxu0
    %v1600 = vadd.f32 %v1017, %v1599
    %v1601 = vpop.f32.mrb[0].mxu0
    %v1602 = vadd.f32 %v1021, %v1601
    %1603 = vmatprep.mubr.bf16.mxu0 0
    %1604 = vmatmul.mubr.bf16.gmra.mrb[0].mxu0 %v1202
    %v1605 = vpop.f32.mrb[0].mxu0
    %v1606 = vadd.f32 %v1017, %v1605
    %v1607 = vpop.f32.mrb[0].mxu0
    %v1608 = vadd.f32 %v1021, %v1607
    %v1609 = vpop.f32.mrb[0].mxu0
    %v1610 = vpop.f32.mrb[0].mxu0
    %1611 = vdwg.mxu0
    %v1612 = vmax.f32 %v1239, 0.0
    %v1613 = vmax.f32 %v1241, 0.0
    %v1614 = vmax.f32 %v1290, 0.0
    %v1615 = vmax.f32 %v1292, 0.0
    %v1616 = vmax.f32 %v1341, 0.0
    %v1617 = vmax.f32 %v1343, 0.0
    %v1618 = vmax.f32 %v1392, 0.0
    %v1619 = vmax.f32 %v1394, 0.0
    %v1620 = vmax.f32 %v1443, 0.0
    %v1621 = vmax.f32 %v1445, 0.0
    %v1622 = vmax.f32 %v1494, 0.0
    %v1623 = vmax.f32 %v1496, 0.0
    %v1624 = vmax.f32 %v1545, 0.0
    %v1625 = vmax.f32 %v1547, 0.0
    %v1626 = vmax.f32 %v1596, 0.0
    %v1627 = vmax.f32 %v1598, 0.0
    %v1628 = vmax.f32 %v1243, 0.0
    %v1629 = vmax.f32 %v1245, 0.0
    %v1630 = vmax.f32 %v1294, 0.0
    %v1631 = vmax.f32 %v1296, 0.0
    %v1632 = vmax.f32 %v1345, 0.0
    %v1633 = vmax.f32 %v1347, 0.0
    %v1634 = vmax.f32 %v1396, 0.0
    %v1635 = vmax.f32 %v1398, 0.0
    %v1636 = vmax.f32 %v1447, 0.0
    %v1637 = vmax.f32 %v1449, 0.0
    %v1638 = vmax.f32 %v1498, 0.0
    %v1639 = vmax.f32 %v1500, 0.0
    %v1640 = vmax.f32 %v1549, 0.0
    %v1641 = vmax.f32 %v1551, 0.0
    %v1642 = vmax.f32 %v1600, 0.0
    %v1643 = vmax.f32 %v1602, 0.0
    %v1644 = vmax.f32 %v1249, 0.0
    %v1645 = vmax.f32 %v1251, 0.0
    %v1646 = vmax.f32 %v1300, 0.0
    %v1647 = vmax.f32 %v1302, 0.0
    %v1648 = vmax.f32 %v1351, 0.0
    %v1649 = vmax.f32 %v1353, 0.0
    %v1650 = vmax.f32 %v1402, 0.0
    %v1651 = vmax.f32 %v1404, 0.0
    %v1652 = vmax.f32 %v1453, 0.0
    %v1653 = vmax.f32 %v1455, 0.0
    %v1654 = vmax.f32 %v1504, 0.0
    %v1655 = vmax.f32 %v1506, 0.0
    %v1656 = vmax.f32 %v1555, 0.0
    %v1657 = vmax.f32 %v1557, 0.0
    %v1658 = vmax.f32 %v1606, 0.0
    %v1659 = vmax.f32 %v1608, 0.0
    %v1660 = vpack.c.bf16 %v1628, %v1612
    %v1661 = vpack.c.bf16 %v1629, %v1613
    %v1662 = vpack.c.bf16 %v1630, %v1614
    %v1663 = vpack.c.bf16 %v1631, %v1615
    %v1664 = vpack.c.bf16 %v1632, %v1616
    %v1665 = vpack.c.bf16 %v1633, %v1617
    %v1666 = vpack.c.bf16 %v1634, %v1618
    %v1667 = vpack.c.bf16 %v1635, %v1619
    %v1668 = vpack.c.bf16 %v1636, %v1620
    %v1669 = vpack.c.bf16 %v1637, %v1621
    %v1670 = vpack.c.bf16 %v1638, %v1622
    %v1671 = vpack.c.bf16 %v1639, %v1623
    %v1672 = vpack.c.bf16 %v1640, %v1624
    %v1673 = vpack.c.bf16 %v1641, %v1625
    %v1674 = vpack.c.bf16 %v1642, %v1626
    %v1675 = vpack.c.bf16 %v1643, %v1627
    %v1676 = vpack.c.bf16 %v1644, %v1644
    %v1677 = vpack.c.bf16 %v1645, %v1645
    %v1678 = vpack.c.bf16 %v1646, %v1646
    %v1679 = vpack.c.bf16 %v1647, %v1647
    %v1680 = vpack.c.bf16 %v1648, %v1648
    %v1681 = vpack.c.bf16 %v1649, %v1649
    %v1682 = vpack.c.bf16 %v1650, %v1650
    %v1683 = vpack.c.bf16 %v1651, %v1651
    %v1684 = vpack.c.bf16 %v1652, %v1652
    %v1685 = vpack.c.bf16 %v1653, %v1653
    %v1686 = vpack.c.bf16 %v1654, %v1654
    %v1687 = vpack.c.bf16 %v1655, %v1655
    %v1688 = vpack.c.bf16 %v1656, %v1656
    %v1689 = vpack.c.bf16 %v1657, %v1657
    %v1690 = vpack.c.bf16 %v1658, %v1658
    %v1691 = vpack.c.bf16 %v1659, %v1659
    %v1693 = vlaneseq
    %v1694 = vshrl.u32 %v1693, 7
    %v1695 = vsub.s32 0, %v1694
    %v1696 = vrot.slane %v953, %v1695
    %v1730 = vunpack.c.l.b16 %v921
    %v1731 = vunpack.c.h.b16 %v921
    %v1732 = vunpack.c.l.b16 %v922
    %v1733 = vunpack.c.h.b16 %v922
    %v1734 = vunpack.c.l.b16 %v923
    %v1735 = vunpack.c.h.b16 %v923
    %v1736 = vunpack.c.l.b16 %v924
    %v1737 = vunpack.c.h.b16 %v924
    %v1738 = vunpack.c.l.b16 %v925
    %v1739 = vunpack.c.h.b16 %v925
    %v1740 = vunpack.c.l.b16 %v926
    %v1741 = vunpack.c.h.b16 %v926
    %v1742 = vunpack.c.l.b16 %v927
    %v1743 = vunpack.c.h.b16 %v927
    %v1744 = vunpack.c.l.b16 %v928
    %v1745 = vunpack.c.h.b16 %v928
    %v1746 = vunpack.c.l.b16 %v929
    %v1747 = vunpack.c.h.b16 %v929
    %v1748 = vunpack.c.l.b16 %v930
    %v1749 = vunpack.c.h.b16 %v930
    %v1750 = vunpack.c.l.b16 %v931
    %v1751 = vunpack.c.h.b16 %v931
    %v1752 = vunpack.c.l.b16 %v932
    %v1753 = vunpack.c.h.b16 %v932
    %v1754 = vunpack.c.l.b16 %v933
    %v1755 = vunpack.c.h.b16 %v933
    %v1756 = vunpack.c.l.b16 %v934
    %v1757 = vunpack.c.h.b16 %v934
    %v1758 = vunpack.c.l.b16 %v935
    %v1759 = vunpack.c.h.b16 %v935
    %v1760 = vunpack.c.l.b16 %v936
    %v1761 = vunpack.c.h.b16 %v936
    %v1762 = vunpack.c.l.b16 %v937
    %v1763 = vunpack.c.h.b16 %v937
    %v1764 = vunpack.c.l.b16 %v938
    %v1765 = vunpack.c.h.b16 %v938
    %v1766 = vunpack.c.l.b16 %v939
    %v1767 = vunpack.c.h.b16 %v939
    %v1768 = vunpack.c.l.b16 %v940
    %v1769 = vunpack.c.h.b16 %v940
    %v1770 = vunpack.c.l.b16 %v941
    %v1771 = vunpack.c.h.b16 %v941
    %v1772 = vunpack.c.l.b16 %v942
    %v1773 = vunpack.c.h.b16 %v942
    %v1774 = vunpack.c.l.b16 %v943
    %v1775 = vunpack.c.h.b16 %v943
    %v1776 = vunpack.c.l.b16 %v944
    %v1777 = vunpack.c.h.b16 %v944
    %v1778 = vunpack.c.l.b16 %v945
    %v1779 = vunpack.c.h.b16 %v945
    %v1780 = vunpack.c.l.b16 %v946
    %v1781 = vunpack.c.h.b16 %v946
    %v1782 = vunpack.c.l.b16 %v947
    %v1783 = vunpack.c.h.b16 %v947
    %v1784 = vunpack.c.l.b16 %v948
    %v1785 = vunpack.c.h.b16 %v948
    %v1786 = vunpack.c.l.b16 %v949
    %v1787 = vunpack.c.h.b16 %v949
    %v1788 = vunpack.c.l.b16 %v950
    %v1789 = vunpack.c.h.b16 %v950
    %v1790 = vunpack.c.l.b16 %v951
    %v1791 = vunpack.c.h.b16 %v951
    %v1792 = vunpack.c.l.b16 %v952
    %v1793 = vunpack.c.h.b16 %v952
    %v1794 = vpack.c.b16 %v1746, %v1730
    %v1795 = vpack.c.b16 %v1747, %v1731
    %v1796 = vpack.c.b16 %v1748, %v1732
    %v1797 = vpack.c.b16 %v1749, %v1733
    %v1798 = vpack.c.b16 %v1750, %v1734
    %v1799 = vpack.c.b16 %v1751, %v1735
    %v1800 = vpack.c.b16 %v1752, %v1736
    %v1801 = vpack.c.b16 %v1753, %v1737
    %v1802 = vpack.c.b16 %v1754, %v1738
    %v1803 = vpack.c.b16 %v1755, %v1739
    %v1804 = vpack.c.b16 %v1756, %v1740
    %v1805 = vpack.c.b16 %v1757, %v1741
    %v1806 = vpack.c.b16 %v1758, %v1742
    %v1807 = vpack.c.b16 %v1759, %v1743
    %v1808 = vpack.c.b16 %v1760, %v1744
    %v1809 = vpack.c.b16 %v1761, %v1745
    %v1810 = vpack.c.b16 %v1778, %v1762
    %v1811 = vpack.c.b16 %v1779, %v1763
    %v1812 = vpack.c.b16 %v1780, %v1764
    %v1813 = vpack.c.b16 %v1781, %v1765
    %v1814 = vpack.c.b16 %v1782, %v1766
    %v1815 = vpack.c.b16 %v1783, %v1767
    %v1816 = vpack.c.b16 %v1784, %v1768
    %v1817 = vpack.c.b16 %v1785, %v1769
    %v1818 = vpack.c.b16 %v1786, %v1770
    %v1819 = vpack.c.b16 %v1787, %v1771
    %v1820 = vpack.c.b16 %v1788, %v1772
    %v1821 = vpack.c.b16 %v1789, %v1773
    %v1822 = vpack.c.b16 %v1790, %v1774
    %v1823 = vpack.c.b16 %v1791, %v1775
    %v1824 = vpack.c.b16 %v1792, %v1776
    %v1825 = vpack.c.b16 %v1793, %v1777
    %1858 = vmatprep.subr.bf16.mxu0 %v1795
    %1859 = vmatpush1.bf16.xpose.msra.mxu0 %v1794
    %1860 = vmatprep.subr.bf16.mxu0 %v1811
    %1861 = vmatpush1.bf16.xpose.msra.mxu0 %v1810
    %1862 = vmatprep.subr.bf16.mxu0 0
    %1863 = vmatpush1.bf16.xpose.msra.mxu0 0
    %1864 = vmatprep.subr.bf16.mxu0 0
    %1865 = vmatpush1.bf16.xpose.msra.mxu0 0
    %1866 = vmatprep.subr.bf16.mxu0 0
    %1867 = vmatpush1.bf16.xpose.msra.mxu0 0
    %1868 = vmatprep.subr.bf16.mxu0 0
    %1869 = vmatpush1.bf16.xpose.msra.mxu0 0
    %1870 = vmatprep.subr.bf16.mxu0 0
    %1871 = vmatpush1.bf16.xpose.msra.mxu0 0
    %1872 = vmatprep.subr.bf16.mxu0 0
    %1873 = vmatpush1.bf16.xpose.msra.mxu0 0
    %1874 = vmatprep.subr.bf16.mxu0 0
    %1875 = vmatpush1.bf16.xpose.msra.mxu0 0
    %1876 = vmatprep.subr.bf16.mxu0 0
    %1877 = vmatpush1.bf16.xpose.msra.mxu0 0
    %1878 = vmatprep.subr.bf16.mxu0 0
    %1879 = vmatpush1.bf16.xpose.msra.mxu0 0
    %1880 = vmatprep.subr.bf16.mxu0 0
    %1881 = vmatpush1.bf16.xpose.msra.mxu0 0
    %1882 = vmatprep.subr.bf16.mxu0 0
    %1883 = vmatpush1.bf16.xpose.msra.mxu0 0
    %1884 = vmatprep.subr.bf16.mxu0 0
    %1885 = vmatpush1.bf16.xpose.msra.mxu0 0
    %1886 = vmatprep.subr.bf16.mxu0 0
    %1887 = vmatpush1.bf16.xpose.msra.mxu0 0
    %1888 = vmatprep.subr.bf16.mxu0 0
    %1889 = vmatpush1.bf16.xpose.msra.mxu0 0
    %1890 = vmatprep.mubr.bf16.mxu0 %v1661
    %1891 = vmatmul.mubr.bf16.gmra.mrb[0].mxu0 %v1660
    %v1892 = vpop.f32.mrb[0].mxu0
    %v1893 = vadd.f32 %v1696, %v1892
    %v1894 = vpop.f32.mrb[0].mxu0
    %v1895 = vpop.f32.mrb[0].mxu0
    %v1896 = vadd.f32 %v1696, %v1895
    %v1897 = vpop.f32.mrb[0].mxu0
    %1898 = vmatprep.mubr.bf16.mxu0 %v1677
    %1899 = vmatmul.mubr.bf16.gmra.mrb[0].mxu0 %v1676
    %v1900 = vpop.f32.mrb[0].mxu0
    %v1901 = vadd.f32 %v1696, %v1900
    %v1902 = vpop.f32.mrb[0].mxu0
    %v1903 = vpop.f32.mrb[0].mxu0
    %v1904 = vpop.f32.mrb[0].mxu0
    %1905 = vdwg.mxu0
    %1906 = vmatprep.subr.bf16.mxu0 %v1797
    %1907 = vmatpush1.bf16.xpose.msra.mxu0 %v1796
    %1908 = vmatprep.subr.bf16.mxu0 %v1813
    %1909 = vmatpush1.bf16.xpose.msra.mxu0 %v1812
    %1910 = vmatprep.subr.bf16.mxu0 0
    %1911 = vmatpush1.bf16.xpose.msra.mxu0 0
    %1912 = vmatprep.subr.bf16.mxu0 0
    %1913 = vmatpush1.bf16.xpose.msra.mxu0 0
    %1914 = vmatprep.subr.bf16.mxu0 0
    %1915 = vmatpush1.bf16.xpose.msra.mxu0 0
    %1916 = vmatprep.subr.bf16.mxu0 0
    %1917 = vmatpush1.bf16.xpose.msra.mxu0 0
    %1918 = vmatprep.subr.bf16.mxu0 0
    %1919 = vmatpush1.bf16.xpose.msra.mxu0 0
    %1920 = vmatprep.subr.bf16.mxu0 0
    %1921 = vmatpush1.bf16.xpose.msra.mxu0 0
    %1922 = vmatprep.subr.bf16.mxu0 0
    %1923 = vmatpush1.bf16.xpose.msra.mxu0 0
    %1924 = vmatprep.subr.bf16.mxu0 0
    %1925 = vmatpush1.bf16.xpose.msra.mxu0 0
    %1926 = vmatprep.subr.bf16.mxu0 0
    %1927 = vmatpush1.bf16.xpose.msra.mxu0 0
    %1928 = vmatprep.subr.bf16.mxu0 0
    %1929 = vmatpush1.bf16.xpose.msra.mxu0 0
    %1930 = vmatprep.subr.bf16.mxu0 0
    %1931 = vmatpush1.bf16.xpose.msra.mxu0 0
    %1932 = vmatprep.subr.bf16.mxu0 0
    %1933 = vmatpush1.bf16.xpose.msra.mxu0 0
    %1934 = vmatprep.subr.bf16.mxu0 0
    %1935 = vmatpush1.bf16.xpose.msra.mxu0 0
    %1936 = vmatprep.subr.bf16.mxu0 0
    %1937 = vmatpush1.bf16.xpose.msra.mxu0 0
    %1938 = vmatprep.mubr.bf16.mxu0 %v1663
    %1939 = vmatmul.mubr.bf16.gmra.mrb[0].mxu0 %v1662
    %v1940 = vpop.f32.mrb[0].mxu0
    %v1941 = vadd.f32 %v1893, %v1940
    %v1942 = vpop.f32.mrb[0].mxu0
    %v1943 = vpop.f32.mrb[0].mxu0
    %v1944 = vadd.f32 %v1896, %v1943
    %v1945 = vpop.f32.mrb[0].mxu0
    %1946 = vmatprep.mubr.bf16.mxu0 %v1679
    %1947 = vmatmul.mubr.bf16.gmra.mrb[0].mxu0 %v1678
    %v1948 = vpop.f32.mrb[0].mxu0
    %v1949 = vadd.f32 %v1901, %v1948
    %v1950 = vpop.f32.mrb[0].mxu0
    %v1951 = vpop.f32.mrb[0].mxu0
    %v1952 = vpop.f32.mrb[0].mxu0
    %1953 = vdwg.mxu0
    %1954 = vmatprep.subr.bf16.mxu0 %v1799
    %1955 = vmatpush1.bf16.xpose.msra.mxu0 %v1798
    %1956 = vmatprep.subr.bf16.mxu0 %v1815
    %1957 = vmatpush1.bf16.xpose.msra.mxu0 %v1814
    %1958 = vmatprep.subr.bf16.mxu0 0
    %1959 = vmatpush1.bf16.xpose.msra.mxu0 0
    %1960 = vmatprep.subr.bf16.mxu0 0
    %1961 = vmatpush1.bf16.xpose.msra.mxu0 0
    %1962 = vmatprep.subr.bf16.mxu0 0
    %1963 = vmatpush1.bf16.xpose.msra.mxu0 0
    %1964 = vmatprep.subr.bf16.mxu0 0
    %1965 = vmatpush1.bf16.xpose.msra.mxu0 0
    %1966 = vmatprep.subr.bf16.mxu0 0
    %1967 = vmatpush1.bf16.xpose.msra.mxu0 0
    %1968 = vmatprep.subr.bf16.mxu0 0
    %1969 = vmatpush1.bf16.xpose.msra.mxu0 0
    %1970 = vmatprep.subr.bf16.mxu0 0
    %1971 = vmatpush1.bf16.xpose.msra.mxu0 0
    %1972 = vmatprep.subr.bf16.mxu0 0
    %1973 = vmatpush1.bf16.xpose.msra.mxu0 0
    %1974 = vmatprep.subr.bf16.mxu0 0
    %1975 = vmatpush1.bf16.xpose.msra.mxu0 0
    %1976 = vmatprep.subr.bf16.mxu0 0
    %1977 = vmatpush1.bf16.xpose.msra.mxu0 0
    %1978 = vmatprep.subr.bf16.mxu0 0
    %1979 = vmatpush1.bf16.xpose.msra.mxu0 0
    %1980 = vmatprep.subr.bf16.mxu0 0
    %1981 = vmatpush1.bf16.xpose.msra.mxu0 0
    %1982 = vmatprep.subr.bf16.mxu0 0
    %1983 = vmatpush1.bf16.xpose.msra.mxu0 0
    %1984 = vmatprep.subr.bf16.mxu0 0
    %1985 = vmatpush1.bf16.xpose.msra.mxu0 0
    %1986 = vmatprep.mubr.bf16.mxu0 %v1665
    %1987 = vmatmul.mubr.bf16.gmra.mrb[0].mxu0 %v1664
    %v1988 = vpop.f32.mrb[0].mxu0
    %v1989 = vadd.f32 %v1941, %v1988
    %v1990 = vpop.f32.mrb[0].mxu0
    %v1991 = vpop.f32.mrb[0].mxu0
    %v1992 = vadd.f32 %v1944, %v1991
    %v1993 = vpop.f32.mrb[0].mxu0
    %1994 = vmatprep.mubr.bf16.mxu0 %v1681
    %1995 = vmatmul.mubr.bf16.gmra.mrb[0].mxu0 %v1680
    %v1996 = vpop.f32.mrb[0].mxu0
    %v1997 = vadd.f32 %v1949, %v1996
    %v1998 = vpop.f32.mrb[0].mxu0
    %v1999 = vpop.f32.mrb[0].mxu0
    %v2000 = vpop.f32.mrb[0].mxu0
    %2001 = vdwg.mxu0
    %2002 = vmatprep.subr.bf16.mxu0 %v1801
    %2003 = vmatpush1.bf16.xpose.msra.mxu0 %v1800
    %2004 = vmatprep.subr.bf16.mxu0 %v1817
    %2005 = vmatpush1.bf16.xpose.msra.mxu0 %v1816
    %2006 = vmatprep.subr.bf16.mxu0 0
    %2007 = vmatpush1.bf16.xpose.msra.mxu0 0
    %2008 = vmatprep.subr.bf16.mxu0 0
    %2009 = vmatpush1.bf16.xpose.msra.mxu0 0
    %2010 = vmatprep.subr.bf16.mxu0 0
    %2011 = vmatpush1.bf16.xpose.msra.mxu0 0
    %2012 = vmatprep.subr.bf16.mxu0 0
    %2013 = vmatpush1.bf16.xpose.msra.mxu0 0
    %2014 = vmatprep.subr.bf16.mxu0 0
    %2015 = vmatpush1.bf16.xpose.msra.mxu0 0
    %2016 = vmatprep.subr.bf16.mxu0 0
    %2017 = vmatpush1.bf16.xpose.msra.mxu0 0
    %2018 = vmatprep.subr.bf16.mxu0 0
    %2019 = vmatpush1.bf16.xpose.msra.mxu0 0
    %2020 = vmatprep.subr.bf16.mxu0 0
    %2021 = vmatpush1.bf16.xpose.msra.mxu0 0
    %2022 = vmatprep.subr.bf16.mxu0 0
    %2023 = vmatpush1.bf16.xpose.msra.mxu0 0
    %2024 = vmatprep.subr.bf16.mxu0 0
    %2025 = vmatpush1.bf16.xpose.msra.mxu0 0
    %2026 = vmatprep.subr.bf16.mxu0 0
    %2027 = vmatpush1.bf16.xpose.msra.mxu0 0
    %2028 = vmatprep.subr.bf16.mxu0 0
    %2029 = vmatpush1.bf16.xpose.msra.mxu0 0
    %2030 = vmatprep.subr.bf16.mxu0 0
    %2031 = vmatpush1.bf16.xpose.msra.mxu0 0
    %2032 = vmatprep.subr.bf16.mxu0 0
    %2033 = vmatpush1.bf16.xpose.msra.mxu0 0
    %2034 = vmatprep.mubr.bf16.mxu0 %v1667
    %2035 = vmatmul.mubr.bf16.gmra.mrb[0].mxu0 %v1666
    %v2036 = vpop.f32.mrb[0].mxu0
    %v2037 = vadd.f32 %v1989, %v2036
    %v2038 = vpop.f32.mrb[0].mxu0
    %v2039 = vpop.f32.mrb[0].mxu0
    %v2040 = vadd.f32 %v1992, %v2039
    %v2041 = vpop.f32.mrb[0].mxu0
    %2042 = vmatprep.mubr.bf16.mxu0 %v1683
    %2043 = vmatmul.mubr.bf16.gmra.mrb[0].mxu0 %v1682
    %v2044 = vpop.f32.mrb[0].mxu0
    %v2045 = vadd.f32 %v1997, %v2044
    %v2046 = vpop.f32.mrb[0].mxu0
    %v2047 = vpop.f32.mrb[0].mxu0
    %v2048 = vpop.f32.mrb[0].mxu0
    %2049 = vdwg.mxu0
    %2050 = vmatprep.subr.bf16.mxu0 %v1803
    %2051 = vmatpush1.bf16.xpose.msra.mxu0 %v1802
    %2052 = vmatprep.subr.bf16.mxu0 %v1819
    %2053 = vmatpush1.bf16.xpose.msra.mxu0 %v1818
    %2054 = vmatprep.subr.bf16.mxu0 0
    %2055 = vmatpush1.bf16.xpose.msra.mxu0 0
    %2056 = vmatprep.subr.bf16.mxu0 0
    %2057 = vmatpush1.bf16.xpose.msra.mxu0 0
    %2058 = vmatprep.subr.bf16.mxu0 0
    %2059 = vmatpush1.bf16.xpose.msra.mxu0 0
    %2060 = vmatprep.subr.bf16.mxu0 0
    %2061 = vmatpush1.bf16.xpose.msra.mxu0 0
    %2062 = vmatprep.subr.bf16.mxu0 0
    %2063 = vmatpush1.bf16.xpose.msra.mxu0 0
    %2064 = vmatprep.subr.bf16.mxu0 0
    %2065 = vmatpush1.bf16.xpose.msra.mxu0 0
    %2066 = vmatprep.subr.bf16.mxu0 0
    %2067 = vmatpush1.bf16.xpose.msra.mxu0 0
    %2068 = vmatprep.subr.bf16.mxu0 0
    %2069 = vmatpush1.bf16.xpose.msra.mxu0 0
    %2070 = vmatprep.subr.bf16.mxu0 0
    %2071 = vmatpush1.bf16.xpose.msra.mxu0 0
    %2072 = vmatprep.subr.bf16.mxu0 0
    %2073 = vmatpush1.bf16.xpose.msra.mxu0 0
    %2074 = vmatprep.subr.bf16.mxu0 0
    %2075 = vmatpush1.bf16.xpose.msra.mxu0 0
    %2076 = vmatprep.subr.bf16.mxu0 0
    %2077 = vmatpush1.bf16.xpose.msra.mxu0 0
    %2078 = vmatprep.subr.bf16.mxu0 0
    %2079 = vmatpush1.bf16.xpose.msra.mxu0 0
    %2080 = vmatprep.subr.bf16.mxu0 0
    %2081 = vmatpush1.bf16.xpose.msra.mxu0 0
    %2082 = vmatprep.mubr.bf16.mxu0 %v1669
    %2083 = vmatmul.mubr.bf16.gmra.mrb[0].mxu0 %v1668
    %v2084 = vpop.f32.mrb[0].mxu0
    %v2085 = vadd.f32 %v2037, %v2084
    %v2086 = vpop.f32.mrb[0].mxu0
    %v2087 = vpop.f32.mrb[0].mxu0
    %v2088 = vadd.f32 %v2040, %v2087
    %v2089 = vpop.f32.mrb[0].mxu0
    %2090 = vmatprep.mubr.bf16.mxu0 %v1685
    %2091 = vmatmul.mubr.bf16.gmra.mrb[0].mxu0 %v1684
    %v2092 = vpop.f32.mrb[0].mxu0
    %v2093 = vadd.f32 %v2045, %v2092
    %v2094 = vpop.f32.mrb[0].mxu0
    %v2095 = vpop.f32.mrb[0].mxu0
    %v2096 = vpop.f32.mrb[0].mxu0
    %2097 = vdwg.mxu0
    %2098 = vmatprep.subr.bf16.mxu0 %v1805
    %2099 = vmatpush1.bf16.xpose.msra.mxu0 %v1804
    %2100 = vmatprep.subr.bf16.mxu0 %v1821
    %2101 = vmatpush1.bf16.xpose.msra.mxu0 %v1820
    %2102 = vmatprep.subr.bf16.mxu0 0
    %2103 = vmatpush1.bf16.xpose.msra.mxu0 0
    %2104 = vmatprep.subr.bf16.mxu0 0
    %2105 = vmatpush1.bf16.xpose.msra.mxu0 0
    %2106 = vmatprep.subr.bf16.mxu0 0
    %2107 = vmatpush1.bf16.xpose.msra.mxu0 0
    %2108 = vmatprep.subr.bf16.mxu0 0
    %2109 = vmatpush1.bf16.xpose.msra.mxu0 0
    %2110 = vmatprep.subr.bf16.mxu0 0
    %2111 = vmatpush1.bf16.xpose.msra.mxu0 0
    %2112 = vmatprep.subr.bf16.mxu0 0
    %2113 = vmatpush1.bf16.xpose.msra.mxu0 0
    %2114 = vmatprep.subr.bf16.mxu0 0
    %2115 = vmatpush1.bf16.xpose.msra.mxu0 0
    %2116 = vmatprep.subr.bf16.mxu0 0
    %2117 = vmatpush1.bf16.xpose.msra.mxu0 0
    %2118 = vmatprep.subr.bf16.mxu0 0
    %2119 = vmatpush1.bf16.xpose.msra.mxu0 0
    %2120 = vmatprep.subr.bf16.mxu0 0
    %2121 = vmatpush1.bf16.xpose.msra.mxu0 0
    %2122 = vmatprep.subr.bf16.mxu0 0
    %2123 = vmatpush1.bf16.xpose.msra.mxu0 0
    %2124 = vmatprep.subr.bf16.mxu0 0
    %2125 = vmatpush1.bf16.xpose.msra.mxu0 0
    %2126 = vmatprep.subr.bf16.mxu0 0
    %2127 = vmatpush1.bf16.xpose.msra.mxu0 0
    %2128 = vmatprep.subr.bf16.mxu0 0
    %2129 = vmatpush1.bf16.xpose.msra.mxu0 0
    %2130 = vmatprep.mubr.bf16.mxu0 %v1671
    %2131 = vmatmul.mubr.bf16.gmra.mrb[0].mxu0 %v1670
    %v2132 = vpop.f32.mrb[0].mxu0
    %v2133 = vadd.f32 %v2085, %v2132
    %v2134 = vpop.f32.mrb[0].mxu0
    %v2135 = vpop.f32.mrb[0].mxu0
    %v2136 = vadd.f32 %v2088, %v2135
    %v2137 = vpop.f32.mrb[0].mxu0
    %2138 = vmatprep.mubr.bf16.mxu0 %v1687
    %2139 = vmatmul.mubr.bf16.gmra.mrb[0].mxu0 %v1686
    %v2140 = vpop.f32.mrb[0].mxu0
    %v2141 = vadd.f32 %v2093, %v2140
    %v2142 = vpop.f32.mrb[0].mxu0
    %v2143 = vpop.f32.mrb[0].mxu0
    %v2144 = vpop.f32.mrb[0].mxu0
    %2145 = vdwg.mxu0
    %2146 = vmatprep.subr.bf16.mxu0 %v1807
    %2147 = vmatpush1.bf16.xpose.msra.mxu0 %v1806
    %2148 = vmatprep.subr.bf16.mxu0 %v1823
    %2149 = vmatpush1.bf16.xpose.msra.mxu0 %v1822
    %2150 = vmatprep.subr.bf16.mxu0 0
    %2151 = vmatpush1.bf16.xpose.msra.mxu0 0
    %2152 = vmatprep.subr.bf16.mxu0 0
    %2153 = vmatpush1.bf16.xpose.msra.mxu0 0
    %2154 = vmatprep.subr.bf16.mxu0 0
    %2155 = vmatpush1.bf16.xpose.msra.mxu0 0
    %2156 = vmatprep.subr.bf16.mxu0 0
    %2157 = vmatpush1.bf16.xpose.msra.mxu0 0
    %2158 = vmatprep.subr.bf16.mxu0 0
    %2159 = vmatpush1.bf16.xpose.msra.mxu0 0
    %2160 = vmatprep.subr.bf16.mxu0 0
    %2161 = vmatpush1.bf16.xpose.msra.mxu0 0
    %2162 = vmatprep.subr.bf16.mxu0 0
    %2163 = vmatpush1.bf16.xpose.msra.mxu0 0
    %2164 = vmatprep.subr.bf16.mxu0 0
    %2165 = vmatpush1.bf16.xpose.msra.mxu0 0
    %2166 = vmatprep.subr.bf16.mxu0 0
    %2167 = vmatpush1.bf16.xpose.msra.mxu0 0
    %2168 = vmatprep.subr.bf16.mxu0 0
    %2169 = vmatpush1.bf16.xpose.msra.mxu0 0
    %2170 = vmatprep.subr.bf16.mxu0 0
    %2171 = vmatpush1.bf16.xpose.msra.mxu0 0
    %2172 = vmatprep.subr.bf16.mxu0 0
    %2173 = vmatpush1.bf16.xpose.msra.mxu0 0
    %2174 = vmatprep.subr.bf16.mxu0 0
    %2175 = vmatpush1.bf16.xpose.msra.mxu0 0
    %2176 = vmatprep.subr.bf16.mxu0 0
    %2177 = vmatpush1.bf16.xpose.msra.mxu0 0
    %2178 = vmatprep.mubr.bf16.mxu0 %v1673
    %2179 = vmatmul.mubr.bf16.gmra.mrb[0].mxu0 %v1672
    %v2180 = vpop.f32.mrb[0].mxu0
    %v2181 = vadd.f32 %v2133, %v2180
    %v2182 = vpop.f32.mrb[0].mxu0
    %v2183 = vpop.f32.mrb[0].mxu0
    %v2184 = vadd.f32 %v2136, %v2183
    %v2185 = vpop.f32.mrb[0].mxu0
    %2186 = vmatprep.mubr.bf16.mxu0 %v1689
    %2187 = vmatmul.mubr.bf16.gmra.mrb[0].mxu0 %v1688
    %v2188 = vpop.f32.mrb[0].mxu0
    %v2189 = vadd.f32 %v2141, %v2188
    %v2190 = vpop.f32.mrb[0].mxu0
    %v2191 = vpop.f32.mrb[0].mxu0
    %v2192 = vpop.f32.mrb[0].mxu0
    %2193 = vdwg.mxu0
    %2194 = vmatprep.subr.bf16.mxu0 %v1809
    %2195 = vmatpush1.bf16.xpose.msra.mxu0 %v1808
    %2196 = vmatprep.subr.bf16.mxu0 %v1825
    %2197 = vmatpush1.bf16.xpose.msra.mxu0 %v1824
    %2198 = vmatprep.subr.bf16.mxu0 0
    %2199 = vmatpush1.bf16.xpose.msra.mxu0 0
    %2200 = vmatprep.subr.bf16.mxu0 0
    %2201 = vmatpush1.bf16.xpose.msra.mxu0 0
    %2202 = vmatprep.subr.bf16.mxu0 0
    %2203 = vmatpush1.bf16.xpose.msra.mxu0 0
    %2204 = vmatprep.subr.bf16.mxu0 0
    %2205 = vmatpush1.bf16.xpose.msra.mxu0 0
    %2206 = vmatprep.subr.bf16.mxu0 0
    %2207 = vmatpush1.bf16.xpose.msra.mxu0 0
    %2208 = vmatprep.subr.bf16.mxu0 0
    %2209 = vmatpush1.bf16.xpose.msra.mxu0 0
    %2210 = vmatprep.subr.bf16.mxu0 0
    %2211 = vmatpush1.bf16.xpose.msra.mxu0 0
    %2212 = vmatprep.subr.bf16.mxu0 0
    %2213 = vmatpush1.bf16.xpose.msra.mxu0 0
    %2214 = vmatprep.subr.bf16.mxu0 0
    %2215 = vmatpush1.bf16.xpose.msra.mxu0 0
    %2216 = vmatprep.subr.bf16.mxu0 0
    %2217 = vmatpush1.bf16.xpose.msra.mxu0 0
    %2218 = vmatprep.subr.bf16.mxu0 0
    %2219 = vmatpush1.bf16.xpose.msra.mxu0 0
    %2220 = vmatprep.subr.bf16.mxu0 0
    %2221 = vmatpush1.bf16.xpose.msra.mxu0 0
    %2222 = vmatprep.subr.bf16.mxu0 0
    %2223 = vmatpush1.bf16.xpose.msra.mxu0 0
    %2224 = vmatprep.subr.bf16.mxu0 0
    %2225 = vmatpush1.bf16.xpose.msra.mxu0 0
    %2226 = vmatprep.mubr.bf16.mxu0 %v1675
    %2227 = vmatmul.mubr.bf16.gmra.mrb[0].mxu0 %v1674
    %v2228 = vpop.f32.mrb[0].mxu0
    %v2229 = vadd.f32 %v2181, %v2228
    %v2230 = vpop.f32.mrb[0].mxu0
    %v2231 = vpop.f32.mrb[0].mxu0
    %v2232 = vadd.f32 %v2184, %v2231
    %v2233 = vpop.f32.mrb[0].mxu0
    %2234 = vmatprep.mubr.bf16.mxu0 %v1691
    %2235 = vmatmul.mubr.bf16.gmra.mrb[0].mxu0 %v1690
    %v2236 = vpop.f32.mrb[0].mxu0
    %v2237 = vadd.f32 %v2189, %v2236
    %v2238 = vpop.f32.mrb[0].mxu0
    %v2239 = vpop.f32.mrb[0].mxu0
    %v2240 = vpop.f32.mrb[0].mxu0
    %2241 = vdwg.mxu0
    %v2242 = vadd.f32 %v884, %v2229
    %v2243 = vadd.f32 %v885, %v2232
    %v2244 = vadd.f32 %v886, %v2237
    %v2245 = vld [vmem:[#allocation7 + $0x15] sm:$0x1]
    %v2246 = vld [vmem:[#allocation7 + $0x16] sm:$0x1]
    %v2247 = vsel %vm145, %v2242, 0.0
    %2248 = vadd.xlane.f32.xlu0 %v2247
    %v2249 = vpop.xlane.xlu0 %2248
    %v2250 = vsel %vm145, %v2243, 0.0
    %2251 = vadd.xlane.f32.xlu0 %v2250
    %v2252 = vpop.xlane.xlu0 %2251
    %v2253 = vsel %vm834, %v2244, 0.0
    %2254 = vadd.xlane.f32.xlu0 %v2253
    %v2255 = vpop.xlane.xlu0 %2254
    %v2256 = vmul.f32 %v2249, %v838
    %v2257 = vmul.f32 %v2252, %v838
    %v2258 = vmul.f32 %v2255, %v838
    %v2259 = vsub.f32 %v2242, %v2256
    %v2260 = vsub.f32 %v2243, %v2257
    %v2261 = vsub.f32 %v2244, %v2258
    %v2262 = vmul.f32 %v2259, %v2259
    %v2263 = vmul.f32 %v2260, %v2260
    %v2264 = vmul.f32 %v2261, %v2261
    %v2265 = vsel %vm145, %v2262, 0.0
    %2266 = vadd.xlane.f32.xlu0 %v2265
    %v2267 = vpop.xlane.xlu0 %2266
    %v2268 = vsel %vm145, %v2263, 0.0
    %2269 = vadd.xlane.f32.xlu0 %v2268
    %v2270 = vpop.xlane.xlu0 %2269
    %v2271 = vsel %vm834, %v2264, 0.0
    %2272 = vadd.xlane.f32.xlu0 %v2271
    %v2273 = vpop.xlane.xlu0 %2272
    %v2274 = vmul.f32 %v2267, %v838
    %v2275 = vmul.f32 %v2270, %v838
    %v2276 = vmul.f32 %v2273, %v838
    %v2277 = vadd.f32 %v2274, 1e-05
    %v2278 = vadd.f32 %v2275, 1e-05
    %v2279 = vadd.f32 %v2276, 1e-05
    %v2280 = vrsqrt.pop %v2277
    %v2281 = vrsqrt.pop %v2278
    %v2282 = vrsqrt.pop %v2279
    %v2283 = vmul.f32 %v2259, %v2280
    %v2284 = vmul.f32 %v2260, %v2281
    %v2285 = vmul.f32 %v2261, %v2282
    %v2287 = vlaneseq
    %v2288 = vshrl.u32 %v2287, 7
    %v2289 = vsub.s32 0, %v2288
    %v2290 = vrot.slane %v2245, %v2289
    %v2292 = vmul.f32 %v2283, %v2290
    %v2293 = vmul.f32 %v2284, %v2290
    %v2294 = vmul.f32 %v2285, %v2290
    %v2296 = vlaneseq
    %v2297 = vshrl.u32 %v2296, 7
    %v2298 = vsub.s32 0, %v2297
    %v2299 = vrot.slane %v2246, %v2298
    %v2301 = vadd.f32 %v2292, %v2299
    %v2302 = vadd.f32 %v2293, %v2299
    %v2303 = vadd.f32 %v2294, %v2299
    %v2304 = vld [vmem:[#allocation5 + $0x88] sm:$0xf]
    %v2305 = vld [vmem:[#allocation5 + $0x2b8] sm:$0xf]
    %v2306 = vld [vmem:[#allocation5 + $0x4e8] sm:$0xf]
    %v2307 = vld [vmem:[#allocation5 + $0x718] sm:$0xf]
    %v2308 = vpack.c.bf16 %v2302, %v2301
    %v2309 = vpack.c.bf16 %v2303, %v2303
    %v2310 = vld [vmem:[#allocation7 + $0x17] sm:$0x1]
    %v2312 = vlaneseq
    %v2313 = vshrl.u32 %v2312, 7
    %v2314 = vsub.s32 0, %v2313
    %v2315 = vrot.slane %v2310, %v2314
    %v2321 = vunpack.c.l.b16 %v2304
    %v2322 = vunpack.c.l.b16 %v2305
    %v2323 = vunpack.c.l.b16 %v2306
    %v2324 = vunpack.c.l.b16 %v2307
    %v2325 = vpack.c.b16 %v2322, %v2321
    %v2326 = vpack.c.b16 %v2324, %v2323
    %v2330 = vsel %vm145, %v2308, 0
    %v2333 = vsel %vm145, %v2309, 0
    %2335 = vmatprep.subr.bf16.mxu0 0
    %2336 = vmatpush1.bf16.msra.mxu0 %v2325
    %2337 = vmatprep.subr.bf16.mxu0 0
    %2338 = vmatpush1.bf16.msra.mxu0 %v2326
    %2339 = vmatprep.subr.bf16.mxu0 0
    %2340 = vmatpush1.bf16.msra.mxu0 0
    %2341 = vmatprep.subr.bf16.mxu0 0
    %2342 = vmatpush1.bf16.msra.mxu0 0
    %2343 = vmatprep.subr.bf16.mxu0 0
    %2344 = vmatpush1.bf16.msra.mxu0 0
    %2345 = vmatprep.subr.bf16.mxu0 0
    %2346 = vmatpush1.bf16.msra.mxu0 0
    %2347 = vmatprep.subr.bf16.mxu0 0
    %2348 = vmatpush1.bf16.msra.mxu0 0
    %2349 = vmatprep.subr.bf16.mxu0 0
    %2350 = vmatpush1.bf16.msra.mxu0 0
    %2351 = vmatprep.subr.bf16.mxu0 0
    %2352 = vmatpush1.bf16.msra.mxu0 0
    %2353 = vmatprep.subr.bf16.mxu0 0
    %2354 = vmatpush1.bf16.msra.mxu0 0
    %2355 = vmatprep.subr.bf16.mxu0 0
    %2356 = vmatpush1.bf16.msra.mxu0 0
    %2357 = vmatprep.subr.bf16.mxu0 0
    %2358 = vmatpush1.bf16.msra.mxu0 0
    %2359 = vmatprep.subr.bf16.mxu0 0
    %2360 = vmatpush1.bf16.msra.mxu0 0
    %2361 = vmatprep.subr.bf16.mxu0 0
    %2362 = vmatpush1.bf16.msra.mxu0 0
    %2363 = vmatprep.subr.bf16.mxu0 0
    %2364 = vmatpush1.bf16.msra.mxu0 0
    %2365 = vmatprep.subr.bf16.mxu0 0
    %2366 = vmatpush1.bf16.msra.mxu0 0
    %2367 = vmatprep.mubr.bf16.mxu0 0
    %2368 = vmatmul.mubr.bf16.gmra.mrb[0].mxu0 %v2330
    %v2369 = vpop.f32.mrb[0].mxu0
    %v2370 = vadd.f32 %v2315, %v2369
    %v2371 = vpop.f32.mrb[0].mxu0
    %v2372 = vpop.f32.mrb[0].mxu0
    %v2373 = vadd.f32 %v2315, %v2372
    %v2374 = vpop.f32.mrb[0].mxu0
    %2375 = vmatprep.mubr.bf16.mxu0 0
    %2376 = vmatmul.mubr.bf16.gmra.mrb[0].mxu0 %v2333
    %v2377 = vpop.f32.mrb[0].mxu0
    %v2378 = vadd.f32 %v2315, %v2377
    %v2379 = vpop.f32.mrb[0].mxu0
    %v2380 = vpop.f32.mrb[0].mxu0
    %v2381 = vpop.f32.mrb[0].mxu0
    %2382 = vdwg.mxu0
    %v2383 = vld [vmem:[#allocation5 + $0x8c] sm:$0xf]
    %v2384 = vld [vmem:[#allocation5 + $0x2bc] sm:$0xf]
    %v2385 = vld [vmem:[#allocation5 + $0x4ec] sm:$0xf]
    %v2386 = vld [vmem:[#allocation5 + $0x71c] sm:$0xf]
    %v2387 = vld [vmem:[#allocation7 + $0x18] sm:$0x1]
    %2391 = vrot.lane.b32.xlu0 %v2370, 96
    %v2392 = vpop.permute.xlu0 %2391
    %2393 = vrot.lane.b32.xlu0 %v2373, 96
    %v2394 = vpop.permute.xlu0 %2393
    %2395 = vrot.lane.b32.xlu0 %v2378, 96
    %v2396 = vpop.permute.xlu0 %2395
    %v2397 = vsel %vm214, %v2370, 0
    %v2399 = vsel %vm214, %v2373, 0
    %v2401 = vsel %vm214, %v2378, 0
    %v2403 = vsel %vm214, %v2392, 0
    %v2405 = vsel %vm214, %v2394, 0
    %v2407 = vsel %vm214, %v2396, 0
    %2409 = vmatprep.subr.mxu0 0.0
    %2410 = vmatpush1.xpose.msra.mxu0 %v2403
    %2411 = vmatprep.subr.mxu0 0.0
    %2412 = vmatpush1.xpose.msra.mxu0 %v2405
    %2413 = vmatprep.subr.mxu0 0.0
    %2414 = vmatpush1.xpose.msra.mxu0 %v2407
    %2415 = vmatprep.subr.mxu0 0.0
    %2416 = vmatpush1.xpose.msra.mxu0 0.0
    %2417 = vmatprep.subr.mxu0 0.0
    %2418 = vmatpush1.xpose.msra.mxu0 0.0
    %2419 = vmatprep.subr.mxu0 0.0
    %2420 = vmatpush1.xpose.msra.mxu0 0.0
    %2421 = vmatprep.subr.mxu0 0.0
    %2422 = vmatpush1.xpose.msra.mxu0 0.0
    %2423 = vmatprep.subr.mxu0 0.0
    %2424 = vmatpush1.xpose.msra.mxu0 0.0
    %2425 = vmatprep.subr.mxu0 0.0
    %2426 = vmatpush1.xpose.msra.mxu0 0.0
    %2427 = vmatprep.subr.mxu0 0.0
    %2428 = vmatpush1.xpose.msra.mxu0 0.0
    %2429 = vmatprep.subr.mxu0 0.0
    %2430 = vmatpush1.xpose.msra.mxu0 0.0
    %2431 = vmatprep.subr.mxu0 0.0
    %2432 = vmatpush1.xpose.msra.mxu0 0.0
    %2433 = vmatprep.subr.mxu0 0.0
    %2434 = vmatpush1.xpose.msra.mxu0 0.0
    %2435 = vmatprep.subr.mxu0 0.0
    %2436 = vmatpush1.xpose.msra.mxu0 0.0
    %2437 = vmatprep.subr.mxu0 0.0
    %2438 = vmatpush1.xpose.msra.mxu0 0.0
    %2439 = vmatprep.subr.mxu0 0.0
    %2440 = vmatpush1.xpose.msra.mxu0 0.0
    %2441 = vmatprep.subr.mxu0 0.0
    %2442 = vmatpush1.xpose.msra.mxu0 0.0
    %2443 = vmatprep.subr.mxu0 0.0
    %2444 = vmatpush1.xpose.msra.mxu0 0.0
    %2445 = vmatprep.subr.mxu0 0.0
    %2446 = vmatpush1.xpose.msra.mxu0 0.0
    %2447 = vmatprep.subr.mxu0 0.0
    %2448 = vmatpush1.xpose.msra.mxu0 0.0
    %2449 = vmatprep.subr.mxu0 0.0
    %2450 = vmatpush1.xpose.msra.mxu0 0.0
    %2451 = vmatprep.subr.mxu0 0.0
    %2452 = vmatpush1.xpose.msra.mxu0 0.0
    %2453 = vmatprep.subr.mxu0 0.0
    %2454 = vmatpush1.xpose.msra.mxu0 0.0
    %2455 = vmatprep.subr.mxu0 0.0
    %2456 = vmatpush1.xpose.msra.mxu0 0.0
    %2457 = vmatprep.subr.mxu0 0.0
    %2458 = vmatpush1.xpose.msra.mxu0 0.0
    %2459 = vmatprep.subr.mxu0 0.0
    %2460 = vmatpush1.xpose.msra.mxu0 0.0
    %2461 = vmatprep.subr.mxu0 0.0
    %2462 = vmatpush1.xpose.msra.mxu0 0.0
    %2463 = vmatprep.subr.mxu0 0.0
    %2464 = vmatpush1.xpose.msra.mxu0 0.0
    %2465 = vmatprep.subr.mxu0 0.0
    %2466 = vmatpush1.xpose.msra.mxu0 0.0
    %2467 = vmatprep.subr.mxu0 0.0
    %2468 = vmatpush1.xpose.msra.mxu0 0.0
    %2469 = vmatprep.subr.mxu0 0.0
    %2470 = vmatpush1.xpose.msra.mxu0 0.0
    %2471 = vmatprep.subr.mxu0 0.0
    %2472 = vmatpush1.xpose.msra.mxu0 0.0
    %2473 = vmatprep.mubr.f32.mxu0 0.0
    %2474 = vmatmul.mubr.f32.gmra.mrb[0].mxu0 %v2397
    %v2475 = vpop.f32.mrb[0].mxu0
    %v2476 = vadd.f32 0.0, %v2475
    %v2477 = vpop.f32.mrb[0].mxu0
    %2478 = vmatprep.mubr.f32.mxu0 0.0
    %2479 = vmatmul.mubr.f32.gmra.mrb[0].mxu0 %v2399
    %v2480 = vpop.f32.mrb[0].mxu0
    %v2481 = vadd.f32 0.0, %v2480
    %v2482 = vpop.f32.mrb[0].mxu0
    %2483 = vmatprep.mubr.f32.mxu0 0.0
    %2484 = vmatmul.mubr.f32.gmra.mrb[0].mxu0 %v2401
    %v2485 = vpop.f32.mrb[0].mxu0
    %v2486 = vadd.f32 0.0, %v2485
    %v2487 = vpop.f32.mrb[0].mxu0
    %2488 = vdwg.mxu0
    %v2489 = vmul.f32 %v2476, 0.25
    %v2490 = vmul.f32 %v2481, 0.25
    %v2491 = vmul.f32 %v2486, 0.25
    %v2492 = vsel %vm114, %v2489, -inf
    %v2493 = vsel %vm115, %v2490, -inf
    %v2494 = vsel %vm116, %v2491, -inf
    %v2495 = vsel %vm313, %v2492, -inf
    %2496 = vmax.xlane.f32.xlu0 %v2495
    %v2497 = vpop.xlane.xlu0 %2496
    %v2498 = vsel %vm313, %v2493, -inf
    %2499 = vmax.xlane.f32.xlu0 %v2498
    %v2500 = vpop.xlane.xlu0 %2499
    %v2501 = vsel %vm320, %v2494, -inf
    %2502 = vmax.xlane.f32.xlu0 %v2501
    %v2503 = vpop.xlane.xlu0 %2502
    %v2504 = vsub.f32 %v2492, %v2497
    %v2505 = vsub.f32 %v2493, %v2500
    %v2506 = vsub.f32 %v2494, %v2503
    %v2507 = vmul.f32 %v2504, 1.442695
    %v2508 = vpow.pop %v2507
    %v2509 = vmul.f32 %v2505, 1.442695
    %v2510 = vpow.pop %v2509
    %v2511 = vmul.f32 %v2506, 1.442695
    %v2512 = vpow.pop %v2511
    %v2513 = vsel %vm313, %v2508, 0.0
    %2514 = vadd.xlane.f32.xlu0 %v2513
    %v2515 = vpop.xlane.xlu0 %2514
    %v2516 = vsel %vm313, %v2510, 0.0
    %2517 = vadd.xlane.f32.xlu0 %v2516
    %v2518 = vpop.xlane.xlu0 %2517
    %v2519 = vsel %vm320, %v2512, 0.0
    %2520 = vadd.xlane.f32.xlu0 %v2519
    %v2521 = vpop.xlane.xlu0 %2520
    %v2522 = vrcp.pop %v2515
    %v2523 = vmul.f32 %v2508, %v2522
    %v2524 = vrcp.pop %v2518
    %v2525 = vmul.f32 %v2510, %v2524
    %v2526 = vrcp.pop %v2521
    %v2527 = vmul.f32 %v2512, %v2526
    %2528 = vrot.lane.b32.xlu0 %v2370, 64
    %v2529 = vpop.permute.xlu0 %2528
    %2530 = vrot.lane.b32.xlu0 %v2373, 64
    %v2531 = vpop.permute.xlu0 %2530
    %2532 = vrot.lane.b32.xlu0 %v2378, 64
    %v2533 = vpop.permute.xlu0 %2532
    %v2537 = vsel %vm313, %v2523, 0
    %v2540 = vsel %vm313, %v2525, 0
    %v2543 = vsel %vm313, %v2527, 0
    %v2545 = vsel %vm365, %v2533, 0
    %2547 = vmatprep.subr.mxu0 0.0
    %2548 = vmatpush1.msra.mxu0 %v2529
    %2549 = vmatprep.subr.mxu0 0.0
    %2550 = vmatpush1.msra.mxu0 %v2531
    %2551 = vmatprep.subr.mxu0 0.0
    %2552 = vmatpush1.msra.mxu0 %v2545
    %2553 = vmatprep.subr.mxu0 0.0
    %2554 = vmatpush1.msra.mxu0 0.0
    %2555 = vmatprep.subr.mxu0 0.0
    %2556 = vmatpush1.msra.mxu0 0.0
    %2557 = vmatprep.subr.mxu0 0.0
    %2558 = vmatpush1.msra.mxu0 0.0
    %2559 = vmatprep.subr.mxu0 0.0
    %2560 = vmatpush1.msra.mxu0 0.0
    %2561 = vmatprep.subr.mxu0 0.0
    %2562 = vmatpush1.msra.mxu0 0.0
    %2563 = vmatprep.subr.mxu0 0.0
    %2564 = vmatpush1.msra.mxu0 0.0
    %2565 = vmatprep.subr.mxu0 0.0
    %2566 = vmatpush1.msra.mxu0 0.0
    %2567 = vmatprep.subr.mxu0 0.0
    %2568 = vmatpush1.msra.mxu0 0.0
    %2569 = vmatprep.subr.mxu0 0.0
    %2570 = vmatpush1.msra.mxu0 0.0
    %2571 = vmatprep.subr.mxu0 0.0
    %2572 = vmatpush1.msra.mxu0 0.0
    %2573 = vmatprep.subr.mxu0 0.0
    %2574 = vmatpush1.msra.mxu0 0.0
    %2575 = vmatprep.subr.mxu0 0.0
    %2576 = vmatpush1.msra.mxu0 0.0
    %2577 = vmatprep.subr.mxu0 0.0
    %2578 = vmatpush1.msra.mxu0 0.0
    %2579 = vmatprep.subr.mxu0 0.0
    %2580 = vmatpush1.msra.mxu0 0.0
    %2581 = vmatprep.subr.mxu0 0.0
    %2582 = vmatpush1.msra.mxu0 0.0
    %2583 = vmatprep.subr.mxu0 0.0
    %2584 = vmatpush1.msra.mxu0 0.0
    %2585 = vmatprep.subr.mxu0 0.0
    %2586 = vmatpush1.msra.mxu0 0.0
    %2587 = vmatprep.subr.mxu0 0.0
    %2588 = vmatpush1.msra.mxu0 0.0
    %2589 = vmatprep.subr.mxu0 0.0
    %2590 = vmatpush1.msra.mxu0 0.0
    %2591 = vmatprep.subr.mxu0 0.0
    %2592 = vmatpush1.msra.mxu0 0.0
    %2593 = vmatprep.subr.mxu0 0.0
    %2594 = vmatpush1.msra.mxu0 0.0
    %2595 = vmatprep.subr.mxu0 0.0
    %2596 = vmatpush1.msra.mxu0 0.0
    %2597 = vmatprep.subr.mxu0 0.0
    %2598 = vmatpush1.msra.mxu0 0.0
    %2599 = vmatprep.subr.mxu0 0.0
    %2600 = vmatpush1.msra.mxu0 0.0
    %2601 = vmatprep.subr.mxu0 0.0
    %2602 = vmatpush1.msra.mxu0 0.0
    %2603 = vmatprep.subr.mxu0 0.0
    %2604 = vmatpush1.msra.mxu0 0.0
    %2605 = vmatprep.subr.mxu0 0.0
    %2606 = vmatpush1.msra.mxu0 0.0
    %2607 = vmatprep.subr.mxu0 0.0
    %2608 = vmatpush1.msra.mxu0 0.0
    %2609 = vmatprep.subr.mxu0 0.0
    %2610 = vmatpush1.msra.mxu0 0.0
    %2611 = vmatprep.mubr.f32.mxu0 0.0
    %2612 = vmatmul.mubr.f32.gmra.mrb[0].mxu0 %v2537
    %v2613 = vpop.f32.mrb[0].mxu0
    %v2614 = vadd.f32 0.0, %v2613
    %v2615 = vpop.f32.mrb[0].mxu0
    %2616 = vmatprep.mubr.f32.mxu0 0.0
    %2617 = vmatmul.mubr.f32.gmra.mrb[0].mxu0 %v2540
    %v2618 = vpop.f32.mrb[0].mxu0
    %v2619 = vadd.f32 0.0, %v2618
    %v2620 = vpop.f32.mrb[0].mxu0
    %2621 = vmatprep.mubr.f32.mxu0 0.0
    %2622 = vmatmul.mubr.f32.gmra.mrb[0].mxu0 %v2543
    %v2623 = vpop.f32.mrb[0].mxu0
    %v2624 = vadd.f32 0.0, %v2623
    %v2625 = vpop.f32.mrb[0].mxu0
    %2626 = vdwg.mxu0
    %v2627 = vpack.c.bf16 %v2619, %v2614
    %v2628 = vpack.c.bf16 %v2624, %v2624
    %2629 = vrot.lane.b32.xlu0 %v2370, 112
    %v2630 = vpop.permute.xlu0 %2629
    %2631 = vrot.lane.b32.xlu0 %v2373, 112
    %v2632 = vpop.permute.xlu0 %2631
    %2633 = vrot.lane.b32.xlu0 %v2378, 112
    %v2634 = vpop.permute.xlu0 %2633
    %2635 = vrot.lane.b32.xlu0 %v2370, 80
    %v2636 = vpop.permute.xlu0 %2635
    %2637 = vrot.lane.b32.xlu0 %v2373, 80
    %v2638 = vpop.permute.xlu0 %2637
    %2639 = vrot.lane.b32.xlu0 %v2378, 80
    %v2640 = vpop.permute.xlu0 %2639
    %v2641 = vsel %vm214, %v2630, 0
    %v2643 = vsel %vm214, %v2632, 0
    %v2645 = vsel %vm214, %v2634, 0
    %v2647 = vsel %vm214, %v2636, 0
    %v2649 = vsel %vm214, %v2638, 0
    %v2651 = vsel %vm214, %v2640, 0
    %2653 = vmatprep.subr.mxu0 0.0
    %2654 = vmatpush1.xpose.msra.mxu0 %v2647
    %2655 = vmatprep.subr.mxu0 0.0
    %2656 = vmatpush1.xpose.msra.mxu0 %v2649
    %2657 = vmatprep.subr.mxu0 0.0
    %2658 = vmatpush1.xpose.msra.mxu0 %v2651
    %2659 = vmatprep.subr.mxu0 0.0
    %2660 = vmatpush1.xpose.msra.mxu0 0.0
    %2661 = vmatprep.subr.mxu0 0.0
    %2662 = vmatpush1.xpose.msra.mxu0 0.0
    %2663 = vmatprep.subr.mxu0 0.0
    %2664 = vmatpush1.xpose.msra.mxu0 0.0
    %2665 = vmatprep.subr.mxu0 0.0
    %2666 = vmatpush1.xpose.msra.mxu0 0.0
    %2667 = vmatprep.subr.mxu0 0.0
    %2668 = vmatpush1.xpose.msra.mxu0 0.0
    %2669 = vmatprep.subr.mxu0 0.0
    %2670 = vmatpush1.xpose.msra.mxu0 0.0
    %2671 = vmatprep.subr.mxu0 0.0
    %2672 = vmatpush1.xpose.msra.mxu0 0.0
    %2673 = vmatprep.subr.mxu0 0.0
    %2674 = vmatpush1.xpose.msra.mxu0 0.0
    %2675 = vmatprep.subr.mxu0 0.0
    %2676 = vmatpush1.xpose.msra.mxu0 0.0
    %2677 = vmatprep.subr.mxu0 0.0
    %2678 = vmatpush1.xpose.msra.mxu0 0.0
    %2679 = vmatprep.subr.mxu0 0.0
    %2680 = vmatpush1.xpose.msra.mxu0 0.0
    %2681 = vmatprep.subr.mxu0 0.0
    %2682 = vmatpush1.xpose.msra.mxu0 0.0
    %2683 = vmatprep.subr.mxu0 0.0
    %2684 = vmatpush1.xpose.msra.mxu0 0.0
    %2685 = vmatprep.subr.mxu0 0.0
    %2686 = vmatpush1.xpose.msra.mxu0 0.0
    %2687 = vmatprep.subr.mxu0 0.0
    %2688 = vmatpush1.xpose.msra.mxu0 0.0
    %2689 = vmatprep.subr.mxu0 0.0
    %2690 = vmatpush1.xpose.msra.mxu0 0.0
    %2691 = vmatprep.subr.mxu0 0.0
    %2692 = vmatpush1.xpose.msra.mxu0 0.0
    %2693 = vmatprep.subr.mxu0 0.0
    %2694 = vmatpush1.xpose.msra.mxu0 0.0
    %2695 = vmatprep.subr.mxu0 0.0
    %2696 = vmatpush1.xpose.msra.mxu0 0.0
    %2697 = vmatprep.subr.mxu0 0.0
    %2698 = vmatpush1.xpose.msra.mxu0 0.0
    %2699 = vmatprep.subr.mxu0 0.0
    %2700 = vmatpush1.xpose.msra.mxu0 0.0
    %2701 = vmatprep.subr.mxu0 0.0
    %2702 = vmatpush1.xpose.msra.mxu0 0.0
    %2703 = vmatprep.subr.mxu0 0.0
    %2704 = vmatpush1.xpose.msra.mxu0 0.0
    %2705 = vmatprep.subr.mxu0 0.0
    %2706 = vmatpush1.xpose.msra.mxu0 0.0
    %2707 = vmatprep.subr.mxu0 0.0
    %2708 = vmatpush1.xpose.msra.mxu0 0.0
    %2709 = vmatprep.subr.mxu0 0.0
    %2710 = vmatpush1.xpose.msra.mxu0 0.0
    %2711 = vmatprep.subr.mxu0 0.0
    %2712 = vmatpush1.xpose.msra.mxu0 0.0
    %2713 = vmatprep.subr.mxu0 0.0
    %2714 = vmatpush1.xpose.msra.mxu0 0.0
    %2715 = vmatprep.subr.mxu0 0.0
    %2716 = vmatpush1.xpose.msra.mxu0 0.0
    %2717 = vmatprep.mubr.f32.mxu0 0.0
    %2718 = vmatmul.mubr.f32.gmra.mrb[0].mxu0 %v2641
    %v2719 = vpop.f32.mrb[0].mxu0
    %v2720 = vadd.f32 0.0, %v2719
    %v2721 = vpop.f32.mrb[0].mxu0
    %2722 = vmatprep.mubr.f32.mxu0 0.0
    %2723 = vmatmul.mubr.f32.gmra.mrb[0].mxu0 %v2643
    %v2724 = vpop.f32.mrb[0].mxu0
    %v2725 = vadd.f32 0.0, %v2724
    %v2726 = vpop.f32.mrb[0].mxu0
    %2727 = vmatprep.mubr.f32.mxu0 0.0
    %2728 = vmatmul.mubr.f32.gmra.mrb[0].mxu0 %v2645
    %v2729 = vpop.f32.mrb[0].mxu0
    %v2730 = vadd.f32 0.0, %v2729
    %v2731 = vpop.f32.mrb[0].mxu0
    %2732 = vdwg.mxu0
    %v2733 = vmul.f32 %v2720, 0.25
    %v2734 = vmul.f32 %v2725, 0.25
    %v2735 = vmul.f32 %v2730, 0.25
    %v2736 = vsel %vm114, %v2733, -inf
    %v2737 = vsel %vm115, %v2734, -inf
    %v2738 = vsel %vm116, %v2735, -inf
    %v2739 = vsel %vm313, %v2736, -inf
    %2740 = vmax.xlane.f32.xlu0 %v2739
    %v2741 = vpop.xlane.xlu0 %2740
    %v2742 = vsel %vm313, %v2737, -inf
    %2743 = vmax.xlane.f32.xlu0 %v2742
    %v2744 = vpop.xlane.xlu0 %2743
    %v2745 = vsel %vm320, %v2738, -inf
    %2746 = vmax.xlane.f32.xlu0 %v2745
    %v2747 = vpop.xlane.xlu0 %2746
    %v2748 = vsub.f32 %v2736, %v2741
    %v2749 = vsub.f32 %v2737, %v2744
    %v2750 = vsub.f32 %v2738, %v2747
    %v2751 = vmul.f32 %v2748, 1.442695
    %v2752 = vpow.pop %v2751
    %v2753 = vmul.f32 %v2749, 1.442695
    %v2754 = vpow.pop %v2753
    %v2755 = vmul.f32 %v2750, 1.442695
    %v2756 = vpow.pop %v2755
    %v2757 = vsel %vm313, %v2752, 0.0
    %2758 = vadd.xlane.f32.xlu0 %v2757
    %v2759 = vpop.xlane.xlu0 %2758
    %v2760 = vsel %vm313, %v2754, 0.0
    %2761 = vadd.xlane.f32.xlu0 %v2760
    %v2762 = vpop.xlane.xlu0 %2761
    %v2763 = vsel %vm320, %v2756, 0.0
    %2764 = vadd.xlane.f32.xlu0 %v2763
    %v2765 = vpop.xlane.xlu0 %2764
    %v2766 = vrcp.pop %v2759
    %v2767 = vmul.f32 %v2752, %v2766
    %v2768 = vrcp.pop %v2762
    %v2769 = vmul.f32 %v2754, %v2768
    %v2770 = vrcp.pop %v2765
    %v2771 = vmul.f32 %v2756, %v2770
    %2772 = vrot.lane.b32.xlu0 %v2370, 48
    %v2773 = vpop.permute.xlu0 %2772
    %2774 = vrot.lane.b32.xlu0 %v2373, 48
    %v2775 = vpop.permute.xlu0 %2774
    %2776 = vrot.lane.b32.xlu0 %v2378, 48
    %v2777 = vpop.permute.xlu0 %2776
    %v2781 = vsel %vm313, %v2767, 0
    %v2784 = vsel %vm313, %v2769, 0
    %v2787 = vsel %vm313, %v2771, 0
    %v2789 = vsel %vm365, %v2777, 0
    %2791 = vmatprep.subr.mxu0 0.0
    %2792 = vmatpush1.msra.mxu0 %v2773
    %2793 = vmatprep.subr.mxu0 0.0
    %2794 = vmatpush1.msra.mxu0 %v2775
    %2795 = vmatprep.subr.mxu0 0.0
    %2796 = vmatpush1.msra.mxu0 %v2789
    %2797 = vmatprep.subr.mxu0 0.0
    %2798 = vmatpush1.msra.mxu0 0.0
    %2799 = vmatprep.subr.mxu0 0.0
    %2800 = vmatpush1.msra.mxu0 0.0
    %2801 = vmatprep.subr.mxu0 0.0
    %2802 = vmatpush1.msra.mxu0 0.0
    %2803 = vmatprep.subr.mxu0 0.0
    %2804 = vmatpush1.msra.mxu0 0.0
    %2805 = vmatprep.subr.mxu0 0.0
    %2806 = vmatpush1.msra.mxu0 0.0
    %2807 = vmatprep.subr.mxu0 0.0
    %2808 = vmatpush1.msra.mxu0 0.0
    %2809 = vmatprep.subr.mxu0 0.0
    %2810 = vmatpush1.msra.mxu0 0.0
    %2811 = vmatprep.subr.mxu0 0.0
    %2812 = vmatpush1.msra.mxu0 0.0
    %2813 = vmatprep.subr.mxu0 0.0
    %2814 = vmatpush1.msra.mxu0 0.0
    %2815 = vmatprep.subr.mxu0 0.0
    %2816 = vmatpush1.msra.mxu0 0.0
    %2817 = vmatprep.subr.mxu0 0.0
    %2818 = vmatpush1.msra.mxu0 0.0
    %2819 = vmatprep.subr.mxu0 0.0
    %2820 = vmatpush1.msra.mxu0 0.0
    %2821 = vmatprep.subr.mxu0 0.0
    %2822 = vmatpush1.msra.mxu0 0.0
    %2823 = vmatprep.subr.mxu0 0.0
    %2824 = vmatpush1.msra.mxu0 0.0
    %2825 = vmatprep.subr.mxu0 0.0
    %2826 = vmatpush1.msra.mxu0 0.0
    %2827 = vmatprep.subr.mxu0 0.0
    %2828 = vmatpush1.msra.mxu0 0.0
    %2829 = vmatprep.subr.mxu0 0.0
    %2830 = vmatpush1.msra.mxu0 0.0
    %2831 = vmatprep.subr.mxu0 0.0
    %2832 = vmatpush1.msra.mxu0 0.0
    %2833 = vmatprep.subr.mxu0 0.0
    %2834 = vmatpush1.msra.mxu0 0.0
    %2835 = vmatprep.subr.mxu0 0.0
    %2836 = vmatpush1.msra.mxu0 0.0
    %2837 = vmatprep.subr.mxu0 0.0
    %2838 = vmatpush1.msra.mxu0 0.0
    %2839 = vmatprep.subr.mxu0 0.0
    %2840 = vmatpush1.msra.mxu0 0.0
    %2841 = vmatprep.subr.mxu0 0.0
    %2842 = vmatpush1.msra.mxu0 0.0
    %2843 = vmatprep.subr.mxu0 0.0
    %2844 = vmatpush1.msra.mxu0 0.0
    %2845 = vmatprep.subr.mxu0 0.0
    %2846 = vmatpush1.msra.mxu0 0.0
    %2847 = vmatprep.subr.mxu0 0.0
    %2848 = vmatpush1.msra.mxu0 0.0
    %2849 = vmatprep.subr.mxu0 0.0
    %2850 = vmatpush1.msra.mxu0 0.0
    %2851 = vmatprep.subr.mxu0 0.0
    %2852 = vmatpush1.msra.mxu0 0.0
    %2853 = vmatprep.subr.mxu0 0.0
    %2854 = vmatpush1.msra.mxu0 0.0
    %2855 = vmatprep.mubr.f32.mxu0 0.0
    %2856 = vmatmul.mubr.f32.gmra.mrb[0].mxu0 %v2781
    %v2857 = vpop.f32.mrb[0].mxu0
    %v2858 = vadd.f32 0.0, %v2857
    %v2859 = vpop.f32.mrb[0].mxu0
    %2860 = vmatprep.mubr.f32.mxu0 0.0
    %2861 = vmatmul.mubr.f32.gmra.mrb[0].mxu0 %v2784
    %v2862 = vpop.f32.mrb[0].mxu0
    %v2863 = vadd.f32 0.0, %v2862
    %v2864 = vpop.f32.mrb[0].mxu0
    %2865 = vmatprep.mubr.f32.mxu0 0.0
    %2866 = vmatmul.mubr.f32.gmra.mrb[0].mxu0 %v2787
    %v2867 = vpop.f32.mrb[0].mxu0
    %v2868 = vadd.f32 0.0, %v2867
    %v2869 = vpop.f32.mrb[0].mxu0
    %2870 = vdwg.mxu0
    %v2871 = vpack.c.bf16 %v2863, %v2858
    %v2872 = vpack.c.bf16 %v2868, %v2868
    %v2875 = vunpack.c.l.b16 %v2385
    %v2876 = vunpack.c.l.b16 %v2386
    %v2877 = vpack.c.b16 %v2876, %v2875
    %v2880 = vsel %vm214, %v2871, 0
    %v2883 = vsel %vm214, %v2872, 0
    %2885 = vmatprep.subr.bf16.mxu0 0
    %2886 = vmatpush1.bf16.msra.mxu0 %v2877
    %2887 = vmatprep.subr.bf16.mxu0 0
    %2888 = vmatpush1.bf16.msra.mxu0 0
    %2889 = vmatprep.subr.bf16.mxu0 0
    %2890 = vmatpush1.bf16.msra.mxu0 0
    %2891 = vmatprep.subr.bf16.mxu0 0
    %2892 = vmatpush1.bf16.msra.mxu0 0
    %2893 = vmatprep.subr.bf16.mxu0 0
    %2894 = vmatpush1.bf16.msra.mxu0 0
    %2895 = vmatprep.subr.bf16.mxu0 0
    %2896 = vmatpush1.bf16.msra.mxu0 0
    %2897 = vmatprep.subr.bf16.mxu0 0
    %2898 = vmatpush1.bf16.msra.mxu0 0
    %2899 = vmatprep.subr.bf16.mxu0 0
    %2900 = vmatpush1.bf16.msra.mxu0 0
    %2901 = vmatprep.subr.bf16.mxu0 0
    %2902 = vmatpush1.bf16.msra.mxu0 0
    %2903 = vmatprep.subr.bf16.mxu0 0
    %2904 = vmatpush1.bf16.msra.mxu0 0
    %2905 = vmatprep.subr.bf16.mxu0 0
    %2906 = vmatpush1.bf16.msra.mxu0 0
    %2907 = vmatprep.subr.bf16.mxu0 0
    %2908 = vmatpush1.bf16.msra.mxu0 0
    %2909 = vmatprep.subr.bf16.mxu0 0
    %2910 = vmatpush1.bf16.msra.mxu0 0
    %2911 = vmatprep.subr.bf16.mxu0 0
    %2912 = vmatpush1.bf16.msra.mxu0 0
    %2913 = vmatprep.subr.bf16.mxu0 0
    %2914 = vmatpush1.bf16.msra.mxu0 0
    %2915 = vmatprep.subr.bf16.mxu0 0
    %2916 = vmatpush1.bf16.msra.mxu0 0
    %2917 = vmatprep.mubr.bf16.mxu0 0
    %2918 = vmatmul.mubr.bf16.gmra.mrb[0].mxu0 %v2880
    %v2919 = vpop.f32.mrb[0].mxu0
    %v2920 = vadd.f32 0.0, %v2919
    %v2921 = vpop.f32.mrb[0].mxu0
    %v2922 = vpop.f32.mrb[0].mxu0
    %v2923 = vadd.f32 0.0, %v2922
    %v2924 = vpop.f32.mrb[0].mxu0
    %2925 = vmatprep.mubr.bf16.mxu0 0
    %2926 = vmatmul.mubr.bf16.gmra.mrb[0].mxu0 %v2883
    %v2927 = vpop.f32.mrb[0].mxu0
    %v2928 = vadd.f32 0.0, %v2927
    %v2929 = vpop.f32.mrb[0].mxu0
    %v2930 = vpop.f32.mrb[0].mxu0
    %v2931 = vpop.f32.mrb[0].mxu0
    %2932 = vdwg.mxu0
    %v2935 = vunpack.c.l.b16 %v2383
    %v2936 = vunpack.c.l.b16 %v2384
    %v2937 = vpack.c.b16 %v2936, %v2935
    %v2940 = vsel %vm214, %v2627, 0
    %v2943 = vsel %vm214, %v2628, 0
    %2945 = vmatprep.subr.bf16.mxu0 0
    %2946 = vmatpush1.bf16.msra.mxu0 %v2937
    %2947 = vmatprep.subr.bf16.mxu0 0
    %2948 = vmatpush1.bf16.msra.mxu0 0
    %2949 = vmatprep.subr.bf16.mxu0 0
    %2950 = vmatpush1.bf16.msra.mxu0 0
    %2951 = vmatprep.subr.bf16.mxu0 0
    %2952 = vmatpush1.bf16.msra.mxu0 0
    %2953 = vmatprep.subr.bf16.mxu0 0
    %2954 = vmatpush1.bf16.msra.mxu0 0
    %2955 = vmatprep.subr.bf16.mxu0 0
    %2956 = vmatpush1.bf16.msra.mxu0 0
    %2957 = vmatprep.subr.bf16.mxu0 0
    %2958 = vmatpush1.bf16.msra.mxu0 0
    %2959 = vmatprep.subr.bf16.mxu0 0
    %2960 = vmatpush1.bf16.msra.mxu0 0
    %2961 = vmatprep.subr.bf16.mxu0 0
    %2962 = vmatpush1.bf16.msra.mxu0 0
    %2963 = vmatprep.subr.bf16.mxu0 0
    %2964 = vmatpush1.bf16.msra.mxu0 0
    %2965 = vmatprep.subr.bf16.mxu0 0
    %2966 = vmatpush1.bf16.msra.mxu0 0
    %2967 = vmatprep.subr.bf16.mxu0 0
    %2968 = vmatpush1.bf16.msra.mxu0 0
    %2969 = vmatprep.subr.bf16.mxu0 0
    %2970 = vmatpush1.bf16.msra.mxu0 0
    %2971 = vmatprep.subr.bf16.mxu0 0
    %2972 = vmatpush1.bf16.msra.mxu0 0
    %2973 = vmatprep.subr.bf16.mxu0 0
    %2974 = vmatpush1.bf16.msra.mxu0 0
    %2975 = vmatprep.subr.bf16.mxu0 0
    %2976 = vmatpush1.bf16.msra.mxu0 0
    %2977 = vmatprep.mubr.bf16.mxu0 0
    %2978 = vmatmul.mubr.bf16.gmra.mrb[0].mxu0 %v2940
    %v2979 = vpop.f32.mrb[0].mxu0
    %v2980 = vadd.f32 %v2920, %v2979
    %v2981 = vpop.f32.mrb[0].mxu0
    %v2982 = vpop.f32.mrb[0].mxu0
    %v2983 = vadd.f32 %v2923, %v2982
    %v2984 = vpop.f32.mrb[0].mxu0
    %2985 = vmatprep.mubr.bf16.mxu0 0
    %2986 = vmatmul.mubr.bf16.gmra.mrb[0].mxu0 %v2943
    %v2987 = vpop.f32.mrb[0].mxu0
    %v2988 = vadd.f32 %v2928, %v2987
    %v2989 = vpop.f32.mrb[0].mxu0
    %v2990 = vpop.f32.mrb[0].mxu0
    %v2991 = vpop.f32.mrb[0].mxu0
    %2992 = vdwg.mxu0
    %v2994 = vlaneseq
    %v2995 = vshrl.u32 %v2994, 7
    %v2996 = vsub.s32 0, %v2995
    %v2997 = vrot.slane %v2387, %v2996
    %v2999 = vadd.f32 %v2980, %v2997
    %v3000 = vadd.f32 %v2983, %v2997
    %v3001 = vadd.f32 %v2988, %v2997
    %v3002 = vadd.f32 %v2301, %v2999
    %v3003 = vadd.f32 %v2302, %v3000
    %v3004 = vadd.f32 %v2303, %v3001
    %v3005 = vld [vmem:[#allocation7 + $0x2a] sm:$0x1]
    %v3006 = vld [vmem:[#allocation7 + $0x2b] sm:$0x1]
    %v3007 = vsel %vm145, %v3002, 0.0
    %3008 = vadd.xlane.f32.xlu0 %v3007
    %v3009 = vpop.xlane.xlu0 %3008
    %v3010 = vsel %vm145, %v3003, 0.0
    %3011 = vadd.xlane.f32.xlu0 %v3010
    %v3012 = vpop.xlane.xlu0 %3011
    %v3013 = vsel %vm834, %v3004, 0.0
    %3014 = vadd.xlane.f32.xlu0 %v3013
    %v3015 = vpop.xlane.xlu0 %3014
    %v3016 = vmul.f32 %v3009, %v838
    %v3017 = vmul.f32 %v3012, %v838
    %v3018 = vmul.f32 %v3015, %v838
    %v3019 = vsub.f32 %v3002, %v3016
    %v3020 = vsub.f32 %v3003, %v3017
    %v3021 = vsub.f32 %v3004, %v3018
    %v3022 = vmul.f32 %v3019, %v3019
    %v3023 = vmul.f32 %v3020, %v3020
    %v3024 = vmul.f32 %v3021, %v3021
    %v3025 = vsel %vm145, %v3022, 0.0
    %3026 = vadd.xlane.f32.xlu0 %v3025
    %v3027 = vpop.xlane.xlu0 %3026
    %v3028 = vsel %vm145, %v3023, 0.0
    %3029 = vadd.xlane.f32.xlu0 %v3028
    %v3030 = vpop.xlane.xlu0 %3029
    %v3031 = vsel %vm834, %v3024, 0.0
    %3032 = vadd.xlane.f32.xlu0 %v3031
    %v3033 = vpop.xlane.xlu0 %3032
    %v3034 = vmul.f32 %v3027, %v838
    %v3035 = vmul.f32 %v3030, %v838
    %v3036 = vmul.f32 %v3033, %v838
    %v3037 = vadd.f32 %v3034, 1e-05
    %v3038 = vadd.f32 %v3035, 1e-05
    %v3039 = vadd.f32 %v3036, 1e-05
    %v3040 = vrsqrt.pop %v3037
    %v3041 = vrsqrt.pop %v3038
    %v3042 = vrsqrt.pop %v3039
    %v3043 = vmul.f32 %v3019, %v3040
    %v3044 = vmul.f32 %v3020, %v3041
    %v3045 = vmul.f32 %v3021, %v3042
    %v3047 = vlaneseq
    %v3048 = vshrl.u32 %v3047, 7
    %v3049 = vsub.s32 0, %v3048
    %v3050 = vrot.slane %v3005, %v3049
    %v3052 = vmul.f32 %v3043, %v3050
    %v3053 = vmul.f32 %v3044, %v3050
    %v3054 = vmul.f32 %v3045, %v3050
    %v3056 = vlaneseq
    %v3057 = vshrl.u32 %v3056, 7
    %v3058 = vsub.s32 0, %v3057
    %v3059 = vrot.slane %v3006, %v3058
    %v3061 = vadd.f32 %v3052, %v3059
    %v3062 = vadd.f32 %v3053, %v3059
    %v3063 = vadd.f32 %v3054, %v3059
    %v3064 = vld [vmem:[#allocation5 + $0x90] sm:$0xff]
    %v3065 = vld [vmem:[#allocation5 + $0x98] sm:$0xff]
    %v3066 = vld [vmem:[#allocation5 + $0xa0] sm:$0xff]
    %v3067 = vld [vmem:[#allocation5 + $0xa8] sm:$0xff]
    %v3068 = vld [vmem:[#allocation5 + $0xb0] sm:$0xff]
    %v3069 = vld [vmem:[#allocation5 + $0xb8] sm:$0xff]
    %v3070 = vld [vmem:[#allocation5 + $0xc0] sm:$0xff]
    %v3071 = vld [vmem:[#allocation5 + $0xc8] sm:$0xff]
    %v3072 = vld [vmem:[#allocation5 + $0x2c0] sm:$0xff]
    %v3073 = vld [vmem:[#allocation5 + $0x2c8] sm:$0xff]
    %v3074 = vld [vmem:[#allocation5 + $0x2d0] sm:$0xff]
    %v3075 = vld [vmem:[#allocation5 + $0x2d8] sm:$0xff]
    %v3076 = vld [vmem:[#allocation5 + $0x2e0] sm:$0xff]
    %v3077 = vld [vmem:[#allocation5 + $0x2e8] sm:$0xff]
    %v3078 = vld [vmem:[#allocation5 + $0x2f0] sm:$0xff]
    %v3079 = vld [vmem:[#allocation5 + $0x2f8] sm:$0xff]
    %v3080 = vld [vmem:[#allocation5 + $0x4f0] sm:$0xff]
    %v3081 = vld [vmem:[#allocation5 + $0x4f8] sm:$0xff]
    %v3082 = vld [vmem:[#allocation5 + $0x500] sm:$0xff]
    %v3083 = vld [vmem:[#allocation5 + $0x508] sm:$0xff]
    %v3084 = vld [vmem:[#allocation5 + $0x510] sm:$0xff]
    %v3085 = vld [vmem:[#allocation5 + $0x518] sm:$0xff]
    %v3086 = vld [vmem:[#allocation5 + $0x520] sm:$0xff]
    %v3087 = vld [vmem:[#allocation5 + $0x528] sm:$0xff]
    %v3088 = vld [vmem:[#allocation5 + $0x720] sm:$0xff]
    %v3089 = vld [vmem:[#allocation5 + $0x728] sm:$0xff]
    %v3090 = vld [vmem:[#allocation5 + $0x730] sm:$0xff]
    %v3091 = vld [vmem:[#allocation5 + $0x738] sm:$0xff]
    %v3092 = vld [vmem:[#allocation5 + $0x740] sm:$0xff]
    %v3093 = vld [vmem:[#allocation5 + $0x748] sm:$0xff]
    %v3094 = vld [vmem:[#allocation5 + $0x750] sm:$0xff]
    %v3095 = vld [vmem:[#allocation5 + $0x758] sm:$0xff]
    %v3096 = vld [vmem:[#allocation7 + $0x19] sm:$0xff]
    %v3097 = vld [vmem:[#allocation7 + $0x21] sm:$0xff]
    %v3098 = vld [vmem:[#allocation5 + $0xd0] sm:$0xff]
    %v3099 = vld [vmem:[#allocation5 + $0xd8] sm:$0xff]
    %v3100 = vld [vmem:[#allocation5 + $0xe0] sm:$0xff]
    %v3101 = vld [vmem:[#allocation5 + $0xe8] sm:$0xff]
    %v3102 = vld [vmem:[#allocation5 + $0xf0] sm:$0xff]
    %v3103 = vld [vmem:[#allocation5 + $0xf8] sm:$0xff]
    %v3104 = vld [vmem:[#allocation5 + $0x100] sm:$0xff]
    %v3105 = vld [vmem:[#allocation5 + $0x108] sm:$0xff]
    %v3106 = vld [vmem:[#allocation5 + $0x300] sm:$0xff]
    %v3107 = vld [vmem:[#allocation5 + $0x308] sm:$0xff]
    %v3108 = vld [vmem:[#allocation5 + $0x310] sm:$0xff]
    %v3109 = vld [vmem:[#allocation5 + $0x318] sm:$0xff]
    %v3110 = vld [vmem:[#allocation5 + $0x320] sm:$0xff]
    %v3111 = vld [vmem:[#allocation5 + $0x328] sm:$0xff]
    %v3112 = vld [vmem:[#allocation5 + $0x330] sm:$0xff]
    %v3113 = vld [vmem:[#allocation5 + $0x338] sm:$0xff]
    %v3114 = vld [vmem:[#allocation5 + $0x530] sm:$0xff]
    %v3115 = vld [vmem:[#allocation5 + $0x538] sm:$0xff]
    %v3116 = vld [vmem:[#allocation5 + $0x540] sm:$0xff]
    %v3117 = vld [vmem:[#allocation5 + $0x548] sm:$0xff]
    %v3118 = vld [vmem:[#allocation5 + $0x550] sm:$0xff]
    %v3119 = vld [vmem:[#allocation5 + $0x558] sm:$0xff]
    %v3120 = vld [vmem:[#allocation5 + $0x560] sm:$0xff]
    %v3121 = vld [vmem:[#allocation5 + $0x568] sm:$0xff]
    %v3122 = vld [vmem:[#allocation5 + $0x760] sm:$0xff]
    %v3123 = vld [vmem:[#allocation5 + $0x768] sm:$0xff]
    %v3124 = vld [vmem:[#allocation5 + $0x770] sm:$0xff]
    %v3125 = vld [vmem:[#allocation5 + $0x778] sm:$0xff]
    %v3126 = vld [vmem:[#allocation5 + $0x780] sm:$0xff]
    %v3127 = vld [vmem:[#allocation5 + $0x788] sm:$0xff]
    %v3128 = vld [vmem:[#allocation5 + $0x790] sm:$0xff]
    %v3129 = vld [vmem:[#allocation5 + $0x798] sm:$0xff]
    %v3130 = vld [vmem:[#allocation7 + $0x29] sm:$0x1]
    %v3131 = vpack.c.bf16 %v3062, %v3061
    %v3132 = vpack.c.bf16 %v3063, %v3063
    %v3135 = vlaneseq
    %v3136 = vshrl.u32 %v3135, 7
    %v3137 = vsub.s32 0, %v3136
    %v3138 = vrot.slane %v3096, %v3137
    %v3139 = vlaneseq
    %v3140 = vshrl.u32 %v3139, 7
    %v3141 = vsub.s32 1, %v3140
    %v3142 = vrot.slane %v3096, %v3141
    %v3143 = vlaneseq
    %v3144 = vshrl.u32 %v3143, 7
    %v3145 = vsub.s32 2, %v3144
    %v3146 = vrot.slane %v3096, %v3145
    %v3147 = vlaneseq
    %v3148 = vshrl.u32 %v3147, 7
    %v3149 = vsub.s32 3, %v3148
    %v3150 = vrot.slane %v3096, %v3149
    %v3151 = vlaneseq
    %v3152 = vshrl.u32 %v3151, 7
    %v3153 = vsub.s32 4, %v3152
    %v3154 = vrot.slane %v3096, %v3153
    %v3155 = vlaneseq
    %v3156 = vshrl.u32 %v3155, 7
    %v3157 = vsub.s32 5, %v3156
    %v3158 = vrot.slane %v3096, %v3157
    %v3159 = vlaneseq
    %v3160 = vshrl.u32 %v3159, 7
    %v3161 = vsub.s32 6, %v3160
    %v3162 = vrot.slane %v3096, %v3161
    %v3163 = vlaneseq
    %v3164 = vshrl.u32 %v3163, 7
    %v3165 = vsub.s32 7, %v3164
    %v3166 = vrot.slane %v3096, %v3165
    %v3167 = vlaneseq
    %v3168 = vshrl.u32 %v3167, 7
    %v3169 = vsub.s32 0, %v3168
    %v3170 = vrot.slane %v3097, %v3169
    %v3171 = vlaneseq
    %v3172 = vshrl.u32 %v3171, 7
    %v3173 = vsub.s32 1, %v3172
    %v3174 = vrot.slane %v3097, %v3173
    %v3175 = vlaneseq
    %v3176 = vshrl.u32 %v3175, 7
    %v3177 = vsub.s32 2, %v3176
    %v3178 = vrot.slane %v3097, %v3177
    %v3179 = vlaneseq
    %v3180 = vshrl.u32 %v3179, 7
    %v3181 = vsub.s32 3, %v3180
    %v3182 = vrot.slane %v3097, %v3181
    %v3183 = vlaneseq
    %v3184 = vshrl.u32 %v3183, 7
    %v3185 = vsub.s32 4, %v3184
    %v3186 = vrot.slane %v3097, %v3185
    %v3187 = vlaneseq
    %v3188 = vshrl.u32 %v3187, 7
    %v3189 = vsub.s32 5, %v3188
    %v3190 = vrot.slane %v3097, %v3189
    %v3191 = vlaneseq
    %v3192 = vshrl.u32 %v3191, 7
    %v3193 = vsub.s32 6, %v3192
    %v3194 = vrot.slane %v3097, %v3193
    %v3195 = vlaneseq
    %v3196 = vshrl.u32 %v3195, 7
    %v3197 = vsub.s32 7, %v3196
    %v3198 = vrot.slane %v3097, %v3197
    %v3247 = vunpack.c.l.b16 %v3064
    %v3248 = vunpack.c.h.b16 %v3064
    %v3249 = vunpack.c.l.b16 %v3065
    %v3250 = vunpack.c.h.b16 %v3065
    %v3251 = vunpack.c.l.b16 %v3066
    %v3252 = vunpack.c.h.b16 %v3066
    %v3253 = vunpack.c.l.b16 %v3067
    %v3254 = vunpack.c.h.b16 %v3067
    %v3255 = vunpack.c.l.b16 %v3068
    %v3256 = vunpack.c.h.b16 %v3068
    %v3257 = vunpack.c.l.b16 %v3069
    %v3258 = vunpack.c.h.b16 %v3069
    %v3259 = vunpack.c.l.b16 %v3070
    %v3260 = vunpack.c.h.b16 %v3070
    %v3261 = vunpack.c.l.b16 %v3071
    %v3262 = vunpack.c.h.b16 %v3071
    %v3263 = vunpack.c.l.b16 %v3072
    %v3264 = vunpack.c.h.b16 %v3072
    %v3265 = vunpack.c.l.b16 %v3073
    %v3266 = vunpack.c.h.b16 %v3073
    %v3267 = vunpack.c.l.b16 %v3074
    %v3268 = vunpack.c.h.b16 %v3074
    %v3269 = vunpack.c.l.b16 %v3075
    %v3270 = vunpack.c.h.b16 %v3075
    %v3271 = vunpack.c.l.b16 %v3076
    %v3272 = vunpack.c.h.b16 %v3076
    %v3273 = vunpack.c.l.b16 %v3077
    %v3274 = vunpack.c.h.b16 %v3077
    %v3275 = vunpack.c.l.b16 %v3078
    %v3276 = vunpack.c.h.b16 %v3078
    %v3277 = vunpack.c.l.b16 %v3079
    %v3278 = vunpack.c.h.b16 %v3079
    %v3279 = vunpack.c.l.b16 %v3080
    %v3280 = vunpack.c.h.b16 %v3080
    %v3281 = vunpack.c.l.b16 %v3081
    %v3282 = vunpack.c.h.b16 %v3081
    %v3283 = vunpack.c.l.b16 %v3082
    %v3284 = vunpack.c.h.b16 %v3082
    %v3285 = vunpack.c.l.b16 %v3083
    %v3286 = vunpack.c.h.b16 %v3083
    %v3287 = vunpack.c.l.b16 %v3084
    %v3288 = vunpack.c.h.b16 %v3084
    %v3289 = vunpack.c.l.b16 %v3085
    %v3290 = vunpack.c.h.b16 %v3085
    %v3291 = vunpack.c.l.b16 %v3086
    %v3292 = vunpack.c.h.b16 %v3086
    %v3293 = vunpack.c.l.b16 %v3087
    %v3294 = vunpack.c.h.b16 %v3087
    %v3295 = vunpack.c.l.b16 %v3088
    %v3296 = vunpack.c.h.b16 %v3088
    %v3297 = vunpack.c.l.b16 %v3089
    %v3298 = vunpack.c.h.b16 %v3089
    %v3299 = vunpack.c.l.b16 %v3090
    %v3300 = vunpack.c.h.b16 %v3090
    %v3301 = vunpack.c.l.b16 %v3091
    %v3302 = vunpack.c.h.b16 %v3091
    %v3303 = vunpack.c.l.b16 %v3092
    %v3304 = vunpack.c.h.b16 %v3092
    %v3305 = vunpack.c.l.b16 %v3093
    %v3306 = vunpack.c.h.b16 %v3093
    %v3307 = vunpack.c.l.b16 %v3094
    %v3308 = vunpack.c.h.b16 %v3094
    %v3309 = vunpack.c.l.b16 %v3095
    %v3310 = vunpack.c.h.b16 %v3095
    %v3311 = vpack.c.b16 %v3263, %v3247
    %v3312 = vpack.c.b16 %v3264, %v3248
    %v3313 = vpack.c.b16 %v3265, %v3249
    %v3314 = vpack.c.b16 %v3266, %v3250
    %v3315 = vpack.c.b16 %v3267, %v3251
    %v3316 = vpack.c.b16 %v3268, %v3252
    %v3317 = vpack.c.b16 %v3269, %v3253
    %v3318 = vpack.c.b16 %v3270, %v3254
    %v3319 = vpack.c.b16 %v3271, %v3255
    %v3320 = vpack.c.b16 %v3272, %v3256
    %v3321 = vpack.c.b16 %v3273, %v3257
    %v3322 = vpack.c.b16 %v3274, %v3258
    %v3323 = vpack.c.b16 %v3275, %v3259
    %v3324 = vpack.c.b16 %v3276, %v3260
    %v3325 = vpack.c.b16 %v3277, %v3261
    %v3326 = vpack.c.b16 %v3278, %v3262
    %v3327 = vpack.c.b16 %v3295, %v3279
    %v3328 = vpack.c.b16 %v3296, %v3280
    %v3329 = vpack.c.b16 %v3297, %v3281
    %v3330 = vpack.c.b16 %v3298, %v3282
    %v3331 = vpack.c.b16 %v3299, %v3283
    %v3332 = vpack.c.b16 %v3300, %v3284
    %v3333 = vpack.c.b16 %v3301, %v3285
    %v3334 = vpack.c.b16 %v3302, %v3286
    %v3335 = vpack.c.b16 %v3303, %v3287
    %v3336 = vpack.c.b16 %v3304, %v3288
    %v3337 = vpack.c.b16 %v3305, %v3289
    %v3338 = vpack.c.b16 %v3306, %v3290
    %v3339 = vpack.c.b16 %v3307, %v3291
    %v3340 = vpack.c.b16 %v3308, %v3292
    %v3341 = vpack.c.b16 %v3309, %v3293
    %v3342 = vpack.c.b16 %v3310, %v3294
    %v3376 = vsel %vm145, %v3131, 0
    %v3379 = vsel %vm145, %v3132, 0
    %3381 = vmatprep.subr.bf16.mxu0 %v3312
    %3382 = vmatpush1.bf16.msra.mxu0 %v3311
    %3383 = vmatprep.subr.bf16.mxu0 %v3328
    %3384 = vmatpush1.bf16.msra.mxu0 %v3327
    %3385 = vmatprep.subr.bf16.mxu0 0
    %3386 = vmatpush1.bf16.msra.mxu0 0
    %3387 = vmatprep.subr.bf16.mxu0 0
    %3388 = vmatpush1.bf16.msra.mxu0 0
    %3389 = vmatprep.subr.bf16.mxu0 0
    %3390 = vmatpush1.bf16.msra.mxu0 0
    %3391 = vmatprep.subr.bf16.mxu0 0
    %3392 = vmatpush1.bf16.msra.mxu0 0
    %3393 = vmatprep.subr.bf16.mxu0 0
    %3394 = vmatpush1.bf16.msra.mxu0 0
    %3395 = vmatprep.subr.bf16.mxu0 0
    %3396 = vmatpush1.bf16.msra.mxu0 0
    %3397 = vmatprep.subr.bf16.mxu0 0
    %3398 = vmatpush1.bf16.msra.mxu0 0
    %3399 = vmatprep.subr.bf16.mxu0 0
    %3400 = vmatpush1.bf16.msra.mxu0 0
    %3401 = vmatprep.subr.bf16.mxu0 0
    %3402 = vmatpush1.bf16.msra.mxu0 0
    %3403 = vmatprep.subr.bf16.mxu0 0
    %3404 = vmatpush1.bf16.msra.mxu0 0
    %3405 = vmatprep.subr.bf16.mxu0 0
    %3406 = vmatpush1.bf16.msra.mxu0 0
    %3407 = vmatprep.subr.bf16.mxu0 0
    %3408 = vmatpush1.bf16.msra.mxu0 0
    %3409 = vmatprep.subr.bf16.mxu0 0
    %3410 = vmatpush1.bf16.msra.mxu0 0
    %3411 = vmatprep.subr.bf16.mxu0 0
    %3412 = vmatpush1.bf16.msra.mxu0 0
    %3413 = vmatprep.mubr.bf16.mxu0 0
    %3414 = vmatmul.mubr.bf16.gmra.mrb[0].mxu0 %v3376
    %v3415 = vpop.f32.mrb[0].mxu0
    %v3416 = vadd.f32 %v3138, %v3415
    %v3417 = vpop.f32.mrb[0].mxu0
    %v3418 = vadd.f32 %v3142, %v3417
    %v3419 = vpop.f32.mrb[0].mxu0
    %v3420 = vadd.f32 %v3138, %v3419
    %v3421 = vpop.f32.mrb[0].mxu0
    %v3422 = vadd.f32 %v3142, %v3421
    %3423 = vmatprep.mubr.bf16.mxu0 0
    %3424 = vmatmul.mubr.bf16.gmra.mrb[0].mxu0 %v3379
    %v3425 = vpop.f32.mrb[0].mxu0
    %v3426 = vadd.f32 %v3138, %v3425
    %v3427 = vpop.f32.mrb[0].mxu0
    %v3428 = vadd.f32 %v3142, %v3427
    %v3429 = vpop.f32.mrb[0].mxu0
    %v3430 = vpop.f32.mrb[0].mxu0
    %3431 = vdwg.mxu0
    %3432 = vmatprep.subr.bf16.mxu0 %v3314
    %3433 = vmatpush1.bf16.msra.mxu0 %v3313
    %3434 = vmatprep.subr.bf16.mxu0 %v3330
    %3435 = vmatpush1.bf16.msra.mxu0 %v3329
    %3436 = vmatprep.subr.bf16.mxu0 0
    %3437 = vmatpush1.bf16.msra.mxu0 0
    %3438 = vmatprep.subr.bf16.mxu0 0
    %3439 = vmatpush1.bf16.msra.mxu0 0
    %3440 = vmatprep.subr.bf16.mxu0 0
    %3441 = vmatpush1.bf16.msra.mxu0 0
    %3442 = vmatprep.subr.bf16.mxu0 0
    %3443 = vmatpush1.bf16.msra.mxu0 0
    %3444 = vmatprep.subr.bf16.mxu0 0
    %3445 = vmatpush1.bf16.msra.mxu0 0
    %3446 = vmatprep.subr.bf16.mxu0 0
    %3447 = vmatpush1.bf16.msra.mxu0 0
    %3448 = vmatprep.subr.bf16.mxu0 0
    %3449 = vmatpush1.bf16.msra.mxu0 0
    %3450 = vmatprep.subr.bf16.mxu0 0
    %3451 = vmatpush1.bf16.msra.mxu0 0
    %3452 = vmatprep.subr.bf16.mxu0 0
    %3453 = vmatpush1.bf16.msra.mxu0 0
    %3454 = vmatprep.subr.bf16.mxu0 0
    %3455 = vmatpush1.bf16.msra.mxu0 0
    %3456 = vmatprep.subr.bf16.mxu0 0
    %3457 = vmatpush1.bf16.msra.mxu0 0
    %3458 = vmatprep.subr.bf16.mxu0 0
    %3459 = vmatpush1.bf16.msra.mxu0 0
    %3460 = vmatprep.subr.bf16.mxu0 0
    %3461 = vmatpush1.bf16.msra.mxu0 0
    %3462 = vmatprep.subr.bf16.mxu0 0
    %3463 = vmatpush1.bf16.msra.mxu0 0
    %3464 = vmatprep.mubr.bf16.mxu0 0
    %3465 = vmatmul.mubr.bf16.gmra.mrb[0].mxu0 %v3376
    %v3466 = vpop.f32.mrb[0].mxu0
    %v3467 = vadd.f32 %v3146, %v3466
    %v3468 = vpop.f32.mrb[0].mxu0
    %v3469 = vadd.f32 %v3150, %v3468
    %v3470 = vpop.f32.mrb[0].mxu0
    %v3471 = vadd.f32 %v3146, %v3470
    %v3472 = vpop.f32.mrb[0].mxu0
    %v3473 = vadd.f32 %v3150, %v3472
    %3474 = vmatprep.mubr.bf16.mxu0 0
    %3475 = vmatmul.mubr.bf16.gmra.mrb[0].mxu0 %v3379
    %v3476 = vpop.f32.mrb[0].mxu0
    %v3477 = vadd.f32 %v3146, %v3476
    %v3478 = vpop.f32.mrb[0].mxu0
    %v3479 = vadd.f32 %v3150, %v3478
    %v3480 = vpop.f32.mrb[0].mxu0
    %v3481 = vpop.f32.mrb[0].mxu0
    %3482 = vdwg.mxu0
    %3483 = vmatprep.subr.bf16.mxu0 %v3316
    %3484 = vmatpush1.bf16.msra.mxu0 %v3315
    %3485 = vmatprep.subr.bf16.mxu0 %v3332
    %3486 = vmatpush1.bf16.msra.mxu0 %v3331
    %3487 = vmatprep.subr.bf16.mxu0 0
    %3488 = vmatpush1.bf16.msra.mxu0 0
    %3489 = vmatprep.subr.bf16.mxu0 0
    %3490 = vmatpush1.bf16.msra.mxu0 0
    %3491 = vmatprep.subr.bf16.mxu0 0
    %3492 = vmatpush1.bf16.msra.mxu0 0
    %3493 = vmatprep.subr.bf16.mxu0 0
    %3494 = vmatpush1.bf16.msra.mxu0 0
    %3495 = vmatprep.subr.bf16.mxu0 0
    %3496 = vmatpush1.bf16.msra.mxu0 0
    %3497 = vmatprep.subr.bf16.mxu0 0
    %3498 = vmatpush1.bf16.msra.mxu0 0
    %3499 = vmatprep.subr.bf16.mxu0 0
    %3500 = vmatpush1.bf16.msra.mxu0 0
    %3501 = vmatprep.subr.bf16.mxu0 0
    %3502 = vmatpush1.bf16.msra.mxu0 0
    %3503 = vmatprep.subr.bf16.mxu0 0
    %3504 = vmatpush1.bf16.msra.mxu0 0
    %3505 = vmatprep.subr.bf16.mxu0 0
    %3506 = vmatpush1.bf16.msra.mxu0 0
    %3507 = vmatprep.subr.bf16.mxu0 0
    %3508 = vmatpush1.bf16.msra.mxu0 0
    %3509 = vmatprep.subr.bf16.mxu0 0
    %3510 = vmatpush1.bf16.msra.mxu0 0
    %3511 = vmatprep.subr.bf16.mxu0 0
    %3512 = vmatpush1.bf16.msra.mxu0 0
    %3513 = vmatprep.subr.bf16.mxu0 0
    %3514 = vmatpush1.bf16.msra.mxu0 0
    %3515 = vmatprep.mubr.bf16.mxu0 0
    %3516 = vmatmul.mubr.bf16.gmra.mrb[0].mxu0 %v3376
    %v3517 = vpop.f32.mrb[0].mxu0
    %v3518 = vadd.f32 %v3154, %v3517
    %v3519 = vpop.f32.mrb[0].mxu0
    %v3520 = vadd.f32 %v3158, %v3519
    %v3521 = vpop.f32.mrb[0].mxu0
    %v3522 = vadd.f32 %v3154, %v3521
    %v3523 = vpop.f32.mrb[0].mxu0
    %v3524 = vadd.f32 %v3158, %v3523
    %3525 = vmatprep.mubr.bf16.mxu0 0
    %3526 = vmatmul.mubr.bf16.gmra.mrb[0].mxu0 %v3379
    %v3527 = vpop.f32.mrb[0].mxu0
    %v3528 = vadd.f32 %v3154, %v3527
    %v3529 = vpop.f32.mrb[0].mxu0
    %v3530 = vadd.f32 %v3158, %v3529
    %v3531 = vpop.f32.mrb[0].mxu0
    %v3532 = vpop.f32.mrb[0].mxu0
    %3533 = vdwg.mxu0
    %3534 = vmatprep.subr.bf16.mxu0 %v3318
    %3535 = vmatpush1.bf16.msra.mxu0 %v3317
    %3536 = vmatprep.subr.bf16.mxu0 %v3334
    %3537 = vmatpush1.bf16.msra.mxu0 %v3333
    %3538 = vmatprep.subr.bf16.mxu0 0
    %3539 = vmatpush1.bf16.msra.mxu0 0
    %3540 = vmatprep.subr.bf16.mxu0 0
    %3541 = vmatpush1.bf16.msra.mxu0 0
    %3542 = vmatprep.subr.bf16.mxu0 0
    %3543 = vmatpush1.bf16.msra.mxu0 0
    %3544 = vmatprep.subr.bf16.mxu0 0
    %3545 = vmatpush1.bf16.msra.mxu0 0
    %3546 = vmatprep.subr.bf16.mxu0 0
    %3547 = vmatpush1.bf16.msra.mxu0 0
    %3548 = vmatprep.subr.bf16.mxu0 0
    %3549 = vmatpush1.bf16.msra.mxu0 0
    %3550 = vmatprep.subr.bf16.mxu0 0
    %3551 = vmatpush1.bf16.msra.mxu0 0
    %3552 = vmatprep.subr.bf16.mxu0 0
    %3553 = vmatpush1.bf16.msra.mxu0 0
    %3554 = vmatprep.subr.bf16.mxu0 0
    %3555 = vmatpush1.bf16.msra.mxu0 0
    %3556 = vmatprep.subr.bf16.mxu0 0
    %3557 = vmatpush1.bf16.msra.mxu0 0
    %3558 = vmatprep.subr.bf16.mxu0 0
    %3559 = vmatpush1.bf16.msra.mxu0 0
    %3560 = vmatprep.subr.bf16.mxu0 0
    %3561 = vmatpush1.bf16.msra.mxu0 0
    %3562 = vmatprep.subr.bf16.mxu0 0
    %3563 = vmatpush1.bf16.msra.mxu0 0
    %3564 = vmatprep.subr.bf16.mxu0 0
    %3565 = vmatpush1.bf16.msra.mxu0 0
    %3566 = vmatprep.mubr.bf16.mxu0 0
    %3567 = vmatmul.mubr.bf16.gmra.mrb[0].mxu0 %v3376
    %v3568 = vpop.f32.mrb[0].mxu0
    %v3569 = vadd.f32 %v3162, %v3568
    %v3570 = vpop.f32.mrb[0].mxu0
    %v3571 = vadd.f32 %v3166, %v3570
    %v3572 = vpop.f32.mrb[0].mxu0
    %v3573 = vadd.f32 %v3162, %v3572
    %v3574 = vpop.f32.mrb[0].mxu0
    %v3575 = vadd.f32 %v3166, %v3574
    %3576 = vmatprep.mubr.bf16.mxu0 0
    %3577 = vmatmul.mubr.bf16.gmra.mrb[0].mxu0 %v3379
    %v3578 = vpop.f32.mrb[0].mxu0
    %v3579 = vadd.f32 %v3162, %v3578
    %v3580 = vpop.f32.mrb[0].mxu0
    %v3581 = vadd.f32 %v3166, %v3580
    %v3582 = vpop.f32.mrb[0].mxu0
    %v3583 = vpop.f32.mrb[0].mxu0
    %3584 = vdwg.mxu0
    %3585 = vmatprep.subr.bf16.mxu0 %v3320
    %3586 = vmatpush1.bf16.msra.mxu0 %v3319
    %3587 = vmatprep.subr.bf16.mxu0 %v3336
    %3588 = vmatpush1.bf16.msra.mxu0 %v3335
    %3589 = vmatprep.subr.bf16.mxu0 0
    %3590 = vmatpush1.bf16.msra.mxu0 0
    %3591 = vmatprep.subr.bf16.mxu0 0
    %3592 = vmatpush1.bf16.msra.mxu0 0
    %3593 = vmatprep.subr.bf16.mxu0 0
    %3594 = vmatpush1.bf16.msra.mxu0 0
    %3595 = vmatprep.subr.bf16.mxu0 0
    %3596 = vmatpush1.bf16.msra.mxu0 0
    %3597 = vmatprep.subr.bf16.mxu0 0
    %3598 = vmatpush1.bf16.msra.mxu0 0
    %3599 = vmatprep.subr.bf16.mxu0 0
    %3600 = vmatpush1.bf16.msra.mxu0 0
    %3601 = vmatprep.subr.bf16.mxu0 0
    %3602 = vmatpush1.bf16.msra.mxu0 0
    %3603 = vmatprep.subr.bf16.mxu0 0
    %3604 = vmatpush1.bf16.msra.mxu0 0
    %3605 = vmatprep.subr.bf16.mxu0 0
    %3606 = vmatpush1.bf16.msra.mxu0 0
    %3607 = vmatprep.subr.bf16.mxu0 0
    %3608 = vmatpush1.bf16.msra.mxu0 0
    %3609 = vmatprep.subr.bf16.mxu0 0
    %3610 = vmatpush1.bf16.msra.mxu0 0
    %3611 = vmatprep.subr.bf16.mxu0 0
    %3612 = vmatpush1.bf16.msra.mxu0 0
    %3613 = vmatprep.subr.bf16.mxu0 0
    %3614 = vmatpush1.bf16.msra.mxu0 0
    %3615 = vmatprep.subr.bf16.mxu0 0
    %3616 = vmatpush1.bf16.msra.mxu0 0
    %3617 = vmatprep.mubr.bf16.mxu0 0
    %3618 = vmatmul.mubr.bf16.gmra.mrb[0].mxu0 %v3376
    %v3619 = vpop.f32.mrb[0].mxu0
    %v3620 = vadd.f32 %v3170, %v3619
    %v3621 = vpop.f32.mrb[0].mxu0
    %v3622 = vadd.f32 %v3174, %v3621
    %v3623 = vpop.f32.mrb[0].mxu0
    %v3624 = vadd.f32 %v3170, %v3623
    %v3625 = vpop.f32.mrb[0].mxu0
    %v3626 = vadd.f32 %v3174, %v3625
    %3627 = vmatprep.mubr.bf16.mxu0 0
    %3628 = vmatmul.mubr.bf16.gmra.mrb[0].mxu0 %v3379
    %v3629 = vpop.f32.mrb[0].mxu0
    %v3630 = vadd.f32 %v3170, %v3629
    %v3631 = vpop.f32.mrb[0].mxu0
    %v3632 = vadd.f32 %v3174, %v3631
    %v3633 = vpop.f32.mrb[0].mxu0
    %v3634 = vpop.f32.mrb[0].mxu0
    %3635 = vdwg.mxu0
    %3636 = vmatprep.subr.bf16.mxu0 %v3322
    %3637 = vmatpush1.bf16.msra.mxu0 %v3321
    %3638 = vmatprep.subr.bf16.mxu0 %v3338
    %3639 = vmatpush1.bf16.msra.mxu0 %v3337
    %3640 = vmatprep.subr.bf16.mxu0 0
    %3641 = vmatpush1.bf16.msra.mxu0 0
    %3642 = vmatprep.subr.bf16.mxu0 0
    %3643 = vmatpush1.bf16.msra.mxu0 0
    %3644 = vmatprep.subr.bf16.mxu0 0
    %3645 = vmatpush1.bf16.msra.mxu0 0
    %3646 = vmatprep.subr.bf16.mxu0 0
    %3647 = vmatpush1.bf16.msra.mxu0 0
    %3648 = vmatprep.subr.bf16.mxu0 0
    %3649 = vmatpush1.bf16.msra.mxu0 0
    %3650 = vmatprep.subr.bf16.mxu0 0
    %3651 = vmatpush1.bf16.msra.mxu0 0
    %3652 = vmatprep.subr.bf16.mxu0 0
    %3653 = vmatpush1.bf16.msra.mxu0 0
    %3654 = vmatprep.subr.bf16.mxu0 0
    %3655 = vmatpush1.bf16.msra.mxu0 0
    %3656 = vmatprep.subr.bf16.mxu0 0
    %3657 = vmatpush1.bf16.msra.mxu0 0
    %3658 = vmatprep.subr.bf16.mxu0 0
    %3659 = vmatpush1.bf16.msra.mxu0 0
    %3660 = vmatprep.subr.bf16.mxu0 0
    %3661 = vmatpush1.bf16.msra.mxu0 0
    %3662 = vmatprep.subr.bf16.mxu0 0
    %3663 = vmatpush1.bf16.msra.mxu0 0
    %3664 = vmatprep.subr.bf16.mxu0 0
    %3665 = vmatpush1.bf16.msra.mxu0 0
    %3666 = vmatprep.subr.bf16.mxu0 0
    %3667 = vmatpush1.bf16.msra.mxu0 0
    %3668 = vmatprep.mubr.bf16.mxu0 0
    %3669 = vmatmul.mubr.bf16.gmra.mrb[0].mxu0 %v3376
    %v3670 = vpop.f32.mrb[0].mxu0
    %v3671 = vadd.f32 %v3178, %v3670
    %v3672 = vpop.f32.mrb[0].mxu0
    %v3673 = vadd.f32 %v3182, %v3672
    %v3674 = vpop.f32.mrb[0].mxu0
    %v3675 = vadd.f32 %v3178, %v3674
    %v3676 = vpop.f32.mrb[0].mxu0
    %v3677 = vadd.f32 %v3182, %v3676
    %3678 = vmatprep.mubr.bf16.mxu0 0
    %3679 = vmatmul.mubr.bf16.gmra.mrb[0].mxu0 %v3379
    %v3680 = vpop.f32.mrb[0].mxu0
    %v3681 = vadd.f32 %v3178, %v3680
    %v3682 = vpop.f32.mrb[0].mxu0
    %v3683 = vadd.f32 %v3182, %v3682
    %v3684 = vpop.f32.mrb[0].mxu0
    %v3685 = vpop.f32.mrb[0].mxu0
    %3686 = vdwg.mxu0
    %3687 = vmatprep.subr.bf16.mxu0 %v3324
    %3688 = vmatpush1.bf16.msra.mxu0 %v3323
    %3689 = vmatprep.subr.bf16.mxu0 %v3340
    %3690 = vmatpush1.bf16.msra.mxu0 %v3339
    %3691 = vmatprep.subr.bf16.mxu0 0
    %3692 = vmatpush1.bf16.msra.mxu0 0
    %3693 = vmatprep.subr.bf16.mxu0 0
    %3694 = vmatpush1.bf16.msra.mxu0 0
    %3695 = vmatprep.subr.bf16.mxu0 0
    %3696 = vmatpush1.bf16.msra.mxu0 0
    %3697 = vmatprep.subr.bf16.mxu0 0
    %3698 = vmatpush1.bf16.msra.mxu0 0
    %3699 = vmatprep.subr.bf16.mxu0 0
    %3700 = vmatpush1.bf16.msra.mxu0 0
    %3701 = vmatprep.subr.bf16.mxu0 0
    %3702 = vmatpush1.bf16.msra.mxu0 0
    %3703 = vmatprep.subr.bf16.mxu0 0
    %3704 = vmatpush1.bf16.msra.mxu0 0
    %3705 = vmatprep.subr.bf16.mxu0 0
    %3706 = vmatpush1.bf16.msra.mxu0 0
    %3707 = vmatprep.subr.bf16.mxu0 0
    %3708 = vmatpush1.bf16.msra.mxu0 0
    %3709 = vmatprep.subr.bf16.mxu0 0
    %3710 = vmatpush1.bf16.msra.mxu0 0
    %3711 = vmatprep.subr.bf16.mxu0 0
    %3712 = vmatpush1.bf16.msra.mxu0 0
    %3713 = vmatprep.subr.bf16.mxu0 0
    %3714 = vmatpush1.bf16.msra.mxu0 0
    %3715 = vmatprep.subr.bf16.mxu0 0
    %3716 = vmatpush1.bf16.msra.mxu0 0
    %3717 = vmatprep.subr.bf16.mxu0 0
    %3718 = vmatpush1.bf16.msra.mxu0 0
    %3719 = vmatprep.mubr.bf16.mxu0 0
    %3720 = vmatmul.mubr.bf16.gmra.mrb[0].mxu0 %v3376
    %v3721 = vpop.f32.mrb[0].mxu0
    %v3722 = vadd.f32 %v3186, %v3721
    %v3723 = vpop.f32.mrb[0].mxu0
    %v3724 = vadd.f32 %v3190, %v3723
    %v3725 = vpop.f32.mrb[0].mxu0
    %v3726 = vadd.f32 %v3186, %v3725
    %v3727 = vpop.f32.mrb[0].mxu0
    %v3728 = vadd.f32 %v3190, %v3727
    %3729 = vmatprep.mubr.bf16.mxu0 0
    %3730 = vmatmul.mubr.bf16.gmra.mrb[0].mxu0 %v3379
    %v3731 = vpop.f32.mrb[0].mxu0
    %v3732 = vadd.f32 %v3186, %v3731
    %v3733 = vpop.f32.mrb[0].mxu0
    %v3734 = vadd.f32 %v3190, %v3733
    %v3735 = vpop.f32.mrb[0].mxu0
    %v3736 = vpop.f32.mrb[0].mxu0
    %3737 = vdwg.mxu0
    %3738 = vmatprep.subr.bf16.mxu0 %v3326
    %3739 = vmatpush1.bf16.msra.mxu0 %v3325
    %3740 = vmatprep.subr.bf16.mxu0 %v3342
    %3741 = vmatpush1.bf16.msra.mxu0 %v3341
    %3742 = vmatprep.subr.bf16.mxu0 0
    %3743 = vmatpush1.bf16.msra.mxu0 0
    %3744 = vmatprep.subr.bf16.mxu0 0
    %3745 = vmatpush1.bf16.msra.mxu0 0
    %3746 = vmatprep.subr.bf16.mxu0 0
    %3747 = vmatpush1.bf16.msra.mxu0 0
    %3748 = vmatprep.subr.bf16.mxu0 0
    %3749 = vmatpush1.bf16.msra.mxu0 0
    %3750 = vmatprep.subr.bf16.mxu0 0
    %3751 = vmatpush1.bf16.msra.mxu0 0
    %3752 = vmatprep.subr.bf16.mxu0 0
    %3753 = vmatpush1.bf16.msra.mxu0 0
    %3754 = vmatprep.subr.bf16.mxu0 0
    %3755 = vmatpush1.bf16.msra.mxu0 0
    %3756 = vmatprep.subr.bf16.mxu0 0
    %3757 = vmatpush1.bf16.msra.mxu0 0
    %3758 = vmatprep.subr.bf16.mxu0 0
    %3759 = vmatpush1.bf16.msra.mxu0 0
    %3760 = vmatprep.subr.bf16.mxu0 0
    %3761 = vmatpush1.bf16.msra.mxu0 0
    %3762 = vmatprep.subr.bf16.mxu0 0
    %3763 = vmatpush1.bf16.msra.mxu0 0
    %3764 = vmatprep.subr.bf16.mxu0 0
    %3765 = vmatpush1.bf16.msra.mxu0 0
    %3766 = vmatprep.subr.bf16.mxu0 0
    %3767 = vmatpush1.bf16.msra.mxu0 0
    %3768 = vmatprep.subr.bf16.mxu0 0
    %3769 = vmatpush1.bf16.msra.mxu0 0
    %3770 = vmatprep.mubr.bf16.mxu0 0
    %3771 = vmatmul.mubr.bf16.gmra.mrb[0].mxu0 %v3376
    %v3772 = vpop.f32.mrb[0].mxu0
    %v3773 = vadd.f32 %v3194, %v3772
    %v3774 = vpop.f32.mrb[0].mxu0
    %v3775 = vadd.f32 %v3198, %v3774
    %v3776 = vpop.f32.mrb[0].mxu0
    %v3777 = vadd.f32 %v3194, %v3776
    %v3778 = vpop.f32.mrb[0].mxu0
    %v3779 = vadd.f32 %v3198, %v3778
    %3780 = vmatprep.mubr.bf16.mxu0 0
    %3781 = vmatmul.mubr.bf16.gmra.mrb[0].mxu0 %v3379
    %v3782 = vpop.f32.mrb[0].mxu0
    %v3783 = vadd.f32 %v3194, %v3782
    %v3784 = vpop.f32.mrb[0].mxu0
    %v3785 = vadd.f32 %v3198, %v3784
    %v3786 = vpop.f32.mrb[0].mxu0
    %v3787 = vpop.f32.mrb[0].mxu0
    %3788 = vdwg.mxu0
    %v3789 = vmax.f32 %v3416, 0.0
    %v3790 = vmax.f32 %v3418, 0.0
    %v3791 = vmax.f32 %v3467, 0.0
    %v3792 = vmax.f32 %v3469, 0.0
    %v3793 = vmax.f32 %v3518, 0.0
    %v3794 = vmax.f32 %v3520, 0.0
    %v3795 = vmax.f32 %v3569, 0.0
    %v3796 = vmax.f32 %v3571, 0.0
    %v3797 = vmax.f32 %v3620, 0.0
    %v3798 = vmax.f32 %v3622, 0.0
    %v3799 = vmax.f32 %v3671, 0.0
    %v3800 = vmax.f32 %v3673, 0.0
    %v3801 = vmax.f32 %v3722, 0.0
    %v3802 = vmax.f32 %v3724, 0.0
    %v3803 = vmax.f32 %v3773, 0.0
    %v3804 = vmax.f32 %v3775, 0.0
    %v3805 = vmax.f32 %v3420, 0.0
    %v3806 = vmax.f32 %v3422, 0.0
    %v3807 = vmax.f32 %v3471, 0.0
    %v3808 = vmax.f32 %v3473, 0.0
    %v3809 = vmax.f32 %v3522, 0.0
    %v3810 = vmax.f32 %v3524, 0.0
    %v3811 = vmax.f32 %v3573, 0.0
    %v3812 = vmax.f32 %v3575, 0.0
    %v3813 = vmax.f32 %v3624, 0.0
    %v3814 = vmax.f32 %v3626, 0.0
    %v3815 = vmax.f32 %v3675, 0.0
    %v3816 = vmax.f32 %v3677, 0.0
    %v3817 = vmax.f32 %v3726, 0.0
    %v3818 = vmax.f32 %v3728, 0.0
    %v3819 = vmax.f32 %v3777, 0.0
    %v3820 = vmax.f32 %v3779, 0.0
    %v3821 = vmax.f32 %v3426, 0.0
    %v3822 = vmax.f32 %v3428, 0.0
    %v3823 = vmax.f32 %v3477, 0.0
    %v3824 = vmax.f32 %v3479, 0.0
    %v3825 = vmax.f32 %v3528, 0.0
    %v3826 = vmax.f32 %v3530, 0.0
    %v3827 = vmax.f32 %v3579, 0.0
    %v3828 = vmax.f32 %v3581, 0.0
    %v3829 = vmax.f32 %v3630, 0.0
    %v3830 = vmax.f32 %v3632, 0.0
    %v3831 = vmax.f32 %v3681, 0.0
    %v3832 = vmax.f32 %v3683, 0.0
    %v3833 = vmax.f32 %v3732, 0.0
    %v3834 = vmax.f32 %v3734, 0.0
    %v3835 = vmax.f32 %v3783, 0.0
    %v3836 = vmax.f32 %v3785, 0.0
    %v3837 = vpack.c.bf16 %v3805, %v3789
    %v3838 = vpack.c.bf16 %v3806, %v3790
    %v3839 = vpack.c.bf16 %v3807, %v3791
    %v3840 = vpack.c.bf16 %v3808, %v3792
    %v3841 = vpack.c.bf16 %v3809, %v3793
    %v3842 = vpack.c.bf16 %v3810, %v3794
    %v3843 = vpack.c.bf16 %v3811, %v3795
    %v3844 = vpack.c.bf16 %v3812, %v3796
    %v3845 = vpack.c.bf16 %v3813, %v3797
    %v3846 = vpack.c.bf16 %v3814, %v3798
    %v3847 = vpack.c.bf16 %v3815, %v3799
    %v3848 = vpack.c.bf16 %v3816, %v3800
    %v3849 = vpack.c.bf16 %v3817, %v3801
    %v3850 = vpack.c.bf16 %v3818, %v3802
    %v3851 = vpack.c.bf16 %v3819, %v3803
    %v3852 = vpack.c.bf16 %v3820, %v3804
    %v3853 = vpack.c.bf16 %v3821, %v3821
    %v3854 = vpack.c.bf16 %v3822, %v3822
    %v3855 = vpack.c.bf16 %v3823, %v3823
    %v3856 = vpack.c.bf16 %v3824, %v3824
    %v3857 = vpack.c.bf16 %v3825, %v3825
    %v3858 = vpack.c.bf16 %v3826, %v3826
    %v3859 = vpack.c.bf16 %v3827, %v3827
    %v3860 = vpack.c.bf16 %v3828, %v3828
    %v3861 = vpack.c.bf16 %v3829, %v3829
    %v3862 = vpack.c.bf16 %v3830, %v3830
    %v3863 = vpack.c.bf16 %v3831, %v3831
    %v3864 = vpack.c.bf16 %v3832, %v3832
    %v3865 = vpack.c.bf16 %v3833, %v3833
    %v3866 = vpack.c.bf16 %v3834, %v3834
    %v3867 = vpack.c.bf16 %v3835, %v3835
    %v3868 = vpack.c.bf16 %v3836, %v3836
    %v3870 = vlaneseq
    %v3871 = vshrl.u32 %v3870, 7
    %v3872 = vsub.s32 0, %v3871
    %v3873 = vrot.slane %v3130, %v3872
    %v3907 = vunpack.c.l.b16 %v3098
    %v3908 = vunpack.c.h.b16 %v3098
    %v3909 = vunpack.c.l.b16 %v3099
    %v3910 = vunpack.c.h.b16 %v3099
    %v3911 = vunpack.c.l.b16 %v3100
    %v3912 = vunpack.c.h.b16 %v3100
    %v3913 = vunpack.c.l.b16 %v3101
    %v3914 = vunpack.c.h.b16 %v3101
    %v3915 = vunpack.c.l.b16 %v3102
    %v3916 = vunpack.c.h.b16 %v3102
    %v3917 = vunpack.c.l.b16 %v3103
    %v3918 = vunpack.c.h.b16 %v3103
    %v3919 = vunpack.c.l.b16 %v3104
    %v3920 = vunpack.c.h.b16 %v3104
    %v3921 = vunpack.c.l.b16 %v3105
    %v3922 = vunpack.c.h.b16 %v3105
    %v3923 = vunpack.c.l.b16 %v3106
    %v3924 = vunpack.c.h.b16 %v3106
    %v3925 = vunpack.c.l.b16 %v3107
    %v3926 = vunpack.c.h.b16 %v3107
    %v3927 = vunpack.c.l.b16 %v3108
    %v3928 = vunpack.c.h.b16 %v3108
    %v3929 = vunpack.c.l.b16 %v3109
    %v3930 = vunpack.c.h.b16 %v3109
    %v3931 = vunpack.c.l.b16 %v3110
    %v3932 = vunpack.c.h.b16 %v3110
    %v3933 = vunpack.c.l.b16 %v3111
    %v3934 = vunpack.c.h.b16 %v3111
    %v3935 = vunpack.c.l.b16 %v3112
    %v3936 = vunpack.c.h.b16 %v3112
    %v3937 = vunpack.c.l.b16 %v3113
    %v3938 = vunpack.c.h.b16 %v3113
    %v3939 = vunpack.c.l.b16 %v3114
    %v3940 = vunpack.c.h.b16 %v3114
    %v3941 = vunpack.c.l.b16 %v3115
    %v3942 = vunpack.c.h.b16 %v3115
    %v3943 = vunpack.c.l.b16 %v3116
    %v3944 = vunpack.c.h.b16 %v3116
    %v3945 = vunpack.c.l.b16 %v3117
    %v3946 = vunpack.c.h.b16 %v3117
    %v3947 = vunpack.c.l.b16 %v3118
    %v3948 = vunpack.c.h.b16 %v3118
    %v3949 = vunpack.c.l.b16 %v3119
    %v3950 = vunpack.c.h.b16 %v3119
    %v3951 = vunpack.c.l.b16 %v3120
    %v3952 = vunpack.c.h.b16 %v3120
    %v3953 = vunpack.c.l.b16 %v3121
    %v3954 = vunpack.c.h.b16 %v3121
    %v3955 = vunpack.c.l.b16 %v3122
    %v3956 = vunpack.c.h.b16 %v3122
    %v3957 = vunpack.c.l.b16 %v3123
    %v3958 = vunpack.c.h.b16 %v3123
    %v3959 = vunpack.c.l.b16 %v3124
    %v3960 = vunpack.c.h.b16 %v3124
    %v3961 = vunpack.c.l.b16 %v3125
    %v3962 = vunpack.c.h.b16 %v3125
    %v3963 = vunpack.c.l.b16 %v3126
    %v3964 = vunpack.c.h.b16 %v3126
    %v3965 = vunpack.c.l.b16 %v3127
    %v3966 = vunpack.c.h.b16 %v3127
    %v3967 = vunpack.c.l.b16 %v3128
    %v3968 = vunpack.c.h.b16 %v3128
    %v3969 = vunpack.c.l.b16 %v3129
    %v3970 = vunpack.c.h.b16 %v3129
    %v3971 = vpack.c.b16 %v3923, %v3907
    %v3972 = vpack.c.b16 %v3924, %v3908
    %v3973 = vpack.c.b16 %v3925, %v3909
    %v3974 = vpack.c.b16 %v3926, %v3910
    %v3975 = vpack.c.b16 %v3927, %v3911
    %v3976 = vpack.c.b16 %v3928, %v3912
    %v3977 = vpack.c.b16 %v3929, %v3913
    %v3978 = vpack.c.b16 %v3930, %v3914
    %v3979 = vpack.c.b16 %v3931, %v3915
    %v3980 = vpack.c.b16 %v3932, %v3916
    %v3981 = vpack.c.b16 %v3933, %v3917
    %v3982 = vpack.c.b16 %v3934, %v3918
    %v3983 = vpack.c.b16 %v3935, %v3919
    %v3984 = vpack.c.b16 %v3936, %v3920
    %v3985 = vpack.c.b16 %v3937, %v3921
    %v3986 = vpack.c.b16 %v3938, %v3922
    %v3987 = vpack.c.b16 %v3955, %v3939
    %v3988 = vpack.c.b16 %v3956, %v3940
    %v3989 = vpack.c.b16 %v3957, %v3941
    %v3990 = vpack.c.b16 %v3958, %v3942
    %v3991 = vpack.c.b16 %v3959, %v3943
    %v3992 = vpack.c.b16 %v3960, %v3944
    %v3993 = vpack.c.b16 %v3961, %v3945
    %v3994 = vpack.c.b16 %v3962, %v3946
    %v3995 = vpack.c.b16 %v3963, %v3947
    %v3996 = vpack.c.b16 %v3964, %v3948
    %v3997 = vpack.c.b16 %v3965, %v3949
    %v3998 = vpack.c.b16 %v3966, %v3950
    %v3999 = vpack.c.b16 %v3967, %v3951
    %v4000 = vpack.c.b16 %v3968, %v3952
    %v4001 = vpack.c.b16 %v3969, %v3953
    %v4002 = vpack.c.b16 %v3970, %v3954
    %4035 = vmatprep.subr.bf16.mxu0 %v3972
    %4036 = vmatpush1.bf16.xpose.msra.mxu0 %v3971
    %4037 = vmatprep.subr.bf16.mxu0 %v3988
    %4038 = vmatpush1.bf16.xpose.msra.mxu0 %v3987
    %4039 = vmatprep.subr.bf16.mxu0 0
    %4040 = vmatpush1.bf16.xpose.msra.mxu0 0
    %4041 = vmatprep.subr.bf16.mxu0 0
    %4042 = vmatpush1.bf16.xpose.msra.mxu0 0
    %4043 = vmatprep.subr.bf16.mxu0 0
    %4044 = vmatpush1.bf16.xpose.msra.mxu0 0
    %4045 = vmatprep.subr.bf16.mxu0 0
    %4046 = vmatpush1.bf16.xpose.msra.mxu0 0
    %4047 = vmatprep.subr.bf16.mxu0 0
    %4048 = vmatpush1.bf16.xpose.msra.mxu0 0
    %4049 = vmatprep.subr.bf16.mxu0 0
    %4050 = vmatpush1.bf16.xpose.msra.mxu0 0
    %4051 = vmatprep.subr.bf16.mxu0 0
    %4052 = vmatpush1.bf16.xpose.msra.mxu0 0
    %4053 = vmatprep.subr.bf16.mxu0 0
    %4054 = vmatpush1.bf16.xpose.msra.mxu0 0
    %4055 = vmatprep.subr.bf16.mxu0 0
    %4056 = vmatpush1.bf16.xpose.msra.mxu0 0
    %4057 = vmatprep.subr.bf16.mxu0 0
    %4058 = vmatpush1.bf16.xpose.msra.mxu0 0
    %4059 = vmatprep.subr.bf16.mxu0 0
    %4060 = vmatpush1.bf16.xpose.msra.mxu0 0
    %4061 = vmatprep.subr.bf16.mxu0 0
    %4062 = vmatpush1.bf16.xpose.msra.mxu0 0
    %4063 = vmatprep.subr.bf16.mxu0 0
    %4064 = vmatpush1.bf16.xpose.msra.mxu0 0
    %4065 = vmatprep.subr.bf16.mxu0 0
    %4066 = vmatpush1.bf16.xpose.msra.mxu0 0
    %4067 = vmatprep.mubr.bf16.mxu0 %v3838
    %4068 = vmatmul.mubr.bf16.gmra.mrb[0].mxu0 %v3837
    %v4069 = vpop.f32.mrb[0].mxu0
    %v4070 = vadd.f32 %v3873, %v4069
    %v4071 = vpop.f32.mrb[0].mxu0
    %v4072 = vpop.f32.mrb[0].mxu0
    %v4073 = vadd.f32 %v3873, %v4072
    %v4074 = vpop.f32.mrb[0].mxu0
    %4075 = vmatprep.mubr.bf16.mxu0 %v3854
    %4076 = vmatmul.mubr.bf16.gmra.mrb[0].mxu0 %v3853
    %v4077 = vpop.f32.mrb[0].mxu0
    %v4078 = vadd.f32 %v3873, %v4077
    %v4079 = vpop.f32.mrb[0].mxu0
    %v4080 = vpop.f32.mrb[0].mxu0
    %v4081 = vpop.f32.mrb[0].mxu0
    %4082 = vdwg.mxu0
    %4083 = vmatprep.subr.bf16.mxu0 %v3974
    %4084 = vmatpush1.bf16.xpose.msra.mxu0 %v3973
    %4085 = vmatprep.subr.bf16.mxu0 %v3990
    %4086 = vmatpush1.bf16.xpose.msra.mxu0 %v3989
    %4087 = vmatprep.subr.bf16.mxu0 0
    %4088 = vmatpush1.bf16.xpose.msra.mxu0 0
    %4089 = vmatprep.subr.bf16.mxu0 0
    %4090 = vmatpush1.bf16.xpose.msra.mxu0 0
    %4091 = vmatprep.subr.bf16.mxu0 0
    %4092 = vmatpush1.bf16.xpose.msra.mxu0 0
    %4093 = vmatprep.subr.bf16.mxu0 0
    %4094 = vmatpush1.bf16.xpose.msra.mxu0 0
    %4095 = vmatprep.subr.bf16.mxu0 0
    %4096 = vmatpush1.bf16.xpose.msra.mxu0 0
    %4097 = vmatprep.subr.bf16.mxu0 0
    %4098 = vmatpush1.bf16.xpose.msra.mxu0 0
    %4099 = vmatprep.subr.bf16.mxu0 0
    %4100 = vmatpush1.bf16.xpose.msra.mxu0 0
    %4101 = vmatprep.subr.bf16.mxu0 0
    %4102 = vmatpush1.bf16.xpose.msra.mxu0 0
    %4103 = vmatprep.subr.bf16.mxu0 0
    %4104 = vmatpush1.bf16.xpose.msra.mxu0 0
    %4105 = vmatprep.subr.bf16.mxu0 0
    %4106 = vmatpush1.bf16.xpose.msra.mxu0 0
    %4107 = vmatprep.subr.bf16.mxu0 0
    %4108 = vmatpush1.bf16.xpose.msra.mxu0 0
    %4109 = vmatprep.subr.bf16.mxu0 0
    %4110 = vmatpush1.bf16.xpose.msra.mxu0 0
    %4111 = vmatprep.subr.bf16.mxu0 0
    %4112 = vmatpush1.bf16.xpose.msra.mxu0 0
    %4113 = vmatprep.subr.bf16.mxu0 0
    %4114 = vmatpush1.bf16.xpose.msra.mxu0 0
    %4115 = vmatprep.mubr.bf16.mxu0 %v3840
    %4116 = vmatmul.mubr.bf16.gmra.mrb[0].mxu0 %v3839
    %v4117 = vpop.f32.mrb[0].mxu0
    %v4118 = vadd.f32 %v4070, %v4117
    %v4119 = vpop.f32.mrb[0].mxu0
    %v4120 = vpop.f32.mrb[0].mxu0
    %v4121 = vadd.f32 %v4073, %v4120
    %v4122 = vpop.f32.mrb[0].mxu0
    %4123 = vmatprep.mubr.bf16.mxu0 %v3856
    %4124 = vmatmul.mubr.bf16.gmra.mrb[0].mxu0 %v3855
    %v4125 = vpop.f32.mrb[0].mxu0
    %v4126 = vadd.f32 %v4078, %v4125
    %v4127 = vpop.f32.mrb[0].mxu0
    %v4128 = vpop.f32.mrb[0].mxu0
    %v4129 = vpop.f32.mrb[0].mxu0
    %4130 = vdwg.mxu0
    %4131 = vmatprep.subr.bf16.mxu0 %v3976
    %4132 = vmatpush1.bf16.xpose.msra.mxu0 %v3975
    %4133 = vmatprep.subr.bf16.mxu0 %v3992
    %4134 = vmatpush1.bf16.xpose.msra.mxu0 %v3991
    %4135 = vmatprep.subr.bf16.mxu0 0
    %4136 = vmatpush1.bf16.xpose.msra.mxu0 0
    %4137 = vmatprep.subr.bf16.mxu0 0
    %4138 = vmatpush1.bf16.xpose.msra.mxu0 0
    %4139 = vmatprep.subr.bf16.mxu0 0
    %4140 = vmatpush1.bf16.xpose.msra.mxu0 0
    %4141 = vmatprep.subr.bf16.mxu0 0
    %4142 = vmatpush1.bf16.xpose.msra.mxu0 0
    %4143 = vmatprep.subr.bf16.mxu0 0
    %4144 = vmatpush1.bf16.xpose.msra.mxu0 0
    %4145 = vmatprep.subr.bf16.mxu0 0
    %4146 = vmatpush1.bf16.xpose.msra.mxu0 0
    %4147 = vmatprep.subr.bf16.mxu0 0
    %4148 = vmatpush1.bf16.xpose.msra.mxu0 0
    %4149 = vmatprep.subr.bf16.mxu0 0
    %4150 = vmatpush1.bf16.xpose.msra.mxu0 0
    %4151 = vmatprep.subr.bf16.mxu0 0
    %4152 = vmatpush1.bf16.xpose.msra.mxu0 0
    %4153 = vmatprep.subr.bf16.mxu0 0
    %4154 = vmatpush1.bf16.xpose.msra.mxu0 0
    %4155 = vmatprep.subr.bf16.mxu0 0
    %4156 = vmatpush1.bf16.xpose.msra.mxu0 0
    %4157 = vmatprep.subr.bf16.mxu0 0
    %4158 = vmatpush1.bf16.xpose.msra.mxu0 0
    %4159 = vmatprep.subr.bf16.mxu0 0
    %4160 = vmatpush1.bf16.xpose.msra.mxu0 0
    %4161 = vmatprep.subr.bf16.mxu0 0
    %4162 = vmatpush1.bf16.xpose.msra.mxu0 0
    %4163 = vmatprep.mubr.bf16.mxu0 %v3842
    %4164 = vmatmul.mubr.bf16.gmra.mrb[0].mxu0 %v3841
    %v4165 = vpop.f32.mrb[0].mxu0
    %v4166 = vadd.f32 %v4118, %v4165
    %v4167 = vpop.f32.mrb[0].mxu0
    %v4168 = vpop.f32.mrb[0].mxu0
    %v4169 = vadd.f32 %v4121, %v4168
    %v4170 = vpop.f32.mrb[0].mxu0
    %4171 = vmatprep.mubr.bf16.mxu0 %v3858
    %4172 = vmatmul.mubr.bf16.gmra.mrb[0].mxu0 %v3857
    %v4173 = vpop.f32.mrb[0].mxu0
    %v4174 = vadd.f32 %v4126, %v4173
    %v4175 = vpop.f32.mrb[0].mxu0
    %v4176 = vpop.f32.mrb[0].mxu0
    %v4177 = vpop.f32.mrb[0].mxu0
    %4178 = vdwg.mxu0
    %4179 = vmatprep.subr.bf16.mxu0 %v3978
    %4180 = vmatpush1.bf16.xpose.msra.mxu0 %v3977
    %4181 = vmatprep.subr.bf16.mxu0 %v3994
    %4182 = vmatpush1.bf16.xpose.msra.mxu0 %v3993
    %4183 = vmatprep.subr.bf16.mxu0 0
    %4184 = vmatpush1.bf16.xpose.msra.mxu0 0
    %4185 = vmatprep.subr.bf16.mxu0 0
    %4186 = vmatpush1.bf16.xpose.msra.mxu0 0
    %4187 = vmatprep.subr.bf16.mxu0 0
    %4188 = vmatpush1.bf16.xpose.msra.mxu0 0
    %4189 = vmatprep.subr.bf16.mxu0 0
    %4190 = vmatpush1.bf16.xpose.msra.mxu0 0
    %4191 = vmatprep.subr.bf16.mxu0 0
    %4192 = vmatpush1.bf16.xpose.msra.mxu0 0
    %4193 = vmatprep.subr.bf16.mxu0 0
    %4194 = vmatpush1.bf16.xpose.msra.mxu0 0
    %4195 = vmatprep.subr.bf16.mxu0 0
    %4196 = vmatpush1.bf16.xpose.msra.mxu0 0
    %4197 = vmatprep.subr.bf16.mxu0 0
    %4198 = vmatpush1.bf16.xpose.msra.mxu0 0
    %4199 = vmatprep.subr.bf16.mxu0 0
    %4200 = vmatpush1.bf16.xpose.msra.mxu0 0
    %4201 = vmatprep.subr.bf16.mxu0 0
    %4202 = vmatpush1.bf16.xpose.msra.mxu0 0
    %4203 = vmatprep.subr.bf16.mxu0 0
    %4204 = vmatpush1.bf16.xpose.msra.mxu0 0
    %4205 = vmatprep.subr.bf16.mxu0 0
    %4206 = vmatpush1.bf16.xpose.msra.mxu0 0
    %4207 = vmatprep.subr.bf16.mxu0 0
    %4208 = vmatpush1.bf16.xpose.msra.mxu0 0
    %4209 = vmatprep.subr.bf16.mxu0 0
    %4210 = vmatpush1.bf16.xpose.msra.mxu0 0
    %4211 = vmatprep.mubr.bf16.mxu0 %v3844
    %4212 = vmatmul.mubr.bf16.gmra.mrb[0].mxu0 %v3843
    %v4213 = vpop.f32.mrb[0].mxu0
    %v4214 = vadd.f32 %v4166, %v4213
    %v4215 = vpop.f32.mrb[0].mxu0
    %v4216 = vpop.f32.mrb[0].mxu0
    %v4217 = vadd.f32 %v4169, %v4216
    %v4218 = vpop.f32.mrb[0].mxu0
    %4219 = vmatprep.mubr.bf16.mxu0 %v3860
    %4220 = vmatmul.mubr.bf16.gmra.mrb[0].mxu0 %v3859
    %v4221 = vpop.f32.mrb[0].mxu0
    %v4222 = vadd.f32 %v4174, %v4221
    %v4223 = vpop.f32.mrb[0].mxu0
    %v4224 = vpop.f32.mrb[0].mxu0
    %v4225 = vpop.f32.mrb[0].mxu0
    %4226 = vdwg.mxu0
    %4227 = vmatprep.subr.bf16.mxu0 %v3980
    %4228 = vmatpush1.bf16.xpose.msra.mxu0 %v3979
    %4229 = vmatprep.subr.bf16.mxu0 %v3996
    %4230 = vmatpush1.bf16.xpose.msra.mxu0 %v3995
    %4231 = vmatprep.subr.bf16.mxu0 0
    %4232 = vmatpush1.bf16.xpose.msra.mxu0 0
    %4233 = vmatprep.subr.bf16.mxu0 0
    %4234 = vmatpush1.bf16.xpose.msra.mxu0 0
    %4235 = vmatprep.subr.bf16.mxu0 0
    %4236 = vmatpush1.bf16.xpose.msra.mxu0 0
    %4237 = vmatprep.subr.bf16.mxu0 0
    %4238 = vmatpush1.bf16.xpose.msra.mxu0 0
    %4239 = vmatprep.subr.bf16.mxu0 0
    %4240 = vmatpush1.bf16.xpose.msra.mxu0 0
    %4241 = vmatprep.subr.bf16.mxu0 0
    %4242 = vmatpush1.bf16.xpose.msra.mxu0 0
    %4243 = vmatprep.subr.bf16.mxu0 0
    %4244 = vmatpush1.bf16.xpose.msra.mxu0 0
    %4245 = vmatprep.subr.bf16.mxu0 0
    %4246 = vmatpush1.bf16.xpose.msra.mxu0 0
    %4247 = vmatprep.subr.bf16.mxu0 0
    %4248 = vmatpush1.bf16.xpose.msra.mxu0 0
    %4249 = vmatprep.subr.bf16.mxu0 0
    %4250 = vmatpush1.bf16.xpose.msra.mxu0 0
    %4251 = vmatprep.subr.bf16.mxu0 0
    %4252 = vmatpush1.bf16.xpose.msra.mxu0 0
    %4253 = vmatprep.subr.bf16.mxu0 0
    %4254 = vmatpush1.bf16.xpose.msra.mxu0 0
    %4255 = vmatprep.subr.bf16.mxu0 0
    %4256 = vmatpush1.bf16.xpose.msra.mxu0 0
    %4257 = vmatprep.subr.bf16.mxu0 0
    %4258 = vmatpush1.bf16.xpose.msra.mxu0 0
    %4259 = vmatprep.mubr.bf16.mxu0 %v3846
    %4260 = vmatmul.mubr.bf16.gmra.mrb[0].mxu0 %v3845
    %v4261 = vpop.f32.mrb[0].mxu0
    %v4262 = vadd.f32 %v4214, %v4261
    %v4263 = vpop.f32.mrb[0].mxu0
    %v4264 = vpop.f32.mrb[0].mxu0
    %v4265 = vadd.f32 %v4217, %v4264
    %v4266 = vpop.f32.mrb[0].mxu0
    %4267 = vmatprep.mubr.bf16.mxu0 %v3862
    %4268 = vmatmul.mubr.bf16.gmra.mrb[0].mxu0 %v3861
    %v4269 = vpop.f32.mrb[0].mxu0
    %v4270 = vadd.f32 %v4222, %v4269
    %v4271 = vpop.f32.mrb[0].mxu0
    %v4272 = vpop.f32.mrb[0].mxu0
    %v4273 = vpop.f32.mrb[0].mxu0
    %4274 = vdwg.mxu0
    %4275 = vmatprep.subr.bf16.mxu0 %v3982
    %4276 = vmatpush1.bf16.xpose.msra.mxu0 %v3981
    %4277 = vmatprep.subr.bf16.mxu0 %v3998
    %4278 = vmatpush1.bf16.xpose.msra.mxu0 %v3997
    %4279 = vmatprep.subr.bf16.mxu0 0
    %4280 = vmatpush1.bf16.xpose.msra.mxu0 0
    %4281 = vmatprep.subr.bf16.mxu0 0
    %4282 = vmatpush1.bf16.xpose.msra.mxu0 0
    %4283 = vmatprep.subr.bf16.mxu0 0
    %4284 = vmatpush1.bf16.xpose.msra.mxu0 0
    %4285 = vmatprep.subr.bf16.mxu0 0
    %4286 = vmatpush1.bf16.xpose.msra.mxu0 0
    %4287 = vmatprep.subr.bf16.mxu0 0
    %4288 = vmatpush1.bf16.xpose.msra.mxu0 0
    %4289 = vmatprep.subr.bf16.mxu0 0
    %4290 = vmatpush1.bf16.xpose.msra.mxu0 0
    %4291 = vmatprep.subr.bf16.mxu0 0
    %4292 = vmatpush1.bf16.xpose.msra.mxu0 0
    %4293 = vmatprep.subr.bf16.mxu0 0
    %4294 = vmatpush1.bf16.xpose.msra.mxu0 0
    %4295 = vmatprep.subr.bf16.mxu0 0
    %4296 = vmatpush1.bf16.xpose.msra.mxu0 0
    %4297 = vmatprep.subr.bf16.mxu0 0
    %4298 = vmatpush1.bf16.xpose.msra.mxu0 0
    %4299 = vmatprep.subr.bf16.mxu0 0
    %4300 = vmatpush1.bf16.xpose.msra.mxu0 0
    %4301 = vmatprep.subr.bf16.mxu0 0
    %4302 = vmatpush1.bf16.xpose.msra.mxu0 0
    %4303 = vmatprep.subr.bf16.mxu0 0
    %4304 = vmatpush1.bf16.xpose.msra.mxu0 0
    %4305 = vmatprep.subr.bf16.mxu0 0
    %4306 = vmatpush1.bf16.xpose.msra.mxu0 0
    %4307 = vmatprep.mubr.bf16.mxu0 %v3848
    %4308 = vmatmul.mubr.bf16.gmra.mrb[0].mxu0 %v3847
    %v4309 = vpop.f32.mrb[0].mxu0
    %v4310 = vadd.f32 %v4262, %v4309
    %v4311 = vpop.f32.mrb[0].mxu0
    %v4312 = vpop.f32.mrb[0].mxu0
    %v4313 = vadd.f32 %v4265, %v4312
    %v4314 = vpop.f32.mrb[0].mxu0
    %4315 = vmatprep.mubr.bf16.mxu0 %v3864
    %4316 = vmatmul.mubr.bf16.gmra.mrb[0].mxu0 %v3863
    %v4317 = vpop.f32.mrb[0].mxu0
    %v4318 = vadd.f32 %v4270, %v4317
    %v4319 = vpop.f32.mrb[0].mxu0
    %v4320 = vpop.f32.mrb[0].mxu0
    %v4321 = vpop.f32.mrb[0].mxu0
    %4322 = vdwg.mxu0
    %4323 = vmatprep.subr.bf16.mxu0 %v3984
    %4324 = vmatpush1.bf16.xpose.msra.mxu0 %v3983
    %4325 = vmatprep.subr.bf16.mxu0 %v4000
    %4326 = vmatpush1.bf16.xpose.msra.mxu0 %v3999
    %4327 = vmatprep.subr.bf16.mxu0 0
    %4328 = vmatpush1.bf16.xpose.msra.mxu0 0
    %4329 = vmatprep.subr.bf16.mxu0 0
    %4330 = vmatpush1.bf16.xpose.msra.mxu0 0
    %4331 = vmatprep.subr.bf16.mxu0 0
    %4332 = vmatpush1.bf16.xpose.msra.mxu0 0
    %4333 = vmatprep.subr.bf16.mxu0 0
    %4334 = vmatpush1.bf16.xpose.msra.mxu0 0
    %4335 = vmatprep.subr.bf16.mxu0 0
    %4336 = vmatpush1.bf16.xpose.msra.mxu0 0
    %4337 = vmatprep.subr.bf16.mxu0 0
    %4338 = vmatpush1.bf16.xpose.msra.mxu0 0
    %4339 = vmatprep.subr.bf16.mxu0 0
    %4340 = vmatpush1.bf16.xpose.msra.mxu0 0
    %4341 = vmatprep.subr.bf16.mxu0 0
    %4342 = vmatpush1.bf16.xpose.msra.mxu0 0
    %4343 = vmatprep.subr.bf16.mxu0 0
    %4344 = vmatpush1.bf16.xpose.msra.mxu0 0
    %4345 = vmatprep.subr.bf16.mxu0 0
    %4346 = vmatpush1.bf16.xpose.msra.mxu0 0
    %4347 = vmatprep.subr.bf16.mxu0 0
    %4348 = vmatpush1.bf16.xpose.msra.mxu0 0
    %4349 = vmatprep.subr.bf16.mxu0 0
    %4350 = vmatpush1.bf16.xpose.msra.mxu0 0
    %4351 = vmatprep.subr.bf16.mxu0 0
    %4352 = vmatpush1.bf16.xpose.msra.mxu0 0
    %4353 = vmatprep.subr.bf16.mxu0 0
    %4354 = vmatpush1.bf16.xpose.msra.mxu0 0
    %4355 = vmatprep.mubr.bf16.mxu0 %v3850
    %4356 = vmatmul.mubr.bf16.gmra.mrb[0].mxu0 %v3849
    %v4357 = vpop.f32.mrb[0].mxu0
    %v4358 = vadd.f32 %v4310, %v4357
    %v4359 = vpop.f32.mrb[0].mxu0
    %v4360 = vpop.f32.mrb[0].mxu0
    %v4361 = vadd.f32 %v4313, %v4360
    %v4362 = vpop.f32.mrb[0].mxu0
    %4363 = vmatprep.mubr.bf16.mxu0 %v3866
    %4364 = vmatmul.mubr.bf16.gmra.mrb[0].mxu0 %v3865
    %v4365 = vpop.f32.mrb[0].mxu0
    %v4366 = vadd.f32 %v4318, %v4365
    %v4367 = vpop.f32.mrb[0].mxu0
    %v4368 = vpop.f32.mrb[0].mxu0
    %v4369 = vpop.f32.mrb[0].mxu0
    %4370 = vdwg.mxu0
    %4371 = vmatprep.subr.bf16.mxu0 %v3986
    %4372 = vmatpush1.bf16.xpose.msra.mxu0 %v3985
    %4373 = vmatprep.subr.bf16.mxu0 %v4002
    %4374 = vmatpush1.bf16.xpose.msra.mxu0 %v4001
    %4375 = vmatprep.subr.bf16.mxu0 0
    %4376 = vmatpush1.bf16.xpose.msra.mxu0 0
    %4377 = vmatprep.subr.bf16.mxu0 0
    %4378 = vmatpush1.bf16.xpose.msra.mxu0 0
    %4379 = vmatprep.subr.bf16.mxu0 0
    %4380 = vmatpush1.bf16.xpose.msra.mxu0 0
    %4381 = vmatprep.subr.bf16.mxu0 0
    %4382 = vmatpush1.bf16.xpose.msra.mxu0 0
    %4383 = vmatprep.subr.bf16.mxu0 0
    %4384 = vmatpush1.bf16.xpose.msra.mxu0 0
    %4385 = vmatprep.subr.bf16.mxu0 0
    %4386 = vmatpush1.bf16.xpose.msra.mxu0 0
    %4387 = vmatprep.subr.bf16.mxu0 0
    %4388 = vmatpush1.bf16.xpose.msra.mxu0 0
    %4389 = vmatprep.subr.bf16.mxu0 0
    %4390 = vmatpush1.bf16.xpose.msra.mxu0 0
    %4391 = vmatprep.subr.bf16.mxu0 0
    %4392 = vmatpush1.bf16.xpose.msra.mxu0 0
    %4393 = vmatprep.subr.bf16.mxu0 0
    %4394 = vmatpush1.bf16.xpose.msra.mxu0 0
    %4395 = vmatprep.subr.bf16.mxu0 0
    %4396 = vmatpush1.bf16.xpose.msra.mxu0 0
    %4397 = vmatprep.subr.bf16.mxu0 0
    %4398 = vmatpush1.bf16.xpose.msra.mxu0 0
    %4399 = vmatprep.subr.bf16.mxu0 0
    %4400 = vmatpush1.bf16.xpose.msra.mxu0 0
    %4401 = vmatprep.subr.bf16.mxu0 0
    %4402 = vmatpush1.bf16.xpose.msra.mxu0 0
    %4403 = vmatprep.mubr.bf16.mxu0 %v3852
    %4404 = vmatmul.mubr.bf16.gmra.mrb[0].mxu0 %v3851
    %v4405 = vpop.f32.mrb[0].mxu0
    %v4406 = vadd.f32 %v4358, %v4405
    %v4407 = vpop.f32.mrb[0].mxu0
    %v4408 = vpop.f32.mrb[0].mxu0
    %v4409 = vadd.f32 %v4361, %v4408
    %v4410 = vpop.f32.mrb[0].mxu0
    %4411 = vmatprep.mubr.bf16.mxu0 %v3868
    %4412 = vmatmul.mubr.bf16.gmra.mrb[0].mxu0 %v3867
    %v4413 = vpop.f32.mrb[0].mxu0
    %v4414 = vadd.f32 %v4366, %v4413
    %v4415 = vpop.f32.mrb[0].mxu0
    %v4416 = vpop.f32.mrb[0].mxu0
    %v4417 = vpop.f32.mrb[0].mxu0
    %4418 = vdwg.mxu0
    %v4419 = vadd.f32 %v3061, %v4406
    %v4420 = vadd.f32 %v3062, %v4409
    %v4421 = vadd.f32 %v3063, %v4414
    %v4422 = vld [vmem:[#allocation7 + $0x2c] sm:$0x1]
    %v4423 = vld [vmem:[#allocation7 + $0x2d] sm:$0x1]
    %v4424 = vsel %vm145, %v4419, 0.0
    %4425 = vadd.xlane.f32.xlu0 %v4424
    %v4426 = vpop.xlane.xlu0 %4425
    %v4427 = vsel %vm145, %v4420, 0.0
    %4428 = vadd.xlane.f32.xlu0 %v4427
    %v4429 = vpop.xlane.xlu0 %4428
    %v4430 = vsel %vm834, %v4421, 0.0
    %4431 = vadd.xlane.f32.xlu0 %v4430
    %v4432 = vpop.xlane.xlu0 %4431
    %v4433 = vmul.f32 %v4426, %v838
    %v4434 = vmul.f32 %v4429, %v838
    %v4435 = vmul.f32 %v4432, %v838
    %v4436 = vsub.f32 %v4419, %v4433
    %v4437 = vsub.f32 %v4420, %v4434
    %v4438 = vsub.f32 %v4421, %v4435
    %v4439 = vmul.f32 %v4436, %v4436
    %v4440 = vmul.f32 %v4437, %v4437
    %v4441 = vmul.f32 %v4438, %v4438
    %v4442 = vsel %vm145, %v4439, 0.0
    %4443 = vadd.xlane.f32.xlu0 %v4442
    %v4444 = vpop.xlane.xlu0 %4443
    %v4445 = vsel %vm145, %v4440, 0.0
    %4446 = vadd.xlane.f32.xlu0 %v4445
    %v4447 = vpop.xlane.xlu0 %4446
    %v4448 = vsel %vm834, %v4441, 0.0
    %4449 = vadd.xlane.f32.xlu0 %v4448
    %v4450 = vpop.xlane.xlu0 %4449
    %v4451 = vmul.f32 %v4444, %v838
    %v4452 = vmul.f32 %v4447, %v838
    %v4453 = vmul.f32 %v4450, %v838
    %v4454 = vadd.f32 %v4451, 1e-05
    %v4455 = vadd.f32 %v4452, 1e-05
    %v4456 = vadd.f32 %v4453, 1e-05
    %v4457 = vrsqrt.pop %v4454
    %v4458 = vrsqrt.pop %v4455
    %v4459 = vrsqrt.pop %v4456
    %v4460 = vmul.f32 %v4436, %v4457
    %v4461 = vmul.f32 %v4437, %v4458
    %v4462 = vmul.f32 %v4438, %v4459
    %v4464 = vlaneseq
    %v4465 = vshrl.u32 %v4464, 7
    %v4466 = vsub.s32 0, %v4465
    %v4467 = vrot.slane %v4422, %v4466
    %v4469 = vmul.f32 %v4460, %v4467
    %v4470 = vmul.f32 %v4461, %v4467
    %v4471 = vmul.f32 %v4462, %v4467
    %v4473 = vlaneseq
    %v4474 = vshrl.u32 %v4473, 7
    %v4475 = vsub.s32 0, %v4474
    %v4476 = vrot.slane %v4423, %v4475
    %v4478 = vadd.f32 %v4469, %v4476
    %v4479 = vadd.f32 %v4470, %v4476
    %v4480 = vadd.f32 %v4471, %v4476
    %v4481 = vld [vmem:[#allocation2] sm:$0xff]
    %v4482 = vld [vmem:[#allocation2 + $0x8] sm:$0xff]
    %v4483 = vld [vmem:[#allocation5 + $0x110] sm:$0xf]
    %v4484 = vld [vmem:[#allocation5 + $0x340] sm:$0xf]
    %v4485 = vld [vmem:[#allocation5 + $0x570] sm:$0xf]
    %v4486 = vld [vmem:[#allocation5 + $0x7a0] sm:$0xf]
    %v4487 = vpack.c.bf16 %v4482, %v4481
    %v4488 = vld [vmem:[#allocation7 + $0x2e] sm:$0x1]
    %v4490 = vlaneseq
    %v4491 = vshrl.u32 %v4490, 7
    %v4492 = vsub.s32 0, %v4491
    %v4493 = vrot.slane %v4488, %v4492
    %v4499 = vunpack.c.l.b16 %v4483
    %v4500 = vunpack.c.l.b16 %v4484
    %v4501 = vunpack.c.l.b16 %v4485
    %v4502 = vunpack.c.l.b16 %v4486
    %v4503 = vpack.c.b16 %v4500, %v4499
    %v4504 = vpack.c.b16 %v4502, %v4501
    %v4508 = vsel %vm145, %v4487, 0
    %4510 = vmatprep.subr.bf16.mxu0 0
    %4511 = vmatpush1.bf16.msra.mxu0 %v4503
    %4512 = vmatprep.subr.bf16.mxu0 0
    %4513 = vmatpush1.bf16.msra.mxu0 %v4504
    %4514 = vmatprep.subr.bf16.mxu0 0
    %4515 = vmatpush1.bf16.msra.mxu0 0
    %4516 = vmatprep.subr.bf16.mxu0 0
    %4517 = vmatpush1.bf16.msra.mxu0 0
    %4518 = vmatprep.subr.bf16.mxu0 0
    %4519 = vmatpush1.bf16.msra.mxu0 0
    %4520 = vmatprep.subr.bf16.mxu0 0
    %4521 = vmatpush1.bf16.msra.mxu0 0
    %4522 = vmatprep.subr.bf16.mxu0 0
    %4523 = vmatpush1.bf16.msra.mxu0 0
    %4524 = vmatprep.subr.bf16.mxu0 0
    %4525 = vmatpush1.bf16.msra.mxu0 0
    %4526 = vmatprep.subr.bf16.mxu0 0
    %4527 = vmatpush1.bf16.msra.mxu0 0
    %4528 = vmatprep.subr.bf16.mxu0 0
    %4529 = vmatpush1.bf16.msra.mxu0 0
    %4530 = vmatprep.subr.bf16.mxu0 0
    %4531 = vmatpush1.bf16.msra.mxu0 0
    %4532 = vmatprep.subr.bf16.mxu0 0
    %4533 = vmatpush1.bf16.msra.mxu0 0
    %4534 = vmatprep.subr.bf16.mxu0 0
    %4535 = vmatpush1.bf16.msra.mxu0 0
    %4536 = vmatprep.subr.bf16.mxu0 0
    %4537 = vmatpush1.bf16.msra.mxu0 0
    %4538 = vmatprep.subr.bf16.mxu0 0
    %4539 = vmatpush1.bf16.msra.mxu0 0
    %4540 = vmatprep.subr.bf16.mxu0 0
    %4541 = vmatpush1.bf16.msra.mxu0 0
    %4542 = vmatprep.mubr.bf16.mxu0 0
    %4543 = vmatmul.mubr.bf16.gmra.mrb[0].mxu0 %v4508
    %v4544 = vpop.f32.mrb[0].mxu0
    %v4545 = vadd.f32 %v4493, %v4544
    %v4546 = vpop.f32.mrb[0].mxu0
    %v4547 = vpop.f32.mrb[0].mxu0
    %v4548 = vadd.f32 %v4493, %v4547
    %v4549 = vpop.f32.mrb[0].mxu0
    %4550 = vdwg.mxu0
    %v4551 = vld [vmem:[#allocation5 + $0x114] sm:$0xf]
    %v4552 = vld [vmem:[#allocation5 + $0x344] sm:$0xf]
    %v4553 = vld [vmem:[#allocation5 + $0x574] sm:$0xf]
    %v4554 = vld [vmem:[#allocation5 + $0x7a4] sm:$0xf]
    %v4555 = vld [vmem:[#allocation7 + $0x2f] sm:$0x1]
    %4558 = vrot.lane.b32.xlu0 %v4545, 96
    %v4559 = vpop.permute.xlu0 %4558
    %4560 = vrot.lane.b32.xlu0 %v4548, 96
    %v4561 = vpop.permute.xlu0 %4560
    %v4562 = vsel %vm214, %v4545, 0
    %v4564 = vsel %vm214, %v4548, 0
    %v4566 = vsel %vm214, %v4559, 0
    %v4568 = vsel %vm214, %v4561, 0
    %4570 = vmatprep.subr.mxu0 0.0
    %4571 = vmatpush1.xpose.msra.mxu0 %v4566
    %4572 = vmatprep.subr.mxu0 0.0
    %4573 = vmatpush1.xpose.msra.mxu0 %v4568
    %4574 = vmatprep.subr.mxu0 0.0
    %4575 = vmatpush1.xpose.msra.mxu0 0.0
    %4576 = vmatprep.subr.mxu0 0.0
    %4577 = vmatpush1.xpose.msra.mxu0 0.0
    %4578 = vmatprep.subr.mxu0 0.0
    %4579 = vmatpush1.xpose.msra.mxu0 0.0
    %4580 = vmatprep.subr.mxu0 0.0
    %4581 = vmatpush1.xpose.msra.mxu0 0.0
    %4582 = vmatprep.subr.mxu0 0.0
    %4583 = vmatpush1.xpose.msra.mxu0 0.0
    %4584 = vmatprep.subr.mxu0 0.0
    %4585 = vmatpush1.xpose.msra.mxu0 0.0
    %4586 = vmatprep.subr.mxu0 0.0
    %4587 = vmatpush1.xpose.msra.mxu0 0.0
    %4588 = vmatprep.subr.mxu0 0.0
    %4589 = vmatpush1.xpose.msra.mxu0 0.0
    %4590 = vmatprep.subr.mxu0 0.0
    %4591 = vmatpush1.xpose.msra.mxu0 0.0
    %4592 = vmatprep.subr.mxu0 0.0
    %4593 = vmatpush1.xpose.msra.mxu0 0.0
    %4594 = vmatprep.subr.mxu0 0.0
    %4595 = vmatpush1.xpose.msra.mxu0 0.0
    %4596 = vmatprep.subr.mxu0 0.0
    %4597 = vmatpush1.xpose.msra.mxu0 0.0
    %4598 = vmatprep.subr.mxu0 0.0
    %4599 = vmatpush1.xpose.msra.mxu0 0.0
    %4600 = vmatprep.subr.mxu0 0.0
    %4601 = vmatpush1.xpose.msra.mxu0 0.0
    %4602 = vmatprep.subr.mxu0 0.0
    %4603 = vmatpush1.xpose.msra.mxu0 0.0
    %4604 = vmatprep.subr.mxu0 0.0
    %4605 = vmatpush1.xpose.msra.mxu0 0.0
    %4606 = vmatprep.subr.mxu0 0.0
    %4607 = vmatpush1.xpose.msra.mxu0 0.0
    %4608 = vmatprep.subr.mxu0 0.0
    %4609 = vmatpush1.xpose.msra.mxu0 0.0
    %4610 = vmatprep.subr.mxu0 0.0
    %4611 = vmatpush1.xpose.msra.mxu0 0.0
    %4612 = vmatprep.subr.mxu0 0.0
    %4613 = vmatpush1.xpose.msra.mxu0 0.0
    %4614 = vmatprep.subr.mxu0 0.0
    %4615 = vmatpush1.xpose.msra.mxu0 0.0
    %4616 = vmatprep.subr.mxu0 0.0
    %4617 = vmatpush1.xpose.msra.mxu0 0.0
    %4618 = vmatprep.subr.mxu0 0.0
    %4619 = vmatpush1.xpose.msra.mxu0 0.0
    %4620 = vmatprep.subr.mxu0 0.0
    %4621 = vmatpush1.xpose.msra.mxu0 0.0
    %4622 = vmatprep.subr.mxu0 0.0
    %4623 = vmatpush1.xpose.msra.mxu0 0.0
    %4624 = vmatprep.subr.mxu0 0.0
    %4625 = vmatpush1.xpose.msra.mxu0 0.0
    %4626 = vmatprep.subr.mxu0 0.0
    %4627 = vmatpush1.xpose.msra.mxu0 0.0
    %4628 = vmatprep.subr.mxu0 0.0
    %4629 = vmatpush1.xpose.msra.mxu0 0.0
    %4630 = vmatprep.subr.mxu0 0.0
    %4631 = vmatpush1.xpose.msra.mxu0 0.0
    %4632 = vmatprep.subr.mxu0 0.0
    %4633 = vmatpush1.xpose.msra.mxu0 0.0
    %4634 = vmatprep.mubr.f32.mxu0 0.0
    %4635 = vmatmul.mubr.f32.gmra.mrb[0].mxu0 %v4562
    %v4636 = vpop.f32.mrb[0].mxu0
    %v4637 = vadd.f32 0.0, %v4636
    %v4638 = vpop.f32.mrb[0].mxu0
    %4639 = vmatprep.mubr.f32.mxu0 0.0
    %4640 = vmatmul.mubr.f32.gmra.mrb[0].mxu0 %v4564
    %v4641 = vpop.f32.mrb[0].mxu0
    %v4642 = vadd.f32 0.0, %v4641
    %v4643 = vpop.f32.mrb[0].mxu0
    %4644 = vdwg.mxu0
    %v4645 = vmul.f32 %v4637, 0.25
    %v4646 = vmul.f32 %v4642, 0.25
    %v4647 = vsel %vm114, %v4645, -inf
    %v4648 = vsel %vm115, %v4646, -inf
    %v4649 = vsel %vm214, %v4647, -inf
    %4650 = vmax.xlane.f32.xlu0 %v4649
    %v4651 = vpop.xlane.xlu0 %4650
    %v4652 = vsel %vm214, %v4648, -inf
    %4653 = vmax.xlane.f32.xlu0 %v4652
    %v4654 = vpop.xlane.xlu0 %4653
    %v4655 = vsub.f32 %v4647, %v4651
    %v4656 = vsub.f32 %v4648, %v4654
    %v4657 = vmul.f32 %v4655, 1.442695
    %v4658 = vpow.pop %v4657
    %v4659 = vmul.f32 %v4656, 1.442695
    %v4660 = vpow.pop %v4659
    %v4661 = vsel %vm214, %v4658, 0.0
    %4662 = vadd.xlane.f32.xlu0 %v4661
    %v4663 = vpop.xlane.xlu0 %4662
    %v4664 = vsel %vm214, %v4660, 0.0
    %4665 = vadd.xlane.f32.xlu0 %v4664
    %v4666 = vpop.xlane.xlu0 %4665
    %v4667 = vrcp.pop %v4663
    %v4668 = vmul.f32 %v4658, %v4667
    %v4669 = vrcp.pop %v4666
    %v4670 = vmul.f32 %v4660, %v4669
    %4671 = vrot.lane.b32.xlu0 %v4545, 64
    %v4672 = vpop.permute.xlu0 %4671
    %4673 = vrot.lane.b32.xlu0 %v4548, 64
    %v4674 = vpop.permute.xlu0 %4673
    %v4678 = vsel %vm214, %v4668, 0
    %v4681 = vsel %vm214, %v4670, 0
    %4683 = vmatprep.subr.mxu0 0.0
    %4684 = vmatpush1.msra.mxu0 %v4672
    %4685 = vmatprep.subr.mxu0 0.0
    %4686 = vmatpush1.msra.mxu0 %v4674
    %4687 = vmatprep.subr.mxu0 0.0
    %4688 = vmatpush1.msra.mxu0 0.0
    %4689 = vmatprep.subr.mxu0 0.0
    %4690 = vmatpush1.msra.mxu0 0.0
    %4691 = vmatprep.subr.mxu0 0.0
    %4692 = vmatpush1.msra.mxu0 0.0
    %4693 = vmatprep.subr.mxu0 0.0
    %4694 = vmatpush1.msra.mxu0 0.0
    %4695 = vmatprep.subr.mxu0 0.0
    %4696 = vmatpush1.msra.mxu0 0.0
    %4697 = vmatprep.subr.mxu0 0.0
    %4698 = vmatpush1.msra.mxu0 0.0
    %4699 = vmatprep.subr.mxu0 0.0
    %4700 = vmatpush1.msra.mxu0 0.0
    %4701 = vmatprep.subr.mxu0 0.0
    %4702 = vmatpush1.msra.mxu0 0.0
    %4703 = vmatprep.subr.mxu0 0.0
    %4704 = vmatpush1.msra.mxu0 0.0
    %4705 = vmatprep.subr.mxu0 0.0
    %4706 = vmatpush1.msra.mxu0 0.0
    %4707 = vmatprep.subr.mxu0 0.0
    %4708 = vmatpush1.msra.mxu0 0.0
    %4709 = vmatprep.subr.mxu0 0.0
    %4710 = vmatpush1.msra.mxu0 0.0
    %4711 = vmatprep.subr.mxu0 0.0
    %4712 = vmatpush1.msra.mxu0 0.0
    %4713 = vmatprep.subr.mxu0 0.0
    %4714 = vmatpush1.msra.mxu0 0.0
    %4715 = vmatprep.subr.mxu0 0.0
    %4716 = vmatpush1.msra.mxu0 0.0
    %4717 = vmatprep.subr.mxu0 0.0
    %4718 = vmatpush1.msra.mxu0 0.0
    %4719 = vmatprep.subr.mxu0 0.0
    %4720 = vmatpush1.msra.mxu0 0.0
    %4721 = vmatprep.subr.mxu0 0.0
    %4722 = vmatpush1.msra.mxu0 0.0
    %4723 = vmatprep.subr.mxu0 0.0
    %4724 = vmatpush1.msra.mxu0 0.0
    %4725 = vmatprep.subr.mxu0 0.0
    %4726 = vmatpush1.msra.mxu0 0.0
    %4727 = vmatprep.subr.mxu0 0.0
    %4728 = vmatpush1.msra.mxu0 0.0
    %4729 = vmatprep.subr.mxu0 0.0
    %4730 = vmatpush1.msra.mxu0 0.0
    %4731 = vmatprep.subr.mxu0 0.0
    %4732 = vmatpush1.msra.mxu0 0.0
    %4733 = vmatprep.subr.mxu0 0.0
    %4734 = vmatpush1.msra.mxu0 0.0
    %4735 = vmatprep.subr.mxu0 0.0
    %4736 = vmatpush1.msra.mxu0 0.0
    %4737 = vmatprep.subr.mxu0 0.0
    %4738 = vmatpush1.msra.mxu0 0.0
    %4739 = vmatprep.subr.mxu0 0.0
    %4740 = vmatpush1.msra.mxu0 0.0
    %4741 = vmatprep.subr.mxu0 0.0
    %4742 = vmatpush1.msra.mxu0 0.0
    %4743 = vmatprep.subr.mxu0 0.0
    %4744 = vmatpush1.msra.mxu0 0.0
    %4745 = vmatprep.subr.mxu0 0.0
    %4746 = vmatpush1.msra.mxu0 0.0
    %4747 = vmatprep.mubr.f32.mxu0 0.0
    %4748 = vmatmul.mubr.f32.gmra.mrb[0].mxu0 %v4678
    %v4749 = vpop.f32.mrb[0].mxu0
    %v4750 = vadd.f32 0.0, %v4749
    %v4751 = vpop.f32.mrb[0].mxu0
    %4752 = vmatprep.mubr.f32.mxu0 0.0
    %4753 = vmatmul.mubr.f32.gmra.mrb[0].mxu0 %v4681
    %v4754 = vpop.f32.mrb[0].mxu0
    %v4755 = vadd.f32 0.0, %v4754
    %v4756 = vpop.f32.mrb[0].mxu0
    %4757 = vdwg.mxu0
    %v4758 = vpack.c.bf16 %v4755, %v4750
    %4759 = vrot.lane.b32.xlu0 %v4545, 112
    %v4760 = vpop.permute.xlu0 %4759
    %4761 = vrot.lane.b32.xlu0 %v4548, 112
    %v4762 = vpop.permute.xlu0 %4761
    %4763 = vrot.lane.b32.xlu0 %v4545, 80
    %v4764 = vpop.permute.xlu0 %4763
    %4765 = vrot.lane.b32.xlu0 %v4548, 80
    %v4766 = vpop.permute.xlu0 %4765
    %v4767 = vsel %vm214, %v4760, 0
    %v4769 = vsel %vm214, %v4762, 0
    %v4771 = vsel %vm214, %v4764, 0
    %v4773 = vsel %vm214, %v4766, 0
    %4775 = vmatprep.subr.mxu0 0.0
    %4776 = vmatpush1.xpose.msra.mxu0 %v4771
    %4777 = vmatprep.subr.mxu0 0.0
    %4778 = vmatpush1.xpose.msra.mxu0 %v4773
    %4779 = vmatprep.subr.mxu0 0.0
    %4780 = vmatpush1.xpose.msra.mxu0 0.0
    %4781 = vmatprep.subr.mxu0 0.0
    %4782 = vmatpush1.xpose.msra.mxu0 0.0
    %4783 = vmatprep.subr.mxu0 0.0
    %4784 = vmatpush1.xpose.msra.mxu0 0.0
    %4785 = vmatprep.subr.mxu0 0.0
    %4786 = vmatpush1.xpose.msra.mxu0 0.0
    %4787 = vmatprep.subr.mxu0 0.0
    %4788 = vmatpush1.xpose.msra.mxu0 0.0
    %4789 = vmatprep.subr.mxu0 0.0
    %4790 = vmatpush1.xpose.msra.mxu0 0.0
    %4791 = vmatprep.subr.mxu0 0.0
    %4792 = vmatpush1.xpose.msra.mxu0 0.0
    %4793 = vmatprep.subr.mxu0 0.0
    %4794 = vmatpush1.xpose.msra.mxu0 0.0
    %4795 = vmatprep.subr.mxu0 0.0
    %4796 = vmatpush1.xpose.msra.mxu0 0.0
    %4797 = vmatprep.subr.mxu0 0.0
    %4798 = vmatpush1.xpose.msra.mxu0 0.0
    %4799 = vmatprep.subr.mxu0 0.0
    %4800 = vmatpush1.xpose.msra.mxu0 0.0
    %4801 = vmatprep.subr.mxu0 0.0
    %4802 = vmatpush1.xpose.msra.mxu0 0.0
    %4803 = vmatprep.subr.mxu0 0.0
    %4804 = vmatpush1.xpose.msra.mxu0 0.0
    %4805 = vmatprep.subr.mxu0 0.0
    %4806 = vmatpush1.xpose.msra.mxu0 0.0
    %4807 = vmatprep.subr.mxu0 0.0
    %4808 = vmatpush1.xpose.msra.mxu0 0.0
    %4809 = vmatprep.subr.mxu0 0.0
    %4810 = vmatpush1.xpose.msra.mxu0 0.0
    %4811 = vmatprep.subr.mxu0 0.0
    %4812 = vmatpush1.xpose.msra.mxu0 0.0
    %4813 = vmatprep.subr.mxu0 0.0
    %4814 = vmatpush1.xpose.msra.mxu0 0.0
    %4815 = vmatprep.subr.mxu0 0.0
    %4816 = vmatpush1.xpose.msra.mxu0 0.0
    %4817 = vmatprep.subr.mxu0 0.0
    %4818 = vmatpush1.xpose.msra.mxu0 0.0
    %4819 = vmatprep.subr.mxu0 0.0
    %4820 = vmatpush1.xpose.msra.mxu0 0.0
    %4821 = vmatprep.subr.mxu0 0.0
    %4822 = vmatpush1.xpose.msra.mxu0 0.0
    %4823 = vmatprep.subr.mxu0 0.0
    %4824 = vmatpush1.xpose.msra.mxu0 0.0
    %4825 = vmatprep.subr.mxu0 0.0
    %4826 = vmatpush1.xpose.msra.mxu0 0.0
    %4827 = vmatprep.subr.mxu0 0.0
    %4828 = vmatpush1.xpose.msra.mxu0 0.0
    %4829 = vmatprep.subr.mxu0 0.0
    %4830 = vmatpush1.xpose.msra.mxu0 0.0
    %4831 = vmatprep.subr.mxu0 0.0
    %4832 = vmatpush1.xpose.msra.mxu0 0.0
    %4833 = vmatprep.subr.mxu0 0.0
    %4834 = vmatpush1.xpose.msra.mxu0 0.0
    %4835 = vmatprep.subr.mxu0 0.0
    %4836 = vmatpush1.xpose.msra.mxu0 0.0
    %4837 = vmatprep.subr.mxu0 0.0
    %4838 = vmatpush1.xpose.msra.mxu0 0.0
    %4839 = vmatprep.mubr.f32.mxu0 0.0
    %4840 = vmatmul.mubr.f32.gmra.mrb[0].mxu0 %v4767
    %v4841 = vpop.f32.mrb[0].mxu0
    %v4842 = vadd.f32 0.0, %v4841
    %v4843 = vpop.f32.mrb[0].mxu0
    %4844 = vmatprep.mubr.f32.mxu0 0.0
    %4845 = vmatmul.mubr.f32.gmra.mrb[0].mxu0 %v4769
    %v4846 = vpop.f32.mrb[0].mxu0
    %v4847 = vadd.f32 0.0, %v4846
    %v4848 = vpop.f32.mrb[0].mxu0
    %4849 = vdwg.mxu0
    %v4850 = vmul.f32 %v4842, 0.25
    %v4851 = vmul.f32 %v4847, 0.25
    %v4852 = vsel %vm114, %v4850, -inf
    %v4853 = vsel %vm115, %v4851, -inf
    %v4854 = vsel %vm214, %v4852, -inf
    %4855 = vmax.xlane.f32.xlu0 %v4854
    %v4856 = vpop.xlane.xlu0 %4855
    %v4857 = vsel %vm214, %v4853, -inf
    %4858 = vmax.xlane.f32.xlu0 %v4857
    %v4859 = vpop.xlane.xlu0 %4858
    %v4860 = vsub.f32 %v4852, %v4856
    %v4861 = vsub.f32 %v4853, %v4859
    %v4862 = vmul.f32 %v4860, 1.442695
    %v4863 = vpow.pop %v4862
    %v4864 = vmul.f32 %v4861, 1.442695
    %v4865 = vpow.pop %v4864
    %v4866 = vsel %vm214, %v4863, 0.0
    %4867 = vadd.xlane.f32.xlu0 %v4866
    %v4868 = vpop.xlane.xlu0 %4867
    %v4869 = vsel %vm214, %v4865, 0.0
    %4870 = vadd.xlane.f32.xlu0 %v4869
    %v4871 = vpop.xlane.xlu0 %4870
    %v4872 = vrcp.pop %v4868
    %v4873 = vmul.f32 %v4863, %v4872
    %v4874 = vrcp.pop %v4871
    %v4875 = vmul.f32 %v4865, %v4874
    %4876 = vrot.lane.b32.xlu0 %v4545, 48
    %v4877 = vpop.permute.xlu0 %4876
    %4878 = vrot.lane.b32.xlu0 %v4548, 48
    %v4879 = vpop.permute.xlu0 %4878
    %v4883 = vsel %vm214, %v4873, 0
    %v4886 = vsel %vm214, %v4875, 0
    %4888 = vmatprep.subr.mxu0 0.0
    %4889 = vmatpush1.msra.mxu0 %v4877
    %4890 = vmatprep.subr.mxu0 0.0
    %4891 = vmatpush1.msra.mxu0 %v4879
    %4892 = vmatprep.subr.mxu0 0.0
    %4893 = vmatpush1.msra.mxu0 0.0
    %4894 = vmatprep.subr.mxu0 0.0
    %4895 = vmatpush1.msra.mxu0 0.0
    %4896 = vmatprep.subr.mxu0 0.0
    %4897 = vmatpush1.msra.mxu0 0.0
    %4898 = vmatprep.subr.mxu0 0.0
    %4899 = vmatpush1.msra.mxu0 0.0
    %4900 = vmatprep.subr.mxu0 0.0
    %4901 = vmatpush1.msra.mxu0 0.0
    %4902 = vmatprep.subr.mxu0 0.0
    %4903 = vmatpush1.msra.mxu0 0.0
    %4904 = vmatprep.subr.mxu0 0.0
    %4905 = vmatpush1.msra.mxu0 0.0
    %4906 = vmatprep.subr.mxu0 0.0
    %4907 = vmatpush1.msra.mxu0 0.0
    %4908 = vmatprep.subr.mxu0 0.0
    %4909 = vmatpush1.msra.mxu0 0.0
    %4910 = vmatprep.subr.mxu0 0.0
    %4911 = vmatpush1.msra.mxu0 0.0
    %4912 = vmatprep.subr.mxu0 0.0
    %4913 = vmatpush1.msra.mxu0 0.0
    %4914 = vmatprep.subr.mxu0 0.0
    %4915 = vmatpush1.msra.mxu0 0.0
    %4916 = vmatprep.subr.mxu0 0.0
    %4917 = vmatpush1.msra.mxu0 0.0
    %4918 = vmatprep.subr.mxu0 0.0
    %4919 = vmatpush1.msra.mxu0 0.0
    %4920 = vmatprep.subr.mxu0 0.0
    %4921 = vmatpush1.msra.mxu0 0.0
    %4922 = vmatprep.subr.mxu0 0.0
    %4923 = vmatpush1.msra.mxu0 0.0
    %4924 = vmatprep.subr.mxu0 0.0
    %4925 = vmatpush1.msra.mxu0 0.0
    %4926 = vmatprep.subr.mxu0 0.0
    %4927 = vmatpush1.msra.mxu0 0.0
    %4928 = vmatprep.subr.mxu0 0.0
    %4929 = vmatpush1.msra.mxu0 0.0
    %4930 = vmatprep.subr.mxu0 0.0
    %4931 = vmatpush1.msra.mxu0 0.0
    %4932 = vmatprep.subr.mxu0 0.0
    %4933 = vmatpush1.msra.mxu0 0.0
    %4934 = vmatprep.subr.mxu0 0.0
    %4935 = vmatpush1.msra.mxu0 0.0
    %4936 = vmatprep.subr.mxu0 0.0
    %4937 = vmatpush1.msra.mxu0 0.0
    %4938 = vmatprep.subr.mxu0 0.0
    %4939 = vmatpush1.msra.mxu0 0.0
    %4940 = vmatprep.subr.mxu0 0.0
    %4941 = vmatpush1.msra.mxu0 0.0
    %4942 = vmatprep.subr.mxu0 0.0
    %4943 = vmatpush1.msra.mxu0 0.0
    %4944 = vmatprep.subr.mxu0 0.0
    %4945 = vmatpush1.msra.mxu0 0.0
    %4946 = vmatprep.subr.mxu0 0.0
    %4947 = vmatpush1.msra.mxu0 0.0
    %4948 = vmatprep.subr.mxu0 0.0
    %4949 = vmatpush1.msra.mxu0 0.0
    %4950 = vmatprep.subr.mxu0 0.0
    %4951 = vmatpush1.msra.mxu0 0.0
    %4952 = vmatprep.mubr.f32.mxu0 0.0
    %4953 = vmatmul.mubr.f32.gmra.mrb[0].mxu0 %v4883
    %v4954 = vpop.f32.mrb[0].mxu0
    %v4955 = vadd.f32 0.0, %v4954
    %v4956 = vpop.f32.mrb[0].mxu0
    %4957 = vmatprep.mubr.f32.mxu0 0.0
    %4958 = vmatmul.mubr.f32.gmra.mrb[0].mxu0 %v4886
    %v4959 = vpop.f32.mrb[0].mxu0
    %v4960 = vadd.f32 0.0, %v4959
    %v4961 = vpop.f32.mrb[0].mxu0
    %4962 = vdwg.mxu0
    %v4963 = vpack.c.bf16 %v4960, %v4955
    %v4966 = vunpack.c.l.b16 %v4553
    %v4967 = vunpack.c.l.b16 %v4554
    %v4968 = vpack.c.b16 %v4967, %v4966
    %v4971 = vsel %vm214, %v4963, 0
    %4973 = vmatprep.subr.bf16.mxu0 0
    %4974 = vmatpush1.bf16.msra.mxu0 %v4968
    %4975 = vmatprep.subr.bf16.mxu0 0
    %4976 = vmatpush1.bf16.msra.mxu0 0
    %4977 = vmatprep.subr.bf16.mxu0 0
    %4978 = vmatpush1.bf16.msra.mxu0 0
    %4979 = vmatprep.subr.bf16.mxu0 0
    %4980 = vmatpush1.bf16.msra.mxu0 0
    %4981 = vmatprep.subr.bf16.mxu0 0
    %4982 = vmatpush1.bf16.msra.mxu0 0
    %4983 = vmatprep.subr.bf16.mxu0 0
    %4984 = vmatpush1.bf16.msra.mxu0 0
    %4985 = vmatprep.subr.bf16.mxu0 0
    %4986 = vmatpush1.bf16.msra.mxu0 0
    %4987 = vmatprep.subr.bf16.mxu0 0
    %4988 = vmatpush1.bf16.msra.mxu0 0
    %4989 = vmatprep.subr.bf16.mxu0 0
    %4990 = vmatpush1.bf16.msra.mxu0 0
    %4991 = vmatprep.subr.bf16.mxu0 0
    %4992 = vmatpush1.bf16.msra.mxu0 0
    %4993 = vmatprep.subr.bf16.mxu0 0
    %4994 = vmatpush1.bf16.msra.mxu0 0
    %4995 = vmatprep.subr.bf16.mxu0 0
    %4996 = vmatpush1.bf16.msra.mxu0 0
    %4997 = vmatprep.subr.bf16.mxu0 0
    %4998 = vmatpush1.bf16.msra.mxu0 0
    %4999 = vmatprep.subr.bf16.mxu0 0
    %5000 = vmatpush1.bf16.msra.mxu0 0
    %5001 = vmatprep.subr.bf16.mxu0 0
    %5002 = vmatpush1.bf16.msra.mxu0 0
    %5003 = vmatprep.subr.bf16.mxu0 0
    %5004 = vmatpush1.bf16.msra.mxu0 0
    %5005 = vmatprep.mubr.bf16.mxu0 0
    %5006 = vmatmul.mubr.bf16.gmra.mrb[0].mxu0 %v4971
    %v5007 = vpop.f32.mrb[0].mxu0
    %v5008 = vadd.f32 0.0, %v5007
    %v5009 = vpop.f32.mrb[0].mxu0
    %v5010 = vpop.f32.mrb[0].mxu0
    %v5011 = vadd.f32 0.0, %v5010
    %v5012 = vpop.f32.mrb[0].mxu0
    %5013 = vdwg.mxu0
    %v5016 = vunpack.c.l.b16 %v4551
    %v5017 = vunpack.c.l.b16 %v4552
    %v5018 = vpack.c.b16 %v5017, %v5016
    %v5021 = vsel %vm214, %v4758, 0
    %5023 = vmatprep.subr.bf16.mxu0 0
    %5024 = vmatpush1.bf16.msra.mxu0 %v5018
    %5025 = vmatprep.subr.bf16.mxu0 0
    %5026 = vmatpush1.bf16.msra.mxu0 0
    %5027 = vmatprep.subr.bf16.mxu0 0
    %5028 = vmatpush1.bf16.msra.mxu0 0
    %5029 = vmatprep.subr.bf16.mxu0 0
    %5030 = vmatpush1.bf16.msra.mxu0 0
    %5031 = vmatprep.subr.bf16.mxu0 0
    %5032 = vmatpush1.bf16.msra.mxu0 0
    %5033 = vmatprep.subr.bf16.mxu0 0
    %5034 = vmatpush1.bf16.msra.mxu0 0
    %5035 = vmatprep.subr.bf16.mxu0 0
    %5036 = vmatpush1.bf16.msra.mxu0 0
    %5037 = vmatprep.subr.bf16.mxu0 0
    %5038 = vmatpush1.bf16.msra.mxu0 0
    %5039 = vmatprep.subr.bf16.mxu0 0
    %5040 = vmatpush1.bf16.msra.mxu0 0
    %5041 = vmatprep.subr.bf16.mxu0 0
    %5042 = vmatpush1.bf16.msra.mxu0 0
    %5043 = vmatprep.subr.bf16.mxu0 0
    %5044 = vmatpush1.bf16.msra.mxu0 0
    %5045 = vmatprep.subr.bf16.mxu0 0
    %5046 = vmatpush1.bf16.msra.mxu0 0
    %5047 = vmatprep.subr.bf16.mxu0 0
    %5048 = vmatpush1.bf16.msra.mxu0 0
    %5049 = vmatprep.subr.bf16.mxu0 0
    %5050 = vmatpush1.bf16.msra.mxu0 0
    %5051 = vmatprep.subr.bf16.mxu0 0
    %5052 = vmatpush1.bf16.msra.mxu0 0
    %5053 = vmatprep.subr.bf16.mxu0 0
    %5054 = vmatpush1.bf16.msra.mxu0 0
    %5055 = vmatprep.mubr.bf16.mxu0 0
    %5056 = vmatmul.mubr.bf16.gmra.mrb[0].mxu0 %v5021
    %v5057 = vpop.f32.mrb[0].mxu0
    %v5058 = vadd.f32 %v5008, %v5057
    %v5059 = vpop.f32.mrb[0].mxu0
    %v5060 = vpop.f32.mrb[0].mxu0
    %v5061 = vadd.f32 %v5011, %v5060
    %v5062 = vpop.f32.mrb[0].mxu0
    %5063 = vdwg.mxu0
    %v5065 = vlaneseq
    %v5066 = vshrl.u32 %v5065, 7
    %v5067 = vsub.s32 0, %v5066
    %v5068 = vrot.slane %v4555, %v5067
    %v5070 = vadd.f32 %v5058, %v5068
    %v5071 = vadd.f32 %v5061, %v5068
    %v5072 = vadd.f32 %v4481, %v5070
    %v5073 = vadd.f32 %v4482, %v5071
    %v5074 = vld [vmem:[#allocation7 + $0x43] sm:$0x1]
    %v5075 = vld [vmem:[#allocation7 + $0x44] sm:$0x1]
    %v5076 = vsel %vm145, %v5072, 0.0
    %5077 = vadd.xlane.f32.xlu0 %v5076
    %v5078 = vpop.xlane.xlu0 %5077
    %v5079 = vsel %vm145, %v5073, 0.0
    %5080 = vadd.xlane.f32.xlu0 %v5079
    %v5081 = vpop.xlane.xlu0 %5080
    %v5082 = vmul.f32 %v5078, %v838
    %v5083 = vmul.f32 %v5081, %v838
    %v5084 = vsub.f32 %v5072, %v5082
    %v5085 = vsub.f32 %v5073, %v5083
    %v5086 = vmul.f32 %v5084, %v5084
    %v5087 = vmul.f32 %v5085, %v5085
    %v5088 = vsel %vm145, %v5086, 0.0
    %5089 = vadd.xlane.f32.xlu0 %v5088
    %v5090 = vpop.xlane.xlu0 %5089
    %v5091 = vsel %vm145, %v5087, 0.0
    %5092 = vadd.xlane.f32.xlu0 %v5091
    %v5093 = vpop.xlane.xlu0 %5092
    %v5094 = vmul.f32 %v5090, %v838
    %v5095 = vmul.f32 %v5093, %v838
    %v5096 = vadd.f32 %v5094, 1e-05
    %v5097 = vadd.f32 %v5095, 1e-05
    %v5098 = vrsqrt.pop %v5096
    %v5099 = vrsqrt.pop %v5097
    %v5100 = vmul.f32 %v5084, %v5098
    %v5101 = vmul.f32 %v5085, %v5099
    %v5103 = vlaneseq
    %v5104 = vshrl.u32 %v5103, 7
    %v5105 = vsub.s32 0, %v5104
    %v5106 = vrot.slane %v5074, %v5105
    %v5108 = vmul.f32 %v5100, %v5106
    %v5109 = vmul.f32 %v5101, %v5106
    %v5111 = vlaneseq
    %v5112 = vshrl.u32 %v5111, 7
    %v5113 = vsub.s32 0, %v5112
    %v5114 = vrot.slane %v5075, %v5113
    %v5116 = vadd.f32 %v5108, %v5114
    %v5117 = vadd.f32 %v5109, %v5114
    %v5118 = vld [vmem:[#allocation5 + $0x118] sm:$0xf]
    %v5119 = vld [vmem:[#allocation5 + $0x348] sm:$0xf]
    %v5120 = vld [vmem:[#allocation5 + $0x578] sm:$0xf]
    %v5121 = vld [vmem:[#allocation5 + $0x7a8] sm:$0xf]
    %v5122 = vld [vmem:[#allocation7 + $0x30] sm:$0x1]
    %v5123 = vpack.c.bf16 %v5117, %v5116
    %v5125 = vlaneseq
    %v5126 = vshrl.u32 %v5125, 7
    %v5127 = vsub.s32 0, %v5126
    %v5128 = vrot.slane %v5122, %v5127
    %v5134 = vunpack.c.l.b16 %v5118
    %v5135 = vunpack.c.l.b16 %v5119
    %v5136 = vunpack.c.l.b16 %v5120
    %v5137 = vunpack.c.l.b16 %v5121
    %v5138 = vpack.c.b16 %v5135, %v5134
    %v5139 = vpack.c.b16 %v5137, %v5136
    %v5143 = vsel %vm145, %v5123, 0
    %5145 = vmatprep.subr.bf16.mxu0 0
    %5146 = vmatpush1.bf16.msra.mxu0 %v5138
    %5147 = vmatprep.subr.bf16.mxu0 0
    %5148 = vmatpush1.bf16.msra.mxu0 %v5139
    %5149 = vmatprep.subr.bf16.mxu0 0
    %5150 = vmatpush1.bf16.msra.mxu0 0
    %5151 = vmatprep.subr.bf16.mxu0 0
    %5152 = vmatpush1.bf16.msra.mxu0 0
    %5153 = vmatprep.subr.bf16.mxu0 0
    %5154 = vmatpush1.bf16.msra.mxu0 0
    %5155 = vmatprep.subr.bf16.mxu0 0
    %5156 = vmatpush1.bf16.msra.mxu0 0
    %5157 = vmatprep.subr.bf16.mxu0 0
    %5158 = vmatpush1.bf16.msra.mxu0 0
    %5159 = vmatprep.subr.bf16.mxu0 0
    %5160 = vmatpush1.bf16.msra.mxu0 0
    %5161 = vmatprep.subr.bf16.mxu0 0
    %5162 = vmatpush1.bf16.msra.mxu0 0
    %5163 = vmatprep.subr.bf16.mxu0 0
    %5164 = vmatpush1.bf16.msra.mxu0 0
    %5165 = vmatprep.subr.bf16.mxu0 0
    %5166 = vmatpush1.bf16.msra.mxu0 0
    %5167 = vmatprep.subr.bf16.mxu0 0
    %5168 = vmatpush1.bf16.msra.mxu0 0
    %5169 = vmatprep.subr.bf16.mxu0 0
    %5170 = vmatpush1.bf16.msra.mxu0 0
    %5171 = vmatprep.subr.bf16.mxu0 0
    %5172 = vmatpush1.bf16.msra.mxu0 0
    %5173 = vmatprep.subr.bf16.mxu0 0
    %5174 = vmatpush1.bf16.msra.mxu0 0
    %5175 = vmatprep.subr.bf16.mxu0 0
    %5176 = vmatpush1.bf16.msra.mxu0 0
    %5177 = vmatprep.mubr.bf16.mxu0 0
    %5178 = vmatmul.mubr.bf16.gmra.mrb[0].mxu0 %v5143
    %v5179 = vpop.f32.mrb[0].mxu0
    %v5180 = vadd.f32 %v5128, %v5179
    %v5181 = vpop.f32.mrb[0].mxu0
    %v5182 = vpop.f32.mrb[0].mxu0
    %v5183 = vadd.f32 %v5128, %v5182
    %v5184 = vpop.f32.mrb[0].mxu0
    %5185 = vdwg.mxu0
    %v5186 = vpack.c.bf16 %v4479, %v4478
    %v5187 = vpack.c.bf16 %v4480, %v4480
    %5188 = vrot.lane.b32.xlu0 %v5138, 96
    %v5189 = vpop.permute.xlu0 %5188
    %5190 = vrot.lane.b32.xlu0 %v5139, 96
    %v5191 = vpop.permute.xlu0 %5190
    %5194 = vrot.lane.b32.xlu0 %v5128, 96
    %v5195 = vpop.permute.xlu0 %5194
    %v5198 = vsel %vm145, %v5186, 0
    %v5201 = vsel %vm145, %v5187, 0
    %5203 = vmatprep.subr.bf16.mxu0 0
    %5204 = vmatpush1.bf16.msra.mxu0 %v5189
    %5205 = vmatprep.subr.bf16.mxu0 0
    %5206 = vmatpush1.bf16.msra.mxu0 %v5191
    %5207 = vmatprep.subr.bf16.mxu0 0
    %5208 = vmatpush1.bf16.msra.mxu0 0
    %5209 = vmatprep.subr.bf16.mxu0 0
    %5210 = vmatpush1.bf16.msra.mxu0 0
    %5211 = vmatprep.subr.bf16.mxu0 0
    %5212 = vmatpush1.bf16.msra.mxu0 0
    %5213 = vmatprep.subr.bf16.mxu0 0
    %5214 = vmatpush1.bf16.msra.mxu0 0
    %5215 = vmatprep.subr.bf16.mxu0 0
    %5216 = vmatpush1.bf16.msra.mxu0 0
    %5217 = vmatprep.subr.bf16.mxu0 0
    %5218 = vmatpush1.bf16.msra.mxu0 0
    %5219 = vmatprep.subr.bf16.mxu0 0
    %5220 = vmatpush1.bf16.msra.mxu0 0
    %5221 = vmatprep.subr.bf16.mxu0 0
    %5222 = vmatpush1.bf16.msra.mxu0 0
    %5223 = vmatprep.subr.bf16.mxu0 0
    %5224 = vmatpush1.bf16.msra.mxu0 0
    %5225 = vmatprep.subr.bf16.mxu0 0
    %5226 = vmatpush1.bf16.msra.mxu0 0
    %5227 = vmatprep.subr.bf16.mxu0 0
    %5228 = vmatpush1.bf16.msra.mxu0 0
    %5229 = vmatprep.subr.bf16.mxu0 0
    %5230 = vmatpush1.bf16.msra.mxu0 0
    %5231 = vmatprep.subr.bf16.mxu0 0
    %5232 = vmatpush1.bf16.msra.mxu0 0
    %5233 = vmatprep.subr.bf16.mxu0 0
    %5234 = vmatpush1.bf16.msra.mxu0 0
    %5235 = vmatprep.mubr.bf16.mxu0 0
    %5236 = vmatmul.mubr.bf16.gmra.mrb[0].mxu0 %v5198
    %v5237 = vpop.f32.mrb[0].mxu0
    %v5238 = vadd.f32 %v5195, %v5237
    %v5239 = vpop.f32.mrb[0].mxu0
    %v5240 = vpop.f32.mrb[0].mxu0
    %v5241 = vadd.f32 %v5195, %v5240
    %v5242 = vpop.f32.mrb[0].mxu0
    %5243 = vmatprep.mubr.bf16.mxu0 0
    %5244 = vmatmul.mubr.bf16.gmra.mrb[0].mxu0 %v5201
    %v5245 = vpop.f32.mrb[0].mxu0
    %v5246 = vadd.f32 %v5195, %v5245
    %v5247 = vpop.f32.mrb[0].mxu0
    %v5248 = vpop.f32.mrb[0].mxu0
    %v5249 = vpop.f32.mrb[0].mxu0
    %5250 = vdwg.mxu0
    %v5251 = vld [vmem:[#allocation5 + $0x11c] sm:$0xf]
    %v5252 = vld [vmem:[#allocation5 + $0x34c] sm:$0xf]
    %v5253 = vld [vmem:[#allocation5 + $0x57c] sm:$0xf]
    %v5254 = vld [vmem:[#allocation5 + $0x7ac] sm:$0xf]
    %v5255 = vld [vmem:[#allocation7 + $0x31] sm:$0x1]
    %v5257 = vsel %vm214, %v5180, 0
    %v5260 = vsel %vm214, %v5183, 0
    %v5263 = vsel %vm214, %v5238, 0
    %v5266 = vsel %vm214, %v5241, 0
    %v5269 = vsel %vm214, %v5246, 0
    %5271 = vmatprep.subr.mxu0 0.0
    %5272 = vmatpush1.xpose.msra.mxu0 %v5263
    %5273 = vmatprep.subr.mxu0 0.0
    %5274 = vmatpush1.xpose.msra.mxu0 %v5266
    %5275 = vmatprep.subr.mxu0 0.0
    %5276 = vmatpush1.xpose.msra.mxu0 %v5269
    %5277 = vmatprep.subr.mxu0 0.0
    %5278 = vmatpush1.xpose.msra.mxu0 0.0
    %5279 = vmatprep.subr.mxu0 0.0
    %5280 = vmatpush1.xpose.msra.mxu0 0.0
    %5281 = vmatprep.subr.mxu0 0.0
    %5282 = vmatpush1.xpose.msra.mxu0 0.0
    %5283 = vmatprep.subr.mxu0 0.0
    %5284 = vmatpush1.xpose.msra.mxu0 0.0
    %5285 = vmatprep.subr.mxu0 0.0
    %5286 = vmatpush1.xpose.msra.mxu0 0.0
    %5287 = vmatprep.subr.mxu0 0.0
    %5288 = vmatpush1.xpose.msra.mxu0 0.0
    %5289 = vmatprep.subr.mxu0 0.0
    %5290 = vmatpush1.xpose.msra.mxu0 0.0
    %5291 = vmatprep.subr.mxu0 0.0
    %5292 = vmatpush1.xpose.msra.mxu0 0.0
    %5293 = vmatprep.subr.mxu0 0.0
    %5294 = vmatpush1.xpose.msra.mxu0 0.0
    %5295 = vmatprep.subr.mxu0 0.0
    %5296 = vmatpush1.xpose.msra.mxu0 0.0
    %5297 = vmatprep.subr.mxu0 0.0
    %5298 = vmatpush1.xpose.msra.mxu0 0.0
    %5299 = vmatprep.subr.mxu0 0.0
    %5300 = vmatpush1.xpose.msra.mxu0 0.0
    %5301 = vmatprep.subr.mxu0 0.0
    %5302 = vmatpush1.xpose.msra.mxu0 0.0
    %5303 = vmatprep.subr.mxu0 0.0
    %5304 = vmatpush1.xpose.msra.mxu0 0.0
    %5305 = vmatprep.subr.mxu0 0.0
    %5306 = vmatpush1.xpose.msra.mxu0 0.0
    %5307 = vmatprep.subr.mxu0 0.0
    %5308 = vmatpush1.xpose.msra.mxu0 0.0
    %5309 = vmatprep.subr.mxu0 0.0
    %5310 = vmatpush1.xpose.msra.mxu0 0.0
    %5311 = vmatprep.subr.mxu0 0.0
    %5312 = vmatpush1.xpose.msra.mxu0 0.0
    %5313 = vmatprep.subr.mxu0 0.0
    %5314 = vmatpush1.xpose.msra.mxu0 0.0
    %5315 = vmatprep.subr.mxu0 0.0
    %5316 = vmatpush1.xpose.msra.mxu0 0.0
    %5317 = vmatprep.subr.mxu0 0.0
    %5318 = vmatpush1.xpose.msra.mxu0 0.0
    %5319 = vmatprep.subr.mxu0 0.0
    %5320 = vmatpush1.xpose.msra.mxu0 0.0
    %5321 = vmatprep.subr.mxu0 0.0
    %5322 = vmatpush1.xpose.msra.mxu0 0.0
    %5323 = vmatprep.subr.mxu0 0.0
    %5324 = vmatpush1.xpose.msra.mxu0 0.0
    %5325 = vmatprep.subr.mxu0 0.0
    %5326 = vmatpush1.xpose.msra.mxu0 0.0
    %5327 = vmatprep.subr.mxu0 0.0
    %5328 = vmatpush1.xpose.msra.mxu0 0.0
    %5329 = vmatprep.subr.mxu0 0.0
    %5330 = vmatpush1.xpose.msra.mxu0 0.0
    %5331 = vmatprep.subr.mxu0 0.0
    %5332 = vmatpush1.xpose.msra.mxu0 0.0
    %5333 = vmatprep.subr.mxu0 0.0
    %5334 = vmatpush1.xpose.msra.mxu0 0.0
    %5335 = vmatprep.mubr.f32.mxu0 0.0
    %5336 = vmatmul.mubr.f32.gmra.mrb[0].mxu0 %v5257
    %v5337 = vpop.f32.mrb[0].mxu0
    %v5338 = vadd.f32 0.0, %v5337
    %v5339 = vpop.f32.mrb[0].mxu0
    %5340 = vmatprep.mubr.f32.mxu0 0.0
    %5341 = vmatmul.mubr.f32.gmra.mrb[0].mxu0 %v5260
    %v5342 = vpop.f32.mrb[0].mxu0
    %v5343 = vadd.f32 0.0, %v5342
    %v5344 = vpop.f32.mrb[0].mxu0
    %5345 = vdwg.mxu0
    %v5346 = vmul.f32 %v5338, 0.25
    %v5347 = vmul.f32 %v5343, 0.25
    %v5348 = vsel %vm114, %v5346, -inf
    %v5349 = vsel %vm115, %v5347, -inf
    %v5350 = vsel %vm313, %v5348, -inf
    %5351 = vmax.xlane.f32.xlu0 %v5350
    %v5352 = vpop.xlane.xlu0 %5351
    %v5353 = vsel %vm313, %v5349, -inf
    %5354 = vmax.xlane.f32.xlu0 %v5353
    %v5355 = vpop.xlane.xlu0 %5354
    %v5356 = vsub.f32 %v5348, %v5352
    %v5357 = vsub.f32 %v5349, %v5355
    %v5358 = vmul.f32 %v5356, 1.442695
    %v5359 = vpow.pop %v5358
    %v5360 = vmul.f32 %v5357, 1.442695
    %v5361 = vpow.pop %v5360
    %v5362 = vsel %vm313, %v5359, 0.0
    %5363 = vadd.xlane.f32.xlu0 %v5362
    %v5364 = vpop.xlane.xlu0 %5363
    %v5365 = vsel %vm313, %v5361, 0.0
    %5366 = vadd.xlane.f32.xlu0 %v5365
    %v5367 = vpop.xlane.xlu0 %5366
    %v5368 = vrcp.pop %v5364
    %v5369 = vmul.f32 %v5359, %v5368
    %v5370 = vrcp.pop %v5367
    %v5371 = vmul.f32 %v5361, %v5370
    %5372 = vrot.lane.b32.xlu0 %v5238, 96
    %v5373 = vpop.permute.xlu0 %5372
    %5374 = vrot.lane.b32.xlu0 %v5241, 96
    %v5375 = vpop.permute.xlu0 %5374
    %5376 = vrot.lane.b32.xlu0 %v5246, 96
    %v5377 = vpop.permute.xlu0 %5376
    %v5381 = vsel %vm313, %v5369, 0
    %v5384 = vsel %vm313, %v5371, 0
    %v5386 = vsel %vm365, %v5377, 0
    %5388 = vmatprep.subr.mxu0 0.0
    %5389 = vmatpush1.msra.mxu0 %v5373
    %5390 = vmatprep.subr.mxu0 0.0
    %5391 = vmatpush1.msra.mxu0 %v5375
    %5392 = vmatprep.subr.mxu0 0.0
    %5393 = vmatpush1.msra.mxu0 %v5386
    %5394 = vmatprep.subr.mxu0 0.0
    %5395 = vmatpush1.msra.mxu0 0.0
    %5396 = vmatprep.subr.mxu0 0.0
    %5397 = vmatpush1.msra.mxu0 0.0
    %5398 = vmatprep.subr.mxu0 0.0
    %5399 = vmatpush1.msra.mxu0 0.0
    %5400 = vmatprep.subr.mxu0 0.0
    %5401 = vmatpush1.msra.mxu0 0.0
    %5402 = vmatprep.subr.mxu0 0.0
    %5403 = vmatpush1.msra.mxu0 0.0
    %5404 = vmatprep.subr.mxu0 0.0
    %5405 = vmatpush1.msra.mxu0 0.0
    %5406 = vmatprep.subr.mxu0 0.0
    %5407 = vmatpush1.msra.mxu0 0.0
    %5408 = vmatprep.subr.mxu0 0.0
    %5409 = vmatpush1.msra.mxu0 0.0
    %5410 = vmatprep.subr.mxu0 0.0
    %5411 = vmatpush1.msra.mxu0 0.0
    %5412 = vmatprep.subr.mxu0 0.0
    %5413 = vmatpush1.msra.mxu0 0.0
    %5414 = vmatprep.subr.mxu0 0.0
    %5415 = vmatpush1.msra.mxu0 0.0
    %5416 = vmatprep.subr.mxu0 0.0
    %5417 = vmatpush1.msra.mxu0 0.0
    %5418 = vmatprep.subr.mxu0 0.0
    %5419 = vmatpush1.msra.mxu0 0.0
    %5420 = vmatprep.subr.mxu0 0.0
    %5421 = vmatpush1.msra.mxu0 0.0
    %5422 = vmatprep.subr.mxu0 0.0
    %5423 = vmatpush1.msra.mxu0 0.0
    %5424 = vmatprep.subr.mxu0 0.0
    %5425 = vmatpush1.msra.mxu0 0.0
    %5426 = vmatprep.subr.mxu0 0.0
    %5427 = vmatpush1.msra.mxu0 0.0
    %5428 = vmatprep.subr.mxu0 0.0
    %5429 = vmatpush1.msra.mxu0 0.0
    %5430 = vmatprep.subr.mxu0 0.0
    %5431 = vmatpush1.msra.mxu0 0.0
    %5432 = vmatprep.subr.mxu0 0.0
    %5433 = vmatpush1.msra.mxu0 0.0
    %5434 = vmatprep.subr.mxu0 0.0
    %5435 = vmatpush1.msra.mxu0 0.0
    %5436 = vmatprep.subr.mxu0 0.0
    %5437 = vmatpush1.msra.mxu0 0.0
    %5438 = vmatprep.subr.mxu0 0.0
    %5439 = vmatpush1.msra.mxu0 0.0
    %5440 = vmatprep.subr.mxu0 0.0
    %5441 = vmatpush1.msra.mxu0 0.0
    %5442 = vmatprep.subr.mxu0 0.0
    %5443 = vmatpush1.msra.mxu0 0.0
    %5444 = vmatprep.subr.mxu0 0.0
    %5445 = vmatpush1.msra.mxu0 0.0
    %5446 = vmatprep.subr.mxu0 0.0
    %5447 = vmatpush1.msra.mxu0 0.0
    %5448 = vmatprep.subr.mxu0 0.0
    %5449 = vmatpush1.msra.mxu0 0.0
    %5450 = vmatprep.subr.mxu0 0.0
    %5451 = vmatpush1.msra.mxu0 0.0
    %5452 = vmatprep.mubr.f32.mxu0 0.0
    %5453 = vmatmul.mubr.f32.gmra.mrb[0].mxu0 %v5381
    %v5454 = vpop.f32.mrb[0].mxu0
    %v5455 = vadd.f32 0.0, %v5454
    %v5456 = vpop.f32.mrb[0].mxu0
    %5457 = vmatprep.mubr.f32.mxu0 0.0
    %5458 = vmatmul.mubr.f32.gmra.mrb[0].mxu0 %v5384
    %v5459 = vpop.f32.mrb[0].mxu0
    %v5460 = vadd.f32 0.0, %v5459
    %v5461 = vpop.f32.mrb[0].mxu0
    %5462 = vdwg.mxu0
    %v5463 = vpack.c.bf16 %v5460, %v5455
    %5464 = vrot.lane.b32.xlu0 %v5180, 112
    %v5465 = vpop.permute.xlu0 %5464
    %5466 = vrot.lane.b32.xlu0 %v5183, 112
    %v5467 = vpop.permute.xlu0 %5466
    %5468 = vrot.lane.b32.xlu0 %v5238, 112
    %v5469 = vpop.permute.xlu0 %5468
    %5470 = vrot.lane.b32.xlu0 %v5241, 112
    %v5471 = vpop.permute.xlu0 %5470
    %5472 = vrot.lane.b32.xlu0 %v5246, 112
    %v5473 = vpop.permute.xlu0 %5472
    %v5474 = vsel %vm214, %v5465, 0
    %v5476 = vsel %vm214, %v5467, 0
    %v5478 = vsel %vm214, %v5469, 0
    %v5480 = vsel %vm214, %v5471, 0
    %v5482 = vsel %vm214, %v5473, 0
    %5484 = vmatprep.subr.mxu0 0.0
    %5485 = vmatpush1.xpose.msra.mxu0 %v5478
    %5486 = vmatprep.subr.mxu0 0.0
    %5487 = vmatpush1.xpose.msra.mxu0 %v5480
    %5488 = vmatprep.subr.mxu0 0.0
    %5489 = vmatpush1.xpose.msra.mxu0 %v5482
    %5490 = vmatprep.subr.mxu0 0.0
    %5491 = vmatpush1.xpose.msra.mxu0 0.0
    %5492 = vmatprep.subr.mxu0 0.0
    %5493 = vmatpush1.xpose.msra.mxu0 0.0
    %5494 = vmatprep.subr.mxu0 0.0
    %5495 = vmatpush1.xpose.msra.mxu0 0.0
    %5496 = vmatprep.subr.mxu0 0.0
    %5497 = vmatpush1.xpose.msra.mxu0 0.0
    %5498 = vmatprep.subr.mxu0 0.0
    %5499 = vmatpush1.xpose.msra.mxu0 0.0
    %5500 = vmatprep.subr.mxu0 0.0
    %5501 = vmatpush1.xpose.msra.mxu0 0.0
    %5502 = vmatprep.subr.mxu0 0.0
    %5503 = vmatpush1.xpose.msra.mxu0 0.0
    %5504 = vmatprep.subr.mxu0 0.0
    %5505 = vmatpush1.xpose.msra.mxu0 0.0
    %5506 = vmatprep.subr.mxu0 0.0
    %5507 = vmatpush1.xpose.msra.mxu0 0.0
    %5508 = vmatprep.subr.mxu0 0.0
    %5509 = vmatpush1.xpose.msra.mxu0 0.0
    %5510 = vmatprep.subr.mxu0 0.0
    %5511 = vmatpush1.xpose.msra.mxu0 0.0
    %5512 = vmatprep.subr.mxu0 0.0
    %5513 = vmatpush1.xpose.msra.mxu0 0.0
    %5514 = vmatprep.subr.mxu0 0.0
    %5515 = vmatpush1.xpose.msra.mxu0 0.0
    %5516 = vmatprep.subr.mxu0 0.0
    %5517 = vmatpush1.xpose.msra.mxu0 0.0
    %5518 = vmatprep.subr.mxu0 0.0
    %5519 = vmatpush1.xpose.msra.mxu0 0.0
    %5520 = vmatprep.subr.mxu0 0.0
    %5521 = vmatpush1.xpose.msra.mxu0 0.0
    %5522 = vmatprep.subr.mxu0 0.0
    %5523 = vmatpush1.xpose.msra.mxu0 0.0
    %5524 = vmatprep.subr.mxu0 0.0
    %5525 = vmatpush1.xpose.msra.mxu0 0.0
    %5526 = vmatprep.subr.mxu0 0.0
    %5527 = vmatpush1.xpose.msra.mxu0 0.0
    %5528 = vmatprep.subr.mxu0 0.0
    %5529 = vmatpush1.xpose.msra.mxu0 0.0
    %5530 = vmatprep.subr.mxu0 0.0
    %5531 = vmatpush1.xpose.msra.mxu0 0.0
    %5532 = vmatprep.subr.mxu0 0.0
    %5533 = vmatpush1.xpose.msra.mxu0 0.0
    %5534 = vmatprep.subr.mxu0 0.0
    %5535 = vmatpush1.xpose.msra.mxu0 0.0
    %5536 = vmatprep.subr.mxu0 0.0
    %5537 = vmatpush1.xpose.msra.mxu0 0.0
    %5538 = vmatprep.subr.mxu0 0.0
    %5539 = vmatpush1.xpose.msra.mxu0 0.0
    %5540 = vmatprep.subr.mxu0 0.0
    %5541 = vmatpush1.xpose.msra.mxu0 0.0
    %5542 = vmatprep.subr.mxu0 0.0
    %5543 = vmatpush1.xpose.msra.mxu0 0.0
    %5544 = vmatprep.subr.mxu0 0.0
    %5545 = vmatpush1.xpose.msra.mxu0 0.0
    %5546 = vmatprep.subr.mxu0 0.0
    %5547 = vmatpush1.xpose.msra.mxu0 0.0
    %5548 = vmatprep.mubr.f32.mxu0 0.0
    %5549 = vmatmul.mubr.f32.gmra.mrb[0].mxu0 %v5474
    %v5550 = vpop.f32.mrb[0].mxu0
    %v5551 = vadd.f32 0.0, %v5550
    %v5552 = vpop.f32.mrb[0].mxu0
    %5553 = vmatprep.mubr.f32.mxu0 0.0
    %5554 = vmatmul.mubr.f32.gmra.mrb[0].mxu0 %v5476
    %v5555 = vpop.f32.mrb[0].mxu0
    %v5556 = vadd.f32 0.0, %v5555
    %v5557 = vpop.f32.mrb[0].mxu0
    %5558 = vdwg.mxu0
    %v5559 = vmul.f32 %v5551, 0.25
    %v5560 = vmul.f32 %v5556, 0.25
    %v5561 = vsel %vm114, %v5559, -inf
    %v5562 = vsel %vm115, %v5560, -inf
    %v5563 = vsel %vm313, %v5561, -inf
    %5564 = vmax.xlane.f32.xlu0 %v5563
    %v5565 = vpop.xlane.xlu0 %5564
    %v5566 = vsel %vm313, %v5562, -inf
    %5567 = vmax.xlane.f32.xlu0 %v5566
    %v5568 = vpop.xlane.xlu0 %5567
    %v5569 = vsub.f32 %v5561, %v5565
    %v5570 = vsub.f32 %v5562, %v5568
    %v5571 = vmul.f32 %v5569, 1.442695
    %v5572 = vpow.pop %v5571
    %v5573 = vmul.f32 %v5570, 1.442695
    %v5574 = vpow.pop %v5573
    %v5575 = vsel %vm313, %v5572, 0.0
    %5576 = vadd.xlane.f32.xlu0 %v5575
    %v5577 = vpop.xlane.xlu0 %5576
    %v5578 = vsel %vm313, %v5574, 0.0
    %5579 = vadd.xlane.f32.xlu0 %v5578
    %v5580 = vpop.xlane.xlu0 %5579
    %v5581 = vrcp.pop %v5577
    %v5582 = vmul.f32 %v5572, %v5581
    %v5583 = vrcp.pop %v5580
    %v5584 = vmul.f32 %v5574, %v5583
    %5585 = vrot.lane.b32.xlu0 %v5238, 80
    %v5586 = vpop.permute.xlu0 %5585
    %5587 = vrot.lane.b32.xlu0 %v5241, 80
    %v5588 = vpop.permute.xlu0 %5587
    %5589 = vrot.lane.b32.xlu0 %v5246, 80
    %v5590 = vpop.permute.xlu0 %5589
    %v5594 = vsel %vm313, %v5582, 0
    %v5597 = vsel %vm313, %v5584, 0
    %v5599 = vsel %vm365, %v5590, 0
    %5601 = vmatprep.subr.mxu0 0.0
    %5602 = vmatpush1.msra.mxu0 %v5586
    %5603 = vmatprep.subr.mxu0 0.0
    %5604 = vmatpush1.msra.mxu0 %v5588
    %5605 = vmatprep.subr.mxu0 0.0
    %5606 = vmatpush1.msra.mxu0 %v5599
    %5607 = vmatprep.subr.mxu0 0.0
    %5608 = vmatpush1.msra.mxu0 0.0
    %5609 = vmatprep.subr.mxu0 0.0
    %5610 = vmatpush1.msra.mxu0 0.0
    %5611 = vmatprep.subr.mxu0 0.0
    %5612 = vmatpush1.msra.mxu0 0.0
    %5613 = vmatprep.subr.mxu0 0.0
    %5614 = vmatpush1.msra.mxu0 0.0
    %5615 = vmatprep.subr.mxu0 0.0
    %5616 = vmatpush1.msra.mxu0 0.0
    %5617 = vmatprep.subr.mxu0 0.0
    %5618 = vmatpush1.msra.mxu0 0.0
    %5619 = vmatprep.subr.mxu0 0.0
    %5620 = vmatpush1.msra.mxu0 0.0
    %5621 = vmatprep.subr.mxu0 0.0
    %5622 = vmatpush1.msra.mxu0 0.0
    %5623 = vmatprep.subr.mxu0 0.0
    %5624 = vmatpush1.msra.mxu0 0.0
    %5625 = vmatprep.subr.mxu0 0.0
    %5626 = vmatpush1.msra.mxu0 0.0
    %5627 = vmatprep.subr.mxu0 0.0
    %5628 = vmatpush1.msra.mxu0 0.0
    %5629 = vmatprep.subr.mxu0 0.0
    %5630 = vmatpush1.msra.mxu0 0.0
    %5631 = vmatprep.subr.mxu0 0.0
    %5632 = vmatpush1.msra.mxu0 0.0
    %5633 = vmatprep.subr.mxu0 0.0
    %5634 = vmatpush1.msra.mxu0 0.0
    %5635 = vmatprep.subr.mxu0 0.0
    %5636 = vmatpush1.msra.mxu0 0.0
    %5637 = vmatprep.subr.mxu0 0.0
    %5638 = vmatpush1.msra.mxu0 0.0
    %5639 = vmatprep.subr.mxu0 0.0
    %5640 = vmatpush1.msra.mxu0 0.0
    %5641 = vmatprep.subr.mxu0 0.0
    %5642 = vmatpush1.msra.mxu0 0.0
    %5643 = vmatprep.subr.mxu0 0.0
    %5644 = vmatpush1.msra.mxu0 0.0
    %5645 = vmatprep.subr.mxu0 0.0
    %5646 = vmatpush1.msra.mxu0 0.0
    %5647 = vmatprep.subr.mxu0 0.0
    %5648 = vmatpush1.msra.mxu0 0.0
    %5649 = vmatprep.subr.mxu0 0.0
    %5650 = vmatpush1.msra.mxu0 0.0
    %5651 = vmatprep.subr.mxu0 0.0
    %5652 = vmatpush1.msra.mxu0 0.0
    %5653 = vmatprep.subr.mxu0 0.0
    %5654 = vmatpush1.msra.mxu0 0.0
    %5655 = vmatprep.subr.mxu0 0.0
    %5656 = vmatpush1.msra.mxu0 0.0
    %5657 = vmatprep.subr.mxu0 0.0
    %5658 = vmatpush1.msra.mxu0 0.0
    %5659 = vmatprep.subr.mxu0 0.0
    %5660 = vmatpush1.msra.mxu0 0.0
    %5661 = vmatprep.subr.mxu0 0.0
    %5662 = vmatpush1.msra.mxu0 0.0
    %5663 = vmatprep.subr.mxu0 0.0
    %5664 = vmatpush1.msra.mxu0 0.0
    %5665 = vmatprep.mubr.f32.mxu0 0.0
    %5666 = vmatmul.mubr.f32.gmra.mrb[0].mxu0 %v5594
    %v5667 = vpop.f32.mrb[0].mxu0
    %v5668 = vadd.f32 0.0, %v5667
    %v5669 = vpop.f32.mrb[0].mxu0
    %5670 = vmatprep.mubr.f32.mxu0 0.0
    %5671 = vmatmul.mubr.f32.gmra.mrb[0].mxu0 %v5597
    %v5672 = vpop.f32.mrb[0].mxu0
    %v5673 = vadd.f32 0.0, %v5672
    %v5674 = vpop.f32.mrb[0].mxu0
    %5675 = vdwg.mxu0
    %v5676 = vpack.c.bf16 %v5673, %v5668
    %v5679 = vunpack.c.l.b16 %v5253
    %v5680 = vunpack.c.l.b16 %v5254
    %v5681 = vpack.c.b16 %v5680, %v5679
    %v5684 = vsel %vm214, %v5676, 0
    %5686 = vmatprep.subr.bf16.mxu0 0
    %5687 = vmatpush1.bf16.msra.mxu0 %v5681
    %5688 = vmatprep.subr.bf16.mxu0 0
    %5689 = vmatpush1.bf16.msra.mxu0 0
    %5690 = vmatprep.subr.bf16.mxu0 0
    %5691 = vmatpush1.bf16.msra.mxu0 0
    %5692 = vmatprep.subr.bf16.mxu0 0
    %5693 = vmatpush1.bf16.msra.mxu0 0
    %5694 = vmatprep.subr.bf16.mxu0 0
    %5695 = vmatpush1.bf16.msra.mxu0 0
    %5696 = vmatprep.subr.bf16.mxu0 0
    %5697 = vmatpush1.bf16.msra.mxu0 0
    %5698 = vmatprep.subr.bf16.mxu0 0
    %5699 = vmatpush1.bf16.msra.mxu0 0
    %5700 = vmatprep.subr.bf16.mxu0 0
    %5701 = vmatpush1.bf16.msra.mxu0 0
    %5702 = vmatprep.subr.bf16.mxu0 0
    %5703 = vmatpush1.bf16.msra.mxu0 0
    %5704 = vmatprep.subr.bf16.mxu0 0
    %5705 = vmatpush1.bf16.msra.mxu0 0
    %5706 = vmatprep.subr.bf16.mxu0 0
    %5707 = vmatpush1.bf16.msra.mxu0 0
    %5708 = vmatprep.subr.bf16.mxu0 0
    %5709 = vmatpush1.bf16.msra.mxu0 0
    %5710 = vmatprep.subr.bf16.mxu0 0
    %5711 = vmatpush1.bf16.msra.mxu0 0
    %5712 = vmatprep.subr.bf16.mxu0 0
    %5713 = vmatpush1.bf16.msra.mxu0 0
    %5714 = vmatprep.subr.bf16.mxu0 0
    %5715 = vmatpush1.bf16.msra.mxu0 0
    %5716 = vmatprep.subr.bf16.mxu0 0
    %5717 = vmatpush1.bf16.msra.mxu0 0
    %5718 = vmatprep.mubr.bf16.mxu0 0
    %5719 = vmatmul.mubr.bf16.gmra.mrb[0].mxu0 %v5684
    %v5720 = vpop.f32.mrb[0].mxu0
    %v5721 = vadd.f32 0.0, %v5720
    %v5722 = vpop.f32.mrb[0].mxu0
    %v5723 = vpop.f32.mrb[0].mxu0
    %v5724 = vadd.f32 0.0, %v5723
    %v5725 = vpop.f32.mrb[0].mxu0
    %5726 = vdwg.mxu0
    %v5729 = vunpack.c.l.b16 %v5251
    %v5730 = vunpack.c.l.b16 %v5252
    %v5731 = vpack.c.b16 %v5730, %v5729
    %v5734 = vsel %vm214, %v5463, 0
    %5736 = vmatprep.subr.bf16.mxu0 0
    %5737 = vmatpush1.bf16.msra.mxu0 %v5731
    %5738 = vmatprep.subr.bf16.mxu0 0
    %5739 = vmatpush1.bf16.msra.mxu0 0
    %5740 = vmatprep.subr.bf16.mxu0 0
    %5741 = vmatpush1.bf16.msra.mxu0 0
    %5742 = vmatprep.subr.bf16.mxu0 0
    %5743 = vmatpush1.bf16.msra.mxu0 0
    %5744 = vmatprep.subr.bf16.mxu0 0
    %5745 = vmatpush1.bf16.msra.mxu0 0
    %5746 = vmatprep.subr.bf16.mxu0 0
    %5747 = vmatpush1.bf16.msra.mxu0 0
    %5748 = vmatprep.subr.bf16.mxu0 0
    %5749 = vmatpush1.bf16.msra.mxu0 0
    %5750 = vmatprep.subr.bf16.mxu0 0
    %5751 = vmatpush1.bf16.msra.mxu0 0
    %5752 = vmatprep.subr.bf16.mxu0 0
    %5753 = vmatpush1.bf16.msra.mxu0 0
    %5754 = vmatprep.subr.bf16.mxu0 0
    %5755 = vmatpush1.bf16.msra.mxu0 0
    %5756 = vmatprep.subr.bf16.mxu0 0
    %5757 = vmatpush1.bf16.msra.mxu0 0
    %5758 = vmatprep.subr.bf16.mxu0 0
    %5759 = vmatpush1.bf16.msra.mxu0 0
    %5760 = vmatprep.subr.bf16.mxu0 0
    %5761 = vmatpush1.bf16.msra.mxu0 0
    %5762 = vmatprep.subr.bf16.mxu0 0
    %5763 = vmatpush1.bf16.msra.mxu0 0
    %5764 = vmatprep.subr.bf16.mxu0 0
    %5765 = vmatpush1.bf16.msra.mxu0 0
    %5766 = vmatprep.subr.bf16.mxu0 0
    %5767 = vmatpush1.bf16.msra.mxu0 0
    %5768 = vmatprep.mubr.bf16.mxu0 0
    %5769 = vmatmul.mubr.bf16.gmra.mrb[0].mxu0 %v5734
    %v5770 = vpop.f32.mrb[0].mxu0
    %v5771 = vadd.f32 %v5721, %v5770
    %v5772 = vpop.f32.mrb[0].mxu0
    %v5773 = vpop.f32.mrb[0].mxu0
    %v5774 = vadd.f32 %v5724, %v5773
    %v5775 = vpop.f32.mrb[0].mxu0
    %5776 = vdwg.mxu0
    %v5778 = vlaneseq
    %v5779 = vshrl.u32 %v5778, 7
    %v5780 = vsub.s32 0, %v5779
    %v5781 = vrot.slane %v5255, %v5780
    %v5783 = vadd.f32 %v5771, %v5781
    %v5784 = vadd.f32 %v5774, %v5781
    %v5785 = vadd.f32 %v5116, %v5783
    %v5786 = vadd.f32 %v5117, %v5784
    %v5787 = vld [vmem:[#allocation7 + $0x45] sm:$0x1]
    %v5788 = vld [vmem:[#allocation7 + $0x46] sm:$0x1]
    %v5789 = vsel %vm145, %v5785, 0.0
    %5790 = vadd.xlane.f32.xlu0 %v5789
    %v5791 = vpop.xlane.xlu0 %5790
    %v5792 = vsel %vm145, %v5786, 0.0
    %5793 = vadd.xlane.f32.xlu0 %v5792
    %v5794 = vpop.xlane.xlu0 %5793
    %v5795 = vmul.f32 %v5791, %v838
    %v5796 = vmul.f32 %v5794, %v838
    %v5797 = vsub.f32 %v5785, %v5795
    %v5798 = vsub.f32 %v5786, %v5796
    %v5799 = vmul.f32 %v5797, %v5797
    %v5800 = vmul.f32 %v5798, %v5798
    %v5801 = vsel %vm145, %v5799, 0.0
    %5802 = vadd.xlane.f32.xlu0 %v5801
    %v5803 = vpop.xlane.xlu0 %5802
    %v5804 = vsel %vm145, %v5800, 0.0
    %5805 = vadd.xlane.f32.xlu0 %v5804
    %v5806 = vpop.xlane.xlu0 %5805
    %v5807 = vmul.f32 %v5803, %v838
    %v5808 = vmul.f32 %v5806, %v838
    %v5809 = vadd.f32 %v5807, 1e-05
    %v5810 = vadd.f32 %v5808, 1e-05
    %v5811 = vrsqrt.pop %v5809
    %v5812 = vrsqrt.pop %v5810
    %v5813 = vmul.f32 %v5797, %v5811
    %v5814 = vmul.f32 %v5798, %v5812
    %v5816 = vlaneseq
    %v5817 = vshrl.u32 %v5816, 7
    %v5818 = vsub.s32 0, %v5817
    %v5819 = vrot.slane %v5787, %v5818
    %v5821 = vmul.f32 %v5813, %v5819
    %v5822 = vmul.f32 %v5814, %v5819
    %v5824 = vlaneseq
    %v5825 = vshrl.u32 %v5824, 7
    %v5826 = vsub.s32 0, %v5825
    %v5827 = vrot.slane %v5788, %v5826
    %v5829 = vadd.f32 %v5821, %v5827
    %v5830 = vadd.f32 %v5822, %v5827
    %v5831 = vld [vmem:[#allocation5 + $0x120] sm:$0xff]
    %v5832 = vld [vmem:[#allocation5 + $0x128] sm:$0xff]
    %v5833 = vld [vmem:[#allocation5 + $0x130] sm:$0xff]
    %v5834 = vld [vmem:[#allocation5 + $0x138] sm:$0xff]
    %v5835 = vld [vmem:[#allocation5 + $0x140] sm:$0xff]
    %v5836 = vld [vmem:[#allocation5 + $0x148] sm:$0xff]
    %v5837 = vld [vmem:[#allocation5 + $0x150] sm:$0xff]
    %v5838 = vld [vmem:[#allocation5 + $0x158] sm:$0xff]
    %v5839 = vld [vmem:[#allocation5 + $0x350] sm:$0xff]
    %v5840 = vld [vmem:[#allocation5 + $0x358] sm:$0xff]
    %v5841 = vld [vmem:[#allocation5 + $0x360] sm:$0xff]
    %v5842 = vld [vmem:[#allocation5 + $0x368] sm:$0xff]
    %v5843 = vld [vmem:[#allocation5 + $0x370] sm:$0xff]
    %v5844 = vld [vmem:[#allocation5 + $0x378] sm:$0xff]
    %v5845 = vld [vmem:[#allocation5 + $0x380] sm:$0xff]
    %v5846 = vld [vmem:[#allocation5 + $0x388] sm:$0xff]
    %v5847 = vld [vmem:[#allocation5 + $0x580] sm:$0xff]
    %v5848 = vld [vmem:[#allocation5 + $0x588] sm:$0xff]
    %v5849 = vld [vmem:[#allocation5 + $0x590] sm:$0xff]
    %v5850 = vld [vmem:[#allocation5 + $0x598] sm:$0xff]
    %v5851 = vld [vmem:[#allocation5 + $0x5a0] sm:$0xff]
    %v5852 = vld [vmem:[#allocation5 + $0x5a8] sm:$0xff]
    %v5853 = vld [vmem:[#allocation5 + $0x5b0] sm:$0xff]
    %v5854 = vld [vmem:[#allocation5 + $0x5b8] sm:$0xff]
    %v5855 = vld [vmem:[#allocation5 + $0x7b0] sm:$0xff]
    %v5856 = vld [vmem:[#allocation5 + $0x7b8] sm:$0xff]
    %v5857 = vld [vmem:[#allocation5 + $0x7c0] sm:$0xff]
    %v5858 = vld [vmem:[#allocation5 + $0x7c8] sm:$0xff]
    %v5859 = vld [vmem:[#allocation5 + $0x7d0] sm:$0xff]
    %v5860 = vld [vmem:[#allocation5 + $0x7d8] sm:$0xff]
    %v5861 = vld [vmem:[#allocation5 + $0x7e0] sm:$0xff]
    %v5862 = vld [vmem:[#allocation5 + $0x7e8] sm:$0xff]
    %v5863 = vld [vmem:[#allocation7 + $0x32] sm:$0xff]
    %v5864 = vld [vmem:[#allocation7 + $0x3a] sm:$0xff]
    %v5865 = vld [vmem:[#allocation5 + $0x160] sm:$0xff]
    %v5866 = vld [vmem:[#allocation5 + $0x168] sm:$0xff]
    %v5867 = vld [vmem:[#allocation5 + $0x170] sm:$0xff]
    %v5868 = vld [vmem:[#allocation5 + $0x178] sm:$0xff]
    %v5869 = vld [vmem:[#allocation5 + $0x180] sm:$0xff]
    %v5870 = vld [vmem:[#allocation5 + $0x188] sm:$0xff]
    %v5871 = vld [vmem:[#allocation5 + $0x190] sm:$0xff]
    %v5872 = vld [vmem:[#allocation5 + $0x198] sm:$0xff]
    %v5873 = vld [vmem:[#allocation5 + $0x390] sm:$0xff]
    %v5874 = vld [vmem:[#allocation5 + $0x398] sm:$0xff]
    %v5875 = vld [vmem:[#allocation5 + $0x3a0] sm:$0xff]
    %v5876 = vld [vmem:[#allocation5 + $0x3a8] sm:$0xff]
    %v5877 = vld [vmem:[#allocation5 + $0x3b0] sm:$0xff]
    %v5878 = vld [vmem:[#allocation5 + $0x3b8] sm:$0xff]
    %v5879 = vld [vmem:[#allocation5 + $0x3c0] sm:$0xff]
    %v5880 = vld [vmem:[#allocation5 + $0x3c8] sm:$0xff]
    %v5881 = vld [vmem:[#allocation5 + $0x5c0] sm:$0xff]
    %v5882 = vld [vmem:[#allocation5 + $0x5c8] sm:$0xff]
    %v5883 = vld [vmem:[#allocation5 + $0x5d0] sm:$0xff]
    %v5884 = vld [vmem:[#allocation5 + $0x5d8] sm:$0xff]
    %v5885 = vld [vmem:[#allocation5 + $0x5e0] sm:$0xff]
    %v5886 = vld [vmem:[#allocation5 + $0x5e8] sm:$0xff]
    %v5887 = vld [vmem:[#allocation5 + $0x5f0] sm:$0xff]
    %v5888 = vld [vmem:[#allocation5 + $0x5f8] sm:$0xff]
    %v5889 = vld [vmem:[#allocation5 + $0x7f0] sm:$0xff]
    %v5890 = vld [vmem:[#allocation5 + $0x7f8] sm:$0xff]
    %v5891 = vld [vmem:[#allocation5 + $0x800] sm:$0xff]
    %v5892 = vld [vmem:[#allocation5 + $0x808] sm:$0xff]
    %v5893 = vld [vmem:[#allocation5 + $0x810] sm:$0xff]
    %v5894 = vld [vmem:[#allocation5 + $0x818] sm:$0xff]
    %v5895 = vld [vmem:[#allocation5 + $0x820] sm:$0xff]
    %v5896 = vld [vmem:[#allocation5 + $0x828] sm:$0xff]
    %v5897 = vld [vmem:[#allocation7 + $0x42] sm:$0x1]
    %v5898 = vpack.c.bf16 %v5830, %v5829
    %v5901 = vlaneseq
    %v5902 = vshrl.u32 %v5901, 7
    %v5903 = vsub.s32 0, %v5902
    %v5904 = vrot.slane %v5863, %v5903
    %v5905 = vlaneseq
    %v5906 = vshrl.u32 %v5905, 7
    %v5907 = vsub.s32 1, %v5906
    %v5908 = vrot.slane %v5863, %v5907
    %v5909 = vlaneseq
    %v5910 = vshrl.u32 %v5909, 7
    %v5911 = vsub.s32 2, %v5910
    %v5912 = vrot.slane %v5863, %v5911
    %v5913 = vlaneseq
    %v5914 = vshrl.u32 %v5913, 7
    %v5915 = vsub.s32 3, %v5914
    %v5916 = vrot.slane %v5863, %v5915
    %v5917 = vlaneseq
    %v5918 = vshrl.u32 %v5917, 7
    %v5919 = vsub.s32 4, %v5918
    %v5920 = vrot.slane %v5863, %v5919
    %v5921 = vlaneseq
    %v5922 = vshrl.u32 %v5921, 7
    %v5923 = vsub.s32 5, %v5922
    %v5924 = vrot.slane %v5863, %v5923
    %v5925 = vlaneseq
    %v5926 = vshrl.u32 %v5925, 7
    %v5927 = vsub.s32 6, %v5926
    %v5928 = vrot.slane %v5863, %v5927
    %v5929 = vlaneseq
    %v5930 = vshrl.u32 %v5929, 7
    %v5931 = vsub.s32 7, %v5930
    %v5932 = vrot.slane %v5863, %v5931
    %v5933 = vlaneseq
    %v5934 = vshrl.u32 %v5933, 7
    %v5935 = vsub.s32 0, %v5934
    %v5936 = vrot.slane %v5864, %v5935
    %v5937 = vlaneseq
    %v5938 = vshrl.u32 %v5937, 7
    %v5939 = vsub.s32 1, %v5938
    %v5940 = vrot.slane %v5864, %v5939
    %v5941 = vlaneseq
    %v5942 = vshrl.u32 %v5941, 7
    %v5943 = vsub.s32 2, %v5942
    %v5944 = vrot.slane %v5864, %v5943
    %v5945 = vlaneseq
    %v5946 = vshrl.u32 %v5945, 7
    %v5947 = vsub.s32 3, %v5946
    %v5948 = vrot.slane %v5864, %v5947
    %v5949 = vlaneseq
    %v5950 = vshrl.u32 %v5949, 7
    %v5951 = vsub.s32 4, %v5950
    %v5952 = vrot.slane %v5864, %v5951
    %v5953 = vlaneseq
    %v5954 = vshrl.u32 %v5953, 7
    %v5955 = vsub.s32 5, %v5954
    %v5956 = vrot.slane %v5864, %v5955
    %v5957 = vlaneseq
    %v5958 = vshrl.u32 %v5957, 7
    %v5959 = vsub.s32 6, %v5958
    %v5960 = vrot.slane %v5864, %v5959
    %v5961 = vlaneseq
    %v5962 = vshrl.u32 %v5961, 7
    %v5963 = vsub.s32 7, %v5962
    %v5964 = vrot.slane %v5864, %v5963
    %v6013 = vunpack.c.l.b16 %v5831
    %v6014 = vunpack.c.h.b16 %v5831
    %v6015 = vunpack.c.l.b16 %v5832
    %v6016 = vunpack.c.h.b16 %v5832
    %v6017 = vunpack.c.l.b16 %v5833
    %v6018 = vunpack.c.h.b16 %v5833
    %v6019 = vunpack.c.l.b16 %v5834
    %v6020 = vunpack.c.h.b16 %v5834
    %v6021 = vunpack.c.l.b16 %v5835
    %v6022 = vunpack.c.h.b16 %v5835
    %v6023 = vunpack.c.l.b16 %v5836
    %v6024 = vunpack.c.h.b16 %v5836
    %v6025 = vunpack.c.l.b16 %v5837
    %v6026 = vunpack.c.h.b16 %v5837
    %v6027 = vunpack.c.l.b16 %v5838
    %v6028 = vunpack.c.h.b16 %v5838
    %v6029 = vunpack.c.l.b16 %v5839
    %v6030 = vunpack.c.h.b16 %v5839
    %v6031 = vunpack.c.l.b16 %v5840
    %v6032 = vunpack.c.h.b16 %v5840
    %v6033 = vunpack.c.l.b16 %v5841
    %v6034 = vunpack.c.h.b16 %v5841
    %v6035 = vunpack.c.l.b16 %v5842
    %v6036 = vunpack.c.h.b16 %v5842
    %v6037 = vunpack.c.l.b16 %v5843
    %v6038 = vunpack.c.h.b16 %v5843
    %v6039 = vunpack.c.l.b16 %v5844
    %v6040 = vunpack.c.h.b16 %v5844
    %v6041 = vunpack.c.l.b16 %v5845
    %v6042 = vunpack.c.h.b16 %v5845
    %v6043 = vunpack.c.l.b16 %v5846
    %v6044 = vunpack.c.h.b16 %v5846
    %v6045 = vunpack.c.l.b16 %v5847
    %v6046 = vunpack.c.h.b16 %v5847
    %v6047 = vunpack.c.l.b16 %v5848
    %v6048 = vunpack.c.h.b16 %v5848
    %v6049 = vunpack.c.l.b16 %v5849
    %v6050 = vunpack.c.h.b16 %v5849
    %v6051 = vunpack.c.l.b16 %v5850
    %v6052 = vunpack.c.h.b16 %v5850
    %v6053 = vunpack.c.l.b16 %v5851
    %v6054 = vunpack.c.h.b16 %v5851
    %v6055 = vunpack.c.l.b16 %v5852
    %v6056 = vunpack.c.h.b16 %v5852
    %v6057 = vunpack.c.l.b16 %v5853
    %v6058 = vunpack.c.h.b16 %v5853
    %v6059 = vunpack.c.l.b16 %v5854
    %v6060 = vunpack.c.h.b16 %v5854
    %v6061 = vunpack.c.l.b16 %v5855
    %v6062 = vunpack.c.h.b16 %v5855
    %v6063 = vunpack.c.l.b16 %v5856
    %v6064 = vunpack.c.h.b16 %v5856
    %v6065 = vunpack.c.l.b16 %v5857
    %v6066 = vunpack.c.h.b16 %v5857
    %v6067 = vunpack.c.l.b16 %v5858
    %v6068 = vunpack.c.h.b16 %v5858
    %v6069 = vunpack.c.l.b16 %v5859
    %v6070 = vunpack.c.h.b16 %v5859
    %v6071 = vunpack.c.l.b16 %v5860
    %v6072 = vunpack.c.h.b16 %v5860
    %v6073 = vunpack.c.l.b16 %v5861
    %v6074 = vunpack.c.h.b16 %v5861
    %v6075 = vunpack.c.l.b16 %v5862
    %v6076 = vunpack.c.h.b16 %v5862
    %v6077 = vpack.c.b16 %v6029, %v6013
    %v6078 = vpack.c.b16 %v6030, %v6014
    %v6079 = vpack.c.b16 %v6031, %v6015
    %v6080 = vpack.c.b16 %v6032, %v6016
    %v6081 = vpack.c.b16 %v6033, %v6017
    %v6082 = vpack.c.b16 %v6034, %v6018
    %v6083 = vpack.c.b16 %v6035, %v6019
    %v6084 = vpack.c.b16 %v6036, %v6020
    %v6085 = vpack.c.b16 %v6037, %v6021
    %v6086 = vpack.c.b16 %v6038, %v6022
    %v6087 = vpack.c.b16 %v6039, %v6023
    %v6088 = vpack.c.b16 %v6040, %v6024
    %v6089 = vpack.c.b16 %v6041, %v6025
    %v6090 = vpack.c.b16 %v6042, %v6026
    %v6091 = vpack.c.b16 %v6043, %v6027
    %v6092 = vpack.c.b16 %v6044, %v6028
    %v6093 = vpack.c.b16 %v6061, %v6045
    %v6094 = vpack.c.b16 %v6062, %v6046
    %v6095 = vpack.c.b16 %v6063, %v6047
    %v6096 = vpack.c.b16 %v6064, %v6048
    %v6097 = vpack.c.b16 %v6065, %v6049
    %v6098 = vpack.c.b16 %v6066, %v6050
    %v6099 = vpack.c.b16 %v6067, %v6051
    %v6100 = vpack.c.b16 %v6068, %v6052
    %v6101 = vpack.c.b16 %v6069, %v6053
    %v6102 = vpack.c.b16 %v6070, %v6054
    %v6103 = vpack.c.b16 %v6071, %v6055
    %v6104 = vpack.c.b16 %v6072, %v6056
    %v6105 = vpack.c.b16 %v6073, %v6057
    %v6106 = vpack.c.b16 %v6074, %v6058
    %v6107 = vpack.c.b16 %v6075, %v6059
    %v6108 = vpack.c.b16 %v6076, %v6060
    %v6142 = vsel %vm145, %v5898, 0
    %6144 = vmatprep.subr.bf16.mxu0 %v6078
    %6145 = vmatpush1.bf16.msra.mxu0 %v6077
    %6146 = vmatprep.subr.bf16.mxu0 %v6094
    %6147 = vmatpush1.bf16.msra.mxu0 %v6093
    %6148 = vmatprep.subr.bf16.mxu0 0
    %6149 = vmatpush1.bf16.msra.mxu0 0
    %6150 = vmatprep.subr.bf16.mxu0 0
    %6151 = vmatpush1.bf16.msra.mxu0 0
    %6152 = vmatprep.subr.bf16.mxu0 0
    %6153 = vmatpush1.bf16.msra.mxu0 0
    %6154 = vmatprep.subr.bf16.mxu0 0
    %6155 = vmatpush1.bf16.msra.mxu0 0
    %6156 = vmatprep.subr.bf16.mxu0 0
    %6157 = vmatpush1.bf16.msra.mxu0 0
    %6158 = vmatprep.subr.bf16.mxu0 0
    %6159 = vmatpush1.bf16.msra.mxu0 0
    %6160 = vmatprep.subr.bf16.mxu0 0
    %6161 = vmatpush1.bf16.msra.mxu0 0
    %6162 = vmatprep.subr.bf16.mxu0 0
    %6163 = vmatpush1.bf16.msra.mxu0 0
    %6164 = vmatprep.subr.bf16.mxu0 0
    %6165 = vmatpush1.bf16.msra.mxu0 0
    %6166 = vmatprep.subr.bf16.mxu0 0
    %6167 = vmatpush1.bf16.msra.mxu0 0
    %6168 = vmatprep.subr.bf16.mxu0 0
    %6169 = vmatpush1.bf16.msra.mxu0 0
    %6170 = vmatprep.subr.bf16.mxu0 0
    %6171 = vmatpush1.bf16.msra.mxu0 0
    %6172 = vmatprep.subr.bf16.mxu0 0
    %6173 = vmatpush1.bf16.msra.mxu0 0
    %6174 = vmatprep.subr.bf16.mxu0 0
    %6175 = vmatpush1.bf16.msra.mxu0 0
    %6176 = vmatprep.mubr.bf16.mxu0 0
    %6177 = vmatmul.mubr.bf16.gmra.mrb[0].mxu0 %v6142
    %v6178 = vpop.f32.mrb[0].mxu0
    %v6179 = vadd.f32 %v5904, %v6178
    %v6180 = vpop.f32.mrb[0].mxu0
    %v6181 = vadd.f32 %v5908, %v6180
    %v6182 = vpop.f32.mrb[0].mxu0
    %v6183 = vadd.f32 %v5904, %v6182
    %v6184 = vpop.f32.mrb[0].mxu0
    %v6185 = vadd.f32 %v5908, %v6184
    %6186 = vdwg.mxu0
    %6187 = vmatprep.subr.bf16.mxu0 %v6080
    %6188 = vmatpush1.bf16.msra.mxu0 %v6079
    %6189 = vmatprep.subr.bf16.mxu0 %v6096
    %6190 = vmatpush1.bf16.msra.mxu0 %v6095
    %6191 = vmatprep.subr.bf16.mxu0 0
    %6192 = vmatpush1.bf16.msra.mxu0 0
    %6193 = vmatprep.subr.bf16.mxu0 0
    %6194 = vmatpush1.bf16.msra.mxu0 0
    %6195 = vmatprep.subr.bf16.mxu0 0
    %6196 = vmatpush1.bf16.msra.mxu0 0
    %6197 = vmatprep.subr.bf16.mxu0 0
    %6198 = vmatpush1.bf16.msra.mxu0 0
    %6199 = vmatprep.subr.bf16.mxu0 0
    %6200 = vmatpush1.bf16.msra.mxu0 0
    %6201 = vmatprep.subr.bf16.mxu0 0
    %6202 = vmatpush1.bf16.msra.mxu0 0
    %6203 = vmatprep.subr.bf16.mxu0 0
    %6204 = vmatpush1.bf16.msra.mxu0 0
    %6205 = vmatprep.subr.bf16.mxu0 0
    %6206 = vmatpush1.bf16.msra.mxu0 0
    %6207 = vmatprep.subr.bf16.mxu0 0
    %6208 = vmatpush1.bf16.msra.mxu0 0
    %6209 = vmatprep.subr.bf16.mxu0 0
    %6210 = vmatpush1.bf16.msra.mxu0 0
    %6211 = vmatprep.subr.bf16.mxu0 0
    %6212 = vmatpush1.bf16.msra.mxu0 0
    %6213 = vmatprep.subr.bf16.mxu0 0
    %6214 = vmatpush1.bf16.msra.mxu0 0
    %6215 = vmatprep.subr.bf16.mxu0 0
    %6216 = vmatpush1.bf16.msra.mxu0 0
    %6217 = vmatprep.subr.bf16.mxu0 0
    %6218 = vmatpush1.bf16.msra.mxu0 0
    %6219 = vmatprep.mubr.bf16.mxu0 0
    %6220 = vmatmul.mubr.bf16.gmra.mrb[0].mxu0 %v6142
    %v6221 = vpop.f32.mrb[0].mxu0
    %v6222 = vadd.f32 %v5912, %v6221
    %v6223 = vpop.f32.mrb[0].mxu0
    %v6224 = vadd.f32 %v5916, %v6223
    %v6225 = vpop.f32.mrb[0].mxu0
    %v6226 = vadd.f32 %v5912, %v6225
    %v6227 = vpop.f32.mrb[0].mxu0
    %v6228 = vadd.f32 %v5916, %v6227
    %6229 = vdwg.mxu0
    %6230 = vmatprep.subr.bf16.mxu0 %v6082
    %6231 = vmatpush1.bf16.msra.mxu0 %v6081
    %6232 = vmatprep.subr.bf16.mxu0 %v6098
    %6233 = vmatpush1.bf16.msra.mxu0 %v6097
    %6234 = vmatprep.subr.bf16.mxu0 0
    %6235 = vmatpush1.bf16.msra.mxu0 0
    %6236 = vmatprep.subr.bf16.mxu0 0
    %6237 = vmatpush1.bf16.msra.mxu0 0
    %6238 = vmatprep.subr.bf16.mxu0 0
    %6239 = vmatpush1.bf16.msra.mxu0 0
    %6240 = vmatprep.subr.bf16.mxu0 0
    %6241 = vmatpush1.bf16.msra.mxu0 0
    %6242 = vmatprep.subr.bf16.mxu0 0
    %6243 = vmatpush1.bf16.msra.mxu0 0
    %6244 = vmatprep.subr.bf16.mxu0 0
    %6245 = vmatpush1.bf16.msra.mxu0 0
    %6246 = vmatprep.subr.bf16.mxu0 0
    %6247 = vmatpush1.bf16.msra.mxu0 0
    %6248 = vmatprep.subr.bf16.mxu0 0
    %6249 = vmatpush1.bf16.msra.mxu0 0
    %6250 = vmatprep.subr.bf16.mxu0 0
    %6251 = vmatpush1.bf16.msra.mxu0 0
    %6252 = vmatprep.subr.bf16.mxu0 0
    %6253 = vmatpush1.bf16.msra.mxu0 0
    %6254 = vmatprep.subr.bf16.mxu0 0
    %6255 = vmatpush1.bf16.msra.mxu0 0
    %6256 = vmatprep.subr.bf16.mxu0 0
    %6257 = vmatpush1.bf16.msra.mxu0 0
    %6258 = vmatprep.subr.bf16.mxu0 0
    %6259 = vmatpush1.bf16.msra.mxu0 0
    %6260 = vmatprep.subr.bf16.mxu0 0
    %6261 = vmatpush1.bf16.msra.mxu0 0
    %6262 = vmatprep.mubr.bf16.mxu0 0
    %6263 = vmatmul.mubr.bf16.gmra.mrb[0].mxu0 %v6142
    %v6264 = vpop.f32.mrb[0].mxu0
    %v6265 = vadd.f32 %v5920, %v6264
    %v6266 = vpop.f32.mrb[0].mxu0
    %v6267 = vadd.f32 %v5924, %v6266
    %v6268 = vpop.f32.mrb[0].mxu0
    %v6269 = vadd.f32 %v5920, %v6268
    %v6270 = vpop.f32.mrb[0].mxu0
    %v6271 = vadd.f32 %v5924, %v6270
    %6272 = vdwg.mxu0
    %6273 = vmatprep.subr.bf16.mxu0 %v6084
    %6274 = vmatpush1.bf16.msra.mxu0 %v6083
    %6275 = vmatprep.subr.bf16.mxu0 %v6100
    %6276 = vmatpush1.bf16.msra.mxu0 %v6099
    %6277 = vmatprep.subr.bf16.mxu0 0
    %6278 = vmatpush1.bf16.msra.mxu0 0
    %6279 = vmatprep.subr.bf16.mxu0 0
    %6280 = vmatpush1.bf16.msra.mxu0 0
    %6281 = vmatprep.subr.bf16.mxu0 0
    %6282 = vmatpush1.bf16.msra.mxu0 0
    %6283 = vmatprep.subr.bf16.mxu0 0
    %6284 = vmatpush1.bf16.msra.mxu0 0
    %6285 = vmatprep.subr.bf16.mxu0 0
    %6286 = vmatpush1.bf16.msra.mxu0 0
    %6287 = vmatprep.subr.bf16.mxu0 0
    %6288 = vmatpush1.bf16.msra.mxu0 0
    %6289 = vmatprep.subr.bf16.mxu0 0
    %6290 = vmatpush1.bf16.msra.mxu0 0
    %6291 = vmatprep.subr.bf16.mxu0 0
    %6292 = vmatpush1.bf16.msra.mxu0 0
    %6293 = vmatprep.subr.bf16.mxu0 0
    %6294 = vmatpush1.bf16.msra.mxu0 0
    %6295 = vmatprep.subr.bf16.mxu0 0
    %6296 = vmatpush1.bf16.msra.mxu0 0
    %6297 = vmatprep.subr.bf16.mxu0 0
    %6298 = vmatpush1.bf16.msra.mxu0 0
    %6299 = vmatprep.subr.bf16.mxu0 0
    %6300 = vmatpush1.bf16.msra.mxu0 0
    %6301 = vmatprep.subr.bf16.mxu0 0
    %6302 = vmatpush1.bf16.msra.mxu0 0
    %6303 = vmatprep.subr.bf16.mxu0 0
    %6304 = vmatpush1.bf16.msra.mxu0 0
    %6305 = vmatprep.mubr.bf16.mxu0 0
    %6306 = vmatmul.mubr.bf16.gmra.mrb[0].mxu0 %v6142
    %v6307 = vpop.f32.mrb[0].mxu0
    %v6308 = vadd.f32 %v5928, %v6307
    %v6309 = vpop.f32.mrb[0].mxu0
    %v6310 = vadd.f32 %v5932, %v6309
    %v6311 = vpop.f32.mrb[0].mxu0
    %v6312 = vadd.f32 %v5928, %v6311
    %v6313 = vpop.f32.mrb[0].mxu0
    %v6314 = vadd.f32 %v5932, %v6313
    %6315 = vdwg.mxu0
    %6316 = vmatprep.subr.bf16.mxu0 %v6086
    %6317 = vmatpush1.bf16.msra.mxu0 %v6085
    %6318 = vmatprep.subr.bf16.mxu0 %v6102
    %6319 = vmatpush1.bf16.msra.mxu0 %v6101
    %6320 = vmatprep.subr.bf16.mxu0 0
    %6321 = vmatpush1.bf16.msra.mxu0 0
    %6322 = vmatprep.subr.bf16.mxu0 0
    %6323 = vmatpush1.bf16.msra.mxu0 0
    %6324 = vmatprep.subr.bf16.mxu0 0
    %6325 = vmatpush1.bf16.msra.mxu0 0
    %6326 = vmatprep.subr.bf16.mxu0 0
    %6327 = vmatpush1.bf16.msra.mxu0 0
    %6328 = vmatprep.subr.bf16.mxu0 0
    %6329 = vmatpush1.bf16.msra.mxu0 0
    %6330 = vmatprep.subr.bf16.mxu0 0
    %6331 = vmatpush1.bf16.msra.mxu0 0
    %6332 = vmatprep.subr.bf16.mxu0 0
    %6333 = vmatpush1.bf16.msra.mxu0 0
    %6334 = vmatprep.subr.bf16.mxu0 0
    %6335 = vmatpush1.bf16.msra.mxu0 0
    %6336 = vmatprep.subr.bf16.mxu0 0
    %6337 = vmatpush1.bf16.msra.mxu0 0
    %6338 = vmatprep.subr.bf16.mxu0 0
    %6339 = vmatpush1.bf16.msra.mxu0 0
    %6340 = vmatprep.subr.bf16.mxu0 0
    %6341 = vmatpush1.bf16.msra.mxu0 0
    %6342 = vmatprep.subr.bf16.mxu0 0
    %6343 = vmatpush1.bf16.msra.mxu0 0
    %6344 = vmatprep.subr.bf16.mxu0 0
    %6345 = vmatpush1.bf16.msra.mxu0 0
    %6346 = vmatprep.subr.bf16.mxu0 0
    %6347 = vmatpush1.bf16.msra.mxu0 0
    %6348 = vmatprep.mubr.bf16.mxu0 0
    %6349 = vmatmul.mubr.bf16.gmra.mrb[0].mxu0 %v6142
    %v6350 = vpop.f32.mrb[0].mxu0
    %v6351 = vadd.f32 %v5936, %v6350
    %v6352 = vpop.f32.mrb[0].mxu0
    %v6353 = vadd.f32 %v5940, %v6352
    %v6354 = vpop.f32.mrb[0].mxu0
    %v6355 = vadd.f32 %v5936, %v6354
    %v6356 = vpop.f32.mrb[0].mxu0
    %v6357 = vadd.f32 %v5940, %v6356
    %6358 = vdwg.mxu0
    %6359 = vmatprep.subr.bf16.mxu0 %v6088
    %6360 = vmatpush1.bf16.msra.mxu0 %v6087
    %6361 = vmatprep.subr.bf16.mxu0 %v6104
    %6362 = vmatpush1.bf16.msra.mxu0 %v6103
    %6363 = vmatprep.subr.bf16.mxu0 0
    %6364 = vmatpush1.bf16.msra.mxu0 0
    %6365 = vmatprep.subr.bf16.mxu0 0
    %6366 = vmatpush1.bf16.msra.mxu0 0
    %6367 = vmatprep.subr.bf16.mxu0 0
    %6368 = vmatpush1.bf16.msra.mxu0 0
    %6369 = vmatprep.subr.bf16.mxu0 0
    %6370 = vmatpush1.bf16.msra.mxu0 0
    %6371 = vmatprep.subr.bf16.mxu0 0
    %6372 = vmatpush1.bf16.msra.mxu0 0
    %6373 = vmatprep.subr.bf16.mxu0 0
    %6374 = vmatpush1.bf16.msra.mxu0 0
    %6375 = vmatprep.subr.bf16.mxu0 0
    %6376 = vmatpush1.bf16.msra.mxu0 0
    %6377 = vmatprep.subr.bf16.mxu0 0
    %6378 = vmatpush1.bf16.msra.mxu0 0
    %6379 = vmatprep.subr.bf16.mxu0 0
    %6380 = vmatpush1.bf16.msra.mxu0 0
    %6381 = vmatprep.subr.bf16.mxu0 0
    %6382 = vmatpush1.bf16.msra.mxu0 0
    %6383 = vmatprep.subr.bf16.mxu0 0
    %6384 = vmatpush1.bf16.msra.mxu0 0
    %6385 = vmatprep.subr.bf16.mxu0 0
    %6386 = vmatpush1.bf16.msra.mxu0 0
    %6387 = vmatprep.subr.bf16.mxu0 0
    %6388 = vmatpush1.bf16.msra.mxu0 0
    %6389 = vmatprep.subr.bf16.mxu0 0
    %6390 = vmatpush1.bf16.msra.mxu0 0
    %6391 = vmatprep.mubr.bf16.mxu0 0
    %6392 = vmatmul.mubr.bf16.gmra.mrb[0].mxu0 %v6142
    %v6393 = vpop.f32.mrb[0].mxu0
    %v6394 = vadd.f32 %v5944, %v6393
    %v6395 = vpop.f32.mrb[0].mxu0
    %v6396 = vadd.f32 %v5948, %v6395
    %v6397 = vpop.f32.mrb[0].mxu0
    %v6398 = vadd.f32 %v5944, %v6397
    %v6399 = vpop.f32.mrb[0].mxu0
    %v6400 = vadd.f32 %v5948, %v6399
    %6401 = vdwg.mxu0
    %6402 = vmatprep.subr.bf16.mxu0 %v6090
    %6403 = vmatpush1.bf16.msra.mxu0 %v6089
    %6404 = vmatprep.subr.bf16.mxu0 %v6106
    %6405 = vmatpush1.bf16.msra.mxu0 %v6105
    %6406 = vmatprep.subr.bf16.mxu0 0
    %6407 = vmatpush1.bf16.msra.mxu0 0
    %6408 = vmatprep.subr.bf16.mxu0 0
    %6409 = vmatpush1.bf16.msra.mxu0 0
    %6410 = vmatprep.subr.bf16.mxu0 0
    %6411 = vmatpush1.bf16.msra.mxu0 0
    %6412 = vmatprep.subr.bf16.mxu0 0
    %6413 = vmatpush1.bf16.msra.mxu0 0
    %6414 = vmatprep.subr.bf16.mxu0 0
    %6415 = vmatpush1.bf16.msra.mxu0 0
    %6416 = vmatprep.subr.bf16.mxu0 0
    %6417 = vmatpush1.bf16.msra.mxu0 0
    %6418 = vmatprep.subr.bf16.mxu0 0
    %6419 = vmatpush1.bf16.msra.mxu0 0
    %6420 = vmatprep.subr.bf16.mxu0 0
    %6421 = vmatpush1.bf16.msra.mxu0 0
    %6422 = vmatprep.subr.bf16.mxu0 0
    %6423 = vmatpush1.bf16.msra.mxu0 0
    %6424 = vmatprep.subr.bf16.mxu0 0
    %6425 = vmatpush1.bf16.msra.mxu0 0
    %6426 = vmatprep.subr.bf16.mxu0 0
    %6427 = vmatpush1.bf16.msra.mxu0 0
    %6428 = vmatprep.subr.bf16.mxu0 0
    %6429 = vmatpush1.bf16.msra.mxu0 0
    %6430 = vmatprep.subr.bf16.mxu0 0
    %6431 = vmatpush1.bf16.msra.mxu0 0
    %6432 = vmatprep.subr.bf16.mxu0 0
    %6433 = vmatpush1.bf16.msra.mxu0 0
    %6434 = vmatprep.mubr.bf16.mxu0 0
    %6435 = vmatmul.mubr.bf16.gmra.mrb[0].mxu0 %v6142
    %v6436 = vpop.f32.mrb[0].mxu0
    %v6437 = vadd.f32 %v5952, %v6436
    %v6438 = vpop.f32.mrb[0].mxu0
    %v6439 = vadd.f32 %v5956, %v6438
    %v6440 = vpop.f32.mrb[0].mxu0
    %v6441 = vadd.f32 %v5952, %v6440
    %v6442 = vpop.f32.mrb[0].mxu0
    %v6443 = vadd.f32 %v5956, %v6442
    %6444 = vdwg.mxu0
    %6445 = vmatprep.subr.bf16.mxu0 %v6092
    %6446 = vmatpush1.bf16.msra.mxu0 %v6091
    %6447 = vmatprep.subr.bf16.mxu0 %v6108
    %6448 = vmatpush1.bf16.msra.mxu0 %v6107
    %6449 = vmatprep.subr.bf16.mxu0 0
    %6450 = vmatpush1.bf16.msra.mxu0 0
    %6451 = vmatprep.subr.bf16.mxu0 0
    %6452 = vmatpush1.bf16.msra.mxu0 0
    %6453 = vmatprep.subr.bf16.mxu0 0
    %6454 = vmatpush1.bf16.msra.mxu0 0
    %6455 = vmatprep.subr.bf16.mxu0 0
    %6456 = vmatpush1.bf16.msra.mxu0 0
    %6457 = vmatprep.subr.bf16.mxu0 0
    %6458 = vmatpush1.bf16.msra.mxu0 0
    %6459 = vmatprep.subr.bf16.mxu0 0
    %6460 = vmatpush1.bf16.msra.mxu0 0
    %6461 = vmatprep.subr.bf16.mxu0 0
    %6462 = vmatpush1.bf16.msra.mxu0 0
    %6463 = vmatprep.subr.bf16.mxu0 0
    %6464 = vmatpush1.bf16.msra.mxu0 0
    %6465 = vmatprep.subr.bf16.mxu0 0
    %6466 = vmatpush1.bf16.msra.mxu0 0
    %6467 = vmatprep.subr.bf16.mxu0 0
    %6468 = vmatpush1.bf16.msra.mxu0 0
    %6469 = vmatprep.subr.bf16.mxu0 0
    %6470 = vmatpush1.bf16.msra.mxu0 0
    %6471 = vmatprep.subr.bf16.mxu0 0
    %6472 = vmatpush1.bf16.msra.mxu0 0
    %6473 = vmatprep.subr.bf16.mxu0 0
    %6474 = vmatpush1.bf16.msra.mxu0 0
    %6475 = vmatprep.subr.bf16.mxu0 0
    %6476 = vmatpush1.bf16.msra.mxu0 0
    %6477 = vmatprep.mubr.bf16.mxu0 0
    %6478 = vmatmul.mubr.bf16.gmra.mrb[0].mxu0 %v6142
    %v6479 = vpop.f32.mrb[0].mxu0
    %v6480 = vadd.f32 %v5960, %v6479
    %v6481 = vpop.f32.mrb[0].mxu0
    %v6482 = vadd.f32 %v5964, %v6481
    %v6483 = vpop.f32.mrb[0].mxu0
    %v6484 = vadd.f32 %v5960, %v6483
    %v6485 = vpop.f32.mrb[0].mxu0
    %v6486 = vadd.f32 %v5964, %v6485
    %6487 = vdwg.mxu0
    %v6488 = vmax.f32 %v6179, 0.0
    %v6489 = vmax.f32 %v6181, 0.0
    %v6490 = vmax.f32 %v6222, 0.0
    %v6491 = vmax.f32 %v6224, 0.0
    %v6492 = vmax.f32 %v6265, 0.0
    %v6493 = vmax.f32 %v6267, 0.0
    %v6494 = vmax.f32 %v6308, 0.0
    %v6495 = vmax.f32 %v6310, 0.0
    %v6496 = vmax.f32 %v6351, 0.0
    %v6497 = vmax.f32 %v6353, 0.0
    %v6498 = vmax.f32 %v6394, 0.0
    %v6499 = vmax.f32 %v6396, 0.0
    %v6500 = vmax.f32 %v6437, 0.0
    %v6501 = vmax.f32 %v6439, 0.0
    %v6502 = vmax.f32 %v6480, 0.0
    %v6503 = vmax.f32 %v6482, 0.0
    %v6504 = vmax.f32 %v6183, 0.0
    %v6505 = vmax.f32 %v6185, 0.0
    %v6506 = vmax.f32 %v6226, 0.0
    %v6507 = vmax.f32 %v6228, 0.0
    %v6508 = vmax.f32 %v6269, 0.0
    %v6509 = vmax.f32 %v6271, 0.0
    %v6510 = vmax.f32 %v6312, 0.0
    %v6511 = vmax.f32 %v6314, 0.0
    %v6512 = vmax.f32 %v6355, 0.0
    %v6513 = vmax.f32 %v6357, 0.0
    %v6514 = vmax.f32 %v6398, 0.0
    %v6515 = vmax.f32 %v6400, 0.0
    %v6516 = vmax.f32 %v6441, 0.0
    %v6517 = vmax.f32 %v6443, 0.0
    %v6518 = vmax.f32 %v6484, 0.0
    %v6519 = vmax.f32 %v6486, 0.0
    %v6520 = vpack.c.bf16 %v6504, %v6488
    %v6521 = vpack.c.bf16 %v6505, %v6489
    %v6522 = vpack.c.bf16 %v6506, %v6490
    %v6523 = vpack.c.bf16 %v6507, %v6491
    %v6524 = vpack.c.bf16 %v6508, %v6492
    %v6525 = vpack.c.bf16 %v6509, %v6493
    %v6526 = vpack.c.bf16 %v6510, %v6494
    %v6527 = vpack.c.bf16 %v6511, %v6495
    %v6528 = vpack.c.bf16 %v6512, %v6496
    %v6529 = vpack.c.bf16 %v6513, %v6497
    %v6530 = vpack.c.bf16 %v6514, %v6498
    %v6531 = vpack.c.bf16 %v6515, %v6499
    %v6532 = vpack.c.bf16 %v6516, %v6500
    %v6533 = vpack.c.bf16 %v6517, %v6501
    %v6534 = vpack.c.bf16 %v6518, %v6502
    %v6535 = vpack.c.bf16 %v6519, %v6503
    %v6537 = vlaneseq
    %v6538 = vshrl.u32 %v6537, 7
    %v6539 = vsub.s32 0, %v6538
    %v6540 = vrot.slane %v5897, %v6539
    %v6574 = vunpack.c.l.b16 %v5865
    %v6575 = vunpack.c.h.b16 %v5865
    %v6576 = vunpack.c.l.b16 %v5866
    %v6577 = vunpack.c.h.b16 %v5866
    %v6578 = vunpack.c.l.b16 %v5867
    %v6579 = vunpack.c.h.b16 %v5867
    %v6580 = vunpack.c.l.b16 %v5868
    %v6581 = vunpack.c.h.b16 %v5868
    %v6582 = vunpack.c.l.b16 %v5869
    %v6583 = vunpack.c.h.b16 %v5869
    %v6584 = vunpack.c.l.b16 %v5870
    %v6585 = vunpack.c.h.b16 %v5870
    %v6586 = vunpack.c.l.b16 %v5871
    %v6587 = vunpack.c.h.b16 %v5871
    %v6588 = vunpack.c.l.b16 %v5872
    %v6589 = vunpack.c.h.b16 %v5872
    %v6590 = vunpack.c.l.b16 %v5873
    %v6591 = vunpack.c.h.b16 %v5873
    %v6592 = vunpack.c.l.b16 %v5874
    %v6593 = vunpack.c.h.b16 %v5874
    %v6594 = vunpack.c.l.b16 %v5875
    %v6595 = vunpack.c.h.b16 %v5875
    %v6596 = vunpack.c.l.b16 %v5876
    %v6597 = vunpack.c.h.b16 %v5876
    %v6598 = vunpack.c.l.b16 %v5877
    %v6599 = vunpack.c.h.b16 %v5877
    %v6600 = vunpack.c.l.b16 %v5878
    %v6601 = vunpack.c.h.b16 %v5878
    %v6602 = vunpack.c.l.b16 %v5879
    %v6603 = vunpack.c.h.b16 %v5879
    %v6604 = vunpack.c.l.b16 %v5880
    %v6605 = vunpack.c.h.b16 %v5880
    %v6606 = vunpack.c.l.b16 %v5881
    %v6607 = vunpack.c.h.b16 %v5881
    %v6608 = vunpack.c.l.b16 %v5882
    %v6609 = vunpack.c.h.b16 %v5882
    %v6610 = vunpack.c.l.b16 %v5883
    %v6611 = vunpack.c.h.b16 %v5883
    %v6612 = vunpack.c.l.b16 %v5884
    %v6613 = vunpack.c.h.b16 %v5884
    %v6614 = vunpack.c.l.b16 %v5885
    %v6615 = vunpack.c.h.b16 %v5885
    %v6616 = vunpack.c.l.b16 %v5886
    %v6617 = vunpack.c.h.b16 %v5886
    %v6618 = vunpack.c.l.b16 %v5887
    %v6619 = vunpack.c.h.b16 %v5887
    %v6620 = vunpack.c.l.b16 %v5888
    %v6621 = vunpack.c.h.b16 %v5888
    %v6622 = vunpack.c.l.b16 %v5889
    %v6623 = vunpack.c.h.b16 %v5889
    %v6624 = vunpack.c.l.b16 %v5890
    %v6625 = vunpack.c.h.b16 %v5890
    %v6626 = vunpack.c.l.b16 %v5891
    %v6627 = vunpack.c.h.b16 %v5891
    %v6628 = vunpack.c.l.b16 %v5892
    %v6629 = vunpack.c.h.b16 %v5892
    %v6630 = vunpack.c.l.b16 %v5893
    %v6631 = vunpack.c.h.b16 %v5893
    %v6632 = vunpack.c.l.b16 %v5894
    %v6633 = vunpack.c.h.b16 %v5894
    %v6634 = vunpack.c.l.b16 %v5895
    %v6635 = vunpack.c.h.b16 %v5895
    %v6636 = vunpack.c.l.b16 %v5896
    %v6637 = vunpack.c.h.b16 %v5896
    %v6638 = vpack.c.b16 %v6590, %v6574
    %v6639 = vpack.c.b16 %v6591, %v6575
    %v6640 = vpack.c.b16 %v6592, %v6576
    %v6641 = vpack.c.b16 %v6593, %v6577
    %v6642 = vpack.c.b16 %v6594, %v6578
    %v6643 = vpack.c.b16 %v6595, %v6579
    %v6644 = vpack.c.b16 %v6596, %v6580
    %v6645 = vpack.c.b16 %v6597, %v6581
    %v6646 = vpack.c.b16 %v6598, %v6582
    %v6647 = vpack.c.b16 %v6599, %v6583
    %v6648 = vpack.c.b16 %v6600, %v6584
    %v6649 = vpack.c.b16 %v6601, %v6585
    %v6650 = vpack.c.b16 %v6602, %v6586
    %v6651 = vpack.c.b16 %v6603, %v6587
    %v6652 = vpack.c.b16 %v6604, %v6588
    %v6653 = vpack.c.b16 %v6605, %v6589
    %v6654 = vpack.c.b16 %v6622, %v6606
    %v6655 = vpack.c.b16 %v6623, %v6607
    %v6656 = vpack.c.b16 %v6624, %v6608
    %v6657 = vpack.c.b16 %v6625, %v6609
    %v6658 = vpack.c.b16 %v6626, %v6610
    %v6659 = vpack.c.b16 %v6627, %v6611
    %v6660 = vpack.c.b16 %v6628, %v6612
    %v6661 = vpack.c.b16 %v6629, %v6613
    %v6662 = vpack.c.b16 %v6630, %v6614
    %v6663 = vpack.c.b16 %v6631, %v6615
    %v6664 = vpack.c.b16 %v6632, %v6616
    %v6665 = vpack.c.b16 %v6633, %v6617
    %v6666 = vpack.c.b16 %v6634, %v6618
    %v6667 = vpack.c.b16 %v6635, %v6619
    %v6668 = vpack.c.b16 %v6636, %v6620
    %v6669 = vpack.c.b16 %v6637, %v6621
    %6702 = vmatprep.subr.bf16.mxu0 %v6639
    %6703 = vmatpush1.bf16.xpose.msra.mxu0 %v6638
    %6704 = vmatprep.subr.bf16.mxu0 %v6655
    %6705 = vmatpush1.bf16.xpose.msra.mxu0 %v6654
    %6706 = vmatprep.subr.bf16.mxu0 0
    %6707 = vmatpush1.bf16.xpose.msra.mxu0 0
    %6708 = vmatprep.subr.bf16.mxu0 0
    %6709 = vmatpush1.bf16.xpose.msra.mxu0 0
    %6710 = vmatprep.subr.bf16.mxu0 0
    %6711 = vmatpush1.bf16.xpose.msra.mxu0 0
    %6712 = vmatprep.subr.bf16.mxu0 0
    %6713 = vmatpush1.bf16.xpose.msra.mxu0 0
    %6714 = vmatprep.subr.bf16.mxu0 0
    %6715 = vmatpush1.bf16.xpose.msra.mxu0 0
    %6716 = vmatprep.subr.bf16.mxu0 0
    %6717 = vmatpush1.bf16.xpose.msra.mxu0 0
    %6718 = vmatprep.subr.bf16.mxu0 0
    %6719 = vmatpush1.bf16.xpose.msra.mxu0 0
    %6720 = vmatprep.subr.bf16.mxu0 0
    %6721 = vmatpush1.bf16.xpose.msra.mxu0 0
    %6722 = vmatprep.subr.bf16.mxu0 0
    %6723 = vmatpush1.bf16.xpose.msra.mxu0 0
    %6724 = vmatprep.subr.bf16.mxu0 0
    %6725 = vmatpush1.bf16.xpose.msra.mxu0 0
    %6726 = vmatprep.subr.bf16.mxu0 0
    %6727 = vmatpush1.bf16.xpose.msra.mxu0 0
    %6728 = vmatprep.subr.bf16.mxu0 0
    %6729 = vmatpush1.bf16.xpose.msra.mxu0 0
    %6730 = vmatprep.subr.bf16.mxu0 0
    %6731 = vmatpush1.bf16.xpose.msra.mxu0 0
    %6732 = vmatprep.subr.bf16.mxu0 0
    %6733 = vmatpush1.bf16.xpose.msra.mxu0 0
    %6734 = vmatprep.mubr.bf16.mxu0 %v6521
    %6735 = vmatmul.mubr.bf16.gmra.mrb[0].mxu0 %v6520
    %v6736 = vpop.f32.mrb[0].mxu0
    %v6737 = vadd.f32 %v6540, %v6736
    %v6738 = vpop.f32.mrb[0].mxu0
    %v6739 = vpop.f32.mrb[0].mxu0
    %v6740 = vadd.f32 %v6540, %v6739
    %v6741 = vpop.f32.mrb[0].mxu0
    %6742 = vdwg.mxu0
    %6743 = vmatprep.subr.bf16.mxu0 %v6641
    %6744 = vmatpush1.bf16.xpose.msra.mxu0 %v6640
    %6745 = vmatprep.subr.bf16.mxu0 %v6657
    %6746 = vmatpush1.bf16.xpose.msra.mxu0 %v6656
    %6747 = vmatprep.subr.bf16.mxu0 0
    %6748 = vmatpush1.bf16.xpose.msra.mxu0 0
    %6749 = vmatprep.subr.bf16.mxu0 0
    %6750 = vmatpush1.bf16.xpose.msra.mxu0 0
    %6751 = vmatprep.subr.bf16.mxu0 0
    %6752 = vmatpush1.bf16.xpose.msra.mxu0 0
    %6753 = vmatprep.subr.bf16.mxu0 0
    %6754 = vmatpush1.bf16.xpose.msra.mxu0 0
    %6755 = vmatprep.subr.bf16.mxu0 0
    %6756 = vmatpush1.bf16.xpose.msra.mxu0 0
    %6757 = vmatprep.subr.bf16.mxu0 0
    %6758 = vmatpush1.bf16.xpose.msra.mxu0 0
    %6759 = vmatprep.subr.bf16.mxu0 0
    %6760 = vmatpush1.bf16.xpose.msra.mxu0 0
    %6761 = vmatprep.subr.bf16.mxu0 0
    %6762 = vmatpush1.bf16.xpose.msra.mxu0 0
    %6763 = vmatprep.subr.bf16.mxu0 0
    %6764 = vmatpush1.bf16.xpose.msra.mxu0 0
    %6765 = vmatprep.subr.bf16.mxu0 0
    %6766 = vmatpush1.bf16.xpose.msra.mxu0 0
    %6767 = vmatprep.subr.bf16.mxu0 0
    %6768 = vmatpush1.bf16.xpose.msra.mxu0 0
    %6769 = vmatprep.subr.bf16.mxu0 0
    %6770 = vmatpush1.bf16.xpose.msra.mxu0 0
    %6771 = vmatprep.subr.bf16.mxu0 0
    %6772 = vmatpush1.bf16.xpose.msra.mxu0 0
    %6773 = vmatprep.subr.bf16.mxu0 0
    %6774 = vmatpush1.bf16.xpose.msra.mxu0 0
    %6775 = vmatprep.mubr.bf16.mxu0 %v6523
    %6776 = vmatmul.mubr.bf16.gmra.mrb[0].mxu0 %v6522
    %v6777 = vpop.f32.mrb[0].mxu0
    %v6778 = vadd.f32 %v6737, %v6777
    %v6779 = vpop.f32.mrb[0].mxu0
    %v6780 = vpop.f32.mrb[0].mxu0
    %v6781 = vadd.f32 %v6740, %v6780
    %v6782 = vpop.f32.mrb[0].mxu0
    %6783 = vdwg.mxu0
    %6784 = vmatprep.subr.bf16.mxu0 %v6643
    %6785 = vmatpush1.bf16.xpose.msra.mxu0 %v6642
    %6786 = vmatprep.subr.bf16.mxu0 %v6659
    %6787 = vmatpush1.bf16.xpose.msra.mxu0 %v6658
    %6788 = vmatprep.subr.bf16.mxu0 0
    %6789 = vmatpush1.bf16.xpose.msra.mxu0 0
    %6790 = vmatprep.subr.bf16.mxu0 0
    %6791 = vmatpush1.bf16.xpose.msra.mxu0 0
    %6792 = vmatprep.subr.bf16.mxu0 0
    %6793 = vmatpush1.bf16.xpose.msra.mxu0 0
    %6794 = vmatprep.subr.bf16.mxu0 0
    %6795 = vmatpush1.bf16.xpose.msra.mxu0 0
    %6796 = vmatprep.subr.bf16.mxu0 0
    %6797 = vmatpush1.bf16.xpose.msra.mxu0 0
    %6798 = vmatprep.subr.bf16.mxu0 0
    %6799 = vmatpush1.bf16.xpose.msra.mxu0 0
    %6800 = vmatprep.subr.bf16.mxu0 0
    %6801 = vmatpush1.bf16.xpose.msra.mxu0 0
    %6802 = vmatprep.subr.bf16.mxu0 0
    %6803 = vmatpush1.bf16.xpose.msra.mxu0 0
    %6804 = vmatprep.subr.bf16.mxu0 0
    %6805 = vmatpush1.bf16.xpose.msra.mxu0 0
    %6806 = vmatprep.subr.bf16.mxu0 0
    %6807 = vmatpush1.bf16.xpose.msra.mxu0 0
    %6808 = vmatprep.subr.bf16.mxu0 0
    %6809 = vmatpush1.bf16.xpose.msra.mxu0 0
    %6810 = vmatprep.subr.bf16.mxu0 0
    %6811 = vmatpush1.bf16.xpose.msra.mxu0 0
    %6812 = vmatprep.subr.bf16.mxu0 0
    %6813 = vmatpush1.bf16.xpose.msra.mxu0 0
    %6814 = vmatprep.subr.bf16.mxu0 0
    %6815 = vmatpush1.bf16.xpose.msra.mxu0 0
    %6816 = vmatprep.mubr.bf16.mxu0 %v6525
    %6817 = vmatmul.mubr.bf16.gmra.mrb[0].mxu0 %v6524
    %v6818 = vpop.f32.mrb[0].mxu0
    %v6819 = vadd.f32 %v6778, %v6818
    %v6820 = vpop.f32.mrb[0].mxu0
    %v6821 = vpop.f32.mrb[0].mxu0
    %v6822 = vadd.f32 %v6781, %v6821
    %v6823 = vpop.f32.mrb[0].mxu0
    %6824 = vdwg.mxu0
    %6825 = vmatprep.subr.bf16.mxu0 %v6645
    %6826 = vmatpush1.bf16.xpose.msra.mxu0 %v6644
    %6827 = vmatprep.subr.bf16.mxu0 %v6661
    %6828 = vmatpush1.bf16.xpose.msra.mxu0 %v6660
    %6829 = vmatprep.subr.bf16.mxu0 0
    %6830 = vmatpush1.bf16.xpose.msra.mxu0 0
    %6831 = vmatprep.subr.bf16.mxu0 0
    %6832 = vmatpush1.bf16.xpose.msra.mxu0 0
    %6833 = vmatprep.subr.bf16.mxu0 0
    %6834 = vmatpush1.bf16.xpose.msra.mxu0 0
    %6835 = vmatprep.subr.bf16.mxu0 0
    %6836 = vmatpush1.bf16.xpose.msra.mxu0 0
    %6837 = vmatprep.subr.bf16.mxu0 0
    %6838 = vmatpush1.bf16.xpose.msra.mxu0 0
    %6839 = vmatprep.subr.bf16.mxu0 0
    %6840 = vmatpush1.bf16.xpose.msra.mxu0 0
    %6841 = vmatprep.subr.bf16.mxu0 0
    %6842 = vmatpush1.bf16.xpose.msra.mxu0 0
    %6843 = vmatprep.subr.bf16.mxu0 0
    %6844 = vmatpush1.bf16.xpose.msra.mxu0 0
    %6845 = vmatprep.subr.bf16.mxu0 0
    %6846 = vmatpush1.bf16.xpose.msra.mxu0 0
    %6847 = vmatprep.subr.bf16.mxu0 0
    %6848 = vmatpush1.bf16.xpose.msra.mxu0 0
    %6849 = vmatprep.subr.bf16.mxu0 0
    %6850 = vmatpush1.bf16.xpose.msra.mxu0 0
    %6851 = vmatprep.subr.bf16.mxu0 0
    %6852 = vmatpush1.bf16.xpose.msra.mxu0 0
    %6853 = vmatprep.subr.bf16.mxu0 0
    %6854 = vmatpush1.bf16.xpose.msra.mxu0 0
    %6855 = vmatprep.subr.bf16.mxu0 0
    %6856 = vmatpush1.bf16.xpose.msra.mxu0 0
    %6857 = vmatprep.mubr.bf16.mxu0 %v6527
    %6858 = vmatmul.mubr.bf16.gmra.mrb[0].mxu0 %v6526
    %v6859 = vpop.f32.mrb[0].mxu0
    %v6860 = vadd.f32 %v6819, %v6859
    %v6861 = vpop.f32.mrb[0].mxu0
    %v6862 = vpop.f32.mrb[0].mxu0
    %v6863 = vadd.f32 %v6822, %v6862
    %v6864 = vpop.f32.mrb[0].mxu0
    %6865 = vdwg.mxu0
    %6866 = vmatprep.subr.bf16.mxu0 %v6647
    %6867 = vmatpush1.bf16.xpose.msra.mxu0 %v6646
    %6868 = vmatprep.subr.bf16.mxu0 %v6663
    %6869 = vmatpush1.bf16.xpose.msra.mxu0 %v6662
    %6870 = vmatprep.subr.bf16.mxu0 0
    %6871 = vmatpush1.bf16.xpose.msra.mxu0 0
    %6872 = vmatprep.subr.bf16.mxu0 0
    %6873 = vmatpush1.bf16.xpose.msra.mxu0 0
    %6874 = vmatprep.subr.bf16.mxu0 0
    %6875 = vmatpush1.bf16.xpose.msra.mxu0 0
    %6876 = vmatprep.subr.bf16.mxu0 0
    %6877 = vmatpush1.bf16.xpose.msra.mxu0 0
    %6878 = vmatprep.subr.bf16.mxu0 0
    %6879 = vmatpush1.bf16.xpose.msra.mxu0 0
    %6880 = vmatprep.subr.bf16.mxu0 0
    %6881 = vmatpush1.bf16.xpose.msra.mxu0 0
    %6882 = vmatprep.subr.bf16.mxu0 0
    %6883 = vmatpush1.bf16.xpose.msra.mxu0 0
    %6884 = vmatprep.subr.bf16.mxu0 0
    %6885 = vmatpush1.bf16.xpose.msra.mxu0 0
    %6886 = vmatprep.subr.bf16.mxu0 0
    %6887 = vmatpush1.bf16.xpose.msra.mxu0 0
    %6888 = vmatprep.subr.bf16.mxu0 0
    %6889 = vmatpush1.bf16.xpose.msra.mxu0 0
    %6890 = vmatprep.subr.bf16.mxu0 0
    %6891 = vmatpush1.bf16.xpose.msra.mxu0 0
    %6892 = vmatprep.subr.bf16.mxu0 0
    %6893 = vmatpush1.bf16.xpose.msra.mxu0 0
    %6894 = vmatprep.subr.bf16.mxu0 0
    %6895 = vmatpush1.bf16.xpose.msra.mxu0 0
    %6896 = vmatprep.subr.bf16.mxu0 0
    %6897 = vmatpush1.bf16.xpose.msra.mxu0 0
    %6898 = vmatprep.mubr.bf16.mxu0 %v6529
    %6899 = vmatmul.mubr.bf16.gmra.mrb[0].mxu0 %v6528
    %v6900 = vpop.f32.mrb[0].mxu0
    %v6901 = vadd.f32 %v6860, %v6900
    %v6902 = vpop.f32.mrb[0].mxu0
    %v6903 = vpop.f32.mrb[0].mxu0
    %v6904 = vadd.f32 %v6863, %v6903
    %v6905 = vpop.f32.mrb[0].mxu0
    %6906 = vdwg.mxu0
    %6907 = vmatprep.subr.bf16.mxu0 %v6649
    %6908 = vmatpush1.bf16.xpose.msra.mxu0 %v6648
    %6909 = vmatprep.subr.bf16.mxu0 %v6665
    %6910 = vmatpush1.bf16.xpose.msra.mxu0 %v6664
    %6911 = vmatprep.subr.bf16.mxu0 0
    %6912 = vmatpush1.bf16.xpose.msra.mxu0 0
    %6913 = vmatprep.subr.bf16.mxu0 0
    %6914 = vmatpush1.bf16.xpose.msra.mxu0 0
    %6915 = vmatprep.subr.bf16.mxu0 0
    %6916 = vmatpush1.bf16.xpose.msra.mxu0 0
    %6917 = vmatprep.subr.bf16.mxu0 0
    %6918 = vmatpush1.bf16.xpose.msra.mxu0 0
    %6919 = vmatprep.subr.bf16.mxu0 0
    %6920 = vmatpush1.bf16.xpose.msra.mxu0 0
    %6921 = vmatprep.subr.bf16.mxu0 0
    %6922 = vmatpush1.bf16.xpose.msra.mxu0 0
    %6923 = vmatprep.subr.bf16.mxu0 0
    %6924 = vmatpush1.bf16.xpose.msra.mxu0 0
    %6925 = vmatprep.subr.bf16.mxu0 0
    %6926 = vmatpush1.bf16.xpose.msra.mxu0 0
    %6927 = vmatprep.subr.bf16.mxu0 0
    %6928 = vmatpush1.bf16.xpose.msra.mxu0 0
    %6929 = vmatprep.subr.bf16.mxu0 0
    %6930 = vmatpush1.bf16.xpose.msra.mxu0 0
    %6931 = vmatprep.subr.bf16.mxu0 0
    %6932 = vmatpush1.bf16.xpose.msra.mxu0 0
    %6933 = vmatprep.subr.bf16.mxu0 0
    %6934 = vmatpush1.bf16.xpose.msra.mxu0 0
    %6935 = vmatprep.subr.bf16.mxu0 0
    %6936 = vmatpush1.bf16.xpose.msra.mxu0 0
    %6937 = vmatprep.subr.bf16.mxu0 0
    %6938 = vmatpush1.bf16.xpose.msra.mxu0 0
    %6939 = vmatprep.mubr.bf16.mxu0 %v6531
    %6940 = vmatmul.mubr.bf16.gmra.mrb[0].mxu0 %v6530
    %v6941 = vpop.f32.mrb[0].mxu0
    %v6942 = vadd.f32 %v6901, %v6941
    %v6943 = vpop.f32.mrb[0].mxu0
    %v6944 = vpop.f32.mrb[0].mxu0
    %v6945 = vadd.f32 %v6904, %v6944
    %v6946 = vpop.f32.mrb[0].mxu0
    %6947 = vdwg.mxu0
    %6948 = vmatprep.subr.bf16.mxu0 %v6651
    %6949 = vmatpush1.bf16.xpose.msra.mxu0 %v6650
    %6950 = vmatprep.subr.bf16.mxu0 %v6667
    %6951 = vmatpush1.bf16.xpose.msra.mxu0 %v6666
    %6952 = vmatprep.subr.bf16.mxu0 0
    %6953 = vmatpush1.bf16.xpose.msra.mxu0 0
    %6954 = vmatprep.subr.bf16.mxu0 0
    %6955 = vmatpush1.bf16.xpose.msra.mxu0 0
    %6956 = vmatprep.subr.bf16.mxu0 0
    %6957 = vmatpush1.bf16.xpose.msra.mxu0 0
    %6958 = vmatprep.subr.bf16.mxu0 0
    %6959 = vmatpush1.bf16.xpose.msra.mxu0 0
    %6960 = vmatprep.subr.bf16.mxu0 0
    %6961 = vmatpush1.bf16.xpose.msra.mxu0 0
    %6962 = vmatprep.subr.bf16.mxu0 0
    %6963 = vmatpush1.bf16.xpose.msra.mxu0 0
    %6964 = vmatprep.subr.bf16.mxu0 0
    %6965 = vmatpush1.bf16.xpose.msra.mxu0 0
    %6966 = vmatprep.subr.bf16.mxu0 0
    %6967 = vmatpush1.bf16.xpose.msra.mxu0 0
    %6968 = vmatprep.subr.bf16.mxu0 0
    %6969 = vmatpush1.bf16.xpose.msra.mxu0 0
    %6970 = vmatprep.subr.bf16.mxu0 0
    %6971 = vmatpush1.bf16.xpose.msra.mxu0 0
    %6972 = vmatprep.subr.bf16.mxu0 0
    %6973 = vmatpush1.bf16.xpose.msra.mxu0 0
    %6974 = vmatprep.subr.bf16.mxu0 0
    %6975 = vmatpush1.bf16.xpose.msra.mxu0 0
    %6976 = vmatprep.subr.bf16.mxu0 0
    %6977 = vmatpush1.bf16.xpose.msra.mxu0 0
    %6978 = vmatprep.subr.bf16.mxu0 0
    %6979 = vmatpush1.bf16.xpose.msra.mxu0 0
    %6980 = vmatprep.mubr.bf16.mxu0 %v6533
    %6981 = vmatmul.mubr.bf16.gmra.mrb[0].mxu0 %v6532
    %v6982 = vpop.f32.mrb[0].mxu0
    %v6983 = vadd.f32 %v6942, %v6982
    %v6984 = vpop.f32.mrb[0].mxu0
    %v6985 = vpop.f32.mrb[0].mxu0
    %v6986 = vadd.f32 %v6945, %v6985
    %v6987 = vpop.f32.mrb[0].mxu0
    %6988 = vdwg.mxu0
    %6989 = vmatprep.subr.bf16.mxu0 %v6653
    %6990 = vmatpush1.bf16.xpose.msra.mxu0 %v6652
    %6991 = vmatprep.subr.bf16.mxu0 %v6669
    %6992 = vmatpush1.bf16.xpose.msra.mxu0 %v6668
    %6993 = vmatprep.subr.bf16.mxu0 0
    %6994 = vmatpush1.bf16.xpose.msra.mxu0 0
    %6995 = vmatprep.subr.bf16.mxu0 0
    %6996 = vmatpush1.bf16.xpose.msra.mxu0 0
    %6997 = vmatprep.subr.bf16.mxu0 0
    %6998 = vmatpush1.bf16.xpose.msra.mxu0 0
    %6999 = vmatprep.subr.bf16.mxu0 0
    %7000 = vmatpush1.bf16.xpose.msra.mxu0 0
    %7001 = vmatprep.subr.bf16.mxu0 0
    %7002 = vmatpush1.bf16.xpose.msra.mxu0 0
    %7003 = vmatprep.subr.bf16.mxu0 0
    %7004 = vmatpush1.bf16.xpose.msra.mxu0 0
    %7005 = vmatprep.subr.bf16.mxu0 0
    %7006 = vmatpush1.bf16.xpose.msra.mxu0 0
    %7007 = vmatprep.subr.bf16.mxu0 0
    %7008 = vmatpush1.bf16.xpose.msra.mxu0 0
    %7009 = vmatprep.subr.bf16.mxu0 0
    %7010 = vmatpush1.bf16.xpose.msra.mxu0 0
    %7011 = vmatprep.subr.bf16.mxu0 0
    %7012 = vmatpush1.bf16.xpose.msra.mxu0 0
    %7013 = vmatprep.subr.bf16.mxu0 0
    %7014 = vmatpush1.bf16.xpose.msra.mxu0 0
    %7015 = vmatprep.subr.bf16.mxu0 0
    %7016 = vmatpush1.bf16.xpose.msra.mxu0 0
    %7017 = vmatprep.subr.bf16.mxu0 0
    %7018 = vmatpush1.bf16.xpose.msra.mxu0 0
    %7019 = vmatprep.subr.bf16.mxu0 0
    %7020 = vmatpush1.bf16.xpose.msra.mxu0 0
    %7021 = vmatprep.mubr.bf16.mxu0 %v6535
    %7022 = vmatmul.mubr.bf16.gmra.mrb[0].mxu0 %v6534
    %v7023 = vpop.f32.mrb[0].mxu0
    %v7024 = vadd.f32 %v6983, %v7023
    %v7025 = vpop.f32.mrb[0].mxu0
    %v7026 = vpop.f32.mrb[0].mxu0
    %v7027 = vadd.f32 %v6986, %v7026
    %v7028 = vpop.f32.mrb[0].mxu0
    %7029 = vdwg.mxu0
    %v7030 = vadd.f32 %v5829, %v7024
    %v7031 = vadd.f32 %v5830, %v7027
    %v7032 = vld [vmem:[#allocation7 + $0x47] sm:$0x1]
    %v7033 = vld [vmem:[#allocation7 + $0x48] sm:$0x1]
    %v7034 = vsel %vm145, %v7030, 0.0
    %7035 = vadd.xlane.f32.xlu0 %v7034
    %v7036 = vpop.xlane.xlu0 %7035
    %v7037 = vsel %vm145, %v7031, 0.0
    %7038 = vadd.xlane.f32.xlu0 %v7037
    %v7039 = vpop.xlane.xlu0 %7038
    %v7040 = vmul.f32 %v7036, %v838
    %v7041 = vmul.f32 %v7039, %v838
    %v7042 = vsub.f32 %v7030, %v7040
    %v7043 = vsub.f32 %v7031, %v7041
    %v7044 = vmul.f32 %v7042, %v7042
    %v7045 = vmul.f32 %v7043, %v7043
    %v7046 = vsel %vm145, %v7044, 0.0
    %7047 = vadd.xlane.f32.xlu0 %v7046
    %v7048 = vpop.xlane.xlu0 %7047
    %v7049 = vsel %vm145, %v7045, 0.0
    %7050 = vadd.xlane.f32.xlu0 %v7049
    %v7051 = vpop.xlane.xlu0 %7050
    %v7052 = vmul.f32 %v7048, %v838
    %v7053 = vmul.f32 %v7051, %v838
    %v7054 = vadd.f32 %v7052, 1e-05
    %v7055 = vadd.f32 %v7053, 1e-05
    %v7056 = vrsqrt.pop %v7054
    %v7057 = vrsqrt.pop %v7055
    %v7058 = vmul.f32 %v7042, %v7056
    %v7059 = vmul.f32 %v7043, %v7057
    %v7061 = vlaneseq
    %v7062 = vshrl.u32 %v7061, 7
    %v7063 = vsub.s32 0, %v7062
    %v7064 = vrot.slane %v7032, %v7063
    %v7066 = vmul.f32 %v7058, %v7064
    %v7067 = vmul.f32 %v7059, %v7064
    %v7069 = vlaneseq
    %v7070 = vshrl.u32 %v7069, 7
    %v7071 = vsub.s32 0, %v7070
    %v7072 = vrot.slane %v7033, %v7071
    %v7074 = vadd.f32 %v7066, %v7072
    %v7075 = vadd.f32 %v7067, %v7072
    %v7076 = vld [vmem:[#allocation5 + $0x1a0] sm:$0xf]
    %v7077 = vld [vmem:[#allocation5 + $0x3d0] sm:$0xf]
    %v7078 = vld [vmem:[#allocation5 + $0x600] sm:$0xf]
    %v7079 = vld [vmem:[#allocation5 + $0x830] sm:$0xf]
    %v7080 = vpack.c.bf16 %v7075, %v7074
    %v7081 = vld [vmem:[#allocation7 + $0x49] sm:$0x1]
    %v7083 = vlaneseq
    %v7084 = vshrl.u32 %v7083, 7
    %v7085 = vsub.s32 0, %v7084
    %v7086 = vrot.slane %v7081, %v7085
    %v7092 = vunpack.c.l.b16 %v7076
    %v7093 = vunpack.c.l.b16 %v7077
    %v7094 = vunpack.c.l.b16 %v7078
    %v7095 = vunpack.c.l.b16 %v7079
    %v7096 = vpack.c.b16 %v7093, %v7092
    %v7097 = vpack.c.b16 %v7095, %v7094
    %v7101 = vsel %vm145, %v7080, 0
    %7103 = vmatprep.subr.bf16.mxu0 0
    %7104 = vmatpush1.bf16.msra.mxu0 %v7096
    %7105 = vmatprep.subr.bf16.mxu0 0
    %7106 = vmatpush1.bf16.msra.mxu0 %v7097
    %7107 = vmatprep.subr.bf16.mxu0 0
    %7108 = vmatpush1.bf16.msra.mxu0 0
    %7109 = vmatprep.subr.bf16.mxu0 0
    %7110 = vmatpush1.bf16.msra.mxu0 0
    %7111 = vmatprep.subr.bf16.mxu0 0
    %7112 = vmatpush1.bf16.msra.mxu0 0
    %7113 = vmatprep.subr.bf16.mxu0 0
    %7114 = vmatpush1.bf16.msra.mxu0 0
    %7115 = vmatprep.subr.bf16.mxu0 0
    %7116 = vmatpush1.bf16.msra.mxu0 0
    %7117 = vmatprep.subr.bf16.mxu0 0
    %7118 = vmatpush1.bf16.msra.mxu0 0
    %7119 = vmatprep.subr.bf16.mxu0 0
    %7120 = vmatpush1.bf16.msra.mxu0 0
    %7121 = vmatprep.subr.bf16.mxu0 0
    %7122 = vmatpush1.bf16.msra.mxu0 0
    %7123 = vmatprep.subr.bf16.mxu0 0
    %7124 = vmatpush1.bf16.msra.mxu0 0
    %7125 = vmatprep.subr.bf16.mxu0 0
    %7126 = vmatpush1.bf16.msra.mxu0 0
    %7127 = vmatprep.subr.bf16.mxu0 0
    %7128 = vmatpush1.bf16.msra.mxu0 0
    %7129 = vmatprep.subr.bf16.mxu0 0
    %7130 = vmatpush1.bf16.msra.mxu0 0
    %7131 = vmatprep.subr.bf16.mxu0 0
    %7132 = vmatpush1.bf16.msra.mxu0 0
    %7133 = vmatprep.subr.bf16.mxu0 0
    %7134 = vmatpush1.bf16.msra.mxu0 0
    %7135 = vmatprep.mubr.bf16.mxu0 0
    %7136 = vmatmul.mubr.bf16.gmra.mrb[0].mxu0 %v7101
    %v7137 = vpop.f32.mrb[0].mxu0
    %v7138 = vadd.f32 %v7086, %v7137
    %v7139 = vpop.f32.mrb[0].mxu0
    %v7140 = vpop.f32.mrb[0].mxu0
    %v7141 = vadd.f32 %v7086, %v7140
    %v7142 = vpop.f32.mrb[0].mxu0
    %7143 = vdwg.mxu0
    %v7144 = vld [vmem:[#allocation5 + $0x1a4] sm:$0xf]
    %v7145 = vld [vmem:[#allocation5 + $0x3d4] sm:$0xf]
    %v7146 = vld [vmem:[#allocation5 + $0x604] sm:$0xf]
    %v7147 = vld [vmem:[#allocation5 + $0x834] sm:$0xf]
    %v7148 = vld [vmem:[#allocation7 + $0x4a] sm:$0x1]
    %7151 = vrot.lane.b32.xlu0 %v7138, 96
    %v7152 = vpop.permute.xlu0 %7151
    %7153 = vrot.lane.b32.xlu0 %v7141, 96
    %v7154 = vpop.permute.xlu0 %7153
    %v7155 = vsel %vm214, %v7138, 0
    %v7157 = vsel %vm214, %v7141, 0
    %v7159 = vsel %vm214, %v7152, 0
    %v7161 = vsel %vm214, %v7154, 0
    %7163 = vmatprep.subr.mxu0 0.0
    %7164 = vmatpush1.xpose.msra.mxu0 %v7159
    %7165 = vmatprep.subr.mxu0 0.0
    %7166 = vmatpush1.xpose.msra.mxu0 %v7161
    %7167 = vmatprep.subr.mxu0 0.0
    %7168 = vmatpush1.xpose.msra.mxu0 0.0
    %7169 = vmatprep.subr.mxu0 0.0
    %7170 = vmatpush1.xpose.msra.mxu0 0.0
    %7171 = vmatprep.subr.mxu0 0.0
    %7172 = vmatpush1.xpose.msra.mxu0 0.0
    %7173 = vmatprep.subr.mxu0 0.0
    %7174 = vmatpush1.xpose.msra.mxu0 0.0
    %7175 = vmatprep.subr.mxu0 0.0
    %7176 = vmatpush1.xpose.msra.mxu0 0.0
    %7177 = vmatprep.subr.mxu0 0.0
    %7178 = vmatpush1.xpose.msra.mxu0 0.0
    %7179 = vmatprep.subr.mxu0 0.0
    %7180 = vmatpush1.xpose.msra.mxu0 0.0
    %7181 = vmatprep.subr.mxu0 0.0
    %7182 = vmatpush1.xpose.msra.mxu0 0.0
    %7183 = vmatprep.subr.mxu0 0.0
    %7184 = vmatpush1.xpose.msra.mxu0 0.0
    %7185 = vmatprep.subr.mxu0 0.0
    %7186 = vmatpush1.xpose.msra.mxu0 0.0
    %7187 = vmatprep.subr.mxu0 0.0
    %7188 = vmatpush1.xpose.msra.mxu0 0.0
    %7189 = vmatprep.subr.mxu0 0.0
    %7190 = vmatpush1.xpose.msra.mxu0 0.0
    %7191 = vmatprep.subr.mxu0 0.0
    %7192 = vmatpush1.xpose.msra.mxu0 0.0
    %7193 = vmatprep.subr.mxu0 0.0
    %7194 = vmatpush1.xpose.msra.mxu0 0.0
    %7195 = vmatprep.subr.mxu0 0.0
    %7196 = vmatpush1.xpose.msra.mxu0 0.0
    %7197 = vmatprep.subr.mxu0 0.0
    %7198 = vmatpush1.xpose.msra.mxu0 0.0
    %7199 = vmatprep.subr.mxu0 0.0
    %7200 = vmatpush1.xpose.msra.mxu0 0.0
    %7201 = vmatprep.subr.mxu0 0.0
    %7202 = vmatpush1.xpose.msra.mxu0 0.0
    %7203 = vmatprep.subr.mxu0 0.0
    %7204 = vmatpush1.xpose.msra.mxu0 0.0
    %7205 = vmatprep.subr.mxu0 0.0
    %7206 = vmatpush1.xpose.msra.mxu0 0.0
    %7207 = vmatprep.subr.mxu0 0.0
    %7208 = vmatpush1.xpose.msra.mxu0 0.0
    %7209 = vmatprep.subr.mxu0 0.0
    %7210 = vmatpush1.xpose.msra.mxu0 0.0
    %7211 = vmatprep.subr.mxu0 0.0
    %7212 = vmatpush1.xpose.msra.mxu0 0.0
    %7213 = vmatprep.subr.mxu0 0.0
    %7214 = vmatpush1.xpose.msra.mxu0 0.0
    %7215 = vmatprep.subr.mxu0 0.0
    %7216 = vmatpush1.xpose.msra.mxu0 0.0
    %7217 = vmatprep.subr.mxu0 0.0
    %7218 = vmatpush1.xpose.msra.mxu0 0.0
    %7219 = vmatprep.subr.mxu0 0.0
    %7220 = vmatpush1.xpose.msra.mxu0 0.0
    %7221 = vmatprep.subr.mxu0 0.0
    %7222 = vmatpush1.xpose.msra.mxu0 0.0
    %7223 = vmatprep.subr.mxu0 0.0
    %7224 = vmatpush1.xpose.msra.mxu0 0.0
    %7225 = vmatprep.subr.mxu0 0.0
    %7226 = vmatpush1.xpose.msra.mxu0 0.0
    %7227 = vmatprep.mubr.f32.mxu0 0.0
    %7228 = vmatmul.mubr.f32.gmra.mrb[0].mxu0 %v7155
    %v7229 = vpop.f32.mrb[0].mxu0
    %v7230 = vadd.f32 0.0, %v7229
    %v7231 = vpop.f32.mrb[0].mxu0
    %7232 = vmatprep.mubr.f32.mxu0 0.0
    %7233 = vmatmul.mubr.f32.gmra.mrb[0].mxu0 %v7157
    %v7234 = vpop.f32.mrb[0].mxu0
    %v7235 = vadd.f32 0.0, %v7234
    %v7236 = vpop.f32.mrb[0].mxu0
    %7237 = vdwg.mxu0
    %v7238 = vmul.f32 %v7230, 0.25
    %v7239 = vmul.f32 %v7235, 0.25
    %v7240 = vsel %vm114, %v7238, -inf
    %v7241 = vsel %vm115, %v7239, -inf
    %v7242 = vsel %vm214, %v7240, -inf
    %7243 = vmax.xlane.f32.xlu0 %v7242
    %v7244 = vpop.xlane.xlu0 %7243
    %v7245 = vsel %vm214, %v7241, -inf
    %7246 = vmax.xlane.f32.xlu0 %v7245
    %v7247 = vpop.xlane.xlu0 %7246
    %v7248 = vsub.f32 %v7240, %v7244
    %v7249 = vsub.f32 %v7241, %v7247
    %v7250 = vmul.f32 %v7248, 1.442695
    %v7251 = vpow.pop %v7250
    %v7252 = vmul.f32 %v7249, 1.442695
    %v7253 = vpow.pop %v7252
    %v7254 = vsel %vm214, %v7251, 0.0
    %7255 = vadd.xlane.f32.xlu0 %v7254
    %v7256 = vpop.xlane.xlu0 %7255
    %v7257 = vsel %vm214, %v7253, 0.0
    %7258 = vadd.xlane.f32.xlu0 %v7257
    %v7259 = vpop.xlane.xlu0 %7258
    %v7260 = vrcp.pop %v7256
    %v7261 = vmul.f32 %v7251, %v7260
    %v7262 = vrcp.pop %v7259
    %v7263 = vmul.f32 %v7253, %v7262
    %7264 = vrot.lane.b32.xlu0 %v7138, 64
    %v7265 = vpop.permute.xlu0 %7264
    %7266 = vrot.lane.b32.xlu0 %v7141, 64
    %v7267 = vpop.permute.xlu0 %7266
    %v7271 = vsel %vm214, %v7261, 0
    %v7274 = vsel %vm214, %v7263, 0
    %7276 = vmatprep.subr.mxu0 0.0
    %7277 = vmatpush1.msra.mxu0 %v7265
    %7278 = vmatprep.subr.mxu0 0.0
    %7279 = vmatpush1.msra.mxu0 %v7267
    %7280 = vmatprep.subr.mxu0 0.0
    %7281 = vmatpush1.msra.mxu0 0.0
    %7282 = vmatprep.subr.mxu0 0.0
    %7283 = vmatpush1.msra.mxu0 0.0
    %7284 = vmatprep.subr.mxu0 0.0
    %7285 = vmatpush1.msra.mxu0 0.0
    %7286 = vmatprep.subr.mxu0 0.0
    %7287 = vmatpush1.msra.mxu0 0.0
    %7288 = vmatprep.subr.mxu0 0.0
    %7289 = vmatpush1.msra.mxu0 0.0
    %7290 = vmatprep.subr.mxu0 0.0
    %7291 = vmatpush1.msra.mxu0 0.0
    %7292 = vmatprep.subr.mxu0 0.0
    %7293 = vmatpush1.msra.mxu0 0.0
    %7294 = vmatprep.subr.mxu0 0.0
    %7295 = vmatpush1.msra.mxu0 0.0
    %7296 = vmatprep.subr.mxu0 0.0
    %7297 = vmatpush1.msra.mxu0 0.0
    %7298 = vmatprep.subr.mxu0 0.0
    %7299 = vmatpush1.msra.mxu0 0.0
    %7300 = vmatprep.subr.mxu0 0.0
    %7301 = vmatpush1.msra.mxu0 0.0
    %7302 = vmatprep.subr.mxu0 0.0
    %7303 = vmatpush1.msra.mxu0 0.0
    %7304 = vmatprep.subr.mxu0 0.0
    %7305 = vmatpush1.msra.mxu0 0.0
    %7306 = vmatprep.subr.mxu0 0.0
    %7307 = vmatpush1.msra.mxu0 0.0
    %7308 = vmatprep.subr.mxu0 0.0
    %7309 = vmatpush1.msra.mxu0 0.0
    %7310 = vmatprep.subr.mxu0 0.0
    %7311 = vmatpush1.msra.mxu0 0.0
    %7312 = vmatprep.subr.mxu0 0.0
    %7313 = vmatpush1.msra.mxu0 0.0
    %7314 = vmatprep.subr.mxu0 0.0
    %7315 = vmatpush1.msra.mxu0 0.0
    %7316 = vmatprep.subr.mxu0 0.0
    %7317 = vmatpush1.msra.mxu0 0.0
    %7318 = vmatprep.subr.mxu0 0.0
    %7319 = vmatpush1.msra.mxu0 0.0
    %7320 = vmatprep.subr.mxu0 0.0
    %7321 = vmatpush1.msra.mxu0 0.0
    %7322 = vmatprep.subr.mxu0 0.0
    %7323 = vmatpush1.msra.mxu0 0.0
    %7324 = vmatprep.subr.mxu0 0.0
    %7325 = vmatpush1.msra.mxu0 0.0
    %7326 = vmatprep.subr.mxu0 0.0
    %7327 = vmatpush1.msra.mxu0 0.0
    %7328 = vmatprep.subr.mxu0 0.0
    %7329 = vmatpush1.msra.mxu0 0.0
    %7330 = vmatprep.subr.mxu0 0.0
    %7331 = vmatpush1.msra.mxu0 0.0
    %7332 = vmatprep.subr.mxu0 0.0
    %7333 = vmatpush1.msra.mxu0 0.0
    %7334 = vmatprep.subr.mxu0 0.0
    %7335 = vmatpush1.msra.mxu0 0.0
    %7336 = vmatprep.subr.mxu0 0.0
    %7337 = vmatpush1.msra.mxu0 0.0
    %7338 = vmatprep.subr.mxu0 0.0
    %7339 = vmatpush1.msra.mxu0 0.0
    %7340 = vmatprep.mubr.f32.mxu0 0.0
    %7341 = vmatmul.mubr.f32.gmra.mrb[0].mxu0 %v7271
    %v7342 = vpop.f32.mrb[0].mxu0
    %v7343 = vadd.f32 0.0, %v7342
    %v7344 = vpop.f32.mrb[0].mxu0
    %7345 = vmatprep.mubr.f32.mxu0 0.0
    %7346 = vmatmul.mubr.f32.gmra.mrb[0].mxu0 %v7274
    %v7347 = vpop.f32.mrb[0].mxu0
    %v7348 = vadd.f32 0.0, %v7347
    %v7349 = vpop.f32.mrb[0].mxu0
    %7350 = vdwg.mxu0
    %v7351 = vpack.c.bf16 %v7348, %v7343
    %7352 = vrot.lane.b32.xlu0 %v7138, 112
    %v7353 = vpop.permute.xlu0 %7352
    %7354 = vrot.lane.b32.xlu0 %v7141, 112
    %v7355 = vpop.permute.xlu0 %7354
    %7356 = vrot.lane.b32.xlu0 %v7138, 80
    %v7357 = vpop.permute.xlu0 %7356
    %7358 = vrot.lane.b32.xlu0 %v7141, 80
    %v7359 = vpop.permute.xlu0 %7358
    %v7360 = vsel %vm214, %v7353, 0
    %v7362 = vsel %vm214, %v7355, 0
    %v7364 = vsel %vm214, %v7357, 0
    %v7366 = vsel %vm214, %v7359, 0
    %7368 = vmatprep.subr.mxu0 0.0
    %7369 = vmatpush1.xpose.msra.mxu0 %v7364
    %7370 = vmatprep.subr.mxu0 0.0
    %7371 = vmatpush1.xpose.msra.mxu0 %v7366
    %7372 = vmatprep.subr.mxu0 0.0
    %7373 = vmatpush1.xpose.msra.mxu0 0.0
    %7374 = vmatprep.subr.mxu0 0.0
    %7375 = vmatpush1.xpose.msra.mxu0 0.0
    %7376 = vmatprep.subr.mxu0 0.0
    %7377 = vmatpush1.xpose.msra.mxu0 0.0
    %7378 = vmatprep.subr.mxu0 0.0
    %7379 = vmatpush1.xpose.msra.mxu0 0.0
    %7380 = vmatprep.subr.mxu0 0.0
    %7381 = vmatpush1.xpose.msra.mxu0 0.0
    %7382 = vmatprep.subr.mxu0 0.0
    %7383 = vmatpush1.xpose.msra.mxu0 0.0
    %7384 = vmatprep.subr.mxu0 0.0
    %7385 = vmatpush1.xpose.msra.mxu0 0.0
    %7386 = vmatprep.subr.mxu0 0.0
    %7387 = vmatpush1.xpose.msra.mxu0 0.0
    %7388 = vmatprep.subr.mxu0 0.0
    %7389 = vmatpush1.xpose.msra.mxu0 0.0
    %7390 = vmatprep.subr.mxu0 0.0
    %7391 = vmatpush1.xpose.msra.mxu0 0.0
    %7392 = vmatprep.subr.mxu0 0.0
    %7393 = vmatpush1.xpose.msra.mxu0 0.0
    %7394 = vmatprep.subr.mxu0 0.0
    %7395 = vmatpush1.xpose.msra.mxu0 0.0
    %7396 = vmatprep.subr.mxu0 0.0
    %7397 = vmatpush1.xpose.msra.mxu0 0.0
    %7398 = vmatprep.subr.mxu0 0.0
    %7399 = vmatpush1.xpose.msra.mxu0 0.0
    %7400 = vmatprep.subr.mxu0 0.0
    %7401 = vmatpush1.xpose.msra.mxu0 0.0
    %7402 = vmatprep.subr.mxu0 0.0
    %7403 = vmatpush1.xpose.msra.mxu0 0.0
    %7404 = vmatprep.subr.mxu0 0.0
    %7405 = vmatpush1.xpose.msra.mxu0 0.0
    %7406 = vmatprep.subr.mxu0 0.0
    %7407 = vmatpush1.xpose.msra.mxu0 0.0
    %7408 = vmatprep.subr.mxu0 0.0
    %7409 = vmatpush1.xpose.msra.mxu0 0.0
    %7410 = vmatprep.subr.mxu0 0.0
    %7411 = vmatpush1.xpose.msra.mxu0 0.0
    %7412 = vmatprep.subr.mxu0 0.0
    %7413 = vmatpush1.xpose.msra.mxu0 0.0
    %7414 = vmatprep.subr.mxu0 0.0
    %7415 = vmatpush1.xpose.msra.mxu0 0.0
    %7416 = vmatprep.subr.mxu0 0.0
    %7417 = vmatpush1.xpose.msra.mxu0 0.0
    %7418 = vmatprep.subr.mxu0 0.0
    %7419 = vmatpush1.xpose.msra.mxu0 0.0
    %7420 = vmatprep.subr.mxu0 0.0
    %7421 = vmatpush1.xpose.msra.mxu0 0.0
    %7422 = vmatprep.subr.mxu0 0.0
    %7423 = vmatpush1.xpose.msra.mxu0 0.0
    %7424 = vmatprep.subr.mxu0 0.0
    %7425 = vmatpush1.xpose.msra.mxu0 0.0
    %7426 = vmatprep.subr.mxu0 0.0
    %7427 = vmatpush1.xpose.msra.mxu0 0.0
    %7428 = vmatprep.subr.mxu0 0.0
    %7429 = vmatpush1.xpose.msra.mxu0 0.0
    %7430 = vmatprep.subr.mxu0 0.0
    %7431 = vmatpush1.xpose.msra.mxu0 0.0
    %7432 = vmatprep.mubr.f32.mxu0 0.0
    %7433 = vmatmul.mubr.f32.gmra.mrb[0].mxu0 %v7360
    %v7434 = vpop.f32.mrb[0].mxu0
    %v7435 = vadd.f32 0.0, %v7434
    %v7436 = vpop.f32.mrb[0].mxu0
    %7437 = vmatprep.mubr.f32.mxu0 0.0
    %7438 = vmatmul.mubr.f32.gmra.mrb[0].mxu0 %v7362
    %v7439 = vpop.f32.mrb[0].mxu0
    %v7440 = vadd.f32 0.0, %v7439
    %v7441 = vpop.f32.mrb[0].mxu0
    %7442 = vdwg.mxu0
    %v7443 = vmul.f32 %v7435, 0.25
    %v7444 = vmul.f32 %v7440, 0.25
    %v7445 = vsel %vm114, %v7443, -inf
    %v7446 = vsel %vm115, %v7444, -inf
    %v7447 = vsel %vm214, %v7445, -inf
    %7448 = vmax.xlane.f32.xlu0 %v7447
    %v7449 = vpop.xlane.xlu0 %7448
    %v7450 = vsel %vm214, %v7446, -inf
    %7451 = vmax.xlane.f32.xlu0 %v7450
    %v7452 = vpop.xlane.xlu0 %7451
    %v7453 = vsub.f32 %v7445, %v7449
    %v7454 = vsub.f32 %v7446, %v7452
    %v7455 = vmul.f32 %v7453, 1.442695
    %v7456 = vpow.pop %v7455
    %v7457 = vmul.f32 %v7454, 1.442695
    %v7458 = vpow.pop %v7457
    %v7459 = vsel %vm214, %v7456, 0.0
    %7460 = vadd.xlane.f32.xlu0 %v7459
    %v7461 = vpop.xlane.xlu0 %7460
    %v7462 = vsel %vm214, %v7458, 0.0
    %7463 = vadd.xlane.f32.xlu0 %v7462
    %v7464 = vpop.xlane.xlu0 %7463
    %v7465 = vrcp.pop %v7461
    %v7466 = vmul.f32 %v7456, %v7465
    %v7467 = vrcp.pop %v7464
    %v7468 = vmul.f32 %v7458, %v7467
    %7469 = vrot.lane.b32.xlu0 %v7138, 48
    %v7470 = vpop.permute.xlu0 %7469
    %7471 = vrot.lane.b32.xlu0 %v7141, 48
    %v7472 = vpop.permute.xlu0 %7471
    %v7476 = vsel %vm214, %v7466, 0
    %v7479 = vsel %vm214, %v7468, 0
    %7481 = vmatprep.subr.mxu0 0.0
    %7482 = vmatpush1.msra.mxu0 %v7470
    %7483 = vmatprep.subr.mxu0 0.0
    %7484 = vmatpush1.msra.mxu0 %v7472
    %7485 = vmatprep.subr.mxu0 0.0
    %7486 = vmatpush1.msra.mxu0 0.0
    %7487 = vmatprep.subr.mxu0 0.0
    %7488 = vmatpush1.msra.mxu0 0.0
    %7489 = vmatprep.subr.mxu0 0.0
    %7490 = vmatpush1.msra.mxu0 0.0
    %7491 = vmatprep.subr.mxu0 0.0
    %7492 = vmatpush1.msra.mxu0 0.0
    %7493 = vmatprep.subr.mxu0 0.0
    %7494 = vmatpush1.msra.mxu0 0.0
    %7495 = vmatprep.subr.mxu0 0.0
    %7496 = vmatpush1.msra.mxu0 0.0
    %7497 = vmatprep.subr.mxu0 0.0
    %7498 = vmatpush1.msra.mxu0 0.0
    %7499 = vmatprep.subr.mxu0 0.0
    %7500 = vmatpush1.msra.mxu0 0.0
    %7501 = vmatprep.subr.mxu0 0.0
    %7502 = vmatpush1.msra.mxu0 0.0
    %7503 = vmatprep.subr.mxu0 0.0
    %7504 = vmatpush1.msra.mxu0 0.0
    %7505 = vmatprep.subr.mxu0 0.0
    %7506 = vmatpush1.msra.mxu0 0.0
    %7507 = vmatprep.subr.mxu0 0.0
    %7508 = vmatpush1.msra.mxu0 0.0
    %7509 = vmatprep.subr.mxu0 0.0
    %7510 = vmatpush1.msra.mxu0 0.0
    %7511 = vmatprep.subr.mxu0 0.0
    %7512 = vmatpush1.msra.mxu0 0.0
    %7513 = vmatprep.subr.mxu0 0.0
    %7514 = vmatpush1.msra.mxu0 0.0
    %7515 = vmatprep.subr.mxu0 0.0
    %7516 = vmatpush1.msra.mxu0 0.0
    %7517 = vmatprep.subr.mxu0 0.0
    %7518 = vmatpush1.msra.mxu0 0.0
    %7519 = vmatprep.subr.mxu0 0.0
    %7520 = vmatpush1.msra.mxu0 0.0
    %7521 = vmatprep.subr.mxu0 0.0
    %7522 = vmatpush1.msra.mxu0 0.0
    %7523 = vmatprep.subr.mxu0 0.0
    %7524 = vmatpush1.msra.mxu0 0.0
    %7525 = vmatprep.subr.mxu0 0.0
    %7526 = vmatpush1.msra.mxu0 0.0
    %7527 = vmatprep.subr.mxu0 0.0
    %7528 = vmatpush1.msra.mxu0 0.0
    %7529 = vmatprep.subr.mxu0 0.0
    %7530 = vmatpush1.msra.mxu0 0.0
    %7531 = vmatprep.subr.mxu0 0.0
    %7532 = vmatpush1.msra.mxu0 0.0
    %7533 = vmatprep.subr.mxu0 0.0
    %7534 = vmatpush1.msra.mxu0 0.0
    %7535 = vmatprep.subr.mxu0 0.0
    %7536 = vmatpush1.msra.mxu0 0.0
    %7537 = vmatprep.subr.mxu0 0.0
    %7538 = vmatpush1.msra.mxu0 0.0
    %7539 = vmatprep.subr.mxu0 0.0
    %7540 = vmatpush1.msra.mxu0 0.0
    %7541 = vmatprep.subr.mxu0 0.0
    %7542 = vmatpush1.msra.mxu0 0.0
    %7543 = vmatprep.subr.mxu0 0.0
    %7544 = vmatpush1.msra.mxu0 0.0
    %7545 = vmatprep.mubr.f32.mxu0 0.0
    %7546 = vmatmul.mubr.f32.gmra.mrb[0].mxu0 %v7476
    %v7547 = vpop.f32.mrb[0].mxu0
    %v7548 = vadd.f32 0.0, %v7547
    %v7549 = vpop.f32.mrb[0].mxu0
    %7550 = vmatprep.mubr.f32.mxu0 0.0
    %7551 = vmatmul.mubr.f32.gmra.mrb[0].mxu0 %v7479
    %v7552 = vpop.f32.mrb[0].mxu0
    %v7553 = vadd.f32 0.0, %v7552
    %v7554 = vpop.f32.mrb[0].mxu0
    %7555 = vdwg.mxu0
    %v7556 = vpack.c.bf16 %v7553, %v7548
    %v7559 = vunpack.c.l.b16 %v7146
    %v7560 = vunpack.c.l.b16 %v7147
    %v7561 = vpack.c.b16 %v7560, %v7559
    %v7564 = vsel %vm214, %v7556, 0
    %7566 = vmatprep.subr.bf16.mxu0 0
    %7567 = vmatpush1.bf16.msra.mxu0 %v7561
    %7568 = vmatprep.subr.bf16.mxu0 0
    %7569 = vmatpush1.bf16.msra.mxu0 0
    %7570 = vmatprep.subr.bf16.mxu0 0
    %7571 = vmatpush1.bf16.msra.mxu0 0
    %7572 = vmatprep.subr.bf16.mxu0 0
    %7573 = vmatpush1.bf16.msra.mxu0 0
    %7574 = vmatprep.subr.bf16.mxu0 0
    %7575 = vmatpush1.bf16.msra.mxu0 0
    %7576 = vmatprep.subr.bf16.mxu0 0
    %7577 = vmatpush1.bf16.msra.mxu0 0
    %7578 = vmatprep.subr.bf16.mxu0 0
    %7579 = vmatpush1.bf16.msra.mxu0 0
    %7580 = vmatprep.subr.bf16.mxu0 0
    %7581 = vmatpush1.bf16.msra.mxu0 0
    %7582 = vmatprep.subr.bf16.mxu0 0
    %7583 = vmatpush1.bf16.msra.mxu0 0
    %7584 = vmatprep.subr.bf16.mxu0 0
    %7585 = vmatpush1.bf16.msra.mxu0 0
    %7586 = vmatprep.subr.bf16.mxu0 0
    %7587 = vmatpush1.bf16.msra.mxu0 0
    %7588 = vmatprep.subr.bf16.mxu0 0
    %7589 = vmatpush1.bf16.msra.mxu0 0
    %7590 = vmatprep.subr.bf16.mxu0 0
    %7591 = vmatpush1.bf16.msra.mxu0 0
    %7592 = vmatprep.subr.bf16.mxu0 0
    %7593 = vmatpush1.bf16.msra.mxu0 0
    %7594 = vmatprep.subr.bf16.mxu0 0
    %7595 = vmatpush1.bf16.msra.mxu0 0
    %7596 = vmatprep.subr.bf16.mxu0 0
    %7597 = vmatpush1.bf16.msra.mxu0 0
    %7598 = vmatprep.mubr.bf16.mxu0 0
    %7599 = vmatmul.mubr.bf16.gmra.mrb[0].mxu0 %v7564
    %v7600 = vpop.f32.mrb[0].mxu0
    %v7601 = vadd.f32 0.0, %v7600
    %v7602 = vpop.f32.mrb[0].mxu0
    %v7603 = vpop.f32.mrb[0].mxu0
    %v7604 = vadd.f32 0.0, %v7603
    %v7605 = vpop.f32.mrb[0].mxu0
    %7606 = vdwg.mxu0
    %v7609 = vunpack.c.l.b16 %v7144
    %v7610 = vunpack.c.l.b16 %v7145
    %v7611 = vpack.c.b16 %v7610, %v7609
    %v7614 = vsel %vm214, %v7351, 0
    %7616 = vmatprep.subr.bf16.mxu0 0
    %7617 = vmatpush1.bf16.msra.mxu0 %v7611
    %7618 = vmatprep.subr.bf16.mxu0 0
    %7619 = vmatpush1.bf16.msra.mxu0 0
    %7620 = vmatprep.subr.bf16.mxu0 0
    %7621 = vmatpush1.bf16.msra.mxu0 0
    %7622 = vmatprep.subr.bf16.mxu0 0
    %7623 = vmatpush1.bf16.msra.mxu0 0
    %7624 = vmatprep.subr.bf16.mxu0 0
    %7625 = vmatpush1.bf16.msra.mxu0 0
    %7626 = vmatprep.subr.bf16.mxu0 0
    %7627 = vmatpush1.bf16.msra.mxu0 0
    %7628 = vmatprep.subr.bf16.mxu0 0
    %7629 = vmatpush1.bf16.msra.mxu0 0
    %7630 = vmatprep.subr.bf16.mxu0 0
    %7631 = vmatpush1.bf16.msra.mxu0 0
    %7632 = vmatprep.subr.bf16.mxu0 0
    %7633 = vmatpush1.bf16.msra.mxu0 0
    %7634 = vmatprep.subr.bf16.mxu0 0
    %7635 = vmatpush1.bf16.msra.mxu0 0
    %7636 = vmatprep.subr.bf16.mxu0 0
    %7637 = vmatpush1.bf16.msra.mxu0 0
    %7638 = vmatprep.subr.bf16.mxu0 0
    %7639 = vmatpush1.bf16.msra.mxu0 0
    %7640 = vmatprep.subr.bf16.mxu0 0
    %7641 = vmatpush1.bf16.msra.mxu0 0
    %7642 = vmatprep.subr.bf16.mxu0 0
    %7643 = vmatpush1.bf16.msra.mxu0 0
    %7644 = vmatprep.subr.bf16.mxu0 0
    %7645 = vmatpush1.bf16.msra.mxu0 0
    %7646 = vmatprep.subr.bf16.mxu0 0
    %7647 = vmatpush1.bf16.msra.mxu0 0
    %7648 = vmatprep.mubr.bf16.mxu0 0
    %7649 = vmatmul.mubr.bf16.gmra.mrb[0].mxu0 %v7614
    %v7650 = vpop.f32.mrb[0].mxu0
    %v7651 = vadd.f32 %v7601, %v7650
    %v7652 = vpop.f32.mrb[0].mxu0
    %v7653 = vpop.f32.mrb[0].mxu0
    %v7654 = vadd.f32 %v7604, %v7653
    %v7655 = vpop.f32.mrb[0].mxu0
    %7656 = vdwg.mxu0
    %v7658 = vlaneseq
    %v7659 = vshrl.u32 %v7658, 7
    %v7660 = vsub.s32 0, %v7659
    %v7661 = vrot.slane %v7148, %v7660
    %v7663 = vadd.f32 %v7651, %v7661
    %v7664 = vadd.f32 %v7654, %v7661
    %v7665 = vadd.f32 %v7074, %v7663
    %v7666 = vadd.f32 %v7075, %v7664
    %v7667 = vld [vmem:[#allocation7 + $0x5e] sm:$0x1]
    %v7668 = vld [vmem:[#allocation7 + $0x5f] sm:$0x1]
    %v7669 = vsel %vm145, %v7665, 0.0
    %7670 = vadd.xlane.f32.xlu0 %v7669
    %v7671 = vpop.xlane.xlu0 %7670
    %v7672 = vsel %vm145, %v7666, 0.0
    %7673 = vadd.xlane.f32.xlu0 %v7672
    %v7674 = vpop.xlane.xlu0 %7673
    %v7675 = vmul.f32 %v7671, %v838
    %v7676 = vmul.f32 %v7674, %v838
    %v7677 = vsub.f32 %v7665, %v7675
    %v7678 = vsub.f32 %v7666, %v7676
    %v7679 = vmul.f32 %v7677, %v7677
    %v7680 = vmul.f32 %v7678, %v7678
    %v7681 = vsel %vm145, %v7679, 0.0
    %7682 = vadd.xlane.f32.xlu0 %v7681
    %v7683 = vpop.xlane.xlu0 %7682
    %v7684 = vsel %vm145, %v7680, 0.0
    %7685 = vadd.xlane.f32.xlu0 %v7684
    %v7686 = vpop.xlane.xlu0 %7685
    %v7687 = vmul.f32 %v7683, %v838
    %v7688 = vmul.f32 %v7686, %v838
    %v7689 = vadd.f32 %v7687, 1e-05
    %v7690 = vadd.f32 %v7688, 1e-05
    %v7691 = vrsqrt.pop %v7689
    %v7692 = vrsqrt.pop %v7690
    %v7693 = vmul.f32 %v7677, %v7691
    %v7694 = vmul.f32 %v7678, %v7692
    %v7696 = vlaneseq
    %v7697 = vshrl.u32 %v7696, 7
    %v7698 = vsub.s32 0, %v7697
    %v7699 = vrot.slane %v7667, %v7698
    %v7701 = vmul.f32 %v7693, %v7699
    %v7702 = vmul.f32 %v7694, %v7699
    %v7704 = vlaneseq
    %v7705 = vshrl.u32 %v7704, 7
    %v7706 = vsub.s32 0, %v7705
    %v7707 = vrot.slane %v7668, %v7706
    %v7709 = vadd.f32 %v7701, %v7707
    %v7710 = vadd.f32 %v7702, %v7707
    %v7711 = vld [vmem:[#allocation5 + $0x1a8] sm:$0xf]
    %v7712 = vld [vmem:[#allocation5 + $0x3d8] sm:$0xf]
    %v7713 = vld [vmem:[#allocation5 + $0x608] sm:$0xf]
    %v7714 = vld [vmem:[#allocation5 + $0x838] sm:$0xf]
    %v7715 = vld [vmem:[#allocation7 + $0x4b] sm:$0x1]
    %v7716 = vpack.c.bf16 %v7710, %v7709
    %v7718 = vlaneseq
    %v7719 = vshrl.u32 %v7718, 7
    %v7720 = vsub.s32 0, %v7719
    %v7721 = vrot.slane %v7715, %v7720
    %v7727 = vunpack.c.l.b16 %v7711
    %v7728 = vunpack.c.l.b16 %v7712
    %v7729 = vunpack.c.l.b16 %v7713
    %v7730 = vunpack.c.l.b16 %v7714
    %v7731 = vpack.c.b16 %v7728, %v7727
    %v7732 = vpack.c.b16 %v7730, %v7729
    %v7736 = vsel %vm145, %v7716, 0
    %7738 = vmatprep.subr.bf16.mxu0 0
    %7739 = vmatpush1.bf16.msra.mxu0 %v7731
    %7740 = vmatprep.subr.bf16.mxu0 0
    %7741 = vmatpush1.bf16.msra.mxu0 %v7732
    %7742 = vmatprep.subr.bf16.mxu0 0
    %7743 = vmatpush1.bf16.msra.mxu0 0
    %7744 = vmatprep.subr.bf16.mxu0 0
    %7745 = vmatpush1.bf16.msra.mxu0 0
    %7746 = vmatprep.subr.bf16.mxu0 0
    %7747 = vmatpush1.bf16.msra.mxu0 0
    %7748 = vmatprep.subr.bf16.mxu0 0
    %7749 = vmatpush1.bf16.msra.mxu0 0
    %7750 = vmatprep.subr.bf16.mxu0 0
    %7751 = vmatpush1.bf16.msra.mxu0 0
    %7752 = vmatprep.subr.bf16.mxu0 0
    %7753 = vmatpush1.bf16.msra.mxu0 0
    %7754 = vmatprep.subr.bf16.mxu0 0
    %7755 = vmatpush1.bf16.msra.mxu0 0
    %7756 = vmatprep.subr.bf16.mxu0 0
    %7757 = vmatpush1.bf16.msra.mxu0 0
    %7758 = vmatprep.subr.bf16.mxu0 0
    %7759 = vmatpush1.bf16.msra.mxu0 0
    %7760 = vmatprep.subr.bf16.mxu0 0
    %7761 = vmatpush1.bf16.msra.mxu0 0
    %7762 = vmatprep.subr.bf16.mxu0 0
    %7763 = vmatpush1.bf16.msra.mxu0 0
    %7764 = vmatprep.subr.bf16.mxu0 0
    %7765 = vmatpush1.bf16.msra.mxu0 0
    %7766 = vmatprep.subr.bf16.mxu0 0
    %7767 = vmatpush1.bf16.msra.mxu0 0
    %7768 = vmatprep.subr.bf16.mxu0 0
    %7769 = vmatpush1.bf16.msra.mxu0 0
    %7770 = vmatprep.mubr.bf16.mxu0 0
    %7771 = vmatmul.mubr.bf16.gmra.mrb[0].mxu0 %v7736
    %v7772 = vpop.f32.mrb[0].mxu0
    %v7773 = vadd.f32 %v7721, %v7772
    %v7774 = vpop.f32.mrb[0].mxu0
    %v7775 = vpop.f32.mrb[0].mxu0
    %v7776 = vadd.f32 %v7721, %v7775
    %v7777 = vpop.f32.mrb[0].mxu0
    %7778 = vdwg.mxu0
    %7779 = vrot.lane.b32.xlu0 %v7731, 96
    %v7780 = vpop.permute.xlu0 %7779
    %7781 = vrot.lane.b32.xlu0 %v7732, 96
    %v7782 = vpop.permute.xlu0 %7781
    %7785 = vrot.lane.b32.xlu0 %v7721, 96
    %v7786 = vpop.permute.xlu0 %7785
    %7788 = vmatprep.subr.bf16.mxu0 0
    %7789 = vmatpush1.bf16.msra.mxu0 %v7780
    %7790 = vmatprep.subr.bf16.mxu0 0
    %7791 = vmatpush1.bf16.msra.mxu0 %v7782
    %7792 = vmatprep.subr.bf16.mxu0 0
    %7793 = vmatpush1.bf16.msra.mxu0 0
    %7794 = vmatprep.subr.bf16.mxu0 0
    %7795 = vmatpush1.bf16.msra.mxu0 0
    %7796 = vmatprep.subr.bf16.mxu0 0
    %7797 = vmatpush1.bf16.msra.mxu0 0
    %7798 = vmatprep.subr.bf16.mxu0 0
    %7799 = vmatpush1.bf16.msra.mxu0 0
    %7800 = vmatprep.subr.bf16.mxu0 0
    %7801 = vmatpush1.bf16.msra.mxu0 0
    %7802 = vmatprep.subr.bf16.mxu0 0
    %7803 = vmatpush1.bf16.msra.mxu0 0
    %7804 = vmatprep.subr.bf16.mxu0 0
    %7805 = vmatpush1.bf16.msra.mxu0 0
    %7806 = vmatprep.subr.bf16.mxu0 0
    %7807 = vmatpush1.bf16.msra.mxu0 0
    %7808 = vmatprep.subr.bf16.mxu0 0
    %7809 = vmatpush1.bf16.msra.mxu0 0
    %7810 = vmatprep.subr.bf16.mxu0 0
    %7811 = vmatpush1.bf16.msra.mxu0 0
    %7812 = vmatprep.subr.bf16.mxu0 0
    %7813 = vmatpush1.bf16.msra.mxu0 0
    %7814 = vmatprep.subr.bf16.mxu0 0
    %7815 = vmatpush1.bf16.msra.mxu0 0
    %7816 = vmatprep.subr.bf16.mxu0 0
    %7817 = vmatpush1.bf16.msra.mxu0 0
    %7818 = vmatprep.subr.bf16.mxu0 0
    %7819 = vmatpush1.bf16.msra.mxu0 0
    %7820 = vmatprep.mubr.bf16.mxu0 0
    %7821 = vmatmul.mubr.bf16.gmra.mrb[0].mxu0 %v5198
    %v7822 = vpop.f32.mrb[0].mxu0
    %v7823 = vadd.f32 %v7786, %v7822
    %v7824 = vpop.f32.mrb[0].mxu0
    %v7825 = vpop.f32.mrb[0].mxu0
    %v7826 = vadd.f32 %v7786, %v7825
    %v7827 = vpop.f32.mrb[0].mxu0
    %7828 = vmatprep.mubr.bf16.mxu0 0
    %7829 = vmatmul.mubr.bf16.gmra.mrb[0].mxu0 %v5201
    %v7830 = vpop.f32.mrb[0].mxu0
    %v7831 = vadd.f32 %v7786, %v7830
    %v7832 = vpop.f32.mrb[0].mxu0
    %v7833 = vpop.f32.mrb[0].mxu0
    %v7834 = vpop.f32.mrb[0].mxu0
    %7835 = vdwg.mxu0
    %v7836 = vld [vmem:[#allocation5 + $0x1ac] sm:$0xf]
    %v7837 = vld [vmem:[#allocation5 + $0x3dc] sm:$0xf]
    %v7838 = vld [vmem:[#allocation5 + $0x60c] sm:$0xf]
    %v7839 = vld [vmem:[#allocation5 + $0x83c] sm:$0xf]
    %v7840 = vld [vmem:[#allocation7 + $0x4c] sm:$0x1]
    %v7842 = vsel %vm214, %v7773, 0
    %v7845 = vsel %vm214, %v7776, 0
    %v7848 = vsel %vm214, %v7823, 0
    %v7851 = vsel %vm214, %v7826, 0
    %v7854 = vsel %vm214, %v7831, 0
    %7856 = vmatprep.subr.mxu0 0.0
    %7857 = vmatpush1.xpose.msra.mxu0 %v7848
    %7858 = vmatprep.subr.mxu0 0.0
    %7859 = vmatpush1.xpose.msra.mxu0 %v7851
    %7860 = vmatprep.subr.mxu0 0.0
    %7861 = vmatpush1.xpose.msra.mxu0 %v7854
    %7862 = vmatprep.subr.mxu0 0.0
    %7863 = vmatpush1.xpose.msra.mxu0 0.0
    %7864 = vmatprep.subr.mxu0 0.0
    %7865 = vmatpush1.xpose.msra.mxu0 0.0
    %7866 = vmatprep.subr.mxu0 0.0
    %7867 = vmatpush1.xpose.msra.mxu0 0.0
    %7868 = vmatprep.subr.mxu0 0.0
    %7869 = vmatpush1.xpose.msra.mxu0 0.0
    %7870 = vmatprep.subr.mxu0 0.0
    %7871 = vmatpush1.xpose.msra.mxu0 0.0
    %7872 = vmatprep.subr.mxu0 0.0
    %7873 = vmatpush1.xpose.msra.mxu0 0.0
    %7874 = vmatprep.subr.mxu0 0.0
    %7875 = vmatpush1.xpose.msra.mxu0 0.0
    %7876 = vmatprep.subr.mxu0 0.0
    %7877 = vmatpush1.xpose.msra.mxu0 0.0
    %7878 = vmatprep.subr.mxu0 0.0
    %7879 = vmatpush1.xpose.msra.mxu0 0.0
    %7880 = vmatprep.subr.mxu0 0.0
    %7881 = vmatpush1.xpose.msra.mxu0 0.0
    %7882 = vmatprep.subr.mxu0 0.0
    %7883 = vmatpush1.xpose.msra.mxu0 0.0
    %7884 = vmatprep.subr.mxu0 0.0
    %7885 = vmatpush1.xpose.msra.mxu0 0.0
    %7886 = vmatprep.subr.mxu0 0.0
    %7887 = vmatpush1.xpose.msra.mxu0 0.0
    %7888 = vmatprep.subr.mxu0 0.0
    %7889 = vmatpush1.xpose.msra.mxu0 0.0
    %7890 = vmatprep.subr.mxu0 0.0
    %7891 = vmatpush1.xpose.msra.mxu0 0.0
    %7892 = vmatprep.subr.mxu0 0.0
    %7893 = vmatpush1.xpose.msra.mxu0 0.0
    %7894 = vmatprep.subr.mxu0 0.0
    %7895 = vmatpush1.xpose.msra.mxu0 0.0
    %7896 = vmatprep.subr.mxu0 0.0
    %7897 = vmatpush1.xpose.msra.mxu0 0.0
    %7898 = vmatprep.subr.mxu0 0.0
    %7899 = vmatpush1.xpose.msra.mxu0 0.0
    %7900 = vmatprep.subr.mxu0 0.0
    %7901 = vmatpush1.xpose.msra.mxu0 0.0
    %7902 = vmatprep.subr.mxu0 0.0
    %7903 = vmatpush1.xpose.msra.mxu0 0.0
    %7904 = vmatprep.subr.mxu0 0.0
    %7905 = vmatpush1.xpose.msra.mxu0 0.0
    %7906 = vmatprep.subr.mxu0 0.0
    %7907 = vmatpush1.xpose.msra.mxu0 0.0
    %7908 = vmatprep.subr.mxu0 0.0
    %7909 = vmatpush1.xpose.msra.mxu0 0.0
    %7910 = vmatprep.subr.mxu0 0.0
    %7911 = vmatpush1.xpose.msra.mxu0 0.0
    %7912 = vmatprep.subr.mxu0 0.0
    %7913 = vmatpush1.xpose.msra.mxu0 0.0
    %7914 = vmatprep.subr.mxu0 0.0
    %7915 = vmatpush1.xpose.msra.mxu0 0.0
    %7916 = vmatprep.subr.mxu0 0.0
    %7917 = vmatpush1.xpose.msra.mxu0 0.0
    %7918 = vmatprep.subr.mxu0 0.0
    %7919 = vmatpush1.xpose.msra.mxu0 0.0
    %7920 = vmatprep.mubr.f32.mxu0 0.0
    %7921 = vmatmul.mubr.f32.gmra.mrb[0].mxu0 %v7842
    %v7922 = vpop.f32.mrb[0].mxu0
    %v7923 = vadd.f32 0.0, %v7922
    %v7924 = vpop.f32.mrb[0].mxu0
    %7925 = vmatprep.mubr.f32.mxu0 0.0
    %7926 = vmatmul.mubr.f32.gmra.mrb[0].mxu0 %v7845
    %v7927 = vpop.f32.mrb[0].mxu0
    %v7928 = vadd.f32 0.0, %v7927
    %v7929 = vpop.f32.mrb[0].mxu0
    %7930 = vdwg.mxu0
    %v7931 = vmul.f32 %v7923, 0.25
    %v7932 = vmul.f32 %v7928, 0.25
    %v7933 = vsel %vm114, %v7931, -inf
    %v7934 = vsel %vm115, %v7932, -inf
    %v7935 = vsel %vm313, %v7933, -inf
    %7936 = vmax.xlane.f32.xlu0 %v7935
    %v7937 = vpop.xlane.xlu0 %7936
    %v7938 = vsel %vm313, %v7934, -inf
    %7939 = vmax.xlane.f32.xlu0 %v7938
    %v7940 = vpop.xlane.xlu0 %7939
    %v7941 = vsub.f32 %v7933, %v7937
    %v7942 = vsub.f32 %v7934, %v7940
    %v7943 = vmul.f32 %v7941, 1.442695
    %v7944 = vpow.pop %v7943
    %v7945 = vmul.f32 %v7942, 1.442695
    %v7946 = vpow.pop %v7945
    %v7947 = vsel %vm313, %v7944, 0.0
    %7948 = vadd.xlane.f32.xlu0 %v7947
    %v7949 = vpop.xlane.xlu0 %7948
    %v7950 = vsel %vm313, %v7946, 0.0
    %7951 = vadd.xlane.f32.xlu0 %v7950
    %v7952 = vpop.xlane.xlu0 %7951
    %v7953 = vrcp.pop %v7949
    %v7954 = vmul.f32 %v7944, %v7953
    %v7955 = vrcp.pop %v7952
    %v7956 = vmul.f32 %v7946, %v7955
    %7957 = vrot.lane.b32.xlu0 %v7823, 96
    %v7958 = vpop.permute.xlu0 %7957
    %7959 = vrot.lane.b32.xlu0 %v7826, 96
    %v7960 = vpop.permute.xlu0 %7959
    %7961 = vrot.lane.b32.xlu0 %v7831, 96
    %v7962 = vpop.permute.xlu0 %7961
    %v7966 = vsel %vm313, %v7954, 0
    %v7969 = vsel %vm313, %v7956, 0
    %v7971 = vsel %vm365, %v7962, 0
    %7973 = vmatprep.subr.mxu0 0.0
    %7974 = vmatpush1.msra.mxu0 %v7958
    %7975 = vmatprep.subr.mxu0 0.0
    %7976 = vmatpush1.msra.mxu0 %v7960
    %7977 = vmatprep.subr.mxu0 0.0
    %7978 = vmatpush1.msra.mxu0 %v7971
    %7979 = vmatprep.subr.mxu0 0.0
    %7980 = vmatpush1.msra.mxu0 0.0
    %7981 = vmatprep.subr.mxu0 0.0
    %7982 = vmatpush1.msra.mxu0 0.0
    %7983 = vmatprep.subr.mxu0 0.0
    %7984 = vmatpush1.msra.mxu0 0.0
    %7985 = vmatprep.subr.mxu0 0.0
    %7986 = vmatpush1.msra.mxu0 0.0
    %7987 = vmatprep.subr.mxu0 0.0
    %7988 = vmatpush1.msra.mxu0 0.0
    %7989 = vmatprep.subr.mxu0 0.0
    %7990 = vmatpush1.msra.mxu0 0.0
    %7991 = vmatprep.subr.mxu0 0.0
    %7992 = vmatpush1.msra.mxu0 0.0
    %7993 = vmatprep.subr.mxu0 0.0
    %7994 = vmatpush1.msra.mxu0 0.0
    %7995 = vmatprep.subr.mxu0 0.0
    %7996 = vmatpush1.msra.mxu0 0.0
    %7997 = vmatprep.subr.mxu0 0.0
    %7998 = vmatpush1.msra.mxu0 0.0
    %7999 = vmatprep.subr.mxu0 0.0
    %8000 = vmatpush1.msra.mxu0 0.0
    %8001 = vmatprep.subr.mxu0 0.0
    %8002 = vmatpush1.msra.mxu0 0.0
    %8003 = vmatprep.subr.mxu0 0.0
    %8004 = vmatpush1.msra.mxu0 0.0
    %8005 = vmatprep.subr.mxu0 0.0
    %8006 = vmatpush1.msra.mxu0 0.0
    %8007 = vmatprep.subr.mxu0 0.0
    %8008 = vmatpush1.msra.mxu0 0.0
    %8009 = vmatprep.subr.mxu0 0.0
    %8010 = vmatpush1.msra.mxu0 0.0
    %8011 = vmatprep.subr.mxu0 0.0
    %8012 = vmatpush1.msra.mxu0 0.0
    %8013 = vmatprep.subr.mxu0 0.0
    %8014 = vmatpush1.msra.mxu0 0.0
    %8015 = vmatprep.subr.mxu0 0.0
    %8016 = vmatpush1.msra.mxu0 0.0
    %8017 = vmatprep.subr.mxu0 0.0
    %8018 = vmatpush1.msra.mxu0 0.0
    %8019 = vmatprep.subr.mxu0 0.0
    %8020 = vmatpush1.msra.mxu0 0.0
    %8021 = vmatprep.subr.mxu0 0.0
    %8022 = vmatpush1.msra.mxu0 0.0
    %8023 = vmatprep.subr.mxu0 0.0
    %8024 = vmatpush1.msra.mxu0 0.0
    %8025 = vmatprep.subr.mxu0 0.0
    %8026 = vmatpush1.msra.mxu0 0.0
    %8027 = vmatprep.subr.mxu0 0.0
    %8028 = vmatpush1.msra.mxu0 0.0
    %8029 = vmatprep.subr.mxu0 0.0
    %8030 = vmatpush1.msra.mxu0 0.0
    %8031 = vmatprep.subr.mxu0 0.0
    %8032 = vmatpush1.msra.mxu0 0.0
    %8033 = vmatprep.subr.mxu0 0.0
    %8034 = vmatpush1.msra.mxu0 0.0
    %8035 = vmatprep.subr.mxu0 0.0
    %8036 = vmatpush1.msra.mxu0 0.0
    %8037 = vmatprep.mubr.f32.mxu0 0.0
    %8038 = vmatmul.mubr.f32.gmra.mrb[0].mxu0 %v7966
    %v8039 = vpop.f32.mrb[0].mxu0
    %v8040 = vadd.f32 0.0, %v8039
    %v8041 = vpop.f32.mrb[0].mxu0
    %8042 = vmatprep.mubr.f32.mxu0 0.0
    %8043 = vmatmul.mubr.f32.gmra.mrb[0].mxu0 %v7969
    %v8044 = vpop.f32.mrb[0].mxu0
    %v8045 = vadd.f32 0.0, %v8044
    %v8046 = vpop.f32.mrb[0].mxu0
    %8047 = vdwg.mxu0
    %v8048 = vpack.c.bf16 %v8045, %v8040
    %8049 = vrot.lane.b32.xlu0 %v7773, 112
    %v8050 = vpop.permute.xlu0 %8049
    %8051 = vrot.lane.b32.xlu0 %v7776, 112
    %v8052 = vpop.permute.xlu0 %8051
    %8053 = vrot.lane.b32.xlu0 %v7823, 112
    %v8054 = vpop.permute.xlu0 %8053
    %8055 = vrot.lane.b32.xlu0 %v7826, 112
    %v8056 = vpop.permute.xlu0 %8055
    %8057 = vrot.lane.b32.xlu0 %v7831, 112
    %v8058 = vpop.permute.xlu0 %8057
    %v8059 = vsel %vm214, %v8050, 0
    %v8061 = vsel %vm214, %v8052, 0
    %v8063 = vsel %vm214, %v8054, 0
    %v8065 = vsel %vm214, %v8056, 0
    %v8067 = vsel %vm214, %v8058, 0
    %8069 = vmatprep.subr.mxu0 0.0
    %8070 = vmatpush1.xpose.msra.mxu0 %v8063
    %8071 = vmatprep.subr.mxu0 0.0
    %8072 = vmatpush1.xpose.msra.mxu0 %v8065
    %8073 = vmatprep.subr.mxu0 0.0
    %8074 = vmatpush1.xpose.msra.mxu0 %v8067
    %8075 = vmatprep.subr.mxu0 0.0
    %8076 = vmatpush1.xpose.msra.mxu0 0.0
    %8077 = vmatprep.subr.mxu0 0.0
    %8078 = vmatpush1.xpose.msra.mxu0 0.0
    %8079 = vmatprep.subr.mxu0 0.0
    %8080 = vmatpush1.xpose.msra.mxu0 0.0
    %8081 = vmatprep.subr.mxu0 0.0
    %8082 = vmatpush1.xpose.msra.mxu0 0.0
    %8083 = vmatprep.subr.mxu0 0.0
    %8084 = vmatpush1.xpose.msra.mxu0 0.0
    %8085 = vmatprep.subr.mxu0 0.0
    %8086 = vmatpush1.xpose.msra.mxu0 0.0
    %8087 = vmatprep.subr.mxu0 0.0
    %8088 = vmatpush1.xpose.msra.mxu0 0.0
    %8089 = vmatprep.subr.mxu0 0.0
    %8090 = vmatpush1.xpose.msra.mxu0 0.0
    %8091 = vmatprep.subr.mxu0 0.0
    %8092 = vmatpush1.xpose.msra.mxu0 0.0
    %8093 = vmatprep.subr.mxu0 0.0
    %8094 = vmatpush1.xpose.msra.mxu0 0.0
    %8095 = vmatprep.subr.mxu0 0.0
    %8096 = vmatpush1.xpose.msra.mxu0 0.0
    %8097 = vmatprep.subr.mxu0 0.0
    %8098 = vmatpush1.xpose.msra.mxu0 0.0
    %8099 = vmatprep.subr.mxu0 0.0
    %8100 = vmatpush1.xpose.msra.mxu0 0.0
    %8101 = vmatprep.subr.mxu0 0.0
    %8102 = vmatpush1.xpose.msra.mxu0 0.0
    %8103 = vmatprep.subr.mxu0 0.0
    %8104 = vmatpush1.xpose.msra.mxu0 0.0
    %8105 = vmatprep.subr.mxu0 0.0
    %8106 = vmatpush1.xpose.msra.mxu0 0.0
    %8107 = vmatprep.subr.mxu0 0.0
    %8108 = vmatpush1.xpose.msra.mxu0 0.0
    %8109 = vmatprep.subr.mxu0 0.0
    %8110 = vmatpush1.xpose.msra.mxu0 0.0
    %8111 = vmatprep.subr.mxu0 0.0
    %8112 = vmatpush1.xpose.msra.mxu0 0.0
    %8113 = vmatprep.subr.mxu0 0.0
    %8114 = vmatpush1.xpose.msra.mxu0 0.0
    %8115 = vmatprep.subr.mxu0 0.0
    %8116 = vmatpush1.xpose.msra.mxu0 0.0
    %8117 = vmatprep.subr.mxu0 0.0
    %8118 = vmatpush1.xpose.msra.mxu0 0.0
    %8119 = vmatprep.subr.mxu0 0.0
    %8120 = vmatpush1.xpose.msra.mxu0 0.0
    %8121 = vmatprep.subr.mxu0 0.0
    %8122 = vmatpush1.xpose.msra.mxu0 0.0
    %8123 = vmatprep.subr.mxu0 0.0
    %8124 = vmatpush1.xpose.msra.mxu0 0.0
    %8125 = vmatprep.subr.mxu0 0.0
    %8126 = vmatpush1.xpose.msra.mxu0 0.0
    %8127 = vmatprep.subr.mxu0 0.0
    %8128 = vmatpush1.xpose.msra.mxu0 0.0
    %8129 = vmatprep.subr.mxu0 0.0
    %8130 = vmatpush1.xpose.msra.mxu0 0.0
    %8131 = vmatprep.subr.mxu0 0.0
    %8132 = vmatpush1.xpose.msra.mxu0 0.0
    %8133 = vmatprep.mubr.f32.mxu0 0.0
    %8134 = vmatmul.mubr.f32.gmra.mrb[0].mxu0 %v8059
    %v8135 = vpop.f32.mrb[0].mxu0
    %v8136 = vadd.f32 0.0, %v8135
    %v8137 = vpop.f32.mrb[0].mxu0
    %8138 = vmatprep.mubr.f32.mxu0 0.0
    %8139 = vmatmul.mubr.f32.gmra.mrb[0].mxu0 %v8061
    %v8140 = vpop.f32.mrb[0].mxu0
    %v8141 = vadd.f32 0.0, %v8140
    %v8142 = vpop.f32.mrb[0].mxu0
    %8143 = vdwg.mxu0
    %v8144 = vmul.f32 %v8136, 0.25
    %v8145 = vmul.f32 %v8141, 0.25
    %v8146 = vsel %vm114, %v8144, -inf
    %v8147 = vsel %vm115, %v8145, -inf
    %v8148 = vsel %vm313, %v8146, -inf
    %8149 = vmax.xlane.f32.xlu0 %v8148
    %v8150 = vpop.xlane.xlu0 %8149
    %v8151 = vsel %vm313, %v8147, -inf
    %8152 = vmax.xlane.f32.xlu0 %v8151
    %v8153 = vpop.xlane.xlu0 %8152
    %v8154 = vsub.f32 %v8146, %v8150
    %v8155 = vsub.f32 %v8147, %v8153
    %v8156 = vmul.f32 %v8154, 1.442695
    %v8157 = vpow.pop %v8156
    %v8158 = vmul.f32 %v8155, 1.442695
    %v8159 = vpow.pop %v8158
    %v8160 = vsel %vm313, %v8157, 0.0
    %8161 = vadd.xlane.f32.xlu0 %v8160
    %v8162 = vpop.xlane.xlu0 %8161
    %v8163 = vsel %vm313, %v8159, 0.0
    %8164 = vadd.xlane.f32.xlu0 %v8163
    %v8165 = vpop.xlane.xlu0 %8164
    %v8166 = vrcp.pop %v8162
    %v8167 = vmul.f32 %v8157, %v8166
    %v8168 = vrcp.pop %v8165
    %v8169 = vmul.f32 %v8159, %v8168
    %8170 = vrot.lane.b32.xlu0 %v7823, 80
    %v8171 = vpop.permute.xlu0 %8170
    %8172 = vrot.lane.b32.xlu0 %v7826, 80
    %v8173 = vpop.permute.xlu0 %8172
    %8174 = vrot.lane.b32.xlu0 %v7831, 80
    %v8175 = vpop.permute.xlu0 %8174
    %v8179 = vsel %vm313, %v8167, 0
    %v8182 = vsel %vm313, %v8169, 0
    %v8184 = vsel %vm365, %v8175, 0
    %8186 = vmatprep.subr.mxu0 0.0
    %8187 = vmatpush1.msra.mxu0 %v8171
    %8188 = vmatprep.subr.mxu0 0.0
    %8189 = vmatpush1.msra.mxu0 %v8173
    %8190 = vmatprep.subr.mxu0 0.0
    %8191 = vmatpush1.msra.mxu0 %v8184
    %8192 = vmatprep.subr.mxu0 0.0
    %8193 = vmatpush1.msra.mxu0 0.0
    %8194 = vmatprep.subr.mxu0 0.0
    %8195 = vmatpush1.msra.mxu0 0.0
    %8196 = vmatprep.subr.mxu0 0.0
    %8197 = vmatpush1.msra.mxu0 0.0
    %8198 = vmatprep.subr.mxu0 0.0
    %8199 = vmatpush1.msra.mxu0 0.0
    %8200 = vmatprep.subr.mxu0 0.0
    %8201 = vmatpush1.msra.mxu0 0.0
    %8202 = vmatprep.subr.mxu0 0.0
    %8203 = vmatpush1.msra.mxu0 0.0
    %8204 = vmatprep.subr.mxu0 0.0
    %8205 = vmatpush1.msra.mxu0 0.0
    %8206 = vmatprep.subr.mxu0 0.0
    %8207 = vmatpush1.msra.mxu0 0.0
    %8208 = vmatprep.subr.mxu0 0.0
    %8209 = vmatpush1.msra.mxu0 0.0
    %8210 = vmatprep.subr.mxu0 0.0
    %8211 = vmatpush1.msra.mxu0 0.0
    %8212 = vmatprep.subr.mxu0 0.0
    %8213 = vmatpush1.msra.mxu0 0.0
    %8214 = vmatprep.subr.mxu0 0.0
    %8215 = vmatpush1.msra.mxu0 0.0
    %8216 = vmatprep.subr.mxu0 0.0
    %8217 = vmatpush1.msra.mxu0 0.0
    %8218 = vmatprep.subr.mxu0 0.0
    %8219 = vmatpush1.msra.mxu0 0.0
    %8220 = vmatprep.subr.mxu0 0.0
    %8221 = vmatpush1.msra.mxu0 0.0
    %8222 = vmatprep.subr.mxu0 0.0
    %8223 = vmatpush1.msra.mxu0 0.0
    %8224 = vmatprep.subr.mxu0 0.0
    %8225 = vmatpush1.msra.mxu0 0.0
    %8226 = vmatprep.subr.mxu0 0.0
    %8227 = vmatpush1.msra.mxu0 0.0
    %8228 = vmatprep.subr.mxu0 0.0
    %8229 = vmatpush1.msra.mxu0 0.0
    %8230 = vmatprep.subr.mxu0 0.0
    %8231 = vmatpush1.msra.mxu0 0.0
    %8232 = vmatprep.subr.mxu0 0.0
    %8233 = vmatpush1.msra.mxu0 0.0
    %8234 = vmatprep.subr.mxu0 0.0
    %8235 = vmatpush1.msra.mxu0 0.0
    %8236 = vmatprep.subr.mxu0 0.0
    %8237 = vmatpush1.msra.mxu0 0.0
    %8238 = vmatprep.subr.mxu0 0.0
    %8239 = vmatpush1.msra.mxu0 0.0
    %8240 = vmatprep.subr.mxu0 0.0
    %8241 = vmatpush1.msra.mxu0 0.0
    %8242 = vmatprep.subr.mxu0 0.0
    %8243 = vmatpush1.msra.mxu0 0.0
    %8244 = vmatprep.subr.mxu0 0.0
    %8245 = vmatpush1.msra.mxu0 0.0
    %8246 = vmatprep.subr.mxu0 0.0
    %8247 = vmatpush1.msra.mxu0 0.0
    %8248 = vmatprep.subr.mxu0 0.0
    %8249 = vmatpush1.msra.mxu0 0.0
    %8250 = vmatprep.mubr.f32.mxu0 0.0
    %8251 = vmatmul.mubr.f32.gmra.mrb[0].mxu0 %v8179
    %v8252 = vpop.f32.mrb[0].mxu0
    %v8253 = vadd.f32 0.0, %v8252
    %v8254 = vpop.f32.mrb[0].mxu0
    %8255 = vmatprep.mubr.f32.mxu0 0.0
    %8256 = vmatmul.mubr.f32.gmra.mrb[0].mxu0 %v8182
    %v8257 = vpop.f32.mrb[0].mxu0
    %v8258 = vadd.f32 0.0, %v8257
    %v8259 = vpop.f32.mrb[0].mxu0
    %8260 = vdwg.mxu0
    %v8261 = vpack.c.bf16 %v8258, %v8253
    %v8264 = vunpack.c.l.b16 %v7838
    %v8265 = vunpack.c.l.b16 %v7839
    %v8266 = vpack.c.b16 %v8265, %v8264
    %v8269 = vsel %vm214, %v8261, 0
    %8271 = vmatprep.subr.bf16.mxu0 0
    %8272 = vmatpush1.bf16.msra.mxu0 %v8266
    %8273 = vmatprep.subr.bf16.mxu0 0
    %8274 = vmatpush1.bf16.msra.mxu0 0
    %8275 = vmatprep.subr.bf16.mxu0 0
    %8276 = vmatpush1.bf16.msra.mxu0 0
    %8277 = vmatprep.subr.bf16.mxu0 0
    %8278 = vmatpush1.bf16.msra.mxu0 0
    %8279 = vmatprep.subr.bf16.mxu0 0
    %8280 = vmatpush1.bf16.msra.mxu0 0
    %8281 = vmatprep.subr.bf16.mxu0 0
    %8282 = vmatpush1.bf16.msra.mxu0 0
    %8283 = vmatprep.subr.bf16.mxu0 0
    %8284 = vmatpush1.bf16.msra.mxu0 0
    %8285 = vmatprep.subr.bf16.mxu0 0
    %8286 = vmatpush1.bf16.msra.mxu0 0
    %8287 = vmatprep.subr.bf16.mxu0 0
    %8288 = vmatpush1.bf16.msra.mxu0 0
    %8289 = vmatprep.subr.bf16.mxu0 0
    %8290 = vmatpush1.bf16.msra.mxu0 0
    %8291 = vmatprep.subr.bf16.mxu0 0
    %8292 = vmatpush1.bf16.msra.mxu0 0
    %8293 = vmatprep.subr.bf16.mxu0 0
    %8294 = vmatpush1.bf16.msra.mxu0 0
    %8295 = vmatprep.subr.bf16.mxu0 0
    %8296 = vmatpush1.bf16.msra.mxu0 0
    %8297 = vmatprep.subr.bf16.mxu0 0
    %8298 = vmatpush1.bf16.msra.mxu0 0
    %8299 = vmatprep.subr.bf16.mxu0 0
    %8300 = vmatpush1.bf16.msra.mxu0 0
    %8301 = vmatprep.subr.bf16.mxu0 0
    %8302 = vmatpush1.bf16.msra.mxu0 0
    %8303 = vmatprep.mubr.bf16.mxu0 0
    %8304 = vmatmul.mubr.bf16.gmra.mrb[0].mxu0 %v8269
    %v8305 = vpop.f32.mrb[0].mxu0
    %v8306 = vadd.f32 0.0, %v8305
    %v8307 = vpop.f32.mrb[0].mxu0
    %v8308 = vpop.f32.mrb[0].mxu0
    %v8309 = vadd.f32 0.0, %v8308
    %v8310 = vpop.f32.mrb[0].mxu0
    %8311 = vdwg.mxu0
    %v8314 = vunpack.c.l.b16 %v7836
    %v8315 = vunpack.c.l.b16 %v7837
    %v8316 = vpack.c.b16 %v8315, %v8314
    %v8319 = vsel %vm214, %v8048, 0
    %8321 = vmatprep.subr.bf16.mxu0 0
    %8322 = vmatpush1.bf16.msra.mxu0 %v8316
    %8323 = vmatprep.subr.bf16.mxu0 0
    %8324 = vmatpush1.bf16.msra.mxu0 0
    %8325 = vmatprep.subr.bf16.mxu0 0
    %8326 = vmatpush1.bf16.msra.mxu0 0
    %8327 = vmatprep.subr.bf16.mxu0 0
    %8328 = vmatpush1.bf16.msra.mxu0 0
    %8329 = vmatprep.subr.bf16.mxu0 0
    %8330 = vmatpush1.bf16.msra.mxu0 0
    %8331 = vmatprep.subr.bf16.mxu0 0
    %8332 = vmatpush1.bf16.msra.mxu0 0
    %8333 = vmatprep.subr.bf16.mxu0 0
    %8334 = vmatpush1.bf16.msra.mxu0 0
    %8335 = vmatprep.subr.bf16.mxu0 0
    %8336 = vmatpush1.bf16.msra.mxu0 0
    %8337 = vmatprep.subr.bf16.mxu0 0
    %8338 = vmatpush1.bf16.msra.mxu0 0
    %8339 = vmatprep.subr.bf16.mxu0 0
    %8340 = vmatpush1.bf16.msra.mxu0 0
    %8341 = vmatprep.subr.bf16.mxu0 0
    %8342 = vmatpush1.bf16.msra.mxu0 0
    %8343 = vmatprep.subr.bf16.mxu0 0
    %8344 = vmatpush1.bf16.msra.mxu0 0
    %8345 = vmatprep.subr.bf16.mxu0 0
    %8346 = vmatpush1.bf16.msra.mxu0 0
    %8347 = vmatprep.subr.bf16.mxu0 0
    %8348 = vmatpush1.bf16.msra.mxu0 0
    %8349 = vmatprep.subr.bf16.mxu0 0
    %8350 = vmatpush1.bf16.msra.mxu0 0
    %8351 = vmatprep.subr.bf16.mxu0 0
    %8352 = vmatpush1.bf16.msra.mxu0 0
    %8353 = vmatprep.mubr.bf16.mxu0 0
    %8354 = vmatmul.mubr.bf16.gmra.mrb[0].mxu0 %v8319
    %v8355 = vpop.f32.mrb[0].mxu0
    %v8356 = vadd.f32 %v8306, %v8355
    %v8357 = vpop.f32.mrb[0].mxu0
    %v8358 = vpop.f32.mrb[0].mxu0
    %v8359 = vadd.f32 %v8309, %v8358
    %v8360 = vpop.f32.mrb[0].mxu0
    %8361 = vdwg.mxu0
    %v8363 = vlaneseq
    %v8364 = vshrl.u32 %v8363, 7
    %v8365 = vsub.s32 0, %v8364
    %v8366 = vrot.slane %v7840, %v8365
    %v8368 = vadd.f32 %v8356, %v8366
    %v8369 = vadd.f32 %v8359, %v8366
    %v8370 = vadd.f32 %v7709, %v8368
    %v8371 = vadd.f32 %v7710, %v8369
    %v8372 = vld [vmem:[#allocation7 + $0x60] sm:$0x1]
    %v8373 = vld [vmem:[#allocation7 + $0x61] sm:$0x1]
    %v8374 = vsel %vm145, %v8370, 0.0
    %8375 = vadd.xlane.f32.xlu0 %v8374
    %v8376 = vpop.xlane.xlu0 %8375
    %v8377 = vsel %vm145, %v8371, 0.0
    %8378 = vadd.xlane.f32.xlu0 %v8377
    %v8379 = vpop.xlane.xlu0 %8378
    %v8380 = vmul.f32 %v8376, %v838
    %v8381 = vmul.f32 %v8379, %v838
    %v8382 = vsub.f32 %v8370, %v8380
    %v8383 = vsub.f32 %v8371, %v8381
    %v8384 = vmul.f32 %v8382, %v8382
    %v8385 = vmul.f32 %v8383, %v8383
    %v8386 = vsel %vm145, %v8384, 0.0
    %8387 = vadd.xlane.f32.xlu0 %v8386
    %v8388 = vpop.xlane.xlu0 %8387
    %v8389 = vsel %vm145, %v8385, 0.0
    %8390 = vadd.xlane.f32.xlu0 %v8389
    %v8391 = vpop.xlane.xlu0 %8390
    %v8392 = vmul.f32 %v8388, %v838
    %v8393 = vmul.f32 %v8391, %v838
    %v8394 = vadd.f32 %v8392, 1e-05
    %v8395 = vadd.f32 %v8393, 1e-05
    %v8396 = vrsqrt.pop %v8394
    %v8397 = vrsqrt.pop %v8395
    %v8398 = vmul.f32 %v8382, %v8396
    %v8399 = vmul.f32 %v8383, %v8397
    %v8401 = vlaneseq
    %v8402 = vshrl.u32 %v8401, 7
    %v8403 = vsub.s32 0, %v8402
    %v8404 = vrot.slane %v8372, %v8403
    %v8406 = vmul.f32 %v8398, %v8404
    %v8407 = vmul.f32 %v8399, %v8404
    %v8409 = vlaneseq
    %v8410 = vshrl.u32 %v8409, 7
    %v8411 = vsub.s32 0, %v8410
    %v8412 = vrot.slane %v8373, %v8411
    %v8414 = vadd.f32 %v8406, %v8412
    %v8415 = vadd.f32 %v8407, %v8412
    %v8416 = vld [vmem:[#allocation5 + $0x1b0] sm:$0xff]
    %v8417 = vld [vmem:[#allocation5 + $0x1b8] sm:$0xff]
    %v8418 = vld [vmem:[#allocation5 + $0x1c0] sm:$0xff]
    %v8419 = vld [vmem:[#allocation5 + $0x1c8] sm:$0xff]
    %v8420 = vld [vmem:[#allocation5 + $0x1d0] sm:$0xff]
    %v8421 = vld [vmem:[#allocation5 + $0x1d8] sm:$0xff]
    %v8422 = vld [vmem:[#allocation5 + $0x1e0] sm:$0xff]
    %v8423 = vld [vmem:[#allocation5 + $0x1e8] sm:$0xff]
    %v8424 = vld [vmem:[#allocation5 + $0x3e0] sm:$0xff]
    %v8425 = vld [vmem:[#allocation5 + $0x3e8] sm:$0xff]
    %v8426 = vld [vmem:[#allocation5 + $0x3f0] sm:$0xff]
    %v8427 = vld [vmem:[#allocation5 + $0x3f8] sm:$0xff]
    %v8428 = vld [vmem:[#allocation5 + $0x400] sm:$0xff]
    %v8429 = vld [vmem:[#allocation5 + $0x408] sm:$0xff]
    %v8430 = vld [vmem:[#allocation5 + $0x410] sm:$0xff]
    %v8431 = vld [vmem:[#allocation5 + $0x418] sm:$0xff]
    %v8432 = vld [vmem:[#allocation5 + $0x610] sm:$0xff]
    %v8433 = vld [vmem:[#allocation5 + $0x618] sm:$0xff]
    %v8434 = vld [vmem:[#allocation5 + $0x620] sm:$0xff]
    %v8435 = vld [vmem:[#allocation5 + $0x628] sm:$0xff]
    %v8436 = vld [vmem:[#allocation5 + $0x630] sm:$0xff]
    %v8437 = vld [vmem:[#allocation5 + $0x638] sm:$0xff]
    %v8438 = vld [vmem:[#allocation5 + $0x640] sm:$0xff]
    %v8439 = vld [vmem:[#allocation5 + $0x648] sm:$0xff]
    %v8440 = vld [vmem:[#allocation5 + $0x840] sm:$0xff]
    %v8441 = vld [vmem:[#allocation5 + $0x848] sm:$0xff]
    %v8442 = vld [vmem:[#allocation5 + $0x850] sm:$0xff]
    %v8443 = vld [vmem:[#allocation5 + $0x858] sm:$0xff]
    %v8444 = vld [vmem:[#allocation5 + $0x860] sm:$0xff]
    %v8445 = vld [vmem:[#allocation5 + $0x868] sm:$0xff]
    %v8446 = vld [vmem:[#allocation5 + $0x870] sm:$0xff]
    %v8447 = vld [vmem:[#allocation5 + $0x878] sm:$0xff]
    %v8448 = vld [vmem:[#allocation7 + $0x4d] sm:$0xff]
    %v8449 = vld [vmem:[#allocation7 + $0x55] sm:$0xff]
    %v8450 = vld [vmem:[#allocation5 + $0x1f0] sm:$0xff]
    %v8451 = vld [vmem:[#allocation5 + $0x1f8] sm:$0xff]
    %v8452 = vld [vmem:[#allocation5 + $0x200] sm:$0xff]
    %v8453 = vld [vmem:[#allocation5 + $0x208] sm:$0xff]
    %v8454 = vld [vmem:[#allocation5 + $0x210] sm:$0xff]
    %v8455 = vld [vmem:[#allocation5 + $0x218] sm:$0xff]
    %v8456 = vld [vmem:[#allocation5 + $0x220] sm:$0xff]
    %v8457 = vld [vmem:[#allocation5 + $0x228] sm:$0xff]
    %v8458 = vld [vmem:[#allocation5 + $0x420] sm:$0xff]
    %v8459 = vld [vmem:[#allocation5 + $0x428] sm:$0xff]
    %v8460 = vld [vmem:[#allocation5 + $0x430] sm:$0xff]
    %v8461 = vld [vmem:[#allocation5 + $0x438] sm:$0xff]
    %v8462 = vld [vmem:[#allocation5 + $0x440] sm:$0xff]
    %v8463 = vld [vmem:[#allocation5 + $0x448] sm:$0xff]
    %v8464 = vld [vmem:[#allocation5 + $0x450] sm:$0xff]
    %v8465 = vld [vmem:[#allocation5 + $0x458] sm:$0xff]
    %v8466 = vld [vmem:[#allocation5 + $0x650] sm:$0xff]
    %v8467 = vld [vmem:[#allocation5 + $0x658] sm:$0xff]
    %v8468 = vld [vmem:[#allocation5 + $0x660] sm:$0xff]
    %v8469 = vld [vmem:[#allocation5 + $0x668] sm:$0xff]
    %v8470 = vld [vmem:[#allocation5 + $0x670] sm:$0xff]
    %v8471 = vld [vmem:[#allocation5 + $0x678] sm:$0xff]
    %v8472 = vld [vmem:[#allocation5 + $0x680] sm:$0xff]
    %v8473 = vld [vmem:[#allocation5 + $0x688] sm:$0xff]
    %v8474 = vld [vmem:[#allocation5 + $0x880] sm:$0xff]
    %v8475 = vld [vmem:[#allocation5 + $0x888] sm:$0xff]
    %v8476 = vld [vmem:[#allocation5 + $0x890] sm:$0xff]
    %v8477 = vld [vmem:[#allocation5 + $0x898] sm:$0xff]
    %v8478 = vld [vmem:[#allocation5 + $0x8a0] sm:$0xff]
    %v8479 = vld [vmem:[#allocation5 + $0x8a8] sm:$0xff]
    %v8480 = vld [vmem:[#allocation5 + $0x8b0] sm:$0xff]
    %v8481 = vld [vmem:[#allocation5 + $0x8b8] sm:$0xff]
    %v8482 = vld [vmem:[#allocation7 + $0x5d] sm:$0x1]
    %v8483 = vpack.c.bf16 %v8415, %v8414
    %v8486 = vlaneseq
    %v8487 = vshrl.u32 %v8486, 7
    %v8488 = vsub.s32 0, %v8487
    %v8489 = vrot.slane %v8448, %v8488
    %v8490 = vlaneseq
    %v8491 = vshrl.u32 %v8490, 7
    %v8492 = vsub.s32 1, %v8491
    %v8493 = vrot.slane %v8448, %v8492
    %v8494 = vlaneseq
    %v8495 = vshrl.u32 %v8494, 7
    %v8496 = vsub.s32 2, %v8495
    %v8497 = vrot.slane %v8448, %v8496
    %v8498 = vlaneseq
    %v8499 = vshrl.u32 %v8498, 7
    %v8500 = vsub.s32 3, %v8499
    %v8501 = vrot.slane %v8448, %v8500
    %v8502 = vlaneseq
    %v8503 = vshrl.u32 %v8502, 7
    %v8504 = vsub.s32 4, %v8503
    %v8505 = vrot.slane %v8448, %v8504
    %v8506 = vlaneseq
    %v8507 = vshrl.u32 %v8506, 7
    %v8508 = vsub.s32 5, %v8507
    %v8509 = vrot.slane %v8448, %v8508
    %v8510 = vlaneseq
    %v8511 = vshrl.u32 %v8510, 7
    %v8512 = vsub.s32 6, %v8511
    %v8513 = vrot.slane %v8448, %v8512
    %v8514 = vlaneseq
    %v8515 = vshrl.u32 %v8514, 7
    %v8516 = vsub.s32 7, %v8515
    %v8517 = vrot.slane %v8448, %v8516
    %v8518 = vlaneseq
    %v8519 = vshrl.u32 %v8518, 7
    %v8520 = vsub.s32 0, %v8519
    %v8521 = vrot.slane %v8449, %v8520
    %v8522 = vlaneseq
    %v8523 = vshrl.u32 %v8522, 7
    %v8524 = vsub.s32 1, %v8523
    %v8525 = vrot.slane %v8449, %v8524
    %v8526 = vlaneseq
    %v8527 = vshrl.u32 %v8526, 7
    %v8528 = vsub.s32 2, %v8527
    %v8529 = vrot.slane %v8449, %v8528
    %v8530 = vlaneseq
    %v8531 = vshrl.u32 %v8530, 7
    %v8532 = vsub.s32 3, %v8531
    %v8533 = vrot.slane %v8449, %v8532
    %v8534 = vlaneseq
    %v8535 = vshrl.u32 %v8534, 7
    %v8536 = vsub.s32 4, %v8535
    %v8537 = vrot.slane %v8449, %v8536
    %v8538 = vlaneseq
    %v8539 = vshrl.u32 %v8538, 7
    %v8540 = vsub.s32 5, %v8539
    %v8541 = vrot.slane %v8449, %v8540
    %v8542 = vlaneseq
    %v8543 = vshrl.u32 %v8542, 7
    %v8544 = vsub.s32 6, %v8543
    %v8545 = vrot.slane %v8449, %v8544
    %v8546 = vlaneseq
    %v8547 = vshrl.u32 %v8546, 7
    %v8548 = vsub.s32 7, %v8547
    %v8549 = vrot.slane %v8449, %v8548
    %v8598 = vunpack.c.l.b16 %v8416
    %v8599 = vunpack.c.h.b16 %v8416
    %v8600 = vunpack.c.l.b16 %v8417
    %v8601 = vunpack.c.h.b16 %v8417
    %v8602 = vunpack.c.l.b16 %v8418
    %v8603 = vunpack.c.h.b16 %v8418
    %v8604 = vunpack.c.l.b16 %v8419
    %v8605 = vunpack.c.h.b16 %v8419
    %v8606 = vunpack.c.l.b16 %v8420
    %v8607 = vunpack.c.h.b16 %v8420
    %v8608 = vunpack.c.l.b16 %v8421
    %v8609 = vunpack.c.h.b16 %v8421
    %v8610 = vunpack.c.l.b16 %v8422
    %v8611 = vunpack.c.h.b16 %v8422
    %v8612 = vunpack.c.l.b16 %v8423
    %v8613 = vunpack.c.h.b16 %v8423
    %v8614 = vunpack.c.l.b16 %v8424
    %v8615 = vunpack.c.h.b16 %v8424
    %v8616 = vunpack.c.l.b16 %v8425
    %v8617 = vunpack.c.h.b16 %v8425
    %v8618 = vunpack.c.l.b16 %v8426
    %v8619 = vunpack.c.h.b16 %v8426
    %v8620 = vunpack.c.l.b16 %v8427
    %v8621 = vunpack.c.h.b16 %v8427
    %v8622 = vunpack.c.l.b16 %v8428
    %v8623 = vunpack.c.h.b16 %v8428
    %v8624 = vunpack.c.l.b16 %v8429
    %v8625 = vunpack.c.h.b16 %v8429
    %v8626 = vunpack.c.l.b16 %v8430
    %v8627 = vunpack.c.h.b16 %v8430
    %v8628 = vunpack.c.l.b16 %v8431
    %v8629 = vunpack.c.h.b16 %v8431
    %v8630 = vunpack.c.l.b16 %v8432
    %v8631 = vunpack.c.h.b16 %v8432
    %v8632 = vunpack.c.l.b16 %v8433
    %v8633 = vunpack.c.h.b16 %v8433
    %v8634 = vunpack.c.l.b16 %v8434
    %v8635 = vunpack.c.h.b16 %v8434
    %v8636 = vunpack.c.l.b16 %v8435
    %v8637 = vunpack.c.h.b16 %v8435
    %v8638 = vunpack.c.l.b16 %v8436
    %v8639 = vunpack.c.h.b16 %v8436
    %v8640 = vunpack.c.l.b16 %v8437
    %v8641 = vunpack.c.h.b16 %v8437
    %v8642 = vunpack.c.l.b16 %v8438
    %v8643 = vunpack.c.h.b16 %v8438
    %v8644 = vunpack.c.l.b16 %v8439
    %v8645 = vunpack.c.h.b16 %v8439
    %v8646 = vunpack.c.l.b16 %v8440
    %v8647 = vunpack.c.h.b16 %v8440
    %v8648 = vunpack.c.l.b16 %v8441
    %v8649 = vunpack.c.h.b16 %v8441
    %v8650 = vunpack.c.l.b16 %v8442
    %v8651 = vunpack.c.h.b16 %v8442
    %v8652 = vunpack.c.l.b16 %v8443
    %v8653 = vunpack.c.h.b16 %v8443
    %v8654 = vunpack.c.l.b16 %v8444
    %v8655 = vunpack.c.h.b16 %v8444
    %v8656 = vunpack.c.l.b16 %v8445
    %v8657 = vunpack.c.h.b16 %v8445
    %v8658 = vunpack.c.l.b16 %v8446
    %v8659 = vunpack.c.h.b16 %v8446
    %v8660 = vunpack.c.l.b16 %v8447
    %v8661 = vunpack.c.h.b16 %v8447
    %v8662 = vpack.c.b16 %v8614, %v8598
    %v8663 = vpack.c.b16 %v8615, %v8599
    %v8664 = vpack.c.b16 %v8616, %v8600
    %v8665 = vpack.c.b16 %v8617, %v8601
    %v8666 = vpack.c.b16 %v8618, %v8602
    %v8667 = vpack.c.b16 %v8619, %v8603
    %v8668 = vpack.c.b16 %v8620, %v8604
    %v8669 = vpack.c.b16 %v8621, %v8605
    %v8670 = vpack.c.b16 %v8622, %v8606
    %v8671 = vpack.c.b16 %v8623, %v8607
    %v8672 = vpack.c.b16 %v8624, %v8608
    %v8673 = vpack.c.b16 %v8625, %v8609
    %v8674 = vpack.c.b16 %v8626, %v8610
    %v8675 = vpack.c.b16 %v8627, %v8611
    %v8676 = vpack.c.b16 %v8628, %v8612
    %v8677 = vpack.c.b16 %v8629, %v8613
    %v8678 = vpack.c.b16 %v8646, %v8630
    %v8679 = vpack.c.b16 %v8647, %v8631
    %v8680 = vpack.c.b16 %v8648, %v8632
    %v8681 = vpack.c.b16 %v8649, %v8633
    %v8682 = vpack.c.b16 %v8650, %v8634
    %v8683 = vpack.c.b16 %v8651, %v8635
    %v8684 = vpack.c.b16 %v8652, %v8636
    %v8685 = vpack.c.b16 %v8653, %v8637
    %v8686 = vpack.c.b16 %v8654, %v8638
    %v8687 = vpack.c.b16 %v8655, %v8639
    %v8688 = vpack.c.b16 %v8656, %v8640
    %v8689 = vpack.c.b16 %v8657, %v8641
    %v8690 = vpack.c.b16 %v8658, %v8642
    %v8691 = vpack.c.b16 %v8659, %v8643
    %v8692 = vpack.c.b16 %v8660, %v8644
    %v8693 = vpack.c.b16 %v8661, %v8645
    %v8727 = vsel %vm145, %v8483, 0
    %8729 = vmatprep.subr.bf16.mxu0 %v8663
    %8730 = vmatpush1.bf16.msra.mxu0 %v8662
    %8731 = vmatprep.subr.bf16.mxu0 %v8679
    %8732 = vmatpush1.bf16.msra.mxu0 %v8678
    %8733 = vmatprep.subr.bf16.mxu0 0
    %8734 = vmatpush1.bf16.msra.mxu0 0
    %8735 = vmatprep.subr.bf16.mxu0 0
    %8736 = vmatpush1.bf16.msra.mxu0 0
    %8737 = vmatprep.subr.bf16.mxu0 0
    %8738 = vmatpush1.bf16.msra.mxu0 0
    %8739 = vmatprep.subr.bf16.mxu0 0
    %8740 = vmatpush1.bf16.msra.mxu0 0
    %8741 = vmatprep.subr.bf16.mxu0 0
    %8742 = vmatpush1.bf16.msra.mxu0 0
    %8743 = vmatprep.subr.bf16.mxu0 0
    %8744 = vmatpush1.bf16.msra.mxu0 0
    %8745 = vmatprep.subr.bf16.mxu0 0
    %8746 = vmatpush1.bf16.msra.mxu0 0
    %8747 = vmatprep.subr.bf16.mxu0 0
    %8748 = vmatpush1.bf16.msra.mxu0 0
    %8749 = vmatprep.subr.bf16.mxu0 0
    %8750 = vmatpush1.bf16.msra.mxu0 0
    %8751 = vmatprep.subr.bf16.mxu0 0
    %8752 = vmatpush1.bf16.msra.mxu0 0
    %8753 = vmatprep.subr.bf16.mxu0 0
    %8754 = vmatpush1.bf16.msra.mxu0 0
    %8755 = vmatprep.subr.bf16.mxu0 0
    %8756 = vmatpush1.bf16.msra.mxu0 0
    %8757 = vmatprep.subr.bf16.mxu0 0
    %8758 = vmatpush1.bf16.msra.mxu0 0
    %8759 = vmatprep.subr.bf16.mxu0 0
    %8760 = vmatpush1.bf16.msra.mxu0 0
    %8761 = vmatprep.mubr.bf16.mxu0 0
    %8762 = vmatmul.mubr.bf16.gmra.mrb[0].mxu0 %v8727
    %v8763 = vpop.f32.mrb[0].mxu0
    %v8764 = vadd.f32 %v8489, %v8763
    %v8765 = vpop.f32.mrb[0].mxu0
    %v8766 = vadd.f32 %v8493, %v8765
    %v8767 = vpop.f32.mrb[0].mxu0
    %v8768 = vadd.f32 %v8489, %v8767
    %v8769 = vpop.f32.mrb[0].mxu0
    %v8770 = vadd.f32 %v8493, %v8769
    %8771 = vdwg.mxu0
    %8772 = vmatprep.subr.bf16.mxu0 %v8665
    %8773 = vmatpush1.bf16.msra.mxu0 %v8664
    %8774 = vmatprep.subr.bf16.mxu0 %v8681
    %8775 = vmatpush1.bf16.msra.mxu0 %v8680
    %8776 = vmatprep.subr.bf16.mxu0 0
    %8777 = vmatpush1.bf16.msra.mxu0 0
    %8778 = vmatprep.subr.bf16.mxu0 0
    %8779 = vmatpush1.bf16.msra.mxu0 0
    %8780 = vmatprep.subr.bf16.mxu0 0
    %8781 = vmatpush1.bf16.msra.mxu0 0
    %8782 = vmatprep.subr.bf16.mxu0 0
    %8783 = vmatpush1.bf16.msra.mxu0 0
    %8784 = vmatprep.subr.bf16.mxu0 0
    %8785 = vmatpush1.bf16.msra.mxu0 0
    %8786 = vmatprep.subr.bf16.mxu0 0
    %8787 = vmatpush1.bf16.msra.mxu0 0
    %8788 = vmatprep.subr.bf16.mxu0 0
    %8789 = vmatpush1.bf16.msra.mxu0 0
    %8790 = vmatprep.subr.bf16.mxu0 0
    %8791 = vmatpush1.bf16.msra.mxu0 0
    %8792 = vmatprep.subr.bf16.mxu0 0
    %8793 = vmatpush1.bf16.msra.mxu0 0
    %8794 = vmatprep.subr.bf16.mxu0 0
    %8795 = vmatpush1.bf16.msra.mxu0 0
    %8796 = vmatprep.subr.bf16.mxu0 0
    %8797 = vmatpush1.bf16.msra.mxu0 0
    %8798 = vmatprep.subr.bf16.mxu0 0
    %8799 = vmatpush1.bf16.msra.mxu0 0
    %8800 = vmatprep.subr.bf16.mxu0 0
    %8801 = vmatpush1.bf16.msra.mxu0 0
    %8802 = vmatprep.subr.bf16.mxu0 0
    %8803 = vmatpush1.bf16.msra.mxu0 0
    %8804 = vmatprep.mubr.bf16.mxu0 0
    %8805 = vmatmul.mubr.bf16.gmra.mrb[0].mxu0 %v8727
    %v8806 = vpop.f32.mrb[0].mxu0
    %v8807 = vadd.f32 %v8497, %v8806
    %v8808 = vpop.f32.mrb[0].mxu0
    %v8809 = vadd.f32 %v8501, %v8808
    %v8810 = vpop.f32.mrb[0].mxu0
    %v8811 = vadd.f32 %v8497, %v8810
    %v8812 = vpop.f32.mrb[0].mxu0
    %v8813 = vadd.f32 %v8501, %v8812
    %8814 = vdwg.mxu0
    %8815 = vmatprep.subr.bf16.mxu0 %v8667
    %8816 = vmatpush1.bf16.msra.mxu0 %v8666
    %8817 = vmatprep.subr.bf16.mxu0 %v8683
    %8818 = vmatpush1.bf16.msra.mxu0 %v8682
    %8819 = vmatprep.subr.bf16.mxu0 0
    %8820 = vmatpush1.bf16.msra.mxu0 0
    %8821 = vmatprep.subr.bf16.mxu0 0
    %8822 = vmatpush1.bf16.msra.mxu0 0
    %8823 = vmatprep.subr.bf16.mxu0 0
    %8824 = vmatpush1.bf16.msra.mxu0 0
    %8825 = vmatprep.subr.bf16.mxu0 0
    %8826 = vmatpush1.bf16.msra.mxu0 0
    %8827 = vmatprep.subr.bf16.mxu0 0
    %8828 = vmatpush1.bf16.msra.mxu0 0
    %8829 = vmatprep.subr.bf16.mxu0 0
    %8830 = vmatpush1.bf16.msra.mxu0 0
    %8831 = vmatprep.subr.bf16.mxu0 0
    %8832 = vmatpush1.bf16.msra.mxu0 0
    %8833 = vmatprep.subr.bf16.mxu0 0
    %8834 = vmatpush1.bf16.msra.mxu0 0
    %8835 = vmatprep.subr.bf16.mxu0 0
    %8836 = vmatpush1.bf16.msra.mxu0 0
    %8837 = vmatprep.subr.bf16.mxu0 0
    %8838 = vmatpush1.bf16.msra.mxu0 0
    %8839 = vmatprep.subr.bf16.mxu0 0
    %8840 = vmatpush1.bf16.msra.mxu0 0
    %8841 = vmatprep.subr.bf16.mxu0 0
    %8842 = vmatpush1.bf16.msra.mxu0 0
    %8843 = vmatprep.subr.bf16.mxu0 0
    %8844 = vmatpush1.bf16.msra.mxu0 0
    %8845 = vmatprep.subr.bf16.mxu0 0
    %8846 = vmatpush1.bf16.msra.mxu0 0
    %8847 = vmatprep.mubr.bf16.mxu0 0
    %8848 = vmatmul.mubr.bf16.gmra.mrb[0].mxu0 %v8727
    %v8849 = vpop.f32.mrb[0].mxu0
    %v8850 = vadd.f32 %v8505, %v8849
    %v8851 = vpop.f32.mrb[0].mxu0
    %v8852 = vadd.f32 %v8509, %v8851
    %v8853 = vpop.f32.mrb[0].mxu0
    %v8854 = vadd.f32 %v8505, %v8853
    %v8855 = vpop.f32.mrb[0].mxu0
    %v8856 = vadd.f32 %v8509, %v8855
    %8857 = vdwg.mxu0
    %8858 = vmatprep.subr.bf16.mxu0 %v8669
    %8859 = vmatpush1.bf16.msra.mxu0 %v8668
    %8860 = vmatprep.subr.bf16.mxu0 %v8685
    %8861 = vmatpush1.bf16.msra.mxu0 %v8684
    %8862 = vmatprep.subr.bf16.mxu0 0
    %8863 = vmatpush1.bf16.msra.mxu0 0
    %8864 = vmatprep.subr.bf16.mxu0 0
    %8865 = vmatpush1.bf16.msra.mxu0 0
    %8866 = vmatprep.subr.bf16.mxu0 0
    %8867 = vmatpush1.bf16.msra.mxu0 0
    %8868 = vmatprep.subr.bf16.mxu0 0
    %8869 = vmatpush1.bf16.msra.mxu0 0
    %8870 = vmatprep.subr.bf16.mxu0 0
    %8871 = vmatpush1.bf16.msra.mxu0 0
    %8872 = vmatprep.subr.bf16.mxu0 0
    %8873 = vmatpush1.bf16.msra.mxu0 0
    %8874 = vmatprep.subr.bf16.mxu0 0
    %8875 = vmatpush1.bf16.msra.mxu0 0
    %8876 = vmatprep.subr.bf16.mxu0 0
    %8877 = vmatpush1.bf16.msra.mxu0 0
    %8878 = vmatprep.subr.bf16.mxu0 0
    %8879 = vmatpush1.bf16.msra.mxu0 0
    %8880 = vmatprep.subr.bf16.mxu0 0
    %8881 = vmatpush1.bf16.msra.mxu0 0
    %8882 = vmatprep.subr.bf16.mxu0 0
    %8883 = vmatpush1.bf16.msra.mxu0 0
    %8884 = vmatprep.subr.bf16.mxu0 0
    %8885 = vmatpush1.bf16.msra.mxu0 0
    %8886 = vmatprep.subr.bf16.mxu0 0
    %8887 = vmatpush1.bf16.msra.mxu0 0
    %8888 = vmatprep.subr.bf16.mxu0 0
    %8889 = vmatpush1.bf16.msra.mxu0 0
    %8890 = vmatprep.mubr.bf16.mxu0 0
    %8891 = vmatmul.mubr.bf16.gmra.mrb[0].mxu0 %v8727
    %v8892 = vpop.f32.mrb[0].mxu0
    %v8893 = vadd.f32 %v8513, %v8892
    %v8894 = vpop.f32.mrb[0].mxu0
    %v8895 = vadd.f32 %v8517, %v8894
    %v8896 = vpop.f32.mrb[0].mxu0
    %v8897 = vadd.f32 %v8513, %v8896
    %v8898 = vpop.f32.mrb[0].mxu0
    %v8899 = vadd.f32 %v8517, %v8898
    %8900 = vdwg.mxu0
    %8901 = vmatprep.subr.bf16.mxu0 %v8671
    %8902 = vmatpush1.bf16.msra.mxu0 %v8670
    %8903 = vmatprep.subr.bf16.mxu0 %v8687
    %8904 = vmatpush1.bf16.msra.mxu0 %v8686
    %8905 = vmatprep.subr.bf16.mxu0 0
    %8906 = vmatpush1.bf16.msra.mxu0 0
    %8907 = vmatprep.subr.bf16.mxu0 0
    %8908 = vmatpush1.bf16.msra.mxu0 0
    %8909 = vmatprep.subr.bf16.mxu0 0
    %8910 = vmatpush1.bf16.msra.mxu0 0
    %8911 = vmatprep.subr.bf16.mxu0 0
    %8912 = vmatpush1.bf16.msra.mxu0 0
    %8913 = vmatprep.subr.bf16.mxu0 0
    %8914 = vmatpush1.bf16.msra.mxu0 0
    %8915 = vmatprep.subr.bf16.mxu0 0
    %8916 = vmatpush1.bf16.msra.mxu0 0
    %8917 = vmatprep.subr.bf16.mxu0 0
    %8918 = vmatpush1.bf16.msra.mxu0 0
    %8919 = vmatprep.subr.bf16.mxu0 0
    %8920 = vmatpush1.bf16.msra.mxu0 0
    %8921 = vmatprep.subr.bf16.mxu0 0
    %8922 = vmatpush1.bf16.msra.mxu0 0
    %8923 = vmatprep.subr.bf16.mxu0 0
    %8924 = vmatpush1.bf16.msra.mxu0 0
    %8925 = vmatprep.subr.bf16.mxu0 0
    %8926 = vmatpush1.bf16.msra.mxu0 0
    %8927 = vmatprep.subr.bf16.mxu0 0
    %8928 = vmatpush1.bf16.msra.mxu0 0
    %8929 = vmatprep.subr.bf16.mxu0 0
    %8930 = vmatpush1.bf16.msra.mxu0 0
    %8931 = vmatprep.subr.bf16.mxu0 0
    %8932 = vmatpush1.bf16.msra.mxu0 0
    %8933 = vmatprep.mubr.bf16.mxu0 0
    %8934 = vmatmul.mubr.bf16.gmra.mrb[0].mxu0 %v8727
    %v8935 = vpop.f32.mrb[0].mxu0
    %v8936 = vadd.f32 %v8521, %v8935
    %v8937 = vpop.f32.mrb[0].mxu0
    %v8938 = vadd.f32 %v8525, %v8937
    %v8939 = vpop.f32.mrb[0].mxu0
    %v8940 = vadd.f32 %v8521, %v8939
    %v8941 = vpop.f32.mrb[0].mxu0
    %v8942 = vadd.f32 %v8525, %v8941
    %8943 = vdwg.mxu0
    %8944 = vmatprep.subr.bf16.mxu0 %v8673
    %8945 = vmatpush1.bf16.msra.mxu0 %v8672
    %8946 = vmatprep.subr.bf16.mxu0 %v8689
    %8947 = vmatpush1.bf16.msra.mxu0 %v8688
    %8948 = vmatprep.subr.bf16.mxu0 0
    %8949 = vmatpush1.bf16.msra.mxu0 0
    %8950 = vmatprep.subr.bf16.mxu0 0
    %8951 = vmatpush1.bf16.msra.mxu0 0
    %8952 = vmatprep.subr.bf16.mxu0 0
    %8953 = vmatpush1.bf16.msra.mxu0 0
    %8954 = vmatprep.subr.bf16.mxu0 0
    %8955 = vmatpush1.bf16.msra.mxu0 0
    %8956 = vmatprep.subr.bf16.mxu0 0
    %8957 = vmatpush1.bf16.msra.mxu0 0
    %8958 = vmatprep.subr.bf16.mxu0 0
    %8959 = vmatpush1.bf16.msra.mxu0 0
    %8960 = vmatprep.subr.bf16.mxu0 0
    %8961 = vmatpush1.bf16.msra.mxu0 0
    %8962 = vmatprep.subr.bf16.mxu0 0
    %8963 = vmatpush1.bf16.msra.mxu0 0
    %8964 = vmatprep.subr.bf16.mxu0 0
    %8965 = vmatpush1.bf16.msra.mxu0 0
    %8966 = vmatprep.subr.bf16.mxu0 0
    %8967 = vmatpush1.bf16.msra.mxu0 0
    %8968 = vmatprep.subr.bf16.mxu0 0
    %8969 = vmatpush1.bf16.msra.mxu0 0
    %8970 = vmatprep.subr.bf16.mxu0 0
    %8971 = vmatpush1.bf16.msra.mxu0 0
    %8972 = vmatprep.subr.bf16.mxu0 0
    %8973 = vmatpush1.bf16.msra.mxu0 0
    %8974 = vmatprep.subr.bf16.mxu0 0
    %8975 = vmatpush1.bf16.msra.mxu0 0
    %8976 = vmatprep.mubr.bf16.mxu0 0
    %8977 = vmatmul.mubr.bf16.gmra.mrb[0].mxu0 %v8727
    %v8978 = vpop.f32.mrb[0].mxu0
    %v8979 = vadd.f32 %v8529, %v8978
    %v8980 = vpop.f32.mrb[0].mxu0
    %v8981 = vadd.f32 %v8533, %v8980
    %v8982 = vpop.f32.mrb[0].mxu0
    %v8983 = vadd.f32 %v8529, %v8982
    %v8984 = vpop.f32.mrb[0].mxu0
    %v8985 = vadd.f32 %v8533, %v8984
    %8986 = vdwg.mxu0
    %8987 = vmatprep.subr.bf16.mxu0 %v8675
    %8988 = vmatpush1.bf16.msra.mxu0 %v8674
    %8989 = vmatprep.subr.bf16.mxu0 %v8691
    %8990 = vmatpush1.bf16.msra.mxu0 %v8690
    %8991 = vmatprep.subr.bf16.mxu0 0
    %8992 = vmatpush1.bf16.msra.mxu0 0
    %8993 = vmatprep.subr.bf16.mxu0 0
    %8994 = vmatpush1.bf16.msra.mxu0 0
    %8995 = vmatprep.subr.bf16.mxu0 0
    %8996 = vmatpush1.bf16.msra.mxu0 0
    %8997 = vmatprep.subr.bf16.mxu0 0
    %8998 = vmatpush1.bf16.msra.mxu0 0
    %8999 = vmatprep.subr.bf16.mxu0 0
    %9000 = vmatpush1.bf16.msra.mxu0 0
    %9001 = vmatprep.subr.bf16.mxu0 0
    %9002 = vmatpush1.bf16.msra.mxu0 0
    %9003 = vmatprep.subr.bf16.mxu0 0
    %9004 = vmatpush1.bf16.msra.mxu0 0
    %9005 = vmatprep.subr.bf16.mxu0 0
    %9006 = vmatpush1.bf16.msra.mxu0 0
    %9007 = vmatprep.subr.bf16.mxu0 0
    %9008 = vmatpush1.bf16.msra.mxu0 0
    %9009 = vmatprep.subr.bf16.mxu0 0
    %9010 = vmatpush1.bf16.msra.mxu0 0
    %9011 = vmatprep.subr.bf16.mxu0 0
    %9012 = vmatpush1.bf16.msra.mxu0 0
    %9013 = vmatprep.subr.bf16.mxu0 0
    %9014 = vmatpush1.bf16.msra.mxu0 0
    %9015 = vmatprep.subr.bf16.mxu0 0
    %9016 = vmatpush1.bf16.msra.mxu0 0
    %9017 = vmatprep.subr.bf16.mxu0 0
    %9018 = vmatpush1.bf16.msra.mxu0 0
    %9019 = vmatprep.mubr.bf16.mxu0 0
    %9020 = vmatmul.mubr.bf16.gmra.mrb[0].mxu0 %v8727
    %v9021 = vpop.f32.mrb[0].mxu0
    %v9022 = vadd.f32 %v8537, %v9021
    %v9023 = vpop.f32.mrb[0].mxu0
    %v9024 = vadd.f32 %v8541, %v9023
    %v9025 = vpop.f32.mrb[0].mxu0
    %v9026 = vadd.f32 %v8537, %v9025
    %v9027 = vpop.f32.mrb[0].mxu0
    %v9028 = vadd.f32 %v8541, %v9027
    %9029 = vdwg.mxu0
    %9030 = vmatprep.subr.bf16.mxu0 %v8677
    %9031 = vmatpush1.bf16.msra.mxu0 %v8676
    %9032 = vmatprep.subr.bf16.mxu0 %v8693
    %9033 = vmatpush1.bf16.msra.mxu0 %v8692
    %9034 = vmatprep.subr.bf16.mxu0 0
    %9035 = vmatpush1.bf16.msra.mxu0 0
    %9036 = vmatprep.subr.bf16.mxu0 0
    %9037 = vmatpush1.bf16.msra.mxu0 0
    %9038 = vmatprep.subr.bf16.mxu0 0
    %9039 = vmatpush1.bf16.msra.mxu0 0
    %9040 = vmatprep.subr.bf16.mxu0 0
    %9041 = vmatpush1.bf16.msra.mxu0 0
    %9042 = vmatprep.subr.bf16.mxu0 0
    %9043 = vmatpush1.bf16.msra.mxu0 0
    %9044 = vmatprep.subr.bf16.mxu0 0
    %9045 = vmatpush1.bf16.msra.mxu0 0
    %9046 = vmatprep.subr.bf16.mxu0 0
    %9047 = vmatpush1.bf16.msra.mxu0 0
    %9048 = vmatprep.subr.bf16.mxu0 0
    %9049 = vmatpush1.bf16.msra.mxu0 0
    %9050 = vmatprep.subr.bf16.mxu0 0
    %9051 = vmatpush1.bf16.msra.mxu0 0
    %9052 = vmatprep.subr.bf16.mxu0 0
    %9053 = vmatpush1.bf16.msra.mxu0 0
    %9054 = vmatprep.subr.bf16.mxu0 0
    %9055 = vmatpush1.bf16.msra.mxu0 0
    %9056 = vmatprep.subr.bf16.mxu0 0
    %9057 = vmatpush1.bf16.msra.mxu0 0
    %9058 = vmatprep.subr.bf16.mxu0 0
    %9059 = vmatpush1.bf16.msra.mxu0 0
    %9060 = vmatprep.subr.bf16.mxu0 0
    %9061 = vmatpush1.bf16.msra.mxu0 0
    %9062 = vmatprep.mubr.bf16.mxu0 0
    %9063 = vmatmul.mubr.bf16.gmra.mrb[0].mxu0 %v8727
    %v9064 = vpop.f32.mrb[0].mxu0
    %v9065 = vadd.f32 %v8545, %v9064
    %v9066 = vpop.f32.mrb[0].mxu0
    %v9067 = vadd.f32 %v8549, %v9066
    %v9068 = vpop.f32.mrb[0].mxu0
    %v9069 = vadd.f32 %v8545, %v9068
    %v9070 = vpop.f32.mrb[0].mxu0
    %v9071 = vadd.f32 %v8549, %v9070
    %9072 = vdwg.mxu0
    %v9073 = vmax.f32 %v8764, 0.0
    %v9074 = vmax.f32 %v8766, 0.0
    %v9075 = vmax.f32 %v8807, 0.0
    %v9076 = vmax.f32 %v8809, 0.0
    %v9077 = vmax.f32 %v8850, 0.0
    %v9078 = vmax.f32 %v8852, 0.0
    %v9079 = vmax.f32 %v8893, 0.0
    %v9080 = vmax.f32 %v8895, 0.0
    %v9081 = vmax.f32 %v8936, 0.0
    %v9082 = vmax.f32 %v8938, 0.0
    %v9083 = vmax.f32 %v8979, 0.0
    %v9084 = vmax.f32 %v8981, 0.0
    %v9085 = vmax.f32 %v9022, 0.0
    %v9086 = vmax.f32 %v9024, 0.0
    %v9087 = vmax.f32 %v9065, 0.0
    %v9088 = vmax.f32 %v9067, 0.0
    %v9089 = vmax.f32 %v8768, 0.0
    %v9090 = vmax.f32 %v8770, 0.0
    %v9091 = vmax.f32 %v8811, 0.0
    %v9092 = vmax.f32 %v8813, 0.0
    %v9093 = vmax.f32 %v8854, 0.0
    %v9094 = vmax.f32 %v8856, 0.0
    %v9095 = vmax.f32 %v8897, 0.0
    %v9096 = vmax.f32 %v8899, 0.0
    %v9097 = vmax.f32 %v8940, 0.0
    %v9098 = vmax.f32 %v8942, 0.0
    %v9099 = vmax.f32 %v8983, 0.0
    %v9100 = vmax.f32 %v8985, 0.0
    %v9101 = vmax.f32 %v9026, 0.0
    %v9102 = vmax.f32 %v9028, 0.0
    %v9103 = vmax.f32 %v9069, 0.0
    %v9104 = vmax.f32 %v9071, 0.0
    %v9105 = vpack.c.bf16 %v9089, %v9073
    %v9106 = vpack.c.bf16 %v9090, %v9074
    %v9107 = vpack.c.bf16 %v9091, %v9075
    %v9108 = vpack.c.bf16 %v9092, %v9076
    %v9109 = vpack.c.bf16 %v9093, %v9077
    %v9110 = vpack.c.bf16 %v9094, %v9078
    %v9111 = vpack.c.bf16 %v9095, %v9079
    %v9112 = vpack.c.bf16 %v9096, %v9080
    %v9113 = vpack.c.bf16 %v9097, %v9081
    %v9114 = vpack.c.bf16 %v9098, %v9082
    %v9115 = vpack.c.bf16 %v9099, %v9083
    %v9116 = vpack.c.bf16 %v9100, %v9084
    %v9117 = vpack.c.bf16 %v9101, %v9085
    %v9118 = vpack.c.bf16 %v9102, %v9086
    %v9119 = vpack.c.bf16 %v9103, %v9087
    %v9120 = vpack.c.bf16 %v9104, %v9088
    %v9122 = vlaneseq
    %v9123 = vshrl.u32 %v9122, 7
    %v9124 = vsub.s32 0, %v9123
    %v9125 = vrot.slane %v8482, %v9124
    %v9159 = vunpack.c.l.b16 %v8450
    %v9160 = vunpack.c.h.b16 %v8450
    %v9161 = vunpack.c.l.b16 %v8451
    %v9162 = vunpack.c.h.b16 %v8451
    %v9163 = vunpack.c.l.b16 %v8452
    %v9164 = vunpack.c.h.b16 %v8452
    %v9165 = vunpack.c.l.b16 %v8453
    %v9166 = vunpack.c.h.b16 %v8453
    %v9167 = vunpack.c.l.b16 %v8454
    %v9168 = vunpack.c.h.b16 %v8454
    %v9169 = vunpack.c.l.b16 %v8455
    %v9170 = vunpack.c.h.b16 %v8455
    %v9171 = vunpack.c.l.b16 %v8456
    %v9172 = vunpack.c.h.b16 %v8456
    %v9173 = vunpack.c.l.b16 %v8457
    %v9174 = vunpack.c.h.b16 %v8457
    %v9175 = vunpack.c.l.b16 %v8458
    %v9176 = vunpack.c.h.b16 %v8458
    %v9177 = vunpack.c.l.b16 %v8459
    %v9178 = vunpack.c.h.b16 %v8459
    %v9179 = vunpack.c.l.b16 %v8460
    %v9180 = vunpack.c.h.b16 %v8460
    %v9181 = vunpack.c.l.b16 %v8461
    %v9182 = vunpack.c.h.b16 %v8461
    %v9183 = vunpack.c.l.b16 %v8462
    %v9184 = vunpack.c.h.b16 %v8462
    %v9185 = vunpack.c.l.b16 %v8463
    %v9186 = vunpack.c.h.b16 %v8463
    %v9187 = vunpack.c.l.b16 %v8464
    %v9188 = vunpack.c.h.b16 %v8464
    %v9189 = vunpack.c.l.b16 %v8465
    %v9190 = vunpack.c.h.b16 %v8465
    %v9191 = vunpack.c.l.b16 %v8466
    %v9192 = vunpack.c.h.b16 %v8466
    %v9193 = vunpack.c.l.b16 %v8467
    %v9194 = vunpack.c.h.b16 %v8467
    %v9195 = vunpack.c.l.b16 %v8468
    %v9196 = vunpack.c.h.b16 %v8468
    %v9197 = vunpack.c.l.b16 %v8469
    %v9198 = vunpack.c.h.b16 %v8469
    %v9199 = vunpack.c.l.b16 %v8470
    %v9200 = vunpack.c.h.b16 %v8470
    %v9201 = vunpack.c.l.b16 %v8471
    %v9202 = vunpack.c.h.b16 %v8471
    %v9203 = vunpack.c.l.b16 %v8472
    %v9204 = vunpack.c.h.b16 %v8472
    %v9205 = vunpack.c.l.b16 %v8473
    %v9206 = vunpack.c.h.b16 %v8473
    %v9207 = vunpack.c.l.b16 %v8474
    %v9208 = vunpack.c.h.b16 %v8474
    %v9209 = vunpack.c.l.b16 %v8475
    %v9210 = vunpack.c.h.b16 %v8475
    %v9211 = vunpack.c.l.b16 %v8476
    %v9212 = vunpack.c.h.b16 %v8476
    %v9213 = vunpack.c.l.b16 %v8477
    %v9214 = vunpack.c.h.b16 %v8477
    %v9215 = vunpack.c.l.b16 %v8478
    %v9216 = vunpack.c.h.b16 %v8478
    %v9217 = vunpack.c.l.b16 %v8479
    %v9218 = vunpack.c.h.b16 %v8479
    %v9219 = vunpack.c.l.b16 %v8480
    %v9220 = vunpack.c.h.b16 %v8480
    %v9221 = vunpack.c.l.b16 %v8481
    %v9222 = vunpack.c.h.b16 %v8481
    %v9223 = vpack.c.b16 %v9175, %v9159
    %v9224 = vpack.c.b16 %v9176, %v9160
    %v9225 = vpack.c.b16 %v9177, %v9161
    %v9226 = vpack.c.b16 %v9178, %v9162
    %v9227 = vpack.c.b16 %v9179, %v9163
    %v9228 = vpack.c.b16 %v9180, %v9164
    %v9229 = vpack.c.b16 %v9181, %v9165
    %v9230 = vpack.c.b16 %v9182, %v9166
    %v9231 = vpack.c.b16 %v9183, %v9167
    %v9232 = vpack.c.b16 %v9184, %v9168
    %v9233 = vpack.c.b16 %v9185, %v9169
    %v9234 = vpack.c.b16 %v9186, %v9170
    %v9235 = vpack.c.b16 %v9187, %v9171
    %v9236 = vpack.c.b16 %v9188, %v9172
    %v9237 = vpack.c.b16 %v9189, %v9173
    %v9238 = vpack.c.b16 %v9190, %v9174
    %v9239 = vpack.c.b16 %v9207, %v9191
    %v9240 = vpack.c.b16 %v9208, %v9192
    %v9241 = vpack.c.b16 %v9209, %v9193
    %v9242 = vpack.c.b16 %v9210, %v9194
    %v9243 = vpack.c.b16 %v9211, %v9195
    %v9244 = vpack.c.b16 %v9212, %v9196
    %v9245 = vpack.c.b16 %v9213, %v9197
    %v9246 = vpack.c.b16 %v9214, %v9198
    %v9247 = vpack.c.b16 %v9215, %v9199
    %v9248 = vpack.c.b16 %v9216, %v9200
    %v9249 = vpack.c.b16 %v9217, %v9201
    %v9250 = vpack.c.b16 %v9218, %v9202
    %v9251 = vpack.c.b16 %v9219, %v9203
    %v9252 = vpack.c.b16 %v9220, %v9204
    %v9253 = vpack.c.b16 %v9221, %v9205
    %v9254 = vpack.c.b16 %v9222, %v9206
    %9287 = vmatprep.subr.bf16.mxu0 %v9224
    %9288 = vmatpush1.bf16.xpose.msra.mxu0 %v9223
    %9289 = vmatprep.subr.bf16.mxu0 %v9240
    %9290 = vmatpush1.bf16.xpose.msra.mxu0 %v9239
    %9291 = vmatprep.subr.bf16.mxu0 0
    %9292 = vmatpush1.bf16.xpose.msra.mxu0 0
    %9293 = vmatprep.subr.bf16.mxu0 0
    %9294 = vmatpush1.bf16.xpose.msra.mxu0 0
    %9295 = vmatprep.subr.bf16.mxu0 0
    %9296 = vmatpush1.bf16.xpose.msra.mxu0 0
    %9297 = vmatprep.subr.bf16.mxu0 0
    %9298 = vmatpush1.bf16.xpose.msra.mxu0 0
    %9299 = vmatprep.subr.bf16.mxu0 0
    %9300 = vmatpush1.bf16.xpose.msra.mxu0 0
    %9301 = vmatprep.subr.bf16.mxu0 0
    %9302 = vmatpush1.bf16.xpose.msra.mxu0 0
    %9303 = vmatprep.subr.bf16.mxu0 0
    %9304 = vmatpush1.bf16.xpose.msra.mxu0 0
    %9305 = vmatprep.subr.bf16.mxu0 0
    %9306 = vmatpush1.bf16.xpose.msra.mxu0 0
    %9307 = vmatprep.subr.bf16.mxu0 0
    %9308 = vmatpush1.bf16.xpose.msra.mxu0 0
    %9309 = vmatprep.subr.bf16.mxu0 0
    %9310 = vmatpush1.bf16.xpose.msra.mxu0 0
    %9311 = vmatprep.subr.bf16.mxu0 0
    %9312 = vmatpush1.bf16.xpose.msra.mxu0 0
    %9313 = vmatprep.subr.bf16.mxu0 0
    %9314 = vmatpush1.bf16.xpose.msra.mxu0 0
    %9315 = vmatprep.subr.bf16.mxu0 0
    %9316 = vmatpush1.bf16.xpose.msra.mxu0 0
    %9317 = vmatprep.subr.bf16.mxu0 0
    %9318 = vmatpush1.bf16.xpose.msra.mxu0 0
    %9319 = vmatprep.mubr.bf16.mxu0 %v9106
    %9320 = vmatmul.mubr.bf16.gmra.mrb[0].mxu0 %v9105
    %v9321 = vpop.f32.mrb[0].mxu0
    %v9322 = vadd.f32 %v9125, %v9321
    %v9323 = vpop.f32.mrb[0].mxu0
    %v9324 = vpop.f32.mrb[0].mxu0
    %v9325 = vadd.f32 %v9125, %v9324
    %v9326 = vpop.f32.mrb[0].mxu0
    %9327 = vdwg.mxu0
    %9328 = vmatprep.subr.bf16.mxu0 %v9226
    %9329 = vmatpush1.bf16.xpose.msra.mxu0 %v9225
    %9330 = vmatprep.subr.bf16.mxu0 %v9242
    %9331 = vmatpush1.bf16.xpose.msra.mxu0 %v9241
    %9332 = vmatprep.subr.bf16.mxu0 0
    %9333 = vmatpush1.bf16.xpose.msra.mxu0 0
    %9334 = vmatprep.subr.bf16.mxu0 0
    %9335 = vmatpush1.bf16.xpose.msra.mxu0 0
    %9336 = vmatprep.subr.bf16.mxu0 0
    %9337 = vmatpush1.bf16.xpose.msra.mxu0 0
    %9338 = vmatprep.subr.bf16.mxu0 0
    %9339 = vmatpush1.bf16.xpose.msra.mxu0 0
    %9340 = vmatprep.subr.bf16.mxu0 0
    %9341 = vmatpush1.bf16.xpose.msra.mxu0 0
    %9342 = vmatprep.subr.bf16.mxu0 0
    %9343 = vmatpush1.bf16.xpose.msra.mxu0 0
    %9344 = vmatprep.subr.bf16.mxu0 0
    %9345 = vmatpush1.bf16.xpose.msra.mxu0 0
    %9346 = vmatprep.subr.bf16.mxu0 0
    %9347 = vmatpush1.bf16.xpose.msra.mxu0 0
    %9348 = vmatprep.subr.bf16.mxu0 0
    %9349 = vmatpush1.bf16.xpose.msra.mxu0 0
    %9350 = vmatprep.subr.bf16.mxu0 0
    %9351 = vmatpush1.bf16.xpose.msra.mxu0 0
    %9352 = vmatprep.subr.bf16.mxu0 0
    %9353 = vmatpush1.bf16.xpose.msra.mxu0 0
    %9354 = vmatprep.subr.bf16.mxu0 0
    %9355 = vmatpush1.bf16.xpose.msra.mxu0 0
    %9356 = vmatprep.subr.bf16.mxu0 0
    %9357 = vmatpush1.bf16.xpose.msra.mxu0 0
    %9358 = vmatprep.subr.bf16.mxu0 0
    %9359 = vmatpush1.bf16.xpose.msra.mxu0 0
    %9360 = vmatprep.mubr.bf16.mxu0 %v9108
    %9361 = vmatmul.mubr.bf16.gmra.mrb[0].mxu0 %v9107
    %v9362 = vpop.f32.mrb[0].mxu0
    %v9363 = vadd.f32 %v9322, %v9362
    %v9364 = vpop.f32.mrb[0].mxu0
    %v9365 = vpop.f32.mrb[0].mxu0
    %v9366 = vadd.f32 %v9325, %v9365
    %v9367 = vpop.f32.mrb[0].mxu0
    %9368 = vdwg.mxu0
    %9369 = vmatprep.subr.bf16.mxu0 %v9228
    %9370 = vmatpush1.bf16.xpose.msra.mxu0 %v9227
    %9371 = vmatprep.subr.bf16.mxu0 %v9244
    %9372 = vmatpush1.bf16.xpose.msra.mxu0 %v9243
    %9373 = vmatprep.subr.bf16.mxu0 0
    %9374 = vmatpush1.bf16.xpose.msra.mxu0 0
    %9375 = vmatprep.subr.bf16.mxu0 0
    %9376 = vmatpush1.bf16.xpose.msra.mxu0 0
    %9377 = vmatprep.subr.bf16.mxu0 0
    %9378 = vmatpush1.bf16.xpose.msra.mxu0 0
    %9379 = vmatprep.subr.bf16.mxu0 0
    %9380 = vmatpush1.bf16.xpose.msra.mxu0 0
    %9381 = vmatprep.subr.bf16.mxu0 0
    %9382 = vmatpush1.bf16.xpose.msra.mxu0 0
    %9383 = vmatprep.subr.bf16.mxu0 0
    %9384 = vmatpush1.bf16.xpose.msra.mxu0 0
    %9385 = vmatprep.subr.bf16.mxu0 0
    %9386 = vmatpush1.bf16.xpose.msra.mxu0 0
    %9387 = vmatprep.subr.bf16.mxu0 0
    %9388 = vmatpush1.bf16.xpose.msra.mxu0 0
    %9389 = vmatprep.subr.bf16.mxu0 0
    %9390 = vmatpush1.bf16.xpose.msra.mxu0 0
    %9391 = vmatprep.subr.bf16.mxu0 0
    %9392 = vmatpush1.bf16.xpose.msra.mxu0 0
    %9393 = vmatprep.subr.bf16.mxu0 0
    %9394 = vmatpush1.bf16.xpose.msra.mxu0 0
    %9395 = vmatprep.subr.bf16.mxu0 0
    %9396 = vmatpush1.bf16.xpose.msra.mxu0 0
    %9397 = vmatprep.subr.bf16.mxu0 0
    %9398 = vmatpush1.bf16.xpose.msra.mxu0 0
    %9399 = vmatprep.subr.bf16.mxu0 0
    %9400 = vmatpush1.bf16.xpose.msra.mxu0 0
    %9401 = vmatprep.mubr.bf16.mxu0 %v9110
    %9402 = vmatmul.mubr.bf16.gmra.mrb[0].mxu0 %v9109
    %v9403 = vpop.f32.mrb[0].mxu0
    %v9404 = vadd.f32 %v9363, %v9403
    %v9405 = vpop.f32.mrb[0].mxu0
    %v9406 = vpop.f32.mrb[0].mxu0
    %v9407 = vadd.f32 %v9366, %v9406
    %v9408 = vpop.f32.mrb[0].mxu0
    %9409 = vdwg.mxu0
    %9410 = vmatprep.subr.bf16.mxu0 %v9230
    %9411 = vmatpush1.bf16.xpose.msra.mxu0 %v9229
    %9412 = vmatprep.subr.bf16.mxu0 %v9246
    %9413 = vmatpush1.bf16.xpose.msra.mxu0 %v9245
    %9414 = vmatprep.subr.bf16.mxu0 0
    %9415 = vmatpush1.bf16.xpose.msra.mxu0 0
    %9416 = vmatprep.subr.bf16.mxu0 0
    %9417 = vmatpush1.bf16.xpose.msra.mxu0 0
    %9418 = vmatprep.subr.bf16.mxu0 0
    %9419 = vmatpush1.bf16.xpose.msra.mxu0 0
    %9420 = vmatprep.subr.bf16.mxu0 0
    %9421 = vmatpush1.bf16.xpose.msra.mxu0 0
    %9422 = vmatprep.subr.bf16.mxu0 0
    %9423 = vmatpush1.bf16.xpose.msra.mxu0 0
    %9424 = vmatprep.subr.bf16.mxu0 0
    %9425 = vmatpush1.bf16.xpose.msra.mxu0 0
    %9426 = vmatprep.subr.bf16.mxu0 0
    %9427 = vmatpush1.bf16.xpose.msra.mxu0 0
    %9428 = vmatprep.subr.bf16.mxu0 0
    %9429 = vmatpush1.bf16.xpose.msra.mxu0 0
    %9430 = vmatprep.subr.bf16.mxu0 0
    %9431 = vmatpush1.bf16.xpose.msra.mxu0 0
    %9432 = vmatprep.subr.bf16.mxu0 0
    %9433 = vmatpush1.bf16.xpose.msra.mxu0 0
    %9434 = vmatprep.subr.bf16.mxu0 0
    %9435 = vmatpush1.bf16.xpose.msra.mxu0 0
    %9436 = vmatprep.subr.bf16.mxu0 0
    %9437 = vmatpush1.bf16.xpose.msra.mxu0 0
    %9438 = vmatprep.subr.bf16.mxu0 0
    %9439 = vmatpush1.bf16.xpose.msra.mxu0 0
    %9440 = vmatprep.subr.bf16.mxu0 0
    %9441 = vmatpush1.bf16.xpose.msra.mxu0 0
    %9442 = vmatprep.mubr.bf16.mxu0 %v9112
    %9443 = vmatmul.mubr.bf16.gmra.mrb[0].mxu0 %v9111
    %v9444 = vpop.f32.mrb[0].mxu0
    %v9445 = vadd.f32 %v9404, %v9444
    %v9446 = vpop.f32.mrb[0].mxu0
    %v9447 = vpop.f32.mrb[0].mxu0
    %v9448 = vadd.f32 %v9407, %v9447
    %v9449 = vpop.f32.mrb[0].mxu0
    %9450 = vdwg.mxu0
    %9451 = vmatprep.subr.bf16.mxu0 %v9232
    %9452 = vmatpush1.bf16.xpose.msra.mxu0 %v9231
    %9453 = vmatprep.subr.bf16.mxu0 %v9248
    %9454 = vmatpush1.bf16.xpose.msra.mxu0 %v9247
    %9455 = vmatprep.subr.bf16.mxu0 0
    %9456 = vmatpush1.bf16.xpose.msra.mxu0 0
    %9457 = vmatprep.subr.bf16.mxu0 0
    %9458 = vmatpush1.bf16.xpose.msra.mxu0 0
    %9459 = vmatprep.subr.bf16.mxu0 0
    %9460 = vmatpush1.bf16.xpose.msra.mxu0 0
    %9461 = vmatprep.subr.bf16.mxu0 0
    %9462 = vmatpush1.bf16.xpose.msra.mxu0 0
    %9463 = vmatprep.subr.bf16.mxu0 0
    %9464 = vmatpush1.bf16.xpose.msra.mxu0 0
    %9465 = vmatprep.subr.bf16.mxu0 0
    %9466 = vmatpush1.bf16.xpose.msra.mxu0 0
    %9467 = vmatprep.subr.bf16.mxu0 0
    %9468 = vmatpush1.bf16.xpose.msra.mxu0 0
    %9469 = vmatprep.subr.bf16.mxu0 0
    %9470 = vmatpush1.bf16.xpose.msra.mxu0 0
    %9471 = vmatprep.subr.bf16.mxu0 0
    %9472 = vmatpush1.bf16.xpose.msra.mxu0 0
    %9473 = vmatprep.subr.bf16.mxu0 0
    %9474 = vmatpush1.bf16.xpose.msra.mxu0 0
    %9475 = vmatprep.subr.bf16.mxu0 0
    %9476 = vmatpush1.bf16.xpose.msra.mxu0 0
    %9477 = vmatprep.subr.bf16.mxu0 0
    %9478 = vmatpush1.bf16.xpose.msra.mxu0 0
    %9479 = vmatprep.subr.bf16.mxu0 0
    %9480 = vmatpush1.bf16.xpose.msra.mxu0 0
    %9481 = vmatprep.subr.bf16.mxu0 0
    %9482 = vmatpush1.bf16.xpose.msra.mxu0 0
    %9483 = vmatprep.mubr.bf16.mxu0 %v9114
    %9484 = vmatmul.mubr.bf16.gmra.mrb[0].mxu0 %v9113
    %v9485 = vpop.f32.mrb[0].mxu0
    %v9486 = vadd.f32 %v9445, %v9485
    %v9487 = vpop.f32.mrb[0].mxu0
    %v9488 = vpop.f32.mrb[0].mxu0
    %v9489 = vadd.f32 %v9448, %v9488
    %v9490 = vpop.f32.mrb[0].mxu0
    %9491 = vdwg.mxu0
    %9492 = vmatprep.subr.bf16.mxu0 %v9234
    %9493 = vmatpush1.bf16.xpose.msra.mxu0 %v9233
    %9494 = vmatprep.subr.bf16.mxu0 %v9250
    %9495 = vmatpush1.bf16.xpose.msra.mxu0 %v9249
    %9496 = vmatprep.subr.bf16.mxu0 0
    %9497 = vmatpush1.bf16.xpose.msra.mxu0 0
    %9498 = vmatprep.subr.bf16.mxu0 0
    %9499 = vmatpush1.bf16.xpose.msra.mxu0 0
    %9500 = vmatprep.subr.bf16.mxu0 0
    %9501 = vmatpush1.bf16.xpose.msra.mxu0 0
    %9502 = vmatprep.subr.bf16.mxu0 0
    %9503 = vmatpush1.bf16.xpose.msra.mxu0 0
    %9504 = vmatprep.subr.bf16.mxu0 0
    %9505 = vmatpush1.bf16.xpose.msra.mxu0 0
    %9506 = vmatprep.subr.bf16.mxu0 0
    %9507 = vmatpush1.bf16.xpose.msra.mxu0 0
    %9508 = vmatprep.subr.bf16.mxu0 0
    %9509 = vmatpush1.bf16.xpose.msra.mxu0 0
    %9510 = vmatprep.subr.bf16.mxu0 0
    %9511 = vmatpush1.bf16.xpose.msra.mxu0 0
    %9512 = vmatprep.subr.bf16.mxu0 0
    %9513 = vmatpush1.bf16.xpose.msra.mxu0 0
    %9514 = vmatprep.subr.bf16.mxu0 0
    %9515 = vmatpush1.bf16.xpose.msra.mxu0 0
    %9516 = vmatprep.subr.bf16.mxu0 0
    %9517 = vmatpush1.bf16.xpose.msra.mxu0 0
    %9518 = vmatprep.subr.bf16.mxu0 0
    %9519 = vmatpush1.bf16.xpose.msra.mxu0 0
    %9520 = vmatprep.subr.bf16.mxu0 0
    %9521 = vmatpush1.bf16.xpose.msra.mxu0 0
    %9522 = vmatprep.subr.bf16.mxu0 0
    %9523 = vmatpush1.bf16.xpose.msra.mxu0 0
    %9524 = vmatprep.mubr.bf16.mxu0 %v9116
    %9525 = vmatmul.mubr.bf16.gmra.mrb[0].mxu0 %v9115
    %v9526 = vpop.f32.mrb[0].mxu0
    %v9527 = vadd.f32 %v9486, %v9526
    %v9528 = vpop.f32.mrb[0].mxu0
    %v9529 = vpop.f32.mrb[0].mxu0
    %v9530 = vadd.f32 %v9489, %v9529
    %v9531 = vpop.f32.mrb[0].mxu0
    %9532 = vdwg.mxu0
    %9533 = vmatprep.subr.bf16.mxu0 %v9236
    %9534 = vmatpush1.bf16.xpose.msra.mxu0 %v9235
    %9535 = vmatprep.subr.bf16.mxu0 %v9252
    %9536 = vmatpush1.bf16.xpose.msra.mxu0 %v9251
    %9537 = vmatprep.subr.bf16.mxu0 0
    %9538 = vmatpush1.bf16.xpose.msra.mxu0 0
    %9539 = vmatprep.subr.bf16.mxu0 0
    %9540 = vmatpush1.bf16.xpose.msra.mxu0 0
    %9541 = vmatprep.subr.bf16.mxu0 0
    %9542 = vmatpush1.bf16.xpose.msra.mxu0 0
    %9543 = vmatprep.subr.bf16.mxu0 0
    %9544 = vmatpush1.bf16.xpose.msra.mxu0 0
    %9545 = vmatprep.subr.bf16.mxu0 0
    %9546 = vmatpush1.bf16.xpose.msra.mxu0 0
    %9547 = vmatprep.subr.bf16.mxu0 0
    %9548 = vmatpush1.bf16.xpose.msra.mxu0 0
    %9549 = vmatprep.subr.bf16.mxu0 0
    %9550 = vmatpush1.bf16.xpose.msra.mxu0 0
    %9551 = vmatprep.subr.bf16.mxu0 0
    %9552 = vmatpush1.bf16.xpose.msra.mxu0 0
    %9553 = vmatprep.subr.bf16.mxu0 0
    %9554 = vmatpush1.bf16.xpose.msra.mxu0 0
    %9555 = vmatprep.subr.bf16.mxu0 0
    %9556 = vmatpush1.bf16.xpose.msra.mxu0 0
    %9557 = vmatprep.subr.bf16.mxu0 0
    %9558 = vmatpush1.bf16.xpose.msra.mxu0 0
    %9559 = vmatprep.subr.bf16.mxu0 0
    %9560 = vmatpush1.bf16.xpose.msra.mxu0 0
    %9561 = vmatprep.subr.bf16.mxu0 0
    %9562 = vmatpush1.bf16.xpose.msra.mxu0 0
    %9563 = vmatprep.subr.bf16.mxu0 0
    %9564 = vmatpush1.bf16.xpose.msra.mxu0 0
    %9565 = vmatprep.mubr.bf16.mxu0 %v9118
    %9566 = vmatmul.mubr.bf16.gmra.mrb[0].mxu0 %v9117
    %v9567 = vpop.f32.mrb[0].mxu0
    %v9568 = vadd.f32 %v9527, %v9567
    %v9569 = vpop.f32.mrb[0].mxu0
    %v9570 = vpop.f32.mrb[0].mxu0
    %v9571 = vadd.f32 %v9530, %v9570
    %v9572 = vpop.f32.mrb[0].mxu0
    %9573 = vdwg.mxu0
    %9574 = vmatprep.subr.bf16.mxu0 %v9238
    %9575 = vmatpush1.bf16.xpose.msra.mxu0 %v9237
    %9576 = vmatprep.subr.bf16.mxu0 %v9254
    %9577 = vmatpush1.bf16.xpose.msra.mxu0 %v9253
    %9578 = vmatprep.subr.bf16.mxu0 0
    %9579 = vmatpush1.bf16.xpose.msra.mxu0 0
    %9580 = vmatprep.subr.bf16.mxu0 0
    %9581 = vmatpush1.bf16.xpose.msra.mxu0 0
    %9582 = vmatprep.subr.bf16.mxu0 0
    %9583 = vmatpush1.bf16.xpose.msra.mxu0 0
    %9584 = vmatprep.subr.bf16.mxu0 0
    %9585 = vmatpush1.bf16.xpose.msra.mxu0 0
    %9586 = vmatprep.subr.bf16.mxu0 0
    %9587 = vmatpush1.bf16.xpose.msra.mxu0 0
    %9588 = vmatprep.subr.bf16.mxu0 0
    %9589 = vmatpush1.bf16.xpose.msra.mxu0 0
    %9590 = vmatprep.subr.bf16.mxu0 0
    %9591 = vmatpush1.bf16.xpose.msra.mxu0 0
    %9592 = vmatprep.subr.bf16.mxu0 0
    %9593 = vmatpush1.bf16.xpose.msra.mxu0 0
    %9594 = vmatprep.subr.bf16.mxu0 0
    %9595 = vmatpush1.bf16.xpose.msra.mxu0 0
    %9596 = vmatprep.subr.bf16.mxu0 0
    %9597 = vmatpush1.bf16.xpose.msra.mxu0 0
    %9598 = vmatprep.subr.bf16.mxu0 0
    %9599 = vmatpush1.bf16.xpose.msra.mxu0 0
    %9600 = vmatprep.subr.bf16.mxu0 0
    %9601 = vmatpush1.bf16.xpose.msra.mxu0 0
    %9602 = vmatprep.subr.bf16.mxu0 0
    %9603 = vmatpush1.bf16.xpose.msra.mxu0 0
    %9604 = vmatprep.subr.bf16.mxu0 0
    %9605 = vmatpush1.bf16.xpose.msra.mxu0 0
    %9606 = vmatprep.mubr.bf16.mxu0 %v9120
    %9607 = vmatmul.mubr.bf16.gmra.mrb[0].mxu0 %v9119
    %v9608 = vpop.f32.mrb[0].mxu0
    %v9609 = vadd.f32 %v9568, %v9608
    %v9610 = vpop.f32.mrb[0].mxu0
    %v9611 = vpop.f32.mrb[0].mxu0
    %v9612 = vadd.f32 %v9571, %v9611
    %v9613 = vpop.f32.mrb[0].mxu0
    %9614 = vdwg.mxu0
    %v9615 = vadd.f32 %v8414, %v9609
    %v9616 = vadd.f32 %v8415, %v9612
    %v9617 = vld [vmem:[#allocation7 + $0x62] sm:$0x1]
    %v9618 = vld [vmem:[#allocation7 + $0x63] sm:$0x1]
    %v9619 = vsel %vm145, %v9615, 0.0
    %9620 = vadd.xlane.f32.xlu0 %v9619
    %v9621 = vpop.xlane.xlu0 %9620
    %v9622 = vsel %vm145, %v9616, 0.0
    %9623 = vadd.xlane.f32.xlu0 %v9622
    %v9624 = vpop.xlane.xlu0 %9623
    %v9625 = vmul.f32 %v9621, %v838
    %v9626 = vmul.f32 %v9624, %v838
    %v9627 = vsub.f32 %v9615, %v9625
    %v9628 = vsub.f32 %v9616, %v9626
    %v9629 = vmul.f32 %v9627, %v9627
    %v9630 = vmul.f32 %v9628, %v9628
    %v9631 = vsel %vm145, %v9629, 0.0
    %9632 = vadd.xlane.f32.xlu0 %v9631
    %v9633 = vpop.xlane.xlu0 %9632
    %v9634 = vsel %vm145, %v9630, 0.0
    %9635 = vadd.xlane.f32.xlu0 %v9634
    %v9636 = vpop.xlane.xlu0 %9635
    %v9637 = vmul.f32 %v9633, %v838
    %v9638 = vmul.f32 %v9636, %v838
    %v9639 = vadd.f32 %v9637, 1e-05
    %v9640 = vadd.f32 %v9638, 1e-05
    %v9641 = vrsqrt.pop %v9639
    %v9642 = vrsqrt.pop %v9640
    %v9643 = vmul.f32 %v9627, %v9641
    %v9644 = vmul.f32 %v9628, %v9642
    %v9646 = vlaneseq
    %v9647 = vshrl.u32 %v9646, 7
    %v9648 = vsub.s32 0, %v9647
    %v9649 = vrot.slane %v9617, %v9648
    %v9651 = vmul.f32 %v9643, %v9649
    %v9652 = vmul.f32 %v9644, %v9649
    %v9654 = vlaneseq
    %v9655 = vshrl.u32 %v9654, 7
    %v9656 = vsub.s32 0, %v9655
    %v9657 = vrot.slane %v9618, %v9656
    %v9659 = vadd.f32 %v9651, %v9657
    %v9660 = vadd.f32 %v9652, %v9657
    %9661 = vst.msk [vmem:[%s5] sm:$0xff] %vm145, %v4478
    %9662 = vst.msk [vmem:[%s5 + $0x8] sm:$0xff] %vm145, %v4479
    %9663 = vst.msk [vmem:[%s5 + $0x10] sm:$0x3] %vm834, %v4480
    %9664 = vst.msk [vmem:[#allocation8] sm:$0xff] %vm145, %v9659
    %9665 = vst.msk [vmem:[#allocation8 + $0x8] sm:$0xff] %vm145, %v9660
    // Predicated region
    $region30: #{single_branch_transformer.1} parent=1 // pred_check
      _
    $region31: #{single_branch_transformer.1} parent=1 // pred_check_branch
      %9667 = sbr.rel (0) target = $region33
    $region32: #{single_branch_transformer.1} parent=1 // pred_region
      %s9669 = ssub.s32 256, 256
      %9670 = vsyncadd [#allocation4], %s9669
      %s9671 = sshll.u32 [#allocation8], 4
      %s9672 = int_to_ptr.vmem [resolvable:$true] %s9671
      %9677 = dma.vmem_to_hbm [thread:$0]  %s9672, 256, %s4, [#allocation4], 128, 128, 8
    $region33: #{single_branch_transformer.1} parent=1 // pred_fallthru
      _
    // Predicated region
    $region34: #{single_branch_transformer.1} parent=1 // pred_check
      _
    $region35: #{single_branch_transformer.1} parent=1 // pred_check_branch
      %9679 = sbr.rel (0) target = $region37
    $region36: #{single_branch_transformer.1} parent=1 // pred_region
      _
    $region37: #{single_branch_transformer.1} parent=1 // pred_fallthru
      _
    // Predicated region
    $region38: #{single_branch_transformer.1} parent=1 // pred_check
      _
    $region39: #{single_branch_transformer.1} parent=1 // pred_check_branch
      %9681 = sbr.rel (0) target = $region41
    $region40: #{single_branch_transformer.1} parent=1 // pred_region
      %9682 = dma.done [#allocation4], 256
    $region41: #{single_branch_transformer.1} parent=1 // pred_fallthru
      _
    // Predicated region
    $region42: #{single_branch_transformer.1} parent=1 // pred_check
      _
    $region43: #{single_branch_transformer.1} parent=1 // pred_check_branch
      %9684 = sbr.rel (0) target = $region45
    $region44: #{single_branch_transformer.1} parent=1 // pred_region
      _
    $region45: #{single_branch_transformer.1} parent=1 // pred_fallthru
      _
    %9685 = vsyncpa [#allocation3], 1
    %9686 = vsyncpa [#allocation6], 1
    %9687 = vsyncpa [#allocation4], 1

</llo_original>
